<compile_context>
chip_gen: v6e
topology: v6e:2x2x1
jax: 0.10.0
libtpu: 0.0.40
codegen_flags: <defaults>
</compile_context>

<pallas_src>
import functools
import math

import jax
import jax.numpy as jnp
from jax.experimental import pallas as pl
from jax.experimental.pallas import tpu as pltpu

_BN_EPS = 1e-5
_LANE = 128
_TM_SPLIT = 256                      # M tile used only when feeding 2 TensorCores
_VMEM_BUDGET = 20 * 1024 * 1024      # fits the 32 MiB default scoped VMEM everywhere


def _round_up(x, m):
    return (x + m - 1) // m * m


def _detect_num_tensorcores():
    """1 TC/chip on v5e/v6e (grid is a serial loop), 2 on v7x / v4-class megacore."""
    try:
        kind = jax.devices()[0].device_kind.lower()
    except Exception:
        return 1
    if any(t in kind for t in ("lite", "v5e", "v6", "v2", "v3")):
        return 1
    if any(t in kind for t in ("v4", "v5p", "7")):
        return 2
    return 1


_NUM_TC = _detect_num_tensorcores()


# ---------------------------------------------------------------------------
# Pallas kernels: matmul + fused shift (+ residual) (+ full / masked ReLU)
# ---------------------------------------------------------------------------
def _mm_single_kernel(a_ref, b_ref, st_ref, *rest, relu_mode, has_res):
    """Single-shot: whole K in one block, no accumulator scratch."""
    if has_res:
        r_ref, o_ref = rest
    else:
        (o_ref,) = rest
    out = jnp.dot(a_ref[...], b_ref[...], preferred_element_type=jnp.float32)
    out = out + st_ref[0:1, :]
    if has_res:
        out = out + r_ref[...].astype(jnp.float32)
    if relu_mode == "all":
        out = jnp.maximum(out, 0.0)
    elif relu_mode == "mask":
        out = jnp.where(st_ref[1:2, :] > 0.0, jnp.maximum(out, 0.0), out)
    o_ref[...] = out.astype(o_ref.dtype)


def _mm_ksplit_kernel(a_ref, b_ref, st_ref, *rest, relu_mode, has_res, nsteps):
    """Fallback for large K: grid K axis + VMEM accumulator."""
    if has_res:
        r_ref, o_ref, acc_ref = rest
    else:
        o_ref, acc_ref = rest

    @pl.when(pl.program_id(2) == 0)
    def _():
        acc_ref[...] = jnp.zeros_like(acc_ref)

    acc_ref[...] += jnp.dot(a_ref[...], b_ref[...],
                            preferred_element_type=jnp.float32)

    @pl.when(pl.program_id(2) == nsteps - 1)
    def _():
        out = acc_ref[...] + st_ref[0:1, :]
        if has_res:
            out = out + r_ref[...].astype(jnp.float32)
        if relu_mode == "all":
            out = jnp.maximum(out, 0.0)
        elif relu_mode == "mask":
            out = jnp.where(st_ref[1:2, :] > 0.0, jnp.maximum(out, 0.0), out)
        o_ref[...] = out.astype(o_ref.dtype)


def _pick_tk(kp):
    """Largest divisor of kp that is a multiple of 512 (then 256, then 128)."""
    cap = min(kp, 2048)
    for step in (512, 256, 128):
        cand = (cap // step) * step
        while cand >= step:
            if kp % cand == 0:
                return cand
            cand -= step
    return 128


def _plan_tiles(m, kp, np_, has_res, out_bytes):
    """Generation-aware tile plan under an explicit VMEM budget."""
    def est(tm, tn, tk):
        a = tm * tk * 2
        b = tk * tn * 2
        r = tm * tn * 2 if has_res else 0
        s = 2 * tn * 4
        o = tm * tn * out_bytes
        acc = tm * tn * 4 if tk < kp else 0
        return 2 * (a + b + r + s + o) + acc

    if _NUM_TC >= 2 and m >= 2 * _TM_SPLIT:
        tm_pref = _TM_SPLIT          # give the second TensorCore work (v7x)
    else:
        tm_pref = _round_up(m, 16)   # single block: no per-grid-step overhead

    tm_cands = [tm_pref] + [c for c in (512, 256, 128) if c < tm_pref]
    tn_cands = [c for c in (np_, 512, 256, 128) if c <= np_ and np_ % c == 0]
    tk_cands = [kp] + ([_pick_tk(kp)] if kp > 512 else [])

    for tk in tk_cands:
        for tm in tm_cands:
            for tn in tn_cands:
                if est(tm, tn, tk) <= _VMEM_BUDGET:
                    return tm, tn, tk, _round_up(m, tm)
    tm, tn, tk = tm_cands[-1], tn_cands[-1], tk_cands[-1]
    return tm, tn, tk, _round_up(m, tm)


def fused_matmul(a, wmat, st, residual=None, relu_mode="none",
                 out_dtype=jnp.bfloat16):
    """epilogue(a @ wmat + shift [+ residual]) with the epilogue fused in-kernel.

    a        : (M, Kp) activations, already K-padded by the im2col (any dtype).
    wmat     : (Kp, Np) bf16 weight with BN scale folded in, padded at init.
    st       : (2, Np) f32 packed [shift ; relu-mask].
    residual : optional (Mr, Nr) array added (in f32) before the ReLU.
    Returns the (Mp, Np) `out_dtype` result; callers fold [:M, off:off+oc] into
    their reshapes.
    """
    m, ka = a.shape
    kp, np_ = wmat.shape
    assert ka == kp, (ka, kp)
    has_res = residual is not None
    out_bytes = jnp.dtype(out_dtype).itemsize

    tm, tn, tk, mp = _plan_tiles(m, kp, np_, has_res, out_bytes)

    a_in = a.astype(jnp.bfloat16)
    if mp != m:
        a_in = jnp.pad(a_in, ((0, mp - m), (0, 0)))

    inputs = [a_in, wmat, st]
    if has_res:
        r = residual
        if r.shape[1] > np_:
            r = r[:, :np_]
        elif r.shape[1] < np_:
            r = jnp.pad(r, ((0, 0), (0, np_ - r.shape[1])))
        if r.shape[0] > mp:
            r = r[:mp]
        elif r.shape[0] < mp:
            r = jnp.pad(r, ((0, mp - r.shape[0]), (0, 0)))
        inputs.append(r)

    out_shape = jax.ShapeDtypeStruct((mp, np_), out_dtype)

    if tk == kp:
        in_specs = [pl.BlockSpec((tm, kp), lambda i, j: (i, 0)),
                    pl.BlockSpec((kp, tn), lambda i, j: (0, j)),
                    pl.BlockSpec((2, tn), lambda i, j: (0, j))]
        if has_res:
            in_specs.append(pl.BlockSpec((tm, tn), lambda i, j: (i, j)))
        kernel = functools.partial(_mm_single_kernel, relu_mode=relu_mode,
                                   has_res=has_res)
        return pl.pallas_call(
            kernel,
            out_shape=out_shape,
            grid=(mp // tm, np_ // tn),
            in_specs=in_specs,
            out_specs=pl.BlockSpec((tm, tn), lambda i, j: (i, j)),
            compiler_params=pltpu.CompilerParams(
                dimension_semantics=("parallel", "parallel")),
        )(*inputs)

    nsteps = kp // tk
    in_specs = [pl.BlockSpec((tm, tk), lambda i, j, k: (i, k)),
                pl.BlockSpec((tk, tn), lambda i, j, k: (k, j)),
                pl.BlockSpec((2, tn), lambda i, j, k: (0, j))]
    if has_res:
        in_specs.append(pl.BlockSpec((tm, tn), lambda i, j, k: (i, j)))
    kernel = functools.partial(_mm_ksplit_kernel, relu_mode=relu_mode,
                               has_res=has_res, nsteps=nsteps)
    return pl.pallas_call(
        kernel,
        out_shape=out_shape,
        grid=(mp // tm, np_ // tn, nsteps),
        in_specs=in_specs,
        out_specs=pl.BlockSpec((tm, tn), lambda i, j, k: (i, j)),
        scratch_shapes=[pltpu.VMEM((tm, tn), jnp.float32)],
        compiler_params=pltpu.CompilerParams(
            dimension_semantics=("parallel", "parallel", "arbitrary")),
    )(*inputs)


# ---------------------------------------------------------------------------
# Conv / ConvTranspose via NHWC im2col + the fused Pallas matmul
# ---------------------------------------------------------------------------
def _im2col_nhwc(x, kh, kw, stride, pad, k_pad_to=None):
    """x: (N,H,W,C) -> patches (N*OH*OW, Kp) in (kh, kw, c) order.

    The K padding is folded into the concatenate so the expanded tensor is not
    written and re-read just to be padded again.
    TODO(synk): move this construction fully inside the Pallas kernel.
    """
    n, h, w, c = x.shape
    sh, sw = stride
    (pt, pb), (pl_, pr) = pad
    xp = jnp.pad(x, ((0, 0), (pt, pb), (pl_, pr), (0, 0)))
    hh, ww = xp.shape[1], xp.shape[2]
    oh = (hh - kh) // sh + 1
    ow = (ww - kw) // sw + 1
    cols = []
    for i in range(kh):
        for j in range(kw):
            cols.append(xp[:, i:i + sh * (oh - 1) + 1:sh,
                           j:j + sw * (ow - 1) + 1:sw, :])
    k = kh * kw * c
    if k_pad_to is not None and k_pad_to > k:
        cols.append(jnp.zeros((n, oh, ow, k_pad_to - k), x.dtype))
        k = k_pad_to
    patches = jnp.concatenate(cols, axis=-1)
    return patches.reshape(n * oh * ow, k), oh, ow


def conv2d_fused(x, layer, stride, padding, relu_mode, residual=None,
                 out_dtype=jnp.bfloat16):
    """Conv2d (NHWC, BN folded) -> padded (Mp, Np) 2-D result + output dims."""
    ph, pw = padding
    patches, oh, ow = _im2col_nhwc(
        x.astype(jnp.bfloat16), layer['kh'], layer['kw'], stride,
        ((ph, ph), (pw, pw)), k_pad_to=layer['kp'])
    out = fused_matmul(patches, layer['wmat'], layer['st'],
                       residual=residual, relu_mode=relu_mode,
                       out_dtype=out_dtype)
    return out, oh, ow


def _to_nhwc(out2d, n, oh, ow, oc, off=0):
    return out2d[:n * oh * ow, off:off + oc].reshape(n, oh, ow, oc)


def conv_transpose2d_subpixel(x, sp, opad, relu_mode, residual=None,
                              out_dtype=jnp.bfloat16):
    """Stride-2 ConvTranspose2d via the sub-pixel (output-phase) decomposition:
    one matmul on the un-dilated input (4 phase weights packed along N), then a
    strided interleave of the 4 phase outputs. No zeros go through the MXU."""
    n, h, w, _ = x.shape
    t, pb = sp['win'], sp['pad_before']
    pa = t - 1 - pb
    patches, _, _ = _im2col_nhwc(x.astype(jnp.bfloat16), t, t, (1, 1),
                                 ((pb, pa), (pb, pa)), k_pad_to=sp['kp'])
    out2d = fused_matmul(patches, sp['wmat'], sp['st'], residual=residual,
                         relu_mode=relu_mode, out_dtype=out_dtype)
    oc = sp['oc']
    full = jnp.zeros((n, 2 * h, 2 * w, oc), out_dtype)
    for g, (ay, ax) in enumerate(((0, 0), (0, 1), (1, 0), (1, 1))):
        phase = out2d[:n * h * w, g * oc:(g + 1) * oc].reshape(n, h, w, oc)
        full = full.at[:, ay::2, ax::2, :].set(phase)
    oh = 2 * h - 1 + opad[0]
    ow = 2 * w - 1 + opad[1]
    return full[:, :oh, :ow, :]


# ---------------------------------------------------------------------------
# Pool / unpool / interpolate glue (plain JAX, NHWC)
# ---------------------------------------------------------------------------
def maxpool2d_with_indices(x, kernel=3, stride=2, pad=1):
    # TODO(synk): tie-breaking picks the first max in tap order; duplicate
    # indices from overlapping windows make the later unpool write order
    # implementation-defined (matches the previously accepted behaviour).
    n, h, w, c = x.shape
    oh = (h + 2 * pad - kernel) // stride + 1
    ow = (w + 2 * pad - kernel) // stride + 1
    xp = jnp.pad(x, ((0, 0), (pad, pad), (pad, pad), (0, 0)),
                 constant_values=-jnp.inf)
    vals, idxs = [], []
    for i in range(kernel):
        for j in range(kernel):
            vals.append(xp[:, i:i + stride * (oh - 1) + 1:stride,
                           j:j + stride * (ow - 1) + 1:stride, :])
            rr = jnp.arange(oh) * stride + i - pad
            cc = jnp.arange(ow) * stride + j - pad
            flat = (rr[:, None] * w + cc[None, :]).astype(jnp.int32)
            idxs.append(jnp.broadcast_to(flat[None, :, :, None], (n, oh, ow, c)))
    vals = jnp.stack(vals, axis=0)
    idxs = jnp.stack(idxs, axis=0)
    which = jnp.argmax(vals, axis=0)
    maxval = jnp.max(vals, axis=0)
    index = jnp.take_along_axis(idxs, which[None], axis=0)[0]
    return maxval, index


def max_unpool2d(x, indices, out_hw):
    n, h, w, c = x.shape
    oh, ow = out_hw
    xv = x.reshape(n, h * w, c)
    idx = indices.reshape(n, h * w, c)
    out = jnp.zeros((n, oh * ow, c), x.dtype)
    out = out.at[jnp.arange(n)[:, None, None], idx,
                 jnp.arange(c)[None, None, :]].set(xv)
    return out.reshape(n, oh, ow, c)


def interpolate_nearest(x, size):
    n, h, w, c = x.shape
    oh, ow = size
    ri = (jnp.arange(oh) * h) // oh
    ci = (jnp.arange(ow) * w) // ow
    return x[:, ri][:, :, ci]


def linear(x, w, b):
    # Tiny FC layers: plain jnp.dot (padding them to MXU tiles is wasted work).
    return jnp.dot(x, w.T) + b


# ---------------------------------------------------------------------------
# Shape helpers (same semantics as the PyTorch module's helpers)
# ---------------------------------------------------------------------------
def get_post_conv_hw(h, w, stride):
    return (h - 1) // stride + 1, (w - 1) // stride + 1


def get_output_padding(h, w, stride):
    return (h - 1) % stride, (w - 1) % stride


# ---------------------------------------------------------------------------
# Parameter init: pre-padded, BN-scale-folded, N-packed weight matrices
# ---------------------------------------------------------------------------
class KeyGen:
    def __init__(self, seed=0):
        self._key = jax.random.PRNGKey(seed)

    def __call__(self):
        self._key, sub = jax.random.split(self._key)
        return sub


def _conv_w(kg, shape):
    fan_in = shape[1] * shape[2] * shape[3]
    return jax.random.normal(kg(), shape, jnp.float32) / math.sqrt(max(fan_in, 1))


def _bn_fold(c, bias=None):
    # Fresh BatchNorm2d (eval): gamma=1, beta=0, running_mean=0, running_var=1.
    s = jnp.full((c,), 1.0 / math.sqrt(1.0 + _BN_EPS), jnp.float32)
    t = jnp.zeros((c,), jnp.float32)
    if bias is not None:
        t = bias * s
    return s, t


def _pack_conv(w_oihw, scale, shift):
    """Conv2d weight (OC,IC,KH,KW) -> (Kp,Np) bf16 with BN scale folded in."""
    oc, ic, kh, kw = w_oihw.shape
    k = kh * kw * ic
    kp, np_ = _round_up(k, _LANE), _round_up(oc, _LANE)
    wmat = jnp.transpose(w_oihw, (2, 3, 1, 0)).reshape(k, oc) * scale[None, :]
    wpad = jnp.zeros((kp, np_), jnp.float32).at[:k, :oc].set(wmat)
    st = jnp.zeros((2, np_), jnp.float32).at[0, :oc].set(shift).at[1, :oc].set(1.0)
    return {'wmat': wpad.astype(jnp.bfloat16), 'st': st,
            'kh': kh, 'kw': kw, 'kp': kp, 'np': np_, 'oc': oc}


def _pack_convt(w_iohw, scale, shift):
    """Stride-1 ConvTranspose2d -> equivalent (flipped) conv pack."""
    w_conv = jnp.flip(jnp.transpose(w_iohw, (1, 0, 2, 3)), axis=(2, 3))
    return _pack_conv(w_conv, scale, shift)


def _pack_merged33(w_main_oihw, scale_m, shift_m, w_side_oi, scale_s, shift_s):
    """Merge a 3x3 conv (ReLU'd) with a 1x1 identity-branch conv (no ReLU) that
    reads the centre tap of the SAME im2col patches.
    Column layout: [0:oc_s) identity branch | [oc_s : oc_s+oc_m) main conv."""
    oc_m, ic, kh, kw = w_main_oihw.shape
    assert (kh, kw) == (3, 3)
    oc_s = w_side_oi.shape[0]
    k = 9 * ic
    nr = oc_s + oc_m
    kp, np_ = _round_up(k, _LANE), _round_up(nr, _LANE)
    wm = jnp.transpose(w_main_oihw, (2, 3, 1, 0)).reshape(k, oc_m) * scale_m[None, :]
    ws = w_side_oi.T * scale_s[None, :]                # (ic, oc_s)
    wfull = jnp.zeros((kp, np_), jnp.float32)
    wfull = wfull.at[:k, oc_s:oc_s + oc_m].set(wm)
    wfull = wfull.at[4 * ic:5 * ic, :oc_s].set(ws)     # centre tap of 3x3, pad 1
    st = jnp.zeros((2, np_), jnp.float32)
    st = st.at[0, :oc_s].set(shift_s).at[0, oc_s:oc_s + oc_m].set(shift_m)
    st = st.at[1, oc_s:oc_s + oc_m].set(1.0)           # ReLU only on the main path
    return {'wmat': wfull.astype(jnp.bfloat16), 'st': st,
            'kh': 3, 'kw': 3, 'kp': kp, 'np': np_,
            'oc0': oc_s, 'oc1': oc_m, 'off1': oc_s, 'oc': nr}


def _pack_convt_subpixel(w_iohw, scale, shift, padding):
    """Stride-2 ConvTranspose2d as 4 output-phase convolutions on the un-dilated
    input, packed along N into a single matmul (sub-pixel decomposition)."""
    ic, oc, kh, kw = w_iohw.shape
    ds = sorted({(a + padding - ky) // 2
                 for a in (0, 1) for ky in range(kh)
                 if (a + padding - ky) % 2 == 0})
    dmin, dmax = ds[0], ds[-1]
    assert dmin <= 0 <= dmax, (dmin, dmax)
    t = dmax - dmin + 1
    pb = -dmin
    k = t * t * ic
    nr = 4 * oc
    kp, np_ = _round_up(k, _LANE), _round_up(nr, _LANE)
    wfull = jnp.zeros((t, t, ic, 4, oc), jnp.float32)
    for ay in (0, 1):
        for ax in (0, 1):
            g = ay * 2 + ax
            for uy in range(t):
                ky = ay + padding - 2 * (uy - pb)
                if not 0 <= ky < kh:
                    continue
                for ux in range(t):
                    kx = ax + padding - 2 * (ux - pb)
                    if not 0 <= kx < kw:
                        continue
                    wfull = wfull.at[uy, ux, :, g, :].set(w_iohw[:, :, ky, kx])
    wfull = wfull * scale[None, None, None, None, :]
    wmat = wfull.reshape(k, nr)
    wpad = jnp.zeros((kp, np_), jnp.float32).at[:k, :nr].set(wmat)
    st = jnp.zeros((2, np_), jnp.float32)
    st = st.at[0, :nr].set(jnp.tile(shift, 4)).at[1, :nr].set(1.0)
    return {'wmat': wpad.astype(jnp.bfloat16), 'st': st,
            'win': t, 'pad_before': pb, 'kp': kp, 'np': np_, 'oc': oc}


def _init_basic_block(kg, in_c, out_c, stride):
    p = {'stride': (stride, stride)}
    w1 = _conv_w(kg, (out_c, in_c, 3, 3))
    s1, t1 = _bn_fold(out_c)
    w2 = _conv_w(kg, (out_c, out_c, 3, 3))
    p['conv2'] = _pack_conv(w2, *_bn_fold(out_c))
    if stride != 1 or in_c != out_c:
        wd = _conv_w(kg, (out_c, in_c, 1, 1))
        bd = 0.01 * jax.random.normal(kg(), (out_c,), jnp.float32)
        sd, td = _bn_fold(out_c, bias=bd)
        p['merged'] = _pack_merged33(w1, s1, t1, wd[:, :, 0, 0], sd, td)
        p['conv1'] = None
    else:
        p['conv1'] = _pack_conv(w1, s1, t1)
        p['merged'] = None
    return p


def _init_rev_block(kg, in_c, out_c, stride, output_padding, with_up=True):
    p = {'stride': (stride, stride), 'opad': output_padding}
    w1 = _conv_w(kg, (in_c, in_c, 3, 3))          # ConvT weight (IC, OC, kh, kw)
    s1, t1 = _bn_fold(in_c)
    w2 = _conv_w(kg, (in_c, out_c, 3, 3))
    s2, t2 = _bn_fold(out_c)
    if stride != 1:
        p['convT2sp'] = _pack_convt_subpixel(w2, s2, t2, padding=1)
        p['convT2'] = None
    else:
        p['convT2'] = _pack_convt(w2, s2, t2)
        p['convT2sp'] = None
    if with_up:
        wu = _conv_w(kg, (in_c, out_c, 1, 1))     # ConvT 1x1 (IC, OC, 1, 1)
        bu = 0.01 * jax.random.normal(kg(), (out_c,), jnp.float32)
        su, tu = _bn_fold(out_c, bias=bu)
        # convT1 as its conv-equivalent, merged with the 1x1 up path (centre tap).
        w1_conv = jnp.flip(jnp.transpose(w1, (1, 0, 2, 3)), axis=(2, 3))
        p['merged'] = _pack_merged33(w1_conv, s1, t1, wu[:, :, 0, 0].T, su, tu)
        p['convT1'] = None
        p['up_shift'] = tu
    else:
        p['convT1'] = _pack_convt(w1, s1, t1)
        p['merged'] = None
        p['up_shift'] = None
    return p


def init_model(height, width, embedding_size, n_channels,
               block_sections=(1, 1, 1, 1), base=8, seed=0):
    kg = KeyGen(seed)
    h77, w77 = get_post_conv_hw(height, width, 2)
    hp, wp = get_post_conv_hw(h77, w77, 2)
    h128, w128 = get_post_conv_hw(hp, wp, 2)
    h256, w256 = get_post_conv_hw(h128, w128, 2)
    h512, w512 = get_post_conv_hw(h256, w256, 2)

    params = {}
    w_stem = _conv_w(kg, (base, n_channels, 7, 7))
    params['enc_stem'] = _pack_conv(w_stem, *_bn_fold(base))

    in_c = base
    enc_sections = []
    for n_blocks, n_ch, stride in zip(block_sections,
                                      (base, base * 2, base * 4, base * 8),
                                      (1, 2, 2, 2)):
        blocks = [_init_basic_block(kg, in_c, n_ch, stride)]
        in_c = n_ch
        for _ in range(n_blocks - 1):
            blocks.append(_init_basic_block(kg, in_c, n_ch, 1))
        enc_sections.append(blocks)
    params['enc_sections'] = enc_sections

    params['enc_fc_w'] = jax.random.normal(kg(), (embedding_size, base * 8),
                                           jnp.float32) / math.sqrt(base * 8)
    params['enc_fc_b'] = 0.01 * jax.random.normal(kg(), (embedding_size,), jnp.float32)
    params['dec_fc_w'] = jax.random.normal(kg(), (base * 8, embedding_size),
                                           jnp.float32) / math.sqrt(embedding_size)
    params['dec_fc_b'] = 0.01 * jax.random.normal(kg(), (base * 8,), jnp.float32)

    dec_sections = []
    rev_cfg = [
        (h256, w256, block_sections[3], base * 8, 2),
        (h128, w128, block_sections[2], base * 4, 2),
        (hp, wp, block_sections[1], base * 2, 2),
        (hp, wp, block_sections[0], base, 1),
    ]
    for ph, pw_, n_blocks, n_ch, stride in rev_cfg:
        opad = get_output_padding(ph, pw_, stride)
        blocks = []
        for _ in range(n_blocks - 1):
            blocks.append(_init_rev_block(kg, in_c, n_ch, 1, (0, 0), with_up=False))
        blocks.append(_init_rev_block(kg, in_c, n_ch // stride, stride, opad,
                                      with_up=True))
        in_c = n_ch // stride
        dec_sections.append(blocks)
    params['dec_sections'] = dec_sections

    wf = _conv_w(kg, (in_c, n_channels, 7, 7))            # ConvT weight (IC,OC,7,7)
    bf = 0.01 * jax.random.normal(kg(), (n_channels,), jnp.float32)
    params['final'] = _pack_convt_subpixel(
        wf, jnp.ones((n_channels,), jnp.float32), bf, padding=3)

    cfg = {
        'post_unpool': (h77, w77),
        'interp': (h512, w512),
        'out_pad77': get_output_padding(height, width, 2),
    }
    return params, cfg


# ---------------------------------------------------------------------------
# Forward pass (NHWC bf16 internally)
# ---------------------------------------------------------------------------
def basic_block_fwd(x, p):
    n, h, w, _ = x.shape
    s = p['stride']
    if p['merged'] is not None:
        m = p['merged']
        mo, oh, ow = conv2d_fused(x, m, s, (1, 1), relu_mode="mask")
        out1 = _to_nhwc(mo, n, oh, ow, m['oc1'], m['off1'])
        identity2d = mo                                  # cols [0:oc0) = downsample
    else:
        c1, oh, ow = conv2d_fused(x, p['conv1'], s, (1, 1), relu_mode="all")
        out1 = _to_nhwc(c1, n, oh, ow, p['conv1']['oc'])
        identity2d = x.astype(jnp.bfloat16).reshape(n * h * w, x.shape[3])
    o2, oh2, ow2 = conv2d_fused(out1, p['conv2'], (1, 1), (1, 1),
                                relu_mode="all", residual=identity2d)
    return _to_nhwc(o2, n, oh2, ow2, p['conv2']['oc'])


def rev_block_fwd(x, p):
    n, h, w, _ = x.shape
    s = p['stride'][0]
    if p['merged'] is not None:
        m = p['merged']
        mo, oh, ow = conv2d_fused(x, m, (1, 1), (1, 1), relu_mode="mask")
        out1 = _to_nhwc(mo, n, oh, ow, m['oc1'], m['off1'])
        up2d = mo                                        # cols [0:oc0) = up path
    else:
        c1, oh, ow = conv2d_fused(x, p['convT1'], (1, 1), (1, 1), relu_mode="all")
        out1 = _to_nhwc(c1, n, oh, ow, p['convT1']['oc'])
        up2d = None

    if s == 1:
        if up2d is None:
            identity2d = x.astype(jnp.bfloat16).reshape(n * h * w, x.shape[3])
        else:
            identity2d = up2d
        o2, oh2, ow2 = conv2d_fused(out1, p['convT2'], (1, 1), (1, 1),
                                    relu_mode="all", residual=identity2d)
        return _to_nhwc(o2, n, oh2, ow2, p['convT2']['oc'])

    # stride-2: sub-pixel convT2; residual packed per output phase
    # (phase (0,0) carries the 1x1 up values, the other phases its BN'd bias).
    sp = p['convT2sp']
    oc2 = sp['oc']
    m_rows = n * h * w
    up_vals = up2d[:m_rows, :oc2]
    bg = jnp.broadcast_to(p['up_shift'].astype(up_vals.dtype), (m_rows, oc2))
    identity2d = jnp.concatenate([up_vals, bg, bg, bg], axis=1)
    return conv_transpose2d_subpixel(out1, sp, p['opad'], relu_mode="all",
                                     residual=identity2d)


def resnet_autoencoder_forward(params, cfg, x_nchw):
    n = x_nchw.shape[0]
    x = jnp.transpose(x_nchw, (0, 2, 3, 1)).astype(jnp.float32)   # NCHW -> NHWC once

    # ---- encoder ----
    s2d, oh, ow = conv2d_fused(x, params['enc_stem'], (2, 2), (3, 3),
                               relu_mode="all")
    h = _to_nhwc(s2d, n, oh, ow, params['enc_stem']['oc'])
    # TODO(synk): Dropout2d(p=0.1) is identity in eval mode.
    h, pool_idx = maxpool2d_with_indices(h, 3, 2, 1)
    for sec in params['enc_sections']:
        for blk in sec:
            h = basic_block_fwd(h, blk)
    feat = jnp.mean(h.astype(jnp.float32), axis=(1, 2))   # AdaptiveAvgPool + Flatten
    emb = linear(feat, params['enc_fc_w'], params['enc_fc_b'])

    # ---- decoder ----
    d = linear(emb, params['dec_fc_w'], params['dec_fc_b'])
    d = d.reshape(d.shape[0], 1, 1, -1)                   # ReshapeLayer (NHWC)
    d = interpolate_nearest(d, cfg['interp'])             # InterpolateLayer
    for sec in params['dec_sections']:
        for blk in sec:
            d = rev_block_fwd(d, blk)
    d = max_unpool2d(d, pool_idx, cfg['post_unpool'])
    d = conv_transpose2d_subpixel(d, params['final'], cfg['out_pad77'],
                                  relu_mode="none", out_dtype=jnp.float32)
    recon = jnp.transpose(d, (0, 3, 1, 2))                # NHWC -> NCHW once
    return emb, recon


if __name__ == "__main__":
    HEIGHT = WIDTH = 32
    N_CHANNELS = 3
    EMBEDDING = 16
    BASE = 8
    BATCH = 2

    params, cfg = init_model(HEIGHT, WIDTH, EMBEDDING, N_CHANNELS,
                             block_sections=(1, 1, 1, 1), base=BASE, seed=0)
    x = jax.random.normal(jax.random.PRNGKey(0),
                          (BATCH, N_CHANNELS, HEIGHT, WIDTH), jnp.float32)

    fwd = jax.jit(functools.partial(resnet_autoencoder_forward, params, cfg))
    emb, recon = fwd(x)
    jax.block_until_ready((emb, recon))

    assert emb.shape == (BATCH, EMBEDDING), emb.shape
    assert recon.shape == (BATCH, N_CHANNELS, HEIGHT, WIDTH), recon.shape
    assert bool(jnp.all(jnp.isfinite(emb))) and bool(jnp.all(jnp.isfinite(recon)))
    print("KERNEL_OK")
</pallas_src>

<mosaic_0001>
module attributes {stable_mosaic.version = 11 : i64} {
  func.func @_mm_single_kernel(%arg0: i32, %arg1: i32, %arg2: memref<512x256xbf16, #tpu.memory_space<vmem>>, %arg3: memref<256x128xbf16, #tpu.memory_space<vmem>>, %arg4: memref<2x128xf32, #tpu.memory_space<vmem>>, %arg5: memref<512x128xbf16, #tpu.memory_space<vmem>>) attributes {dimension_semantics = [#tpu.dimension_semantics<parallel>, #tpu.dimension_semantics<parallel>], iteration_bounds = array<i64: 1, 1>, scalar_prefetch = 0 : i64, scratch_operands = 0 : i64, tpu.core_type = #tpu.core_type<tc>, window_params = [{transform_indices = @transform_0, window_bounds = array<i64: 512, 256>}, {transform_indices = @transform_1, window_bounds = array<i64: 256, 128>}, {transform_indices = @transform_2, window_bounds = array<i64: 2, 128>}, {transform_indices = @transform_3, window_bounds = array<i64: 512, 128>}]} {
    %c0 = arith.constant 0 : index
    %c0_0 = arith.constant 0 : index
    %0 = vector.load %arg2[%c0, %c0_0] : memref<512x256xbf16, #tpu.memory_space<vmem>>, vector<512x256xbf16>
    %c0_1 = arith.constant 0 : index
    %c0_2 = arith.constant 0 : index
    %1 = vector.load %arg3[%c0_1, %c0_2] : memref<256x128xbf16, #tpu.memory_space<vmem>>, vector<256x128xbf16>
    %cst = arith.constant dense<0.000000e+00> : vector<512x128xf32>
    %2 = tpu.matmul %0, %1, %cst {dimension_numbers = #tpu.dot_dimension_numbers<[1], [0], [0], [1], [0, 0, 1, 1], [], []>} : vector<512x256xbf16>, vector<256x128xbf16>, vector<512x128xf32> -> vector<512x128xf32>
    %c0_3 = arith.constant 0 : index
    %c0_4 = arith.constant 0 : index
    %3 = vector.load %arg4[%c0_3, %c0_4] : memref<2x128xf32, #tpu.memory_space<vmem>>, vector<1x128xf32>
    %4 = vector.broadcast %3 : vector<1x128xf32> to vector<512x128xf32>
    %5 = arith.addf %2, %4 : vector<512x128xf32>
    %cst_5 = arith.constant 0.000000e+00 : f32
    %6 = vector.broadcast %cst_5 : f32 to vector<512x128xf32>
    %7 = arith.maximumf %5, %6 : vector<512x128xf32>
    %8 = arith.truncf %7 : vector<512x128xf32> to vector<512x128xbf16>
    %c0_6 = arith.constant 0 : index
    %c0_7 = arith.constant 0 : index
    %9 = vector.load %arg5[%c0_6, %c0_7] : memref<512x128xbf16, #tpu.memory_space<vmem>>, vector<512x128xbf16>
    tpu.vector_store %arg5[%c0_6, %c0_7], %8 {strides = array<i32>} : memref<512x128xbf16, #tpu.memory_space<vmem>>, vector<512x128xbf16>,
    return
  }
  func.func @transform_0(%arg0: i32, %arg1: i32) -> (i32, i32) {
    %c0_i32 = arith.constant 0 : i32
    %c0_i32_0 = arith.constant 0 : i32
    return %arg0, %c0_i32 : i32, i32
  }
  func.func @transform_1(%arg0: i32, %arg1: i32) -> (i32, i32) {
    %c0_i32 = arith.constant 0 : i32
    %c0_i32_0 = arith.constant 0 : i32
    return %c0_i32, %arg1 : i32, i32
  }
  func.func @transform_2(%arg0: i32, %arg1: i32) -> (i32, i32) {
    %c0_i32 = arith.constant 0 : i32
    %c0_i32_0 = arith.constant 0 : i32
    return %c0_i32, %arg1 : i32, i32
  }
  func.func @transform_3(%arg0: i32, %arg1: i32) -> (i32, i32) {
    %c0_i32 = arith.constant 0 : i32
    return %arg0, %arg1 : i32, i32
  }
}

module attributes {stable_mosaic.version = 11 : i64} {
  func.func @_mm_single_kernel(%arg0: i32, %arg1: i32, %arg2: memref<128x128xbf16, #tpu.memory_space<vmem>>, %arg3: memref<128x128xbf16, #tpu.memory_space<vmem>>, %arg4: memref<2x128xf32, #tpu.memory_space<vmem>>, %arg5: memref<128x128xbf16, #tpu.memory_space<vmem>>) attributes {dimension_semantics = [#tpu.dimension_semantics<parallel>, #tpu.dimension_semantics<parallel>], iteration_bounds = array<i64: 1, 1>, scalar_prefetch = 0 : i64, scratch_operands = 0 : i64, tpu.core_type = #tpu.core_type<tc>, window_params = [{transform_indices = @transform_0, window_bounds = array<i64: 128, 128>}, {transform_indices = @transform_1, window_bounds = array<i64: 128, 128>}, {transform_indices = @transform_2, window_bounds = array<i64: 2, 128>}, {transform_indices = @transform_3, window_bounds = array<i64: 128, 128>}]} {
    %c0 = arith.constant 0 : index
    %c0_0 = arith.constant 0 : index
    %0 = vector.load %arg2[%c0, %c0_0] : memref<128x128xbf16, #tpu.memory_space<vmem>>, vector<128x128xbf16>
    %c0_1 = arith.constant 0 : index
    %c0_2 = arith.constant 0 : index
    %1 = vector.load %arg3[%c0_1, %c0_2] : memref<128x128xbf16, #tpu.memory_space<vmem>>, vector<128x128xbf16>
    %cst = arith.constant dense<0.000000e+00> : vector<128x128xf32>
    %2 = tpu.matmul %0, %1, %cst {dimension_numbers = #tpu.dot_dimension_numbers<[1], [0], [0], [1], [0, 0, 1, 1], [], []>} : vector<128x128xbf16>, vector<128x128xbf16>, vector<128x128xf32> -> vector<128x128xf32>
    %c0_3 = arith.constant 0 : index
    %c0_4 = arith.constant 0 : index
    %3 = vector.load %arg4[%c0_3, %c0_4] : memref<2x128xf32, #tpu.memory_space<vmem>>, vector<1x128xf32>
    %4 = vector.broadcast %3 : vector<1x128xf32> to vector<128x128xf32>
    %5 = arith.addf %2, %4 : vector<128x128xf32>
    %cst_5 = arith.constant 0.000000e+00 : f32
    %6 = vector.broadcast %cst_5 : f32 to vector<128x128xf32>
    %7 = arith.maximumf %5, %6 : vector<128x128xf32>
    %8 = arith.truncf %7 : vector<128x128xf32> to vector<128x128xbf16>
    %c0_6 = arith.constant 0 : index
    %c0_7 = arith.constant 0 : index
    %9 = vector.load %arg5[%c0_6, %c0_7] : memref<128x128xbf16, #tpu.memory_space<vmem>>, vector<128x128xbf16>
    tpu.vector_store %arg5[%c0_6, %c0_7], %8 {strides = array<i32>} : memref<128x128xbf16, #tpu.memory_space<vmem>>, vector<128x128xbf16>,
    return
  }
  func.func @transform_0(%arg0: i32, %arg1: i32) -> (i32, i32) {
    %c0_i32 = arith.constant 0 : i32
    %c0_i32_0 = arith.constant 0 : i32
    return %arg0, %c0_i32 : i32, i32
  }
  func.func @transform_1(%arg0: i32, %arg1: i32) -> (i32, i32) {
    %c0_i32 = arith.constant 0 : i32
    %c0_i32_0 = arith.constant 0 : i32
    return %c0_i32, %arg1 : i32, i32
  }
  func.func @transform_2(%arg0: i32, %arg1: i32) -> (i32, i32) {
    %c0_i32 = arith.constant 0 : i32
    %c0_i32_0 = arith.constant 0 : i32
    return %c0_i32, %arg1 : i32, i32
  }
  func.func @transform_3(%arg0: i32, %arg1: i32) -> (i32, i32) {
    %c0_i32 = arith.constant 0 : i32
    return %arg0, %arg1 : i32, i32
  }
}

module attributes {stable_mosaic.version = 11 : i64} {
  func.func @_mm_single_kernel(%arg0: i32, %arg1: i32, %arg2: memref<128x128xbf16, #tpu.memory_space<vmem>>, %arg3: memref<128x128xbf16, #tpu.memory_space<vmem>>, %arg4: memref<2x128xf32, #tpu.memory_space<vmem>>, %arg5: memref<128x128xbf16, #tpu.memory_space<vmem>>, %arg6: memref<128x128xbf16, #tpu.memory_space<vmem>>) attributes {dimension_semantics = [#tpu.dimension_semantics<parallel>, #tpu.dimension_semantics<parallel>], iteration_bounds = array<i64: 1, 1>, scalar_prefetch = 0 : i64, scratch_operands = 0 : i64, tpu.core_type = #tpu.core_type<tc>, window_params = [{transform_indices = @transform_0, window_bounds = array<i64: 128, 128>}, {transform_indices = @transform_1, window_bounds = array<i64: 128, 128>}, {transform_indices = @transform_2, window_bounds = array<i64: 2, 128>}, {transform_indices = @transform_3, window_bounds = array<i64: 128, 128>}, {transform_indices = @transform_4, window_bounds = array<i64: 128, 128>}]} {
    %c0 = arith.constant 0 : index
    %c0_0 = arith.constant 0 : index
    %0 = vector.load %arg2[%c0, %c0_0] : memref<128x128xbf16, #tpu.memory_space<vmem>>, vector<128x128xbf16>
    %c0_1 = arith.constant 0 : index
    %c0_2 = arith.constant 0 : index
    %1 = vector.load %arg3[%c0_1, %c0_2] : memref<128x128xbf16, #tpu.memory_space<vmem>>, vector<128x128xbf16>
    %cst = arith.constant dense<0.000000e+00> : vector<128x128xf32>
    %2 = tpu.matmul %0, %1, %cst {dimension_numbers = #tpu.dot_dimension_numbers<[1], [0], [0], [1], [0, 0, 1, 1], [], []>} : vector<128x128xbf16>, vector<128x128xbf16>, vector<128x128xf32> -> vector<128x128xf32>
    %c0_3 = arith.constant 0 : index
    %c0_4 = arith.constant 0 : index
    %3 = vector.load %arg4[%c0_3, %c0_4] : memref<2x128xf32, #tpu.memory_space<vmem>>, vector<1x128xf32>
    %4 = vector.broadcast %3 : vector<1x128xf32> to vector<128x128xf32>
    %5 = arith.addf %2, %4 : vector<128x128xf32>
    %c0_5 = arith.constant 0 : index
    %c0_6 = arith.constant 0 : index
    %6 = vector.load %arg5[%c0_5, %c0_6] : memref<128x128xbf16, #tpu.memory_space<vmem>>, vector<128x128xbf16>
    %7 = arith.extf %6 : vector<128x128xbf16> to vector<128x128xf32>
    %8 = arith.addf %5, %7 : vector<128x128xf32>
    %cst_7 = arith.constant 0.000000e+00 : f32
    %9 = vector.broadcast %cst_7 : f32 to vector<128x128xf32>
    %10 = arith.maximumf %8, %9 : vector<128x128xf32>
    %11 = arith.truncf %10 : vector<128x128xf32> to vector<128x128xbf16>
    %c0_8 = arith.constant 0 : index
    %c0_9 = arith.constant 0 : index
    %12 = vector.load %arg6[%c0_8, %c0_9] : memref<128x128xbf16, #tpu.memory_space<vmem>>, vector<128x128xbf16>
    tpu.vector_store %arg6[%c0_8, %c0_9], %11 {strides = array<i32>} : memref<128x128xbf16, #tpu.memory_space<vmem>>, vector<128x128xbf16>,
    return
  }
  func.func @transform_0(%arg0: i32, %arg1: i32) -> (i32, i32) {
    %c0_i32 = arith.constant 0 : i32
    %c0_i32_0 = arith.constant 0 : i32
    return %arg0, %c0_i32 : i32, i32
  }
  func.func @transform_1(%arg0: i32, %arg1: i32) -> (i32, i32) {
    %c0_i32 = arith.constant 0 : i32
    %c0_i32_0 = arith.constant 0 : i32
    return %c0_i32, %arg1 : i32, i32
  }
  func.func @transform_2(%arg0: i32, %arg1: i32) -> (i32, i32) {
    %c0_i32 = arith.constant 0 : i32
    %c0_i32_0 = arith.constant 0 : i32
    return %c0_i32, %arg1 : i32, i32
  }
  func.func @transform_3(%arg0: i32, %arg1: i32) -> (i32, i32) {
    %c0_i32 = arith.constant 0 : i32
    return %arg0, %arg1 : i32, i32
  }
  func.func @transform_4(%arg0: i32, %arg1: i32) -> (i32, i32) {
    %c0_i32 = arith.constant 0 : i32
    return %arg0, %arg1 : i32, i32
  }
}

module attributes {stable_mosaic.version = 11 : i64} {
  func.func @_mm_single_kernel(%arg0: i32, %arg1: i32, %arg2: memref<32x128xbf16, #tpu.memory_space<vmem>>, %arg3: memref<128x128xbf16, #tpu.memory_space<vmem>>, %arg4: memref<2x128xf32, #tpu.memory_space<vmem>>, %arg5: memref<32x128xbf16, #tpu.memory_space<vmem>>) attributes {dimension_semantics = [#tpu.dimension_semantics<parallel>, #tpu.dimension_semantics<parallel>], iteration_bounds = array<i64: 1, 1>, scalar_prefetch = 0 : i64, scratch_operands = 0 : i64, tpu.core_type = #tpu.core_type<tc>, window_params = [{transform_indices = @transform_0, window_bounds = array<i64: 32, 128>}, {transform_indices = @transform_1, window_bounds = array<i64: 128, 128>}, {transform_indices = @transform_2, window_bounds = array<i64: 2, 128>}, {transform_indices = @transform_3, window_bounds = array<i64: 32, 128>}]} {
    %c0 = arith.constant 0 : index
    %c0_0 = arith.constant 0 : index
    %0 = vector.load %arg2[%c0, %c0_0] : memref<32x128xbf16, #tpu.memory_space<vmem>>, vector<32x128xbf16>
    %c0_1 = arith.constant 0 : index
    %c0_2 = arith.constant 0 : index
    %1 = vector.load %arg3[%c0_1, %c0_2] : memref<128x128xbf16, #tpu.memory_space<vmem>>, vector<128x128xbf16>
    %cst = arith.constant dense<0.000000e+00> : vector<32x128xf32>
    %2 = tpu.matmul %0, %1, %cst {dimension_numbers = #tpu.dot_dimension_numbers<[1], [0], [0], [1], [0, 0, 1, 1], [], []>} : vector<32x128xbf16>, vector<128x128xbf16>, vector<32x128xf32> -> vector<32x128xf32>
    %c0_3 = arith.constant 0 : index
    %c0_4 = arith.constant 0 : index
    %3 = vector.load %arg4[%c0_3, %c0_4] : memref<2x128xf32, #tpu.memory_space<vmem>>, vector<1x128xf32>
    %4 = vector.broadcast %3 : vector<1x128xf32> to vector<32x128xf32>
    %5 = arith.addf %2, %4 : vector<32x128xf32>
    %c1 = arith.constant 1 : index
    %c0_5 = arith.constant 0 : index
    %6 = vector.load %arg4[%c1, %c0_5] : memref<2x128xf32, #tpu.memory_space<vmem>>, vector<1x128xf32>
    %cst_6 = arith.constant 0.000000e+00 : f32
    %7 = vector.broadcast %cst_6 : f32 to vector<1x128xf32>
    %8 = arith.cmpf ogt, %6, %7 : vector<1x128xf32>
    %cst_7 = arith.constant 0.000000e+00 : f32
    %9 = vector.broadcast %cst_7 : f32 to vector<32x128xf32>
    %10 = arith.maximumf %5, %9 : vector<32x128xf32>
    %11 = vector.shape_cast %8 : vector<1x128xi1> to vector<1x128xi1>
    %12 = vector.broadcast %11 : vector<1x128xi1> to vector<32x128xi1>
    %13 = arith.select %12, %10, %5 : vector<32x128xi1>, vector<32x128xf32>
    %14 = arith.truncf %13 : vector<32x128xf32> to vector<32x128xbf16>
    %c0_8 = arith.constant 0 : index
    %c0_9 = arith.constant 0 : index
    %15 = vector.load %arg5[%c0_8, %c0_9] : memref<32x128xbf16, #tpu.memory_space<vmem>>, vector<32x128xbf16>
    tpu.vector_store %arg5[%c0_8, %c0_9], %14 {strides = array<i32>} : memref<32x128xbf16, #tpu.memory_space<vmem>>, vector<32x128xbf16>,
    return
  }
  func.func @transform_0(%arg0: i32, %arg1: i32) -> (i32, i32) {
    %c0_i32 = arith.constant 0 : i32
    %c0_i32_0 = arith.constant 0 : i32
    return %arg0, %c0_i32 : i32, i32
  }
  func.func @transform_1(%arg0: i32, %arg1: i32) -> (i32, i32) {
    %c0_i32 = arith.constant 0 : i32
    %c0_i32_0 = arith.constant 0 : i32
    return %c0_i32, %arg1 : i32, i32
  }
  func.func @transform_2(%arg0: i32, %arg1: i32) -> (i32, i32) {
    %c0_i32 = arith.constant 0 : i32
    %c0_i32_0 = arith.constant 0 : i32
    return %c0_i32, %arg1 : i32, i32
  }
  func.func @transform_3(%arg0: i32, %arg1: i32) -> (i32, i32) {
    %c0_i32 = arith.constant 0 : i32
    return %arg0, %arg1 : i32, i32
  }
}

module attributes {stable_mosaic.version = 11 : i64} {
  func.func @_mm_single_kernel(%arg0: i32, %arg1: i32, %arg2: memref<32x256xbf16, #tpu.memory_space<vmem>>, %arg3: memref<256x128xbf16, #tpu.memory_space<vmem>>, %arg4: memref<2x128xf32, #tpu.memory_space<vmem>>, %arg5: memref<32x128xbf16, #tpu.memory_space<vmem>>, %arg6: memref<32x128xbf16, #tpu.memory_space<vmem>>) attributes {dimension_semantics = [#tpu.dimension_semantics<parallel>, #tpu.dimension_semantics<parallel>], iteration_bounds = array<i64: 1, 1>, scalar_prefetch = 0 : i64, scratch_operands = 0 : i64, tpu.core_type = #tpu.core_type<tc>, window_params = [{transform_indices = @transform_0, window_bounds = array<i64: 32, 256>}, {transform_indices = @transform_1, window_bounds = array<i64: 256, 128>}, {transform_indices = @transform_2, window_bounds = array<i64: 2, 128>}, {transform_indices = @transform_3, window_bounds = array<i64: 32, 128>}, {transform_indices = @transform_4, window_bounds = array<i64: 32, 128>}]} {
    %c0 = arith.constant 0 : index
    %c0_0 = arith.constant 0 : index
    %0 = vector.load %arg2[%c0, %c0_0] : memref<32x256xbf16, #tpu.memory_space<vmem>>, vector<32x256xbf16>
    %c0_1 = arith.constant 0 : index
    %c0_2 = arith.constant 0 : index
    %1 = vector.load %arg3[%c0_1, %c0_2] : memref<256x128xbf16, #tpu.memory_space<vmem>>, vector<256x128xbf16>
    %cst = arith.constant dense<0.000000e+00> : vector<32x128xf32>
    %2 = tpu.matmul %0, %1, %cst {dimension_numbers = #tpu.dot_dimension_numbers<[1], [0], [0], [1], [0, 0, 1, 1], [], []>} : vector<32x256xbf16>, vector<256x128xbf16>, vector<32x128xf32> -> vector<32x128xf32>
    %c0_3 = arith.constant 0 : index
    %c0_4 = arith.constant 0 : index
    %3 = vector.load %arg4[%c0_3, %c0_4] : memref<2x128xf32, #tpu.memory_space<vmem>>, vector<1x128xf32>
    %4 = vector.broadcast %3 : vector<1x128xf32> to vector<32x128xf32>
    %5 = arith.addf %2, %4 : vector<32x128xf32>
    %c0_5 = arith.constant 0 : index
    %c0_6 = arith.constant 0 : index
    %6 = vector.load %arg5[%c0_5, %c0_6] : memref<32x128xbf16, #tpu.memory_space<vmem>>, vector<32x128xbf16>
    %7 = arith.extf %6 : vector<32x128xbf16> to vector<32x128xf32>
    %8 = arith.addf %5, %7 : vector<32x128xf32>
    %cst_7 = arith.constant 0.000000e+00 : f32
    %9 = vector.broadcast %cst_7 : f32 to vector<32x128xf32>
    %10 = arith.maximumf %8, %9 : vector<32x128xf32>
    %11 = arith.truncf %10 : vector<32x128xf32> to vector<32x128xbf16>
    %c0_8 = arith.constant 0 : index
    %c0_9 = arith.constant 0 : index
    %12 = vector.load %arg6[%c0_8, %c0_9] : memref<32x128xbf16, #tpu.memory_space<vmem>>, vector<32x128xbf16>
    tpu.vector_store %arg6[%c0_8, %c0_9], %11 {strides = array<i32>} : memref<32x128xbf16, #tpu.memory_space<vmem>>, vector<32x128xbf16>,
    return
  }
  func.func @transform_0(%arg0: i32, %arg1: i32) -> (i32, i32) {
    %c0_i32 = arith.constant 0 : i32
    %c0_i32_0 = arith.constant 0 : i32
    return %arg0, %c0_i32 : i32, i32
  }
  func.func @transform_1(%arg0: i32, %arg1: i32) -> (i32, i32) {
    %c0_i32 = arith.constant 0 : i32
    %c0_i32_0 = arith.constant 0 : i32
    return %c0_i32, %arg1 : i32, i32
  }
  func.func @transform_2(%arg0: i32, %arg1: i32) -> (i32, i32) {
    %c0_i32 = arith.constant 0 : i32
    %c0_i32_0 = arith.constant 0 : i32
    return %c0_i32, %arg1 : i32, i32
  }
  func.func @transform_3(%arg0: i32, %arg1: i32) -> (i32, i32) {
    %c0_i32 = arith.constant 0 : i32
    return %arg0, %arg1 : i32, i32
  }
  func.func @transform_4(%arg0: i32, %arg1: i32) -> (i32, i32) {
    %c0_i32 = arith.constant 0 : i32
    return %arg0, %arg1 : i32, i32
  }
}

module attributes {stable_mosaic.version = 11 : i64} {
  func.func @_mm_single_kernel(%arg0: i32, %arg1: i32, %arg2: memref<16x256xbf16, #tpu.memory_space<vmem>>, %arg3: memref<256x128xbf16, #tpu.memory_space<vmem>>, %arg4: memref<2x128xf32, #tpu.memory_space<vmem>>, %arg5: memref<16x128xbf16, #tpu.memory_space<vmem>>) attributes {dimension_semantics = [#tpu.dimension_semantics<parallel>, #tpu.dimension_semantics<parallel>], iteration_bounds = array<i64: 1, 1>, scalar_prefetch = 0 : i64, scratch_operands = 0 : i64, tpu.core_type = #tpu.core_type<tc>, window_params = [{transform_indices = @transform_0, window_bounds = array<i64: 16, 256>}, {transform_indices = @transform_1, window_bounds = array<i64: 256, 128>}, {transform_indices = @transform_2, window_bounds = array<i64: 2, 128>}, {transform_indices = @transform_3, window_bounds = array<i64: 16, 128>}]} {
    %c0 = arith.constant 0 : index
    %c0_0 = arith.constant 0 : index
    %0 = vector.load %arg2[%c0, %c0_0] : memref<16x256xbf16, #tpu.memory_space<vmem>>, vector<16x256xbf16>
    %c0_1 = arith.constant 0 : index
    %c0_2 = arith.constant 0 : index
    %1 = vector.load %arg3[%c0_1, %c0_2] : memref<256x128xbf16, #tpu.memory_space<vmem>>, vector<256x128xbf16>
    %cst = arith.constant dense<0.000000e+00> : vector<16x128xf32>
    %2 = tpu.matmul %0, %1, %cst {dimension_numbers = #tpu.dot_dimension_numbers<[1], [0], [0], [1], [0, 0, 1, 1], [], []>} : vector<16x256xbf16>, vector<256x128xbf16>, vector<16x128xf32> -> vector<16x128xf32>
    %c0_3 = arith.constant 0 : index
    %c0_4 = arith.constant 0 : index
    %3 = vector.load %arg4[%c0_3, %c0_4] : memref<2x128xf32, #tpu.memory_space<vmem>>, vector<1x128xf32>
    %4 = vector.broadcast %3 : vector<1x128xf32> to vector<16x128xf32>
    %5 = arith.addf %2, %4 : vector<16x128xf32>
    %c1 = arith.constant 1 : index
    %c0_5 = arith.constant 0 : index
    %6 = vector.load %arg4[%c1, %c0_5] : memref<2x128xf32, #tpu.memory_space<vmem>>, vector<1x128xf32>
    %cst_6 = arith.constant 0.000000e+00 : f32
    %7 = vector.broadcast %cst_6 : f32 to vector<1x128xf32>
    %8 = arith.cmpf ogt, %6, %7 : vector<1x128xf32>
    %cst_7 = arith.constant 0.000000e+00 : f32
    %9 = vector.broadcast %cst_7 : f32 to vector<16x128xf32>
    %10 = arith.maximumf %5, %9 : vector<16x128xf32>
    %11 = vector.shape_cast %8 : vector<1x128xi1> to vector<1x128xi1>
    %12 = vector.broadcast %11 : vector<1x128xi1> to vector<16x128xi1>
    %13 = arith.select %12, %10, %5 : vector<16x128xi1>, vector<16x128xf32>
    %14 = arith.truncf %13 : vector<16x128xf32> to vector<16x128xbf16>
    %c0_8 = arith.constant 0 : index
    %c0_9 = arith.constant 0 : index
    %15 = vector.load %arg5[%c0_8, %c0_9] : memref<16x128xbf16, #tpu.memory_space<vmem>>, vector<16x128xbf16>
    tpu.vector_store %arg5[%c0_8, %c0_9], %14 {strides = array<i32>} : memref<16x128xbf16, #tpu.memory_space<vmem>>, vector<16x128xbf16>,
    return
  }
  func.func @transform_0(%arg0: i32, %arg1: i32) -> (i32, i32) {
    %c0_i32 = arith.constant 0 : i32
    %c0_i32_0 = arith.constant 0 : i32
    return %arg0, %c0_i32 : i32, i32
  }
  func.func @transform_1(%arg0: i32, %arg1: i32) -> (i32, i32) {
    %c0_i32 = arith.constant 0 : i32
    %c0_i32_0 = arith.constant 0 : i32
    return %c0_i32, %arg1 : i32, i32
  }
  func.func @transform_2(%arg0: i32, %arg1: i32) -> (i32, i32) {
    %c0_i32 = arith.constant 0 : i32
    %c0_i32_0 = arith.constant 0 : i32
    return %c0_i32, %arg1 : i32, i32
  }
  func.func @transform_3(%arg0: i32, %arg1: i32) -> (i32, i32) {
    %c0_i32 = arith.constant 0 : i32
    return %arg0, %arg1 : i32, i32
  }
}

module attributes {stable_mosaic.version = 11 : i64} {
  func.func @_mm_single_kernel(%arg0: i32, %arg1: i32, %arg2: memref<16x384xbf16, #tpu.memory_space<vmem>>, %arg3: memref<384x128xbf16, #tpu.memory_space<vmem>>, %arg4: memref<2x128xf32, #tpu.memory_space<vmem>>, %arg5: memref<16x128xbf16, #tpu.memory_space<vmem>>, %arg6: memref<16x128xbf16, #tpu.memory_space<vmem>>) attributes {dimension_semantics = [#tpu.dimension_semantics<parallel>, #tpu.dimension_semantics<parallel>], iteration_bounds = array<i64: 1, 1>, scalar_prefetch = 0 : i64, scratch_operands = 0 : i64, tpu.core_type = #tpu.core_type<tc>, window_params = [{transform_indices = @transform_0, window_bounds = array<i64: 16, 384>}, {transform_indices = @transform_1, window_bounds = array<i64: 384, 128>}, {transform_indices = @transform_2, window_bounds = array<i64: 2, 128>}, {transform_indices = @transform_3, window_bounds = array<i64: 16, 128>}, {transform_indices = @transform_4, window_bounds = array<i64: 16, 128>}]} {
    %c0 = arith.constant 0 : index
    %c0_0 = arith.constant 0 : index
    %0 = vector.load %arg2[%c0, %c0_0] : memref<16x384xbf16, #tpu.memory_space<vmem>>, vector<16x384xbf16>
    %c0_1 = arith.constant 0 : index
    %c0_2 = arith.constant 0 : index
    %1 = vector.load %arg3[%c0_1, %c0_2] : memref<384x128xbf16, #tpu.memory_space<vmem>>, vector<384x128xbf16>
    %cst = arith.constant dense<0.000000e+00> : vector<16x128xf32>
    %2 = tpu.matmul %0, %1, %cst {dimension_numbers = #tpu.dot_dimension_numbers<[1], [0], [0], [1], [0, 0, 1, 1], [], []>} : vector<16x384xbf16>, vector<384x128xbf16>, vector<16x128xf32> -> vector<16x128xf32>
    %c0_3 = arith.constant 0 : index
    %c0_4 = arith.constant 0 : index
    %3 = vector.load %arg4[%c0_3, %c0_4] : memref<2x128xf32, #tpu.memory_space<vmem>>, vector<1x128xf32>
    %4 = vector.broadcast %3 : vector<1x128xf32> to vector<16x128xf32>
    %5 = arith.addf %2, %4 : vector<16x128xf32>
    %c0_5 = arith.constant 0 : index
    %c0_6 = arith.constant 0 : index
    %6 = vector.load %arg5[%c0_5, %c0_6] : memref<16x128xbf16, #tpu.memory_space<vmem>>, vector<16x128xbf16>
    %7 = arith.extf %6 : vector<16x128xbf16> to vector<16x128xf32>
    %8 = arith.addf %5, %7 : vector<16x128xf32>
    %cst_7 = arith.constant 0.000000e+00 : f32
    %9 = vector.broadcast %cst_7 : f32 to vector<16x128xf32>
    %10 = arith.maximumf %8, %9 : vector<16x128xf32>
    %11 = arith.truncf %10 : vector<16x128xf32> to vector<16x128xbf16>
    %c0_8 = arith.constant 0 : index
    %c0_9 = arith.constant 0 : index
    %12 = vector.load %arg6[%c0_8, %c0_9] : memref<16x128xbf16, #tpu.memory_space<vmem>>, vector<16x128xbf16>
    tpu.vector_store %arg6[%c0_8, %c0_9], %11 {strides = array<i32>} : memref<16x128xbf16, #tpu.memory_space<vmem>>, vector<16x128xbf16>,
    return
  }
  func.func @transform_0(%arg0: i32, %arg1: i32) -> (i32, i32) {
    %c0_i32 = arith.constant 0 : i32
    %c0_i32_0 = arith.constant 0 : i32
    return %arg0, %c0_i32 : i32, i32
  }
  func.func @transform_1(%arg0: i32, %arg1: i32) -> (i32, i32) {
    %c0_i32 = arith.constant 0 : i32
    %c0_i32_0 = arith.constant 0 : i32
    return %c0_i32, %arg1 : i32, i32
  }
  func.func @transform_2(%arg0: i32, %arg1: i32) -> (i32, i32) {
    %c0_i32 = arith.constant 0 : i32
    %c0_i32_0 = arith.constant 0 : i32
    return %c0_i32, %arg1 : i32, i32
  }
  func.func @transform_3(%arg0: i32, %arg1: i32) -> (i32, i32) {
    %c0_i32 = arith.constant 0 : i32
    return %arg0, %arg1 : i32, i32
  }
  func.func @transform_4(%arg0: i32, %arg1: i32) -> (i32, i32) {
    %c0_i32 = arith.constant 0 : i32
    return %arg0, %arg1 : i32, i32
  }
}

module attributes {stable_mosaic.version = 11 : i64} {
  func.func @_mm_single_kernel(%arg0: i32, %arg1: i32, %arg2: memref<16x384xbf16, #tpu.memory_space<vmem>>, %arg3: memref<384x128xbf16, #tpu.memory_space<vmem>>, %arg4: memref<2x128xf32, #tpu.memory_space<vmem>>, %arg5: memref<16x128xbf16, #tpu.memory_space<vmem>>) attributes {dimension_semantics = [#tpu.dimension_semantics<parallel>, #tpu.dimension_semantics<parallel>], iteration_bounds = array<i64: 1, 1>, scalar_prefetch = 0 : i64, scratch_operands = 0 : i64, tpu.core_type = #tpu.core_type<tc>, window_params = [{transform_indices = @transform_0, window_bounds = array<i64: 16, 384>}, {transform_indices = @transform_1, window_bounds = array<i64: 384, 128>}, {transform_indices = @transform_2, window_bounds = array<i64: 2, 128>}, {transform_indices = @transform_3, window_bounds = array<i64: 16, 128>}]} {
    %c0 = arith.constant 0 : index
    %c0_0 = arith.constant 0 : index
    %0 = vector.load %arg2[%c0, %c0_0] : memref<16x384xbf16, #tpu.memory_space<vmem>>, vector<16x384xbf16>
    %c0_1 = arith.constant 0 : index
    %c0_2 = arith.constant 0 : index
    %1 = vector.load %arg3[%c0_1, %c0_2] : memref<384x128xbf16, #tpu.memory_space<vmem>>, vector<384x128xbf16>
    %cst = arith.constant dense<0.000000e+00> : vector<16x128xf32>
    %2 = tpu.matmul %0, %1, %cst {dimension_numbers = #tpu.dot_dimension_numbers<[1], [0], [0], [1], [0, 0, 1, 1], [], []>} : vector<16x384xbf16>, vector<384x128xbf16>, vector<16x128xf32> -> vector<16x128xf32>
    %c0_3 = arith.constant 0 : index
    %c0_4 = arith.constant 0 : index
    %3 = vector.load %arg4[%c0_3, %c0_4] : memref<2x128xf32, #tpu.memory_space<vmem>>, vector<1x128xf32>
    %4 = vector.broadcast %3 : vector<1x128xf32> to vector<16x128xf32>
    %5 = arith.addf %2, %4 : vector<16x128xf32>
    %c1 = arith.constant 1 : index
    %c0_5 = arith.constant 0 : index
    %6 = vector.load %arg4[%c1, %c0_5] : memref<2x128xf32, #tpu.memory_space<vmem>>, vector<1x128xf32>
    %cst_6 = arith.constant 0.000000e+00 : f32
    %7 = vector.broadcast %cst_6 : f32 to vector<1x128xf32>
    %8 = arith.cmpf ogt, %6, %7 : vector<1x128xf32>
    %cst_7 = arith.constant 0.000000e+00 : f32
    %9 = vector.broadcast %cst_7 : f32 to vector<16x128xf32>
    %10 = arith.maximumf %5, %9 : vector<16x128xf32>
    %11 = vector.shape_cast %8 : vector<1x128xi1> to vector<1x128xi1>
    %12 = vector.broadcast %11 : vector<1x128xi1> to vector<16x128xi1>
    %13 = arith.select %12, %10, %5 : vector<16x128xi1>, vector<16x128xf32>
    %14 = arith.truncf %13 : vector<16x128xf32> to vector<16x128xbf16>
    %c0_8 = arith.constant 0 : index
    %c0_9 = arith.constant 0 : index
    %15 = vector.load %arg5[%c0_8, %c0_9] : memref<16x128xbf16, #tpu.memory_space<vmem>>, vector<16x128xbf16>
    tpu.vector_store %arg5[%c0_8, %c0_9], %14 {strides = array<i32>} : memref<16x128xbf16, #tpu.memory_space<vmem>>, vector<16x128xbf16>,
    return
  }
  func.func @transform_0(%arg0: i32, %arg1: i32) -> (i32, i32) {
    %c0_i32 = arith.constant 0 : i32
    %c0_i32_0 = arith.constant 0 : i32
    return %arg0, %c0_i32 : i32, i32
  }
  func.func @transform_1(%arg0: i32, %arg1: i32) -> (i32, i32) {
    %c0_i32 = arith.constant 0 : i32
    %c0_i32_0 = arith.constant 0 : i32
    return %c0_i32, %arg1 : i32, i32
  }
  func.func @transform_2(%arg0: i32, %arg1: i32) -> (i32, i32) {
    %c0_i32 = arith.constant 0 : i32
    %c0_i32_0 = arith.constant 0 : i32
    return %c0_i32, %arg1 : i32, i32
  }
  func.func @transform_3(%arg0: i32, %arg1: i32) -> (i32, i32) {
    %c0_i32 = arith.constant 0 : i32
    return %arg0, %arg1 : i32, i32
  }
}

module attributes {stable_mosaic.version = 11 : i64} {
  func.func @_mm_single_kernel(%arg0: i32, %arg1: i32, %arg2: memref<16x640xbf16, #tpu.memory_space<vmem>>, %arg3: memref<640x128xbf16, #tpu.memory_space<vmem>>, %arg4: memref<2x128xf32, #tpu.memory_space<vmem>>, %arg5: memref<16x128xbf16, #tpu.memory_space<vmem>>, %arg6: memref<16x128xbf16, #tpu.memory_space<vmem>>) attributes {dimension_semantics = [#tpu.dimension_semantics<parallel>, #tpu.dimension_semantics<parallel>], iteration_bounds = array<i64: 1, 1>, scalar_prefetch = 0 : i64, scratch_operands = 0 : i64, tpu.core_type = #tpu.core_type<tc>, window_params = [{transform_indices = @transform_0, window_bounds = array<i64: 16, 640>}, {transform_indices = @transform_1, window_bounds = array<i64: 640, 128>}, {transform_indices = @transform_2, window_bounds = array<i64: 2, 128>}, {transform_indices = @transform_3, window_bounds = array<i64: 16, 128>}, {transform_indices = @transform_4, window_bounds = array<i64: 16, 128>}]} {
    %c0 = arith.constant 0 : index
    %c0_0 = arith.constant 0 : index
    %0 = vector.load %arg2[%c0, %c0_0] : memref<16x640xbf16, #tpu.memory_space<vmem>>, vector<16x640xbf16>
    %c0_1 = arith.constant 0 : index
    %c0_2 = arith.constant 0 : index
    %1 = vector.load %arg3[%c0_1, %c0_2] : memref<640x128xbf16, #tpu.memory_space<vmem>>, vector<640x128xbf16>
    %cst = arith.constant dense<0.000000e+00> : vector<16x128xf32>
    %2 = tpu.matmul %0, %1, %cst {dimension_numbers = #tpu.dot_dimension_numbers<[1], [0], [0], [1], [0, 0, 1, 1], [], []>} : vector<16x640xbf16>, vector<640x128xbf16>, vector<16x128xf32> -> vector<16x128xf32>
    %c0_3 = arith.constant 0 : index
    %c0_4 = arith.constant 0 : index
    %3 = vector.load %arg4[%c0_3, %c0_4] : memref<2x128xf32, #tpu.memory_space<vmem>>, vector<1x128xf32>
    %4 = vector.broadcast %3 : vector<1x128xf32> to vector<16x128xf32>
    %5 = arith.addf %2, %4 : vector<16x128xf32>
    %c0_5 = arith.constant 0 : index
    %c0_6 = arith.constant 0 : index
    %6 = vector.load %arg5[%c0_5, %c0_6] : memref<16x128xbf16, #tpu.memory_space<vmem>>, vector<16x128xbf16>
    %7 = arith.extf %6 : vector<16x128xbf16> to vector<16x128xf32>
    %8 = arith.addf %5, %7 : vector<16x128xf32>
    %cst_7 = arith.constant 0.000000e+00 : f32
    %9 = vector.broadcast %cst_7 : f32 to vector<16x128xf32>
    %10 = arith.maximumf %8, %9 : vector<16x128xf32>
    %11 = arith.truncf %10 : vector<16x128xf32> to vector<16x128xbf16>
    %c0_8 = arith.constant 0 : index
    %c0_9 = arith.constant 0 : index
    %12 = vector.load %arg6[%c0_8, %c0_9] : memref<16x128xbf16, #tpu.memory_space<vmem>>, vector<16x128xbf16>
    tpu.vector_store %arg6[%c0_8, %c0_9], %11 {strides = array<i32>} : memref<16x128xbf16, #tpu.memory_space<vmem>>, vector<16x128xbf16>,
    return
  }
  func.func @transform_0(%arg0: i32, %arg1: i32) -> (i32, i32) {
    %c0_i32 = arith.constant 0 : i32
    %c0_i32_0 = arith.constant 0 : i32
    return %arg0, %c0_i32 : i32, i32
  }
  func.func @transform_1(%arg0: i32, %arg1: i32) -> (i32, i32) {
    %c0_i32 = arith.constant 0 : i32
    %c0_i32_0 = arith.constant 0 : i32
    return %c0_i32, %arg1 : i32, i32
  }
  func.func @transform_2(%arg0: i32, %arg1: i32) -> (i32, i32) {
    %c0_i32 = arith.constant 0 : i32
    %c0_i32_0 = arith.constant 0 : i32
    return %c0_i32, %arg1 : i32, i32
  }
  func.func @transform_3(%arg0: i32, %arg1: i32) -> (i32, i32) {
    %c0_i32 = arith.constant 0 : i32
    return %arg0, %arg1 : i32, i32
  }
  func.func @transform_4(%arg0: i32, %arg1: i32) -> (i32, i32) {
    %c0_i32 = arith.constant 0 : i32
    return %arg0, %arg1 : i32, i32
  }
}

module attributes {stable_mosaic.version = 11 : i64} {
  func.func @_mm_single_kernel(%arg0: i32, %arg1: i32, %arg2: memref<16x640xbf16, #tpu.memory_space<vmem>>, %arg3: memref<640x128xbf16, #tpu.memory_space<vmem>>, %arg4: memref<2x128xf32, #tpu.memory_space<vmem>>, %arg5: memref<16x128xbf16, #tpu.memory_space<vmem>>) attributes {dimension_semantics = [#tpu.dimension_semantics<parallel>, #tpu.dimension_semantics<parallel>], iteration_bounds = array<i64: 1, 1>, scalar_prefetch = 0 : i64, scratch_operands = 0 : i64, tpu.core_type = #tpu.core_type<tc>, window_params = [{transform_indices = @transform_0, window_bounds = array<i64: 16, 640>}, {transform_indices = @transform_1, window_bounds = array<i64: 640, 128>}, {transform_indices = @transform_2, window_bounds = array<i64: 2, 128>}, {transform_indices = @transform_3, window_bounds = array<i64: 16, 128>}]} {
    %c0 = arith.constant 0 : index
    %c0_0 = arith.constant 0 : index
    %0 = vector.load %arg2[%c0, %c0_0] : memref<16x640xbf16, #tpu.memory_space<vmem>>, vector<16x640xbf16>
    %c0_1 = arith.constant 0 : index
    %c0_2 = arith.constant 0 : index
    %1 = vector.load %arg3[%c0_1, %c0_2] : memref<640x128xbf16, #tpu.memory_space<vmem>>, vector<640x128xbf16>
    %cst = arith.constant dense<0.000000e+00> : vector<16x128xf32>
    %2 = tpu.matmul %0, %1, %cst {dimension_numbers = #tpu.dot_dimension_numbers<[1], [0], [0], [1], [0, 0, 1, 1], [], []>} : vector<16x640xbf16>, vector<640x128xbf16>, vector<16x128xf32> -> vector<16x128xf32>
    %c0_3 = arith.constant 0 : index
    %c0_4 = arith.constant 0 : index
    %3 = vector.load %arg4[%c0_3, %c0_4] : memref<2x128xf32, #tpu.memory_space<vmem>>, vector<1x128xf32>
    %4 = vector.broadcast %3 : vector<1x128xf32> to vector<16x128xf32>
    %5 = arith.addf %2, %4 : vector<16x128xf32>
    %c1 = arith.constant 1 : index
    %c0_5 = arith.constant 0 : index
    %6 = vector.load %arg4[%c1, %c0_5] : memref<2x128xf32, #tpu.memory_space<vmem>>, vector<1x128xf32>
    %cst_6 = arith.constant 0.000000e+00 : f32
    %7 = vector.broadcast %cst_6 : f32 to vector<1x128xf32>
    %8 = arith.cmpf ogt, %6, %7 : vector<1x128xf32>
    %cst_7 = arith.constant 0.000000e+00 : f32
    %9 = vector.broadcast %cst_7 : f32 to vector<16x128xf32>
    %10 = arith.maximumf %5, %9 : vector<16x128xf32>
    %11 = vector.shape_cast %8 : vector<1x128xi1> to vector<1x128xi1>
    %12 = vector.broadcast %11 : vector<1x128xi1> to vector<16x128xi1>
    %13 = arith.select %12, %10, %5 : vector<16x128xi1>, vector<16x128xf32>
    %14 = arith.truncf %13 : vector<16x128xf32> to vector<16x128xbf16>
    %c0_8 = arith.constant 0 : index
    %c0_9 = arith.constant 0 : index
    %15 = vector.load %arg5[%c0_8, %c0_9] : memref<16x128xbf16, #tpu.memory_space<vmem>>, vector<16x128xbf16>
    tpu.vector_store %arg5[%c0_8, %c0_9], %14 {strides = array<i32>} : memref<16x128xbf16, #tpu.memory_space<vmem>>, vector<16x128xbf16>,
    return
  }
  func.func @transform_0(%arg0: i32, %arg1: i32) -> (i32, i32) {
    %c0_i32 = arith.constant 0 : i32
    %c0_i32_0 = arith.constant 0 : i32
    return %arg0, %c0_i32 : i32, i32
  }
  func.func @transform_1(%arg0: i32, %arg1: i32) -> (i32, i32) {
    %c0_i32 = arith.constant 0 : i32
    %c0_i32_0 = arith.constant 0 : i32
    return %c0_i32, %arg1 : i32, i32
  }
  func.func @transform_2(%arg0: i32, %arg1: i32) -> (i32, i32) {
    %c0_i32 = arith.constant 0 : i32
    %c0_i32_0 = arith.constant 0 : i32
    return %c0_i32, %arg1 : i32, i32
  }
  func.func @transform_3(%arg0: i32, %arg1: i32) -> (i32, i32) {
    %c0_i32 = arith.constant 0 : i32
    return %arg0, %arg1 : i32, i32
  }
}

module attributes {stable_mosaic.version = 11 : i64} {
  func.func @_mm_single_kernel(%arg0: i32, %arg1: i32, %arg2: memref<16x256xbf16, #tpu.memory_space<vmem>>, %arg3: memref<256x128xbf16, #tpu.memory_space<vmem>>, %arg4: memref<2x128xf32, #tpu.memory_space<vmem>>, %arg5: memref<16x128xbf16, #tpu.memory_space<vmem>>, %arg6: memref<16x128xbf16, #tpu.memory_space<vmem>>) attributes {dimension_semantics = [#tpu.dimension_semantics<parallel>, #tpu.dimension_semantics<parallel>], iteration_bounds = array<i64: 1, 1>, scalar_prefetch = 0 : i64, scratch_operands = 0 : i64, tpu.core_type = #tpu.core_type<tc>, window_params = [{transform_indices = @transform_0, window_bounds = array<i64: 16, 256>}, {transform_indices = @transform_1, window_bounds = array<i64: 256, 128>}, {transform_indices = @transform_2, window_bounds = array<i64: 2, 128>}, {transform_indices = @transform_3, window_bounds = array<i64: 16, 128>}, {transform_indices = @transform_4, window_bounds = array<i64: 16, 128>}]} {
    %c0 = arith.constant 0 : index
    %c0_0 = arith.constant 0 : index
    %0 = vector.load %arg2[%c0, %c0_0] : memref<16x256xbf16, #tpu.memory_space<vmem>>, vector<16x256xbf16>
    %c0_1 = arith.constant 0 : index
    %c0_2 = arith.constant 0 : index
    %1 = vector.load %arg3[%c0_1, %c0_2] : memref<256x128xbf16, #tpu.memory_space<vmem>>, vector<256x128xbf16>
    %cst = arith.constant dense<0.000000e+00> : vector<16x128xf32>
    %2 = tpu.matmul %0, %1, %cst {dimension_numbers = #tpu.dot_dimension_numbers<[1], [0], [0], [1], [0, 0, 1, 1], [], []>} : vector<16x256xbf16>, vector<256x128xbf16>, vector<16x128xf32> -> vector<16x128xf32>
    %c0_3 = arith.constant 0 : index
    %c0_4 = arith.constant 0 : index
    %3 = vector.load %arg4[%c0_3, %c0_4] : memref<2x128xf32, #tpu.memory_space<vmem>>, vector<1x128xf32>
    %4 = vector.broadcast %3 : vector<1x128xf32> to vector<16x128xf32>
    %5 = arith.addf %2, %4 : vector<16x128xf32>
    %c0_5 = arith.constant 0 : index
    %c0_6 = arith.constant 0 : index
    %6 = vector.load %arg5[%c0_5, %c0_6] : memref<16x128xbf16, #tpu.memory_space<vmem>>, vector<16x128xbf16>
    %7 = arith.extf %6 : vector<16x128xbf16> to vector<16x128xf32>
    %8 = arith.addf %5, %7 : vector<16x128xf32>
    %cst_7 = arith.constant 0.000000e+00 : f32
    %9 = vector.broadcast %cst_7 : f32 to vector<16x128xf32>
    %10 = arith.maximumf %8, %9 : vector<16x128xf32>
    %11 = arith.truncf %10 : vector<16x128xf32> to vector<16x128xbf16>
    %c0_8 = arith.constant 0 : index
    %c0_9 = arith.constant 0 : index
    %12 = vector.load %arg6[%c0_8, %c0_9] : memref<16x128xbf16, #tpu.memory_space<vmem>>, vector<16x128xbf16>
    tpu.vector_store %arg6[%c0_8, %c0_9], %11 {strides = array<i32>} : memref<16x128xbf16, #tpu.memory_space<vmem>>, vector<16x128xbf16>,
    return
  }
  func.func @transform_0(%arg0: i32, %arg1: i32) -> (i32, i32) {
    %c0_i32 = arith.constant 0 : i32
    %c0_i32_0 = arith.constant 0 : i32
    return %arg0, %c0_i32 : i32, i32
  }
  func.func @transform_1(%arg0: i32, %arg1: i32) -> (i32, i32) {
    %c0_i32 = arith.constant 0 : i32
    %c0_i32_0 = arith.constant 0 : i32
    return %c0_i32, %arg1 : i32, i32
  }
  func.func @transform_2(%arg0: i32, %arg1: i32) -> (i32, i32) {
    %c0_i32 = arith.constant 0 : i32
    %c0_i32_0 = arith.constant 0 : i32
    return %c0_i32, %arg1 : i32, i32
  }
  func.func @transform_3(%arg0: i32, %arg1: i32) -> (i32, i32) {
    %c0_i32 = arith.constant 0 : i32
    return %arg0, %arg1 : i32, i32
  }
  func.func @transform_4(%arg0: i32, %arg1: i32) -> (i32, i32) {
    %c0_i32 = arith.constant 0 : i32
    return %arg0, %arg1 : i32, i32
  }
}

module attributes {stable_mosaic.version = 11 : i64} {
  func.func @_mm_single_kernel(%arg0: i32, %arg1: i32, %arg2: memref<16x128xbf16, #tpu.memory_space<vmem>>, %arg3: memref<128x128xbf16, #tpu.memory_space<vmem>>, %arg4: memref<2x128xf32, #tpu.memory_space<vmem>>, %arg5: memref<16x128xbf16, #tpu.memory_space<vmem>>, %arg6: memref<16x128xbf16, #tpu.memory_space<vmem>>) attributes {dimension_semantics = [#tpu.dimension_semantics<parallel>, #tpu.dimension_semantics<parallel>], iteration_bounds = array<i64: 1, 1>, scalar_prefetch = 0 : i64, scratch_operands = 0 : i64, tpu.core_type = #tpu.core_type<tc>, window_params = [{transform_indices = @transform_0, window_bounds = array<i64: 16, 128>}, {transform_indices = @transform_1, window_bounds = array<i64: 128, 128>}, {transform_indices = @transform_2, window_bounds = array<i64: 2, 128>}, {transform_indices = @transform_3, window_bounds = array<i64: 16, 128>}, {transform_indices = @transform_4, window_bounds = array<i64: 16, 128>}]} {
    %c0 = arith.constant 0 : index
    %c0_0 = arith.constant 0 : index
    %0 = vector.load %arg2[%c0, %c0_0] : memref<16x128xbf16, #tpu.memory_space<vmem>>, vector<16x128xbf16>
    %c0_1 = arith.constant 0 : index
    %c0_2 = arith.constant 0 : index
    %1 = vector.load %arg3[%c0_1, %c0_2] : memref<128x128xbf16, #tpu.memory_space<vmem>>, vector<128x128xbf16>
    %cst = arith.constant dense<0.000000e+00> : vector<16x128xf32>
    %2 = tpu.matmul %0, %1, %cst {dimension_numbers = #tpu.dot_dimension_numbers<[1], [0], [0], [1], [0, 0, 1, 1], [], []>} : vector<16x128xbf16>, vector<128x128xbf16>, vector<16x128xf32> -> vector<16x128xf32>
    %c0_3 = arith.constant 0 : index
    %c0_4 = arith.constant 0 : index
    %3 = vector.load %arg4[%c0_3, %c0_4] : memref<2x128xf32, #tpu.memory_space<vmem>>, vector<1x128xf32>
    %4 = vector.broadcast %3 : vector<1x128xf32> to vector<16x128xf32>
    %5 = arith.addf %2, %4 : vector<16x128xf32>
    %c0_5 = arith.constant 0 : index
    %c0_6 = arith.constant 0 : index
    %6 = vector.load %arg5[%c0_5, %c0_6] : memref<16x128xbf16, #tpu.memory_space<vmem>>, vector<16x128xbf16>
    %7 = arith.extf %6 : vector<16x128xbf16> to vector<16x128xf32>
    %8 = arith.addf %5, %7 : vector<16x128xf32>
    %cst_7 = arith.constant 0.000000e+00 : f32
    %9 = vector.broadcast %cst_7 : f32 to vector<16x128xf32>
    %10 = arith.maximumf %8, %9 : vector<16x128xf32>
    %11 = arith.truncf %10 : vector<16x128xf32> to vector<16x128xbf16>
    %c0_8 = arith.constant 0 : index
    %c0_9 = arith.constant 0 : index
    %12 = vector.load %arg6[%c0_8, %c0_9] : memref<16x128xbf16, #tpu.memory_space<vmem>>, vector<16x128xbf16>
    tpu.vector_store %arg6[%c0_8, %c0_9], %11 {strides = array<i32>} : memref<16x128xbf16, #tpu.memory_space<vmem>>, vector<16x128xbf16>,
    return
  }
  func.func @transform_0(%arg0: i32, %arg1: i32) -> (i32, i32) {
    %c0_i32 = arith.constant 0 : i32
    %c0_i32_0 = arith.constant 0 : i32
    return %arg0, %c0_i32 : i32, i32
  }
  func.func @transform_1(%arg0: i32, %arg1: i32) -> (i32, i32) {
    %c0_i32 = arith.constant 0 : i32
    %c0_i32_0 = arith.constant 0 : i32
    return %c0_i32, %arg1 : i32, i32
  }
  func.func @transform_2(%arg0: i32, %arg1: i32) -> (i32, i32) {
    %c0_i32 = arith.constant 0 : i32
    %c0_i32_0 = arith.constant 0 : i32
    return %c0_i32, %arg1 : i32, i32
  }
  func.func @transform_3(%arg0: i32, %arg1: i32) -> (i32, i32) {
    %c0_i32 = arith.constant 0 : i32
    return %arg0, %arg1 : i32, i32
  }
  func.func @transform_4(%arg0: i32, %arg1: i32) -> (i32, i32) {
    %c0_i32 = arith.constant 0 : i32
    return %arg0, %arg1 : i32, i32
  }
}

module attributes {stable_mosaic.version = 11 : i64} {
  func.func @_mm_single_kernel(%arg0: i32, %arg1: i32, %arg2: memref<32x256xbf16, #tpu.memory_space<vmem>>, %arg3: memref<256x128xbf16, #tpu.memory_space<vmem>>, %arg4: memref<2x128xf32, #tpu.memory_space<vmem>>, %arg5: memref<32x128xbf16, #tpu.memory_space<vmem>>) attributes {dimension_semantics = [#tpu.dimension_semantics<parallel>, #tpu.dimension_semantics<parallel>], iteration_bounds = array<i64: 1, 1>, scalar_prefetch = 0 : i64, scratch_operands = 0 : i64, tpu.core_type = #tpu.core_type<tc>, window_params = [{transform_indices = @transform_0, window_bounds = array<i64: 32, 256>}, {transform_indices = @transform_1, window_bounds = array<i64: 256, 128>}, {transform_indices = @transform_2, window_bounds = array<i64: 2, 128>}, {transform_indices = @transform_3, window_bounds = array<i64: 32, 128>}]} {
    %c0 = arith.constant 0 : index
    %c0_0 = arith.constant 0 : index
    %0 = vector.load %arg2[%c0, %c0_0] : memref<32x256xbf16, #tpu.memory_space<vmem>>, vector<32x256xbf16>
    %c0_1 = arith.constant 0 : index
    %c0_2 = arith.constant 0 : index
    %1 = vector.load %arg3[%c0_1, %c0_2] : memref<256x128xbf16, #tpu.memory_space<vmem>>, vector<256x128xbf16>
    %cst = arith.constant dense<0.000000e+00> : vector<32x128xf32>
    %2 = tpu.matmul %0, %1, %cst {dimension_numbers = #tpu.dot_dimension_numbers<[1], [0], [0], [1], [0, 0, 1, 1], [], []>} : vector<32x256xbf16>, vector<256x128xbf16>, vector<32x128xf32> -> vector<32x128xf32>
    %c0_3 = arith.constant 0 : index
    %c0_4 = arith.constant 0 : index
    %3 = vector.load %arg4[%c0_3, %c0_4] : memref<2x128xf32, #tpu.memory_space<vmem>>, vector<1x128xf32>
    %4 = vector.broadcast %3 : vector<1x128xf32> to vector<32x128xf32>
    %5 = arith.addf %2, %4 : vector<32x128xf32>
    %c1 = arith.constant 1 : index
    %c0_5 = arith.constant 0 : index
    %6 = vector.load %arg4[%c1, %c0_5] : memref<2x128xf32, #tpu.memory_space<vmem>>, vector<1x128xf32>
    %cst_6 = arith.constant 0.000000e+00 : f32
    %7 = vector.broadcast %cst_6 : f32 to vector<1x128xf32>
    %8 = arith.cmpf ogt, %6, %7 : vector<1x128xf32>
    %cst_7 = arith.constant 0.000000e+00 : f32
    %9 = vector.broadcast %cst_7 : f32 to vector<32x128xf32>
    %10 = arith.maximumf %5, %9 : vector<32x128xf32>
    %11 = vector.shape_cast %8 : vector<1x128xi1> to vector<1x128xi1>
    %12 = vector.broadcast %11 : vector<1x128xi1> to vector<32x128xi1>
    %13 = arith.select %12, %10, %5 : vector<32x128xi1>, vector<32x128xf32>
    %14 = arith.truncf %13 : vector<32x128xf32> to vector<32x128xbf16>
    %c0_8 = arith.constant 0 : index
    %c0_9 = arith.constant 0 : index
    %15 = vector.load %arg5[%c0_8, %c0_9] : memref<32x128xbf16, #tpu.memory_space<vmem>>, vector<32x128xbf16>
    tpu.vector_store %arg5[%c0_8, %c0_9], %14 {strides = array<i32>} : memref<32x128xbf16, #tpu.memory_space<vmem>>, vector<32x128xbf16>,
    return
  }
  func.func @transform_0(%arg0: i32, %arg1: i32) -> (i32, i32) {
    %c0_i32 = arith.constant 0 : i32
    %c0_i32_0 = arith.constant 0 : i32
    return %arg0, %c0_i32 : i32, i32
  }
  func.func @transform_1(%arg0: i32, %arg1: i32) -> (i32, i32) {
    %c0_i32 = arith.constant 0 : i32
    %c0_i32_0 = arith.constant 0 : i32
    return %c0_i32, %arg1 : i32, i32
  }
  func.func @transform_2(%arg0: i32, %arg1: i32) -> (i32, i32) {
    %c0_i32 = arith.constant 0 : i32
    %c0_i32_0 = arith.constant 0 : i32
    return %c0_i32, %arg1 : i32, i32
  }
  func.func @transform_3(%arg0: i32, %arg1: i32) -> (i32, i32) {
    %c0_i32 = arith.constant 0 : i32
    return %arg0, %arg1 : i32, i32
  }
}

module attributes {stable_mosaic.version = 11 : i64} {
  func.func @_mm_single_kernel(%arg0: i32, %arg1: i32, %arg2: memref<32x128xbf16, #tpu.memory_space<vmem>>, %arg3: memref<128x128xbf16, #tpu.memory_space<vmem>>, %arg4: memref<2x128xf32, #tpu.memory_space<vmem>>, %arg5: memref<32x128xbf16, #tpu.memory_space<vmem>>, %arg6: memref<32x128xbf16, #tpu.memory_space<vmem>>) attributes {dimension_semantics = [#tpu.dimension_semantics<parallel>, #tpu.dimension_semantics<parallel>], iteration_bounds = array<i64: 1, 1>, scalar_prefetch = 0 : i64, scratch_operands = 0 : i64, tpu.core_type = #tpu.core_type<tc>, window_params = [{transform_indices = @transform_0, window_bounds = array<i64: 32, 128>}, {transform_indices = @transform_1, window_bounds = array<i64: 128, 128>}, {transform_indices = @transform_2, window_bounds = array<i64: 2, 128>}, {transform_indices = @transform_3, window_bounds = array<i64: 32, 128>}, {transform_indices = @transform_4, window_bounds = array<i64: 32, 128>}]} {
    %c0 = arith.constant 0 : index
    %c0_0 = arith.constant 0 : index
    %0 = vector.load %arg2[%c0, %c0_0] : memref<32x128xbf16, #tpu.memory_space<vmem>>, vector<32x128xbf16>
    %c0_1 = arith.constant 0 : index
    %c0_2 = arith.constant 0 : index
    %1 = vector.load %arg3[%c0_1, %c0_2] : memref<128x128xbf16, #tpu.memory_space<vmem>>, vector<128x128xbf16>
    %cst = arith.constant dense<0.000000e+00> : vector<32x128xf32>
    %2 = tpu.matmul %0, %1, %cst {dimension_numbers = #tpu.dot_dimension_numbers<[1], [0], [0], [1], [0, 0, 1, 1], [], []>} : vector<32x128xbf16>, vector<128x128xbf16>, vector<32x128xf32> -> vector<32x128xf32>
    %c0_3 = arith.constant 0 : index
    %c0_4 = arith.constant 0 : index
    %3 = vector.load %arg4[%c0_3, %c0_4] : memref<2x128xf32, #tpu.memory_space<vmem>>, vector<1x128xf32>
    %4 = vector.broadcast %3 : vector<1x128xf32> to vector<32x128xf32>
    %5 = arith.addf %2, %4 : vector<32x128xf32>
    %c0_5 = arith.constant 0 : index
    %c0_6 = arith.constant 0 : index
    %6 = vector.load %arg5[%c0_5, %c0_6] : memref<32x128xbf16, #tpu.memory_space<vmem>>, vector<32x128xbf16>
    %7 = arith.extf %6 : vector<32x128xbf16> to vector<32x128xf32>
    %8 = arith.addf %5, %7 : vector<32x128xf32>
    %cst_7 = arith.constant 0.000000e+00 : f32
    %9 = vector.broadcast %cst_7 : f32 to vector<32x128xf32>
    %10 = arith.maximumf %8, %9 : vector<32x128xf32>
    %11 = arith.truncf %10 : vector<32x128xf32> to vector<32x128xbf16>
    %c0_8 = arith.constant 0 : index
    %c0_9 = arith.constant 0 : index
    %12 = vector.load %arg6[%c0_8, %c0_9] : memref<32x128xbf16, #tpu.memory_space<vmem>>, vector<32x128xbf16>
    tpu.vector_store %arg6[%c0_8, %c0_9], %11 {strides = array<i32>} : memref<32x128xbf16, #tpu.memory_space<vmem>>, vector<32x128xbf16>,
    return
  }
  func.func @transform_0(%arg0: i32, %arg1: i32) -> (i32, i32) {
    %c0_i32 = arith.constant 0 : i32
    %c0_i32_0 = arith.constant 0 : i32
    return %arg0, %c0_i32 : i32, i32
  }
  func.func @transform_1(%arg0: i32, %arg1: i32) -> (i32, i32) {
    %c0_i32 = arith.constant 0 : i32
    %c0_i32_0 = arith.constant 0 : i32
    return %c0_i32, %arg1 : i32, i32
  }
  func.func @transform_2(%arg0: i32, %arg1: i32) -> (i32, i32) {
    %c0_i32 = arith.constant 0 : i32
    %c0_i32_0 = arith.constant 0 : i32
    return %c0_i32, %arg1 : i32, i32
  }
  func.func @transform_3(%arg0: i32, %arg1: i32) -> (i32, i32) {
    %c0_i32 = arith.constant 0 : i32
    return %arg0, %arg1 : i32, i32
  }
  func.func @transform_4(%arg0: i32, %arg1: i32) -> (i32, i32) {
    %c0_i32 = arith.constant 0 : i32
    return %arg0, %arg1 : i32, i32
  }
}

module attributes {stable_mosaic.version = 11 : i64} {
  func.func @_mm_single_kernel(%arg0: i32, %arg1: i32, %arg2: memref<128x128xbf16, #tpu.memory_space<vmem>>, %arg3: memref<128x128xbf16, #tpu.memory_space<vmem>>, %arg4: memref<2x128xf32, #tpu.memory_space<vmem>>, %arg5: memref<128x128xbf16, #tpu.memory_space<vmem>>) attributes {dimension_semantics = [#tpu.dimension_semantics<parallel>, #tpu.dimension_semantics<parallel>], iteration_bounds = array<i64: 1, 1>, scalar_prefetch = 0 : i64, scratch_operands = 0 : i64, tpu.core_type = #tpu.core_type<tc>, window_params = [{transform_indices = @transform_0, window_bounds = array<i64: 128, 128>}, {transform_indices = @transform_1, window_bounds = array<i64: 128, 128>}, {transform_indices = @transform_2, window_bounds = array<i64: 2, 128>}, {transform_indices = @transform_3, window_bounds = array<i64: 128, 128>}]} {
    %c0 = arith.constant 0 : index
    %c0_0 = arith.constant 0 : index
    %0 = vector.load %arg2[%c0, %c0_0] : memref<128x128xbf16, #tpu.memory_space<vmem>>, vector<128x128xbf16>
    %c0_1 = arith.constant 0 : index
    %c0_2 = arith.constant 0 : index
    %1 = vector.load %arg3[%c0_1, %c0_2] : memref<128x128xbf16, #tpu.memory_space<vmem>>, vector<128x128xbf16>
    %cst = arith.constant dense<0.000000e+00> : vector<128x128xf32>
    %2 = tpu.matmul %0, %1, %cst {dimension_numbers = #tpu.dot_dimension_numbers<[1], [0], [0], [1], [0, 0, 1, 1], [], []>} : vector<128x128xbf16>, vector<128x128xbf16>, vector<128x128xf32> -> vector<128x128xf32>
    %c0_3 = arith.constant 0 : index
    %c0_4 = arith.constant 0 : index
    %3 = vector.load %arg4[%c0_3, %c0_4] : memref<2x128xf32, #tpu.memory_space<vmem>>, vector<1x128xf32>
    %4 = vector.broadcast %3 : vector<1x128xf32> to vector<128x128xf32>
    %5 = arith.addf %2, %4 : vector<128x128xf32>
    %c1 = arith.constant 1 : index
    %c0_5 = arith.constant 0 : index
    %6 = vector.load %arg4[%c1, %c0_5] : memref<2x128xf32, #tpu.memory_space<vmem>>, vector<1x128xf32>
    %cst_6 = arith.constant 0.000000e+00 : f32
    %7 = vector.broadcast %cst_6 : f32 to vector<1x128xf32>
    %8 = arith.cmpf ogt, %6, %7 : vector<1x128xf32>
    %cst_7 = arith.constant 0.000000e+00 : f32
    %9 = vector.broadcast %cst_7 : f32 to vector<128x128xf32>
    %10 = arith.maximumf %5, %9 : vector<128x128xf32>
    %11 = vector.shape_cast %8 : vector<1x128xi1> to vector<1x128xi1>
    %12 = vector.broadcast %11 : vector<1x128xi1> to vector<128x128xi1>
    %13 = arith.select %12, %10, %5 : vector<128x128xi1>, vector<128x128xf32>
    %14 = arith.truncf %13 : vector<128x128xf32> to vector<128x128xbf16>
    %c0_8 = arith.constant 0 : index
    %c0_9 = arith.constant 0 : index
    %15 = vector.load %arg5[%c0_8, %c0_9] : memref<128x128xbf16, #tpu.memory_space<vmem>>, vector<128x128xbf16>
    tpu.vector_store %arg5[%c0_8, %c0_9], %14 {strides = array<i32>} : memref<128x128xbf16, #tpu.memory_space<vmem>>, vector<128x128xbf16>,
    return
  }
  func.func @transform_0(%arg0: i32, %arg1: i32) -> (i32, i32) {
    %c0_i32 = arith.constant 0 : i32
    %c0_i32_0 = arith.constant 0 : i32
    return %arg0, %c0_i32 : i32, i32
  }
  func.func @transform_1(%arg0: i32, %arg1: i32) -> (i32, i32) {
    %c0_i32 = arith.constant 0 : i32
    %c0_i32_0 = arith.constant 0 : i32
    return %c0_i32, %arg1 : i32, i32
  }
  func.func @transform_2(%arg0: i32, %arg1: i32) -> (i32, i32) {
    %c0_i32 = arith.constant 0 : i32
    %c0_i32_0 = arith.constant 0 : i32
    return %c0_i32, %arg1 : i32, i32
  }
  func.func @transform_3(%arg0: i32, %arg1: i32) -> (i32, i32) {
    %c0_i32 = arith.constant 0 : i32
    return %arg0, %arg1 : i32, i32
  }
}

module attributes {stable_mosaic.version = 11 : i64} {
  func.func @_mm_single_kernel(%arg0: i32, %arg1: i32, %arg2: memref<512x128xbf16, #tpu.memory_space<vmem>>, %arg3: memref<128x128xbf16, #tpu.memory_space<vmem>>, %arg4: memref<2x128xf32, #tpu.memory_space<vmem>>, %arg5: memref<512x128xf32, #tpu.memory_space<vmem>>) attributes {dimension_semantics = [#tpu.dimension_semantics<parallel>, #tpu.dimension_semantics<parallel>], iteration_bounds = array<i64: 1, 1>, scalar_prefetch = 0 : i64, scratch_operands = 0 : i64, tpu.core_type = #tpu.core_type<tc>, window_params = [{transform_indices = @transform_0, window_bounds = array<i64: 512, 128>}, {transform_indices = @transform_1, window_bounds = array<i64: 128, 128>}, {transform_indices = @transform_2, window_bounds = array<i64: 2, 128>}, {transform_indices = @transform_3, window_bounds = array<i64: 512, 128>}]} {
    %c0 = arith.constant 0 : index
    %c0_0 = arith.constant 0 : index
    %0 = vector.load %arg2[%c0, %c0_0] : memref<512x128xbf16, #tpu.memory_space<vmem>>, vector<512x128xbf16>
    %c0_1 = arith.constant 0 : index
    %c0_2 = arith.constant 0 : index
    %1 = vector.load %arg3[%c0_1, %c0_2] : memref<128x128xbf16, #tpu.memory_space<vmem>>, vector<128x128xbf16>
    %cst = arith.constant dense<0.000000e+00> : vector<512x128xf32>
    %2 = tpu.matmul %0, %1, %cst {dimension_numbers = #tpu.dot_dimension_numbers<[1], [0], [0], [1], [0, 0, 1, 1], [], []>} : vector<512x128xbf16>, vector<128x128xbf16>, vector<512x128xf32> -> vector<512x128xf32>
    %c0_3 = arith.constant 0 : index
    %c0_4 = arith.constant 0 : index
    %3 = vector.load %arg4[%c0_3, %c0_4] : memref<2x128xf32, #tpu.memory_space<vmem>>, vector<1x128xf32>
    %4 = vector.broadcast %3 : vector<1x128xf32> to vector<512x128xf32>
    %5 = arith.addf %2, %4 : vector<512x128xf32>
    %c0_5 = arith.constant 0 : index
    %c0_6 = arith.constant 0 : index
    %6 = vector.load %arg5[%c0_5, %c0_6] : memref<512x128xf32, #tpu.memory_space<vmem>>, vector<512x128xf32>
    tpu.vector_store %arg5[%c0_5, %c0_6], %5 {strides = array<i32>} : memref<512x128xf32, #tpu.memory_space<vmem>>, vector<512x128xf32>,
    return
  }
  func.func @transform_0(%arg0: i32, %arg1: i32) -> (i32, i32) {
    %c0_i32 = arith.constant 0 : i32
    %c0_i32_0 = arith.constant 0 : i32
    return %arg0, %c0_i32 : i32, i32
  }
  func.func @transform_1(%arg0: i32, %arg1: i32) -> (i32, i32) {
    %c0_i32 = arith.constant 0 : i32
    %c0_i32_0 = arith.constant 0 : i32
    return %c0_i32, %arg1 : i32, i32
  }
  func.func @transform_2(%arg0: i32, %arg1: i32) -> (i32, i32) {
    %c0_i32 = arith.constant 0 : i32
    %c0_i32_0 = arith.constant 0 : i32
    return %c0_i32, %arg1 : i32, i32
  }
  func.func @transform_3(%arg0: i32, %arg1: i32) -> (i32, i32) {
    %c0_i32 = arith.constant 0 : i32
    return %arg0, %arg1 : i32, i32
  }
}

</mosaic_0001>

<llo_original>
// kernel: resnet_autoencoder_forward.18
$region0: #{resnet_autoencoder_forward.18}
  #allocation0 [shape = 'u32[]', space=smem, size = 0x4, offset = 0x4, fixed_abs, tag = 'smem constant byte address 0x4 - core index']
  #allocation1 [shape = 'u32[144,128]{1,0:T(1,128)}', space=vmem, size = 0x12000, scoped, tag = 'internal scratch']
  %s0 = inlined_call_operand.vmem [shape: bf16[512,256], index: 0, kind: input, shape index: {}]
  %s1 = inlined_call_operand.vmem [shape: bf16[256,128], index: 1, kind: input, shape index: {}]
  %s2 = inlined_call_operand.vmem [shape: f32[2,128], index: 2, kind: input, shape index: {}]
  %s3 = inlined_call_operand.vmem [shape: bf16[512,128], index: 3, kind: output, shape index: {}]
  %s4 = sld [smem:[#allocation0]]
  $region22: #{resnet_autoencoder_forward.18} parent=0
    _
  %s6 = ssub.s32 1, %s4
  %s7 = scalar_select 0, %s6, %s4
  // Predicated region
  $region2: #{resnet_autoencoder_forward.18} parent=0 // pred_check
    _
  $region3: #{resnet_autoencoder_forward.18} parent=0 // pred_check_branch
    %9 = sbr.rel (0) target = $region5
  $region4: #{resnet_autoencoder_forward.18} parent=0 // pred_region
    _
  $region5: #{resnet_autoencoder_forward.18} parent=0 // pred_fallthru
    _
  // Predicated region
  $region6: #{resnet_autoencoder_forward.18} parent=0 // pred_check
    _
  $region7: #{resnet_autoencoder_forward.18} parent=0 // pred_check_branch
    %11 = sbr.rel (0) target = $region9
  $region8: #{resnet_autoencoder_forward.18} parent=0 // pred_region
    _
  $region9: #{resnet_autoencoder_forward.18} parent=0 // pred_fallthru
    _
  // Predicated region
  $region10: #{resnet_autoencoder_forward.18} parent=0 // pred_check
    _
  $region11: #{resnet_autoencoder_forward.18} parent=0 // pred_check_branch
    %13 = sbr.rel (0) target = $region13
  $region12: #{resnet_autoencoder_forward.18} parent=0 // pred_region
    _
  $region13: #{resnet_autoencoder_forward.18} parent=0 // pred_fallthru
    _
  %v15 = vld [vmem:[%s0] sm:$0xff]
  %v16 = vld [vmem:[%s0 + $0x8] sm:$0xff]
  %v17 = vld [vmem:[%s0 + $0x10] sm:$0xff]
  %v18 = vld [vmem:[%s0 + $0x18] sm:$0xff]
  %v19 = vld [vmem:[%s0 + $0x20] sm:$0xff]
  %v20 = vld [vmem:[%s0 + $0x28] sm:$0xff]
  %v21 = vld [vmem:[%s0 + $0x30] sm:$0xff]
  %v22 = vld [vmem:[%s0 + $0x38] sm:$0xff]
  %v23 = vld [vmem:[%s0 + $0x40] sm:$0xff]
  %v24 = vld [vmem:[%s0 + $0x48] sm:$0xff]
  %v25 = vld [vmem:[%s0 + $0x50] sm:$0xff]
  %v26 = vld [vmem:[%s0 + $0x58] sm:$0xff]
  %v27 = vld [vmem:[%s0 + $0x60] sm:$0xff]
  %v28 = vld [vmem:[%s0 + $0x68] sm:$0xff]
  %v29 = vld [vmem:[%s0 + $0x70] sm:$0xff]
  %v30 = vld [vmem:[%s0 + $0x78] sm:$0xff]
  %v31 = vld [vmem:[%s0 + $0x80] sm:$0xff]
  %v32 = vld [vmem:[%s0 + $0x88] sm:$0xff]
  %v33 = vld [vmem:[%s0 + $0x90] sm:$0xff]
  %v34 = vld [vmem:[%s0 + $0x98] sm:$0xff]
  %v35 = vld [vmem:[%s0 + $0xa0] sm:$0xff]
  %v36 = vld [vmem:[%s0 + $0xa8] sm:$0xff]
  %v37 = vld [vmem:[%s0 + $0xb0] sm:$0xff]
  %v38 = vld [vmem:[%s0 + $0xb8] sm:$0xff]
  %v39 = vld [vmem:[%s0 + $0xc0] sm:$0xff]
  %v40 = vld [vmem:[%s0 + $0xc8] sm:$0xff]
  %v41 = vld [vmem:[%s0 + $0xd0] sm:$0xff]
  %v42 = vld [vmem:[%s0 + $0xd8] sm:$0xff]
  %v43 = vld [vmem:[%s0 + $0xe0] sm:$0xff]
  %v44 = vld [vmem:[%s0 + $0xe8] sm:$0xff]
  %v45 = vld [vmem:[%s0 + $0xf0] sm:$0xff]
  %v46 = vld [vmem:[%s0 + $0xf8] sm:$0xff]
  %v47 = vld [vmem:[%s0 + $0x100] sm:$0xff]
  %v48 = vld [vmem:[%s0 + $0x108] sm:$0xff]
  %v49 = vld [vmem:[%s0 + $0x110] sm:$0xff]
  %v50 = vld [vmem:[%s0 + $0x118] sm:$0xff]
  %v51 = vld [vmem:[%s0 + $0x120] sm:$0xff]
  %v52 = vld [vmem:[%s0 + $0x128] sm:$0xff]
  %v53 = vld [vmem:[%s0 + $0x130] sm:$0xff]
  %v54 = vld [vmem:[%s0 + $0x138] sm:$0xff]
  %v55 = vld [vmem:[%s0 + $0x140] sm:$0xff]
  %v56 = vld [vmem:[%s0 + $0x148] sm:$0xff]
  %v57 = vld [vmem:[%s0 + $0x150] sm:$0xff]
  %v58 = vld [vmem:[%s0 + $0x158] sm:$0xff]
  %v59 = vld [vmem:[%s0 + $0x160] sm:$0xff]
  %v60 = vld [vmem:[%s0 + $0x168] sm:$0xff]
  %v61 = vld [vmem:[%s0 + $0x170] sm:$0xff]
  %v62 = vld [vmem:[%s0 + $0x178] sm:$0xff]
  %v63 = vld [vmem:[%s0 + $0x180] sm:$0xff]
  %v64 = vld [vmem:[%s0 + $0x188] sm:$0xff]
  %v65 = vld [vmem:[%s0 + $0x190] sm:$0xff]
  %v66 = vld [vmem:[%s0 + $0x198] sm:$0xff]
  %v67 = vld [vmem:[%s0 + $0x1a0] sm:$0xff]
  %v68 = vld [vmem:[%s0 + $0x1a8] sm:$0xff]
  %v69 = vld [vmem:[%s0 + $0x1b0] sm:$0xff]
  %v70 = vld [vmem:[%s0 + $0x1b8] sm:$0xff]
  %v71 = vld [vmem:[%s0 + $0x1c0] sm:$0xff]
  %v72 = vld [vmem:[%s0 + $0x1c8] sm:$0xff]
  %v73 = vld [vmem:[%s0 + $0x1d0] sm:$0xff]
  %v74 = vld [vmem:[%s0 + $0x1d8] sm:$0xff]
  %v75 = vld [vmem:[%s0 + $0x1e0] sm:$0xff]
  %v76 = vld [vmem:[%s0 + $0x1e8] sm:$0xff]
  %v77 = vld [vmem:[%s0 + $0x1f0] sm:$0xff]
  %v78 = vld [vmem:[%s0 + $0x1f8] sm:$0xff]
  %v79 = vld [vmem:[%s1] sm:$0xf]
  %v80 = vld [vmem:[%s1 + $0x4] sm:$0xf]
  %v81 = vld [vmem:[%s1 + $0x8] sm:$0xf]
  %v82 = vld [vmem:[%s1 + $0xc] sm:$0xf]
  %v83 = vld [vmem:[%s1 + $0x10] sm:$0xf]
  %v84 = vld [vmem:[%s1 + $0x14] sm:$0xf]
  %v85 = vld [vmem:[%s1 + $0x18] sm:$0xf]
  %v86 = vld [vmem:[%s1 + $0x1c] sm:$0xf]
  %v87 = vld [vmem:[%s1 + $0x20] sm:$0xf]
  %v88 = vld [vmem:[%s1 + $0x24] sm:$0xf]
  %v89 = vld [vmem:[%s1 + $0x28] sm:$0xf]
  %v90 = vld [vmem:[%s1 + $0x2c] sm:$0xf]
  %v91 = vld [vmem:[%s1 + $0x30] sm:$0xf]
  %v92 = vld [vmem:[%s1 + $0x34] sm:$0xf]
  %v93 = vld [vmem:[%s1 + $0x38] sm:$0xf]
  %v94 = vld [vmem:[%s1 + $0x3c] sm:$0xf]
  %v95 = vld [vmem:[%s1 + $0x40] sm:$0xf]
  %v96 = vld [vmem:[%s1 + $0x44] sm:$0xf]
  %v97 = vld [vmem:[%s1 + $0x48] sm:$0xf]
  %v98 = vld [vmem:[%s1 + $0x4c] sm:$0xf]
  %v99 = vld [vmem:[%s1 + $0x50] sm:$0xf]
  %v100 = vld [vmem:[%s1 + $0x54] sm:$0xf]
  %v101 = vld [vmem:[%s1 + $0x58] sm:$0xf]
  %v102 = vld [vmem:[%s1 + $0x5c] sm:$0xf]
  %v103 = vld [vmem:[%s1 + $0x60] sm:$0xf]
  %v104 = vld [vmem:[%s1 + $0x64] sm:$0xf]
  %v105 = vld [vmem:[%s1 + $0x68] sm:$0xf]
  %v106 = vld [vmem:[%s1 + $0x6c] sm:$0xf]
  %v107 = vld [vmem:[%s1 + $0x70] sm:$0xf]
  %v108 = vld [vmem:[%s1 + $0x74] sm:$0xf]
  %v109 = vld [vmem:[%s1 + $0x78] sm:$0xf]
  %v110 = vld [vmem:[%s1 + $0x7c] sm:$0xf]
  %v111 = vld [vmem:[%s2] sm:$0x1]
  %v112 = vlaneseq
  %v113 = vshrl.u32 %v112, 7
  %v114 = vsub.s32 0, %v113
  %v115 = vrot.slane %v111, %v114
  %v180 = vunpack.c.l.b16 %v15
  %v181 = vunpack.c.h.b16 %v15
  %v182 = vunpack.c.l.b16 %v16
  %v183 = vunpack.c.h.b16 %v16
  %v184 = vunpack.c.l.b16 %v17
  %v185 = vunpack.c.h.b16 %v17
  %v186 = vunpack.c.l.b16 %v18
  %v187 = vunpack.c.h.b16 %v18
  %v188 = vunpack.c.l.b16 %v19
  %v189 = vunpack.c.h.b16 %v19
  %v190 = vunpack.c.l.b16 %v20
  %v191 = vunpack.c.h.b16 %v20
  %v192 = vunpack.c.l.b16 %v21
  %v193 = vunpack.c.h.b16 %v21
  %v194 = vunpack.c.l.b16 %v22
  %v195 = vunpack.c.h.b16 %v22
  %v196 = vunpack.c.l.b16 %v23
  %v197 = vunpack.c.h.b16 %v23
  %v198 = vunpack.c.l.b16 %v24
  %v199 = vunpack.c.h.b16 %v24
  %v200 = vunpack.c.l.b16 %v25
  %v201 = vunpack.c.h.b16 %v25
  %v202 = vunpack.c.l.b16 %v26
  %v203 = vunpack.c.h.b16 %v26
  %v204 = vunpack.c.l.b16 %v27
  %v205 = vunpack.c.h.b16 %v27
  %v206 = vunpack.c.l.b16 %v28
  %v207 = vunpack.c.h.b16 %v28
  %v208 = vunpack.c.l.b16 %v29
  %v209 = vunpack.c.h.b16 %v29
  %v210 = vunpack.c.l.b16 %v30
  %v211 = vunpack.c.h.b16 %v30
  %v212 = vunpack.c.l.b16 %v31
  %v213 = vunpack.c.h.b16 %v31
  %v214 = vunpack.c.l.b16 %v32
  %v215 = vunpack.c.h.b16 %v32
  %v216 = vunpack.c.l.b16 %v33
  %v217 = vunpack.c.h.b16 %v33
  %v218 = vunpack.c.l.b16 %v34
  %v219 = vunpack.c.h.b16 %v34
  %v220 = vunpack.c.l.b16 %v35
  %v221 = vunpack.c.h.b16 %v35
  %v222 = vunpack.c.l.b16 %v36
  %v223 = vunpack.c.h.b16 %v36
  %v224 = vunpack.c.l.b16 %v37
  %v225 = vunpack.c.h.b16 %v37
  %v226 = vunpack.c.l.b16 %v38
  %v227 = vunpack.c.h.b16 %v38
  %v228 = vunpack.c.l.b16 %v39
  %v229 = vunpack.c.h.b16 %v39
  %v230 = vunpack.c.l.b16 %v40
  %v231 = vunpack.c.h.b16 %v40
  %v232 = vunpack.c.l.b16 %v41
  %v233 = vunpack.c.h.b16 %v41
  %v234 = vunpack.c.l.b16 %v42
  %v235 = vunpack.c.h.b16 %v42
  %v236 = vunpack.c.l.b16 %v43
  %v237 = vunpack.c.h.b16 %v43
  %v238 = vunpack.c.l.b16 %v44
  %v239 = vunpack.c.h.b16 %v44
  %v240 = vunpack.c.l.b16 %v45
  %v241 = vunpack.c.h.b16 %v45
  %v242 = vunpack.c.l.b16 %v46
  %v243 = vunpack.c.h.b16 %v46
  %v244 = vunpack.c.l.b16 %v47
  %v245 = vunpack.c.h.b16 %v47
  %v246 = vunpack.c.l.b16 %v48
  %v247 = vunpack.c.h.b16 %v48
  %v248 = vunpack.c.l.b16 %v49
  %v249 = vunpack.c.h.b16 %v49
  %v250 = vunpack.c.l.b16 %v50
  %v251 = vunpack.c.h.b16 %v50
  %v252 = vunpack.c.l.b16 %v51
  %v253 = vunpack.c.h.b16 %v51
  %v254 = vunpack.c.l.b16 %v52
  %v255 = vunpack.c.h.b16 %v52
  %v256 = vunpack.c.l.b16 %v53
  %v257 = vunpack.c.h.b16 %v53
  %v258 = vunpack.c.l.b16 %v54
  %v259 = vunpack.c.h.b16 %v54
  %v260 = vunpack.c.l.b16 %v55
  %v261 = vunpack.c.h.b16 %v55
  %v262 = vunpack.c.l.b16 %v56
  %v263 = vunpack.c.h.b16 %v56
  %v264 = vunpack.c.l.b16 %v57
  %v265 = vunpack.c.h.b16 %v57
  %v266 = vunpack.c.l.b16 %v58
  %v267 = vunpack.c.h.b16 %v58
  %v268 = vunpack.c.l.b16 %v59
  %v269 = vunpack.c.h.b16 %v59
  %v270 = vunpack.c.l.b16 %v60
  %v271 = vunpack.c.h.b16 %v60
  %v272 = vunpack.c.l.b16 %v61
  %v273 = vunpack.c.h.b16 %v61
  %v274 = vunpack.c.l.b16 %v62
  %v275 = vunpack.c.h.b16 %v62
  %v276 = vunpack.c.l.b16 %v63
  %v277 = vunpack.c.h.b16 %v63
  %v278 = vunpack.c.l.b16 %v64
  %v279 = vunpack.c.h.b16 %v64
  %v280 = vunpack.c.l.b16 %v65
  %v281 = vunpack.c.h.b16 %v65
  %v282 = vunpack.c.l.b16 %v66
  %v283 = vunpack.c.h.b16 %v66
  %v284 = vunpack.c.l.b16 %v67
  %v285 = vunpack.c.h.b16 %v67
  %v286 = vunpack.c.l.b16 %v68
  %v287 = vunpack.c.h.b16 %v68
  %v288 = vunpack.c.l.b16 %v69
  %v289 = vunpack.c.h.b16 %v69
  %v290 = vunpack.c.l.b16 %v70
  %v291 = vunpack.c.h.b16 %v70
  %v292 = vunpack.c.l.b16 %v71
  %v293 = vunpack.c.h.b16 %v71
  %v294 = vunpack.c.l.b16 %v72
  %v295 = vunpack.c.h.b16 %v72
  %v296 = vunpack.c.l.b16 %v73
  %v297 = vunpack.c.h.b16 %v73
  %v298 = vunpack.c.l.b16 %v74
  %v299 = vunpack.c.h.b16 %v74
  %v300 = vunpack.c.l.b16 %v75
  %v301 = vunpack.c.h.b16 %v75
  %v302 = vunpack.c.l.b16 %v76
  %v303 = vunpack.c.h.b16 %v76
  %v304 = vunpack.c.l.b16 %v77
  %v305 = vunpack.c.h.b16 %v77
  %v306 = vunpack.c.l.b16 %v78
  %v307 = vunpack.c.h.b16 %v78
  %v308 = vpack.c.b16 %v182, %v180
  %v309 = vpack.c.b16 %v183, %v181
  %v310 = vpack.c.b16 %v186, %v184
  %v311 = vpack.c.b16 %v187, %v185
  %v312 = vpack.c.b16 %v190, %v188
  %v313 = vpack.c.b16 %v191, %v189
  %v314 = vpack.c.b16 %v194, %v192
  %v315 = vpack.c.b16 %v195, %v193
  %v316 = vpack.c.b16 %v198, %v196
  %v317 = vpack.c.b16 %v199, %v197
  %v318 = vpack.c.b16 %v202, %v200
  %v319 = vpack.c.b16 %v203, %v201
  %v320 = vpack.c.b16 %v206, %v204
  %v321 = vpack.c.b16 %v207, %v205
  %v322 = vpack.c.b16 %v210, %v208
  %v323 = vpack.c.b16 %v211, %v209
  %v324 = vpack.c.b16 %v214, %v212
  %v325 = vpack.c.b16 %v215, %v213
  %v326 = vpack.c.b16 %v218, %v216
  %v327 = vpack.c.b16 %v219, %v217
  %v328 = vpack.c.b16 %v222, %v220
  %v329 = vpack.c.b16 %v223, %v221
  %v330 = vpack.c.b16 %v226, %v224
  %v331 = vpack.c.b16 %v227, %v225
  %v332 = vpack.c.b16 %v230, %v228
  %v333 = vpack.c.b16 %v231, %v229
  %v334 = vpack.c.b16 %v234, %v232
  %v335 = vpack.c.b16 %v235, %v233
  %v336 = vpack.c.b16 %v238, %v236
  %v337 = vpack.c.b16 %v239, %v237
  %v338 = vpack.c.b16 %v242, %v240
  %v339 = vpack.c.b16 %v243, %v241
  %v340 = vpack.c.b16 %v246, %v244
  %v341 = vpack.c.b16 %v247, %v245
  %v342 = vpack.c.b16 %v250, %v248
  %v343 = vpack.c.b16 %v251, %v249
  %v344 = vpack.c.b16 %v254, %v252
  %v345 = vpack.c.b16 %v255, %v253
  %v346 = vpack.c.b16 %v258, %v256
  %v347 = vpack.c.b16 %v259, %v257
  %v348 = vpack.c.b16 %v262, %v260
  %v349 = vpack.c.b16 %v263, %v261
  %v350 = vpack.c.b16 %v266, %v264
  %v351 = vpack.c.b16 %v267, %v265
  %v352 = vpack.c.b16 %v270, %v268
  %v353 = vpack.c.b16 %v271, %v269
  %v354 = vpack.c.b16 %v274, %v272
  %v355 = vpack.c.b16 %v275, %v273
  %v356 = vpack.c.b16 %v278, %v276
  %v357 = vpack.c.b16 %v279, %v277
  %v358 = vpack.c.b16 %v282, %v280
  %v359 = vpack.c.b16 %v283, %v281
  %v360 = vpack.c.b16 %v286, %v284
  %v361 = vpack.c.b16 %v287, %v285
  %v362 = vpack.c.b16 %v290, %v288
  %v363 = vpack.c.b16 %v291, %v289
  %v364 = vpack.c.b16 %v294, %v292
  %v365 = vpack.c.b16 %v295, %v293
  %v366 = vpack.c.b16 %v298, %v296
  %v367 = vpack.c.b16 %v299, %v297
  %v368 = vpack.c.b16 %v302, %v300
  %v369 = vpack.c.b16 %v303, %v301
  %v370 = vpack.c.b16 %v306, %v304
  %v371 = vpack.c.b16 %v307, %v305
  %v468 = vunpack.c.l.b16 %v79
  %v469 = vunpack.c.l.b16 %v80
  %v470 = vunpack.c.l.b16 %v81
  %v471 = vunpack.c.l.b16 %v82
  %v472 = vunpack.c.l.b16 %v83
  %v473 = vunpack.c.l.b16 %v84
  %v474 = vunpack.c.l.b16 %v85
  %v475 = vunpack.c.l.b16 %v86
  %v476 = vunpack.c.l.b16 %v87
  %v477 = vunpack.c.l.b16 %v88
  %v478 = vunpack.c.l.b16 %v89
  %v479 = vunpack.c.l.b16 %v90
  %v480 = vunpack.c.l.b16 %v91
  %v481 = vunpack.c.l.b16 %v92
  %v482 = vunpack.c.l.b16 %v93
  %v483 = vunpack.c.l.b16 %v94
  %v484 = vunpack.c.l.b16 %v95
  %v485 = vunpack.c.l.b16 %v96
  %v486 = vunpack.c.l.b16 %v97
  %v487 = vunpack.c.l.b16 %v98
  %v488 = vunpack.c.l.b16 %v99
  %v489 = vunpack.c.l.b16 %v100
  %v490 = vunpack.c.l.b16 %v101
  %v491 = vunpack.c.l.b16 %v102
  %v492 = vunpack.c.l.b16 %v103
  %v493 = vunpack.c.l.b16 %v104
  %v494 = vunpack.c.l.b16 %v105
  %v495 = vunpack.c.l.b16 %v106
  %v496 = vunpack.c.l.b16 %v107
  %v497 = vunpack.c.l.b16 %v108
  %v498 = vunpack.c.l.b16 %v109
  %v499 = vunpack.c.l.b16 %v110
  %v500 = vpack.c.b16 %v469, %v468
  %v501 = vpack.c.b16 %v471, %v470
  %v502 = vpack.c.b16 %v473, %v472
  %v503 = vpack.c.b16 %v475, %v474
  %v504 = vpack.c.b16 %v477, %v476
  %v505 = vpack.c.b16 %v479, %v478
  %v506 = vpack.c.b16 %v481, %v480
  %v507 = vpack.c.b16 %v483, %v482
  %v508 = vpack.c.b16 %v485, %v484
  %v509 = vpack.c.b16 %v487, %v486
  %v510 = vpack.c.b16 %v489, %v488
  %v511 = vpack.c.b16 %v491, %v490
  %v512 = vpack.c.b16 %v493, %v492
  %v513 = vpack.c.b16 %v495, %v494
  %v514 = vpack.c.b16 %v497, %v496
  %v515 = vpack.c.b16 %v499, %v498
  %532 = vmatprep.subr.bf16.mxu0 0
  %533 = vmatpush1.bf16.msra.mxu0 %v507
  %534 = vmatprep.subr.bf16.mxu0 0
  %535 = vmatpush1.bf16.msra.mxu0 %v506
  %536 = vmatprep.subr.bf16.mxu0 0
  %537 = vmatpush1.bf16.msra.mxu0 %v505
  %538 = vmatprep.subr.bf16.mxu0 0
  %539 = vmatpush1.bf16.msra.mxu0 %v504
  %540 = vmatprep.subr.bf16.mxu0 0
  %541 = vmatpush1.bf16.msra.mxu0 %v503
  %542 = vmatprep.subr.bf16.mxu0 0
  %543 = vmatpush1.bf16.msra.mxu0 %v502
  %544 = vmatprep.subr.bf16.mxu0 0
  %545 = vmatpush1.bf16.msra.mxu0 %v501
  %546 = vmatprep.subr.bf16.mxu0 0
  %547 = vmatpush1.bf16.msra.mxu0 %v500
  %548 = vmatprep.subr.bf16.mxu0 0
  %549 = vmatpush2.bf16.msra.mxu0 %v515
  %550 = vmatprep.subr.bf16.mxu0 0
  %551 = vmatpush2.bf16.msra.mxu0 %v514
  %552 = vmatprep.subr.bf16.mxu0 0
  %553 = vmatpush2.bf16.msra.mxu0 %v513
  %554 = vmatprep.subr.bf16.mxu0 0
  %555 = vmatpush2.bf16.msra.mxu0 %v512
  %556 = vmatprep.subr.bf16.mxu0 0
  %557 = vmatpush2.bf16.msra.mxu0 %v511
  %558 = vmatprep.subr.bf16.mxu0 0
  %559 = vmatpush2.bf16.msra.mxu0 %v510
  %560 = vmatprep.subr.bf16.mxu0 0
  %561 = vmatpush2.bf16.msra.mxu0 %v509
  %562 = vmatprep.subr.bf16.mxu0 0
  %563 = vmatpush2.bf16.msra.mxu0 %v508
  %564 = vmatprep.mubr.bf16.mxu0 %v309
  %565 = vmatmul.mubr.bf16.gmra.mxu0 %v308
  %v566 = vpop.f32.mrf.mxu0
  %v567 = vadd.f32 %v115, %v566
  %v568 = vpop.f32.mrf.mxu0
  %v569 = vpop.f32.mrf.mxu0
  %v570 = vadd.f32 %v115, %v569
  %v571 = vpop.f32.mrf.mxu0
  %572 = vmatprep.mubr.bf16.mxu0 %v311
  %573 = vmatmul.mubr.bf16.gmra.mxu0 %v310
  %v574 = vpop.f32.mrf.mxu0
  %v575 = vadd.f32 %v115, %v574
  %v576 = vpop.f32.mrf.mxu0
  %v577 = vpop.f32.mrf.mxu0
  %v578 = vadd.f32 %v115, %v577
  %v579 = vpop.f32.mrf.mxu0
  %580 = vmatprep.mubr.bf16.mxu0 %v313
  %581 = vmatmul.mubr.bf16.gmra.mxu0 %v312
  %v582 = vpop.f32.mrf.mxu0
  %v583 = vadd.f32 %v115, %v582
  %v584 = vpop.f32.mrf.mxu0
  %v585 = vpop.f32.mrf.mxu0
  %v586 = vadd.f32 %v115, %v585
  %v587 = vpop.f32.mrf.mxu0
  %588 = vmatprep.mubr.bf16.mxu0 %v315
  %589 = vmatmul.mubr.bf16.gmra.mxu0 %v314
  %v590 = vpop.f32.mrf.mxu0
  %v591 = vadd.f32 %v115, %v590
  %v592 = vpop.f32.mrf.mxu0
  %v593 = vpop.f32.mrf.mxu0
  %v594 = vadd.f32 %v115, %v593
  %v595 = vpop.f32.mrf.mxu0
  %596 = vmatprep.mubr.bf16.mxu0 %v317
  %597 = vmatmul.mubr.bf16.gmra.mxu0 %v316
  %v598 = vpop.f32.mrf.mxu0
  %v599 = vadd.f32 %v115, %v598
  %v600 = vpop.f32.mrf.mxu0
  %v601 = vpop.f32.mrf.mxu0
  %v602 = vadd.f32 %v115, %v601
  %v603 = vpop.f32.mrf.mxu0
  %604 = vmatprep.mubr.bf16.mxu0 %v319
  %605 = vmatmul.mubr.bf16.gmra.mxu0 %v318
  %v606 = vpop.f32.mrf.mxu0
  %v607 = vadd.f32 %v115, %v606
  %v608 = vpop.f32.mrf.mxu0
  %v609 = vpop.f32.mrf.mxu0
  %v610 = vadd.f32 %v115, %v609
  %v611 = vpop.f32.mrf.mxu0
  %612 = vmatprep.mubr.bf16.mxu0 %v321
  %613 = vmatmul.mubr.bf16.gmra.mxu0 %v320
  %v614 = vpop.f32.mrf.mxu0
  %v615 = vadd.f32 %v115, %v614
  %v616 = vpop.f32.mrf.mxu0
  %v617 = vpop.f32.mrf.mxu0
  %v618 = vadd.f32 %v115, %v617
  %v619 = vpop.f32.mrf.mxu0
  %620 = vmatprep.mubr.bf16.mxu0 %v323
  %621 = vmatmul.mubr.bf16.gmra.mxu0 %v322
  %v622 = vpop.f32.mrf.mxu0
  %v623 = vadd.f32 %v115, %v622
  %v624 = vpop.f32.mrf.mxu0
  %v625 = vpop.f32.mrf.mxu0
  %v626 = vadd.f32 %v115, %v625
  %v627 = vpop.f32.mrf.mxu0
  %628 = vmatprep.mubr.bf16.mxu0 %v325
  %629 = vmatmul.mubr.bf16.gmra.mxu0 %v324
  %v630 = vpop.f32.mrf.mxu0
  %v631 = vadd.f32 %v115, %v630
  %v632 = vpop.f32.mrf.mxu0
  %v633 = vpop.f32.mrf.mxu0
  %v634 = vadd.f32 %v115, %v633
  %v635 = vpop.f32.mrf.mxu0
  %636 = vmatprep.mubr.bf16.mxu0 %v327
  %637 = vmatmul.mubr.bf16.gmra.mxu0 %v326
  %v638 = vpop.f32.mrf.mxu0
  %v639 = vadd.f32 %v115, %v638
  %v640 = vpop.f32.mrf.mxu0
  %v641 = vpop.f32.mrf.mxu0
  %v642 = vadd.f32 %v115, %v641
  %v643 = vpop.f32.mrf.mxu0
  %644 = vmatprep.mubr.bf16.mxu0 %v329
  %645 = vmatmul.mubr.bf16.gmra.mxu0 %v328
  %v646 = vpop.f32.mrf.mxu0
  %v647 = vadd.f32 %v115, %v646
  %v648 = vpop.f32.mrf.mxu0
  %v649 = vpop.f32.mrf.mxu0
  %v650 = vadd.f32 %v115, %v649
  %v651 = vpop.f32.mrf.mxu0
  %652 = vmatprep.mubr.bf16.mxu0 %v331
  %653 = vmatmul.mubr.bf16.gmra.mxu0 %v330
  %v654 = vpop.f32.mrf.mxu0
  %v655 = vadd.f32 %v115, %v654
  %v656 = vpop.f32.mrf.mxu0
  %v657 = vpop.f32.mrf.mxu0
  %v658 = vadd.f32 %v115, %v657
  %v659 = vpop.f32.mrf.mxu0
  %660 = vmatprep.mubr.bf16.mxu0 %v333
  %661 = vmatmul.mubr.bf16.gmra.mxu0 %v332
  %v662 = vpop.f32.mrf.mxu0
  %v663 = vadd.f32 %v115, %v662
  %v664 = vpop.f32.mrf.mxu0
  %v665 = vpop.f32.mrf.mxu0
  %v666 = vadd.f32 %v115, %v665
  %v667 = vpop.f32.mrf.mxu0
  %668 = vmatprep.mubr.bf16.mxu0 %v335
  %669 = vmatmul.mubr.bf16.gmra.mxu0 %v334
  %v670 = vpop.f32.mrf.mxu0
  %v671 = vadd.f32 %v115, %v670
  %v672 = vpop.f32.mrf.mxu0
  %v673 = vpop.f32.mrf.mxu0
  %v674 = vadd.f32 %v115, %v673
  %v675 = vpop.f32.mrf.mxu0
  %676 = vmatprep.mubr.bf16.mxu0 %v337
  %677 = vmatmul.mubr.bf16.gmra.mxu0 %v336
  %v678 = vpop.f32.mrf.mxu0
  %v679 = vadd.f32 %v115, %v678
  %v680 = vpop.f32.mrf.mxu0
  %v681 = vpop.f32.mrf.mxu0
  %v682 = vadd.f32 %v115, %v681
  %v683 = vpop.f32.mrf.mxu0
  %684 = vmatprep.mubr.bf16.mxu0 %v339
  %685 = vmatmul.mubr.bf16.gmra.mxu0 %v338
  %v686 = vpop.f32.mrf.mxu0
  %v687 = vadd.f32 %v115, %v686
  %v688 = vpop.f32.mrf.mxu0
  %v689 = vpop.f32.mrf.mxu0
  %v690 = vadd.f32 %v115, %v689
  %v691 = vpop.f32.mrf.mxu0
  %692 = vmatprep.mubr.bf16.mxu0 %v341
  %693 = vmatmul.mubr.bf16.gmra.mxu0 %v340
  %v694 = vpop.f32.mrf.mxu0
  %v695 = vadd.f32 %v115, %v694
  %v696 = vpop.f32.mrf.mxu0
  %v697 = vpop.f32.mrf.mxu0
  %v698 = vadd.f32 %v115, %v697
  %v699 = vpop.f32.mrf.mxu0
  %700 = vmatprep.mubr.bf16.mxu0 %v343
  %701 = vmatmul.mubr.bf16.gmra.mxu0 %v342
  %v702 = vpop.f32.mrf.mxu0
  %v703 = vadd.f32 %v115, %v702
  %v704 = vpop.f32.mrf.mxu0
  %v705 = vpop.f32.mrf.mxu0
  %v706 = vadd.f32 %v115, %v705
  %v707 = vpop.f32.mrf.mxu0
  %708 = vmatprep.mubr.bf16.mxu0 %v345
  %709 = vmatmul.mubr.bf16.gmra.mxu0 %v344
  %v710 = vpop.f32.mrf.mxu0
  %v711 = vadd.f32 %v115, %v710
  %v712 = vpop.f32.mrf.mxu0
  %v713 = vpop.f32.mrf.mxu0
  %v714 = vadd.f32 %v115, %v713
  %v715 = vpop.f32.mrf.mxu0
  %716 = vmatprep.mubr.bf16.mxu0 %v347
  %717 = vmatmul.mubr.bf16.gmra.mxu0 %v346
  %v718 = vpop.f32.mrf.mxu0
  %v719 = vadd.f32 %v115, %v718
  %v720 = vpop.f32.mrf.mxu0
  %v721 = vpop.f32.mrf.mxu0
  %v722 = vadd.f32 %v115, %v721
  %v723 = vpop.f32.mrf.mxu0
  %724 = vmatprep.mubr.bf16.mxu0 %v349
  %725 = vmatmul.mubr.bf16.gmra.mxu0 %v348
  %v726 = vpop.f32.mrf.mxu0
  %v727 = vadd.f32 %v115, %v726
  %v728 = vpop.f32.mrf.mxu0
  %v729 = vpop.f32.mrf.mxu0
  %v730 = vadd.f32 %v115, %v729
  %v731 = vpop.f32.mrf.mxu0
  %732 = vmatprep.mubr.bf16.mxu0 %v351
  %733 = vmatmul.mubr.bf16.gmra.mxu0 %v350
  %v734 = vpop.f32.mrf.mxu0
  %v735 = vadd.f32 %v115, %v734
  %v736 = vpop.f32.mrf.mxu0
  %v737 = vpop.f32.mrf.mxu0
  %v738 = vadd.f32 %v115, %v737
  %v739 = vpop.f32.mrf.mxu0
  %740 = vmatprep.mubr.bf16.mxu0 %v353
  %741 = vmatmul.mubr.bf16.gmra.mxu0 %v352
  %v742 = vpop.f32.mrf.mxu0
  %v743 = vadd.f32 %v115, %v742
  %v744 = vpop.f32.mrf.mxu0
  %v745 = vpop.f32.mrf.mxu0
  %v746 = vadd.f32 %v115, %v745
  %v747 = vpop.f32.mrf.mxu0
  %748 = vmatprep.mubr.bf16.mxu0 %v355
  %749 = vmatmul.mubr.bf16.gmra.mxu0 %v354
  %v750 = vpop.f32.mrf.mxu0
  %v751 = vadd.f32 %v115, %v750
  %v752 = vpop.f32.mrf.mxu0
  %v753 = vpop.f32.mrf.mxu0
  %v754 = vadd.f32 %v115, %v753
  %v755 = vpop.f32.mrf.mxu0
  %756 = vmatprep.mubr.bf16.mxu0 %v357
  %757 = vmatmul.mubr.bf16.gmra.mxu0 %v356
  %v758 = vpop.f32.mrf.mxu0
  %v759 = vadd.f32 %v115, %v758
  %v760 = vpop.f32.mrf.mxu0
  %v761 = vpop.f32.mrf.mxu0
  %v762 = vadd.f32 %v115, %v761
  %v763 = vpop.f32.mrf.mxu0
  %764 = vmatprep.mubr.bf16.mxu0 %v359
  %765 = vmatmul.mubr.bf16.gmra.mxu0 %v358
  %v766 = vpop.f32.mrf.mxu0
  %v767 = vadd.f32 %v115, %v766
  %v768 = vpop.f32.mrf.mxu0
  %v769 = vpop.f32.mrf.mxu0
  %v770 = vadd.f32 %v115, %v769
  %v771 = vpop.f32.mrf.mxu0
  %772 = vmatprep.mubr.bf16.mxu0 %v361
  %773 = vmatmul.mubr.bf16.gmra.mxu0 %v360
  %v774 = vpop.f32.mrf.mxu0
  %v775 = vadd.f32 %v115, %v774
  %v776 = vpop.f32.mrf.mxu0
  %v777 = vpop.f32.mrf.mxu0
  %v778 = vadd.f32 %v115, %v777
  %v779 = vpop.f32.mrf.mxu0
  %780 = vmatprep.mubr.bf16.mxu0 %v363
  %781 = vmatmul.mubr.bf16.gmra.mxu0 %v362
  %v782 = vpop.f32.mrf.mxu0
  %v783 = vadd.f32 %v115, %v782
  %v784 = vpop.f32.mrf.mxu0
  %v785 = vpop.f32.mrf.mxu0
  %v786 = vadd.f32 %v115, %v785
  %v787 = vpop.f32.mrf.mxu0
  %788 = vmatprep.mubr.bf16.mxu0 %v365
  %789 = vmatmul.mubr.bf16.gmra.mxu0 %v364
  %v790 = vpop.f32.mrf.mxu0
  %v791 = vadd.f32 %v115, %v790
  %v792 = vpop.f32.mrf.mxu0
  %v793 = vpop.f32.mrf.mxu0
  %v794 = vadd.f32 %v115, %v793
  %v795 = vpop.f32.mrf.mxu0
  %796 = vmatprep.mubr.bf16.mxu0 %v367
  %797 = vmatmul.mubr.bf16.gmra.mxu0 %v366
  %v798 = vpop.f32.mrf.mxu0
  %v799 = vadd.f32 %v115, %v798
  %v800 = vpop.f32.mrf.mxu0
  %v801 = vpop.f32.mrf.mxu0
  %v802 = vadd.f32 %v115, %v801
  %v803 = vpop.f32.mrf.mxu0
  %804 = vmatprep.mubr.bf16.mxu0 %v369
  %805 = vmatmul.mubr.bf16.gmra.mxu0 %v368
  %v806 = vpop.f32.mrf.mxu0
  %v807 = vadd.f32 %v115, %v806
  %v808 = vpop.f32.mrf.mxu0
  %v809 = vpop.f32.mrf.mxu0
  %v810 = vadd.f32 %v115, %v809
  %v811 = vpop.f32.mrf.mxu0
  %812 = vmatprep.mubr.bf16.mxu0 %v371
  %813 = vmatmul.mubr.bf16.gmra.mxu0 %v370
  %v814 = vpop.f32.mrf.mxu0
  %v815 = vadd.f32 %v115, %v814
  %v816 = vpop.f32.mrf.mxu0
  %v817 = vpop.f32.mrf.mxu0
  %v818 = vadd.f32 %v115, %v817
  %v819 = vpop.f32.mrf.mxu0
  %820 = vdwg.mxu0
  %v821 = vmax.f32 %v567, 0.0
  %v822 = vmax.f32 %v570, 0.0
  %v823 = vmax.f32 %v575, 0.0
  %v824 = vmax.f32 %v578, 0.0
  %v825 = vmax.f32 %v583, 0.0
  %v826 = vmax.f32 %v586, 0.0
  %v827 = vmax.f32 %v591, 0.0
  %v828 = vmax.f32 %v594, 0.0
  %v829 = vmax.f32 %v599, 0.0
  %v830 = vmax.f32 %v602, 0.0
  %v831 = vmax.f32 %v607, 0.0
  %v832 = vmax.f32 %v610, 0.0
  %v833 = vmax.f32 %v615, 0.0
  %v834 = vmax.f32 %v618, 0.0
  %v835 = vmax.f32 %v623, 0.0
  %v836 = vmax.f32 %v626, 0.0
  %v837 = vmax.f32 %v631, 0.0
  %v838 = vmax.f32 %v634, 0.0
  %v839 = vmax.f32 %v639, 0.0
  %v840 = vmax.f32 %v642, 0.0
  %v841 = vmax.f32 %v647, 0.0
  %v842 = vmax.f32 %v650, 0.0
  %v843 = vmax.f32 %v655, 0.0
  %v844 = vmax.f32 %v658, 0.0
  %v845 = vmax.f32 %v663, 0.0
  %v846 = vmax.f32 %v666, 0.0
  %v847 = vmax.f32 %v671, 0.0
  %v848 = vmax.f32 %v674, 0.0
  %v849 = vmax.f32 %v679, 0.0
  %v850 = vmax.f32 %v682, 0.0
  %v851 = vmax.f32 %v687, 0.0
  %v852 = vmax.f32 %v690, 0.0
  %v853 = vmax.f32 %v695, 0.0
  %v854 = vmax.f32 %v698, 0.0
  %v855 = vmax.f32 %v703, 0.0
  %v856 = vmax.f32 %v706, 0.0
  %v857 = vmax.f32 %v711, 0.0
  %v858 = vmax.f32 %v714, 0.0
  %v859 = vmax.f32 %v719, 0.0
  %v860 = vmax.f32 %v722, 0.0
  %v861 = vmax.f32 %v727, 0.0
  %v862 = vmax.f32 %v730, 0.0
  %v863 = vmax.f32 %v735, 0.0
  %v864 = vmax.f32 %v738, 0.0
  %v865 = vmax.f32 %v743, 0.0
  %v866 = vmax.f32 %v746, 0.0
  %v867 = vmax.f32 %v751, 0.0
  %v868 = vmax.f32 %v754, 0.0
  %v869 = vmax.f32 %v759, 0.0
  %v870 = vmax.f32 %v762, 0.0
  %v871 = vmax.f32 %v767, 0.0
  %v872 = vmax.f32 %v770, 0.0
  %v873 = vmax.f32 %v775, 0.0
  %v874 = vmax.f32 %v778, 0.0
  %v875 = vmax.f32 %v783, 0.0
  %v876 = vmax.f32 %v786, 0.0
  %v877 = vmax.f32 %v791, 0.0
  %v878 = vmax.f32 %v794, 0.0
  %v879 = vmax.f32 %v799, 0.0
  %v880 = vmax.f32 %v802, 0.0
  %v881 = vmax.f32 %v807, 0.0
  %v882 = vmax.f32 %v810, 0.0
  %v883 = vmax.f32 %v815, 0.0
  %v884 = vmax.f32 %v818, 0.0
  %v885 = vpack.c.bf16 %v822, %v821
  %v886 = vpack.c.bf16 %v824, %v823
  %v887 = vpack.c.bf16 %v826, %v825
  %v888 = vpack.c.bf16 %v828, %v827
  %v889 = vpack.c.bf16 %v830, %v829
  %v890 = vpack.c.bf16 %v832, %v831
  %v891 = vpack.c.bf16 %v834, %v833
  %v892 = vpack.c.bf16 %v836, %v835
  %v893 = vpack.c.bf16 %v838, %v837
  %v894 = vpack.c.bf16 %v840, %v839
  %v895 = vpack.c.bf16 %v842, %v841
  %v896 = vpack.c.bf16 %v844, %v843
  %v897 = vpack.c.bf16 %v846, %v845
  %v898 = vpack.c.bf16 %v848, %v847
  %v899 = vpack.c.bf16 %v850, %v849
  %v900 = vpack.c.bf16 %v852, %v851
  %v901 = vpack.c.bf16 %v854, %v853
  %v902 = vpack.c.bf16 %v856, %v855
  %v903 = vpack.c.bf16 %v858, %v857
  %v904 = vpack.c.bf16 %v860, %v859
  %v905 = vpack.c.bf16 %v862, %v861
  %v906 = vpack.c.bf16 %v864, %v863
  %v907 = vpack.c.bf16 %v866, %v865
  %v908 = vpack.c.bf16 %v868, %v867
  %v909 = vpack.c.bf16 %v870, %v869
  %v910 = vpack.c.bf16 %v872, %v871
  %v911 = vpack.c.bf16 %v874, %v873
  %v912 = vpack.c.bf16 %v876, %v875
  %v913 = vpack.c.bf16 %v878, %v877
  %v914 = vpack.c.bf16 %v880, %v879
  %v915 = vpack.c.bf16 %v882, %v881
  %v916 = vpack.c.bf16 %v884, %v883
  %v949 = vunpack.c.l.b16 %v885
  %v950 = vunpack.c.h.b16 %v885
  %v951 = vunpack.c.l.b16 %v886
  %v952 = vunpack.c.h.b16 %v886
  %v953 = vunpack.c.l.b16 %v887
  %v954 = vunpack.c.h.b16 %v887
  %v955 = vunpack.c.l.b16 %v888
  %v956 = vunpack.c.h.b16 %v888
  %v957 = vunpack.c.l.b16 %v889
  %v958 = vunpack.c.h.b16 %v889
  %v959 = vunpack.c.l.b16 %v890
  %v960 = vunpack.c.h.b16 %v890
  %v961 = vunpack.c.l.b16 %v891
  %v962 = vunpack.c.h.b16 %v891
  %v963 = vunpack.c.l.b16 %v892
  %v964 = vunpack.c.h.b16 %v892
  %v965 = vunpack.c.l.b16 %v893
  %v966 = vunpack.c.h.b16 %v893
  %v967 = vunpack.c.l.b16 %v894
  %v968 = vunpack.c.h.b16 %v894
  %v969 = vunpack.c.l.b16 %v895
  %v970 = vunpack.c.h.b16 %v895
  %v971 = vunpack.c.l.b16 %v896
  %v972 = vunpack.c.h.b16 %v896
  %v973 = vunpack.c.l.b16 %v897
  %v974 = vunpack.c.h.b16 %v897
  %v975 = vunpack.c.l.b16 %v898
  %v976 = vunpack.c.h.b16 %v898
  %v977 = vunpack.c.l.b16 %v899
  %v978 = vunpack.c.h.b16 %v899
  %v979 = vunpack.c.l.b16 %v900
  %v980 = vunpack.c.h.b16 %v900
  %v981 = vunpack.c.l.b16 %v901
  %v982 = vunpack.c.h.b16 %v901
  %v983 = vunpack.c.l.b16 %v902
  %v984 = vunpack.c.h.b16 %v902
  %v985 = vunpack.c.l.b16 %v903
  %v986 = vunpack.c.h.b16 %v903
  %v987 = vunpack.c.l.b16 %v904
  %v988 = vunpack.c.h.b16 %v904
  %v989 = vunpack.c.l.b16 %v905
  %v990 = vunpack.c.h.b16 %v905
  %v991 = vunpack.c.l.b16 %v906
  %v992 = vunpack.c.h.b16 %v906
  %v993 = vunpack.c.l.b16 %v907
  %v994 = vunpack.c.h.b16 %v907
  %v995 = vunpack.c.l.b16 %v908
  %v996 = vunpack.c.h.b16 %v908
  %v997 = vunpack.c.l.b16 %v909
  %v998 = vunpack.c.h.b16 %v909
  %v999 = vunpack.c.l.b16 %v910
  %v1000 = vunpack.c.h.b16 %v910
  %v1001 = vunpack.c.l.b16 %v911
  %v1002 = vunpack.c.h.b16 %v911
  %v1003 = vunpack.c.l.b16 %v912
  %v1004 = vunpack.c.h.b16 %v912
  %v1005 = vunpack.c.l.b16 %v913
  %v1006 = vunpack.c.h.b16 %v913
  %v1007 = vunpack.c.l.b16 %v914
  %v1008 = vunpack.c.h.b16 %v914
  %v1009 = vunpack.c.l.b16 %v915
  %v1010 = vunpack.c.h.b16 %v915
  %v1011 = vunpack.c.l.b16 %v916
  %v1012 = vunpack.c.h.b16 %v916
  %v1013 = vpack.c.b16 %v949, %v949
  %v1014 = vpack.c.b16 %v950, %v950
  %v1015 = vpack.c.b16 %v951, %v951
  %v1016 = vpack.c.b16 %v952, %v952
  %v1017 = vpack.c.b16 %v953, %v953
  %v1018 = vpack.c.b16 %v954, %v954
  %v1019 = vpack.c.b16 %v955, %v955
  %v1020 = vpack.c.b16 %v956, %v956
  %v1021 = vpack.c.b16 %v957, %v957
  %v1022 = vpack.c.b16 %v958, %v958
  %v1023 = vpack.c.b16 %v959, %v959
  %v1024 = vpack.c.b16 %v960, %v960
  %v1025 = vpack.c.b16 %v961, %v961
  %v1026 = vpack.c.b16 %v962, %v962
  %v1027 = vpack.c.b16 %v963, %v963
  %v1028 = vpack.c.b16 %v964, %v964
  %v1029 = vpack.c.b16 %v965, %v965
  %v1030 = vpack.c.b16 %v966, %v966
  %v1031 = vpack.c.b16 %v967, %v967
  %v1032 = vpack.c.b16 %v968, %v968
  %v1033 = vpack.c.b16 %v969, %v969
  %v1034 = vpack.c.b16 %v970, %v970
  %v1035 = vpack.c.b16 %v971, %v971
  %v1036 = vpack.c.b16 %v972, %v972
  %v1037 = vpack.c.b16 %v973, %v973
  %v1038 = vpack.c.b16 %v974, %v974
  %v1039 = vpack.c.b16 %v975, %v975
  %v1040 = vpack.c.b16 %v976, %v976
  %v1041 = vpack.c.b16 %v977, %v977
  %v1042 = vpack.c.b16 %v978, %v978
  %v1043 = vpack.c.b16 %v979, %v979
  %v1044 = vpack.c.b16 %v980, %v980
  %v1045 = vpack.c.b16 %v981, %v981
  %v1046 = vpack.c.b16 %v982, %v982
  %v1047 = vpack.c.b16 %v983, %v983
  %v1048 = vpack.c.b16 %v984, %v984
  %v1049 = vpack.c.b16 %v985, %v985
  %v1050 = vpack.c.b16 %v986, %v986
  %v1051 = vpack.c.b16 %v987, %v987
  %v1052 = vpack.c.b16 %v988, %v988
  %v1053 = vpack.c.b16 %v989, %v989
  %v1054 = vpack.c.b16 %v990, %v990
  %v1055 = vpack.c.b16 %v991, %v991
  %v1056 = vpack.c.b16 %v992, %v992
  %v1057 = vpack.c.b16 %v993, %v993
  %v1058 = vpack.c.b16 %v994, %v994
  %v1059 = vpack.c.b16 %v995, %v995
  %v1060 = vpack.c.b16 %v996, %v996
  %v1061 = vpack.c.b16 %v997, %v997
  %v1062 = vpack.c.b16 %v998, %v998
  %v1063 = vpack.c.b16 %v999, %v999
  %v1064 = vpack.c.b16 %v1000, %v1000
  %v1065 = vpack.c.b16 %v1001, %v1001
  %v1066 = vpack.c.b16 %v1002, %v1002
  %v1067 = vpack.c.b16 %v1003, %v1003
  %v1068 = vpack.c.b16 %v1004, %v1004
  %v1069 = vpack.c.b16 %v1005, %v1005
  %v1070 = vpack.c.b16 %v1006, %v1006
  %v1071 = vpack.c.b16 %v1007, %v1007
  %v1072 = vpack.c.b16 %v1008, %v1008
  %v1073 = vpack.c.b16 %v1009, %v1009
  %v1074 = vpack.c.b16 %v1010, %v1010
  %v1075 = vpack.c.b16 %v1011, %v1011
  %v1076 = vpack.c.b16 %v1012, %v1012
  %1141 = vst [vmem:[%s3] sm:$0xf] %v1013
  %1142 = vst [vmem:[%s3 + $0x4] sm:$0xf] %v1014
  %1143 = vst [vmem:[%s3 + $0x8] sm:$0xf] %v1015
  %1144 = vst [vmem:[%s3 + $0xc] sm:$0xf] %v1016
  %1145 = vst [vmem:[%s3 + $0x10] sm:$0xf] %v1017
  %1146 = vst [vmem:[%s3 + $0x14] sm:$0xf] %v1018
  %1147 = vst [vmem:[%s3 + $0x18] sm:$0xf] %v1019
  %1148 = vst [vmem:[%s3 + $0x1c] sm:$0xf] %v1020
  %1149 = vst [vmem:[%s3 + $0x20] sm:$0xf] %v1021
  %1150 = vst [vmem:[%s3 + $0x24] sm:$0xf] %v1022
  %1151 = vst [vmem:[%s3 + $0x28] sm:$0xf] %v1023
  %1152 = vst [vmem:[%s3 + $0x2c] sm:$0xf] %v1024
  %1153 = vst [vmem:[%s3 + $0x30] sm:$0xf] %v1025
  %1154 = vst [vmem:[%s3 + $0x34] sm:$0xf] %v1026
  %1155 = vst [vmem:[%s3 + $0x38] sm:$0xf] %v1027
  %1156 = vst [vmem:[%s3 + $0x3c] sm:$0xf] %v1028
  %1157 = vst [vmem:[%s3 + $0x40] sm:$0xf] %v1029
  %1158 = vst [vmem:[%s3 + $0x44] sm:$0xf] %v1030
  %1159 = vst [vmem:[%s3 + $0x48] sm:$0xf] %v1031
  %1160 = vst [vmem:[%s3 + $0x4c] sm:$0xf] %v1032
  %1161 = vst [vmem:[%s3 + $0x50] sm:$0xf] %v1033
  %1162 = vst [vmem:[%s3 + $0x54] sm:$0xf] %v1034
  %1163 = vst [vmem:[%s3 + $0x58] sm:$0xf] %v1035
  %1164 = vst [vmem:[%s3 + $0x5c] sm:$0xf] %v1036
  %1165 = vst [vmem:[%s3 + $0x60] sm:$0xf] %v1037
  %1166 = vst [vmem:[%s3 + $0x64] sm:$0xf] %v1038
  %1167 = vst [vmem:[%s3 + $0x68] sm:$0xf] %v1039
  %1168 = vst [vmem:[%s3 + $0x6c] sm:$0xf] %v1040
  %1169 = vst [vmem:[%s3 + $0x70] sm:$0xf] %v1041
  %1170 = vst [vmem:[%s3 + $0x74] sm:$0xf] %v1042
  %1171 = vst [vmem:[%s3 + $0x78] sm:$0xf] %v1043
  %1172 = vst [vmem:[%s3 + $0x7c] sm:$0xf] %v1044
  %1173 = vst [vmem:[%s3 + $0x80] sm:$0xf] %v1045
  %1174 = vst [vmem:[%s3 + $0x84] sm:$0xf] %v1046
  %1175 = vst [vmem:[%s3 + $0x88] sm:$0xf] %v1047
  %1176 = vst [vmem:[%s3 + $0x8c] sm:$0xf] %v1048
  %1177 = vst [vmem:[%s3 + $0x90] sm:$0xf] %v1049
  %1178 = vst [vmem:[%s3 + $0x94] sm:$0xf] %v1050
  %1179 = vst [vmem:[%s3 + $0x98] sm:$0xf] %v1051
  %1180 = vst [vmem:[%s3 + $0x9c] sm:$0xf] %v1052
  %1181 = vst [vmem:[%s3 + $0xa0] sm:$0xf] %v1053
  %1182 = vst [vmem:[%s3 + $0xa4] sm:$0xf] %v1054
  %1183 = vst [vmem:[%s3 + $0xa8] sm:$0xf] %v1055
  %1184 = vst [vmem:[%s3 + $0xac] sm:$0xf] %v1056
  %1185 = vst [vmem:[%s3 + $0xb0] sm:$0xf] %v1057
  %1186 = vst [vmem:[%s3 + $0xb4] sm:$0xf] %v1058
  %1187 = vst [vmem:[%s3 + $0xb8] sm:$0xf] %v1059
  %1188 = vst [vmem:[%s3 + $0xbc] sm:$0xf] %v1060
  %1189 = vst [vmem:[%s3 + $0xc0] sm:$0xf] %v1061
  %1190 = vst [vmem:[%s3 + $0xc4] sm:$0xf] %v1062
  %1191 = vst [vmem:[%s3 + $0xc8] sm:$0xf] %v1063
  %1192 = vst [vmem:[%s3 + $0xcc] sm:$0xf] %v1064
  %1193 = vst [vmem:[%s3 + $0xd0] sm:$0xf] %v1065
  %1194 = vst [vmem:[%s3 + $0xd4] sm:$0xf] %v1066
  %1195 = vst [vmem:[%s3 + $0xd8] sm:$0xf] %v1067
  %1196 = vst [vmem:[%s3 + $0xdc] sm:$0xf] %v1068
  %1197 = vst [vmem:[%s3 + $0xe0] sm:$0xf] %v1069
  %1198 = vst [vmem:[%s3 + $0xe4] sm:$0xf] %v1070
  %1199 = vst [vmem:[%s3 + $0xe8] sm:$0xf] %v1071
  %1200 = vst [vmem:[%s3 + $0xec] sm:$0xf] %v1072
  %1201 = vst [vmem:[%s3 + $0xf0] sm:$0xf] %v1073
  %1202 = vst [vmem:[%s3 + $0xf4] sm:$0xf] %v1074
  %1203 = vst [vmem:[%s3 + $0xf8] sm:$0xf] %v1075
  %1204 = vst [vmem:[%s3 + $0xfc] sm:$0xf] %v1076
  // Predicated region
  $region14: #{resnet_autoencoder_forward.18} parent=0 // pred_check
    _
  $region15: #{resnet_autoencoder_forward.18} parent=0 // pred_check_branch
    %1206 = sbr.rel (0) target = $region17
  $region16: #{resnet_autoencoder_forward.18} parent=0 // pred_region
    _
  $region17: #{resnet_autoencoder_forward.18} parent=0 // pred_fallthru
    _
  // Predicated region
  $region18: #{resnet_autoencoder_forward.18} parent=0 // pred_check
    _
  $region19: #{resnet_autoencoder_forward.18} parent=0 // pred_check_branch
    %1208 = sbr.rel (0) target = $region21
  $region20: #{resnet_autoencoder_forward.18} parent=0 // pred_region
    _
  $region21: #{resnet_autoencoder_forward.18} parent=0 // pred_fallthru
    _

// kernel: resnet_autoencoder_forward.19
$region0: #{resnet_autoencoder_forward.19}
  #allocation0 [shape = 'u32[]', space=smem, size = 0x4, offset = 0x4, fixed_abs, tag = 'smem constant byte address 0x4 - core index']
  #allocation1 [shape = 'u32[144,128]{1,0:T(1,128)}', space=vmem, size = 0x12000, scoped, tag = 'internal scratch']
  %s0 = inlined_call_operand.vmem [shape: bf16[128,128], index: 0, kind: input, shape index: {}]
  %s1 = inlined_call_operand.vmem [shape: bf16[128,128], index: 1, kind: input, shape index: {}]
  %s2 = inlined_call_operand.vmem [shape: f32[2,128], index: 2, kind: input, shape index: {}]
  %s3 = inlined_call_operand.vmem [shape: bf16[128,128], index: 3, kind: output, shape index: {}]
  %s4 = sld [smem:[#allocation0]]
  $region22: #{resnet_autoencoder_forward.19} parent=0
    _
  %s6 = ssub.s32 1, %s4
  %s7 = scalar_select 0, %s6, %s4
  // Predicated region
  $region2: #{resnet_autoencoder_forward.19} parent=0 // pred_check
    _
  $region3: #{resnet_autoencoder_forward.19} parent=0 // pred_check_branch
    %9 = sbr.rel (0) target = $region5
  $region4: #{resnet_autoencoder_forward.19} parent=0 // pred_region
    _
  $region5: #{resnet_autoencoder_forward.19} parent=0 // pred_fallthru
    _
  // Predicated region
  $region6: #{resnet_autoencoder_forward.19} parent=0 // pred_check
    _
  $region7: #{resnet_autoencoder_forward.19} parent=0 // pred_check_branch
    %11 = sbr.rel (0) target = $region9
  $region8: #{resnet_autoencoder_forward.19} parent=0 // pred_region
    _
  $region9: #{resnet_autoencoder_forward.19} parent=0 // pred_fallthru
    _
  // Predicated region
  $region10: #{resnet_autoencoder_forward.19} parent=0 // pred_check
    _
  $region11: #{resnet_autoencoder_forward.19} parent=0 // pred_check_branch
    %13 = sbr.rel (0) target = $region13
  $region12: #{resnet_autoencoder_forward.19} parent=0 // pred_region
    _
  $region13: #{resnet_autoencoder_forward.19} parent=0 // pred_fallthru
    _
  %v15 = vld [vmem:[%s0] sm:$0xf]
  %v16 = vld [vmem:[%s0 + $0x4] sm:$0xf]
  %v17 = vld [vmem:[%s0 + $0x8] sm:$0xf]
  %v18 = vld [vmem:[%s0 + $0xc] sm:$0xf]
  %v19 = vld [vmem:[%s0 + $0x10] sm:$0xf]
  %v20 = vld [vmem:[%s0 + $0x14] sm:$0xf]
  %v21 = vld [vmem:[%s0 + $0x18] sm:$0xf]
  %v22 = vld [vmem:[%s0 + $0x1c] sm:$0xf]
  %v23 = vld [vmem:[%s0 + $0x20] sm:$0xf]
  %v24 = vld [vmem:[%s0 + $0x24] sm:$0xf]
  %v25 = vld [vmem:[%s0 + $0x28] sm:$0xf]
  %v26 = vld [vmem:[%s0 + $0x2c] sm:$0xf]
  %v27 = vld [vmem:[%s0 + $0x30] sm:$0xf]
  %v28 = vld [vmem:[%s0 + $0x34] sm:$0xf]
  %v29 = vld [vmem:[%s0 + $0x38] sm:$0xf]
  %v30 = vld [vmem:[%s0 + $0x3c] sm:$0xf]
  %v31 = vld [vmem:[%s1] sm:$0xf]
  %v32 = vld [vmem:[%s1 + $0x4] sm:$0xf]
  %v33 = vld [vmem:[%s1 + $0x8] sm:$0xf]
  %v34 = vld [vmem:[%s1 + $0xc] sm:$0xf]
  %v35 = vld [vmem:[%s1 + $0x10] sm:$0xf]
  %v36 = vld [vmem:[%s1 + $0x14] sm:$0xf]
  %v37 = vld [vmem:[%s1 + $0x18] sm:$0xf]
  %v38 = vld [vmem:[%s1 + $0x1c] sm:$0xf]
  %v39 = vld [vmem:[%s1 + $0x20] sm:$0xf]
  %v40 = vld [vmem:[%s1 + $0x24] sm:$0xf]
  %v41 = vld [vmem:[%s1 + $0x28] sm:$0xf]
  %v42 = vld [vmem:[%s1 + $0x2c] sm:$0xf]
  %v43 = vld [vmem:[%s1 + $0x30] sm:$0xf]
  %v44 = vld [vmem:[%s1 + $0x34] sm:$0xf]
  %v45 = vld [vmem:[%s1 + $0x38] sm:$0xf]
  %v46 = vld [vmem:[%s1 + $0x3c] sm:$0xf]
  %v47 = vld [vmem:[%s2] sm:$0x1]
  %v48 = vlaneseq
  %v49 = vshrl.u32 %v48, 7
  %v50 = vsub.s32 0, %v49
  %v51 = vrot.slane %v47, %v50
  %v68 = vunpack.c.l.b16 %v15
  %v69 = vunpack.c.l.b16 %v16
  %v70 = vunpack.c.l.b16 %v17
  %v71 = vunpack.c.l.b16 %v18
  %v72 = vunpack.c.l.b16 %v19
  %v73 = vunpack.c.l.b16 %v20
  %v74 = vunpack.c.l.b16 %v21
  %v75 = vunpack.c.l.b16 %v22
  %v76 = vunpack.c.l.b16 %v23
  %v77 = vunpack.c.l.b16 %v24
  %v78 = vunpack.c.l.b16 %v25
  %v79 = vunpack.c.l.b16 %v26
  %v80 = vunpack.c.l.b16 %v27
  %v81 = vunpack.c.l.b16 %v28
  %v82 = vunpack.c.l.b16 %v29
  %v83 = vunpack.c.l.b16 %v30
  %v84 = vpack.c.b16 %v69, %v68
  %v85 = vpack.c.b16 %v71, %v70
  %v86 = vpack.c.b16 %v73, %v72
  %v87 = vpack.c.b16 %v75, %v74
  %v88 = vpack.c.b16 %v77, %v76
  %v89 = vpack.c.b16 %v79, %v78
  %v90 = vpack.c.b16 %v81, %v80
  %v91 = vpack.c.b16 %v83, %v82
  %v116 = vunpack.c.l.b16 %v31
  %v117 = vunpack.c.l.b16 %v32
  %v118 = vunpack.c.l.b16 %v33
  %v119 = vunpack.c.l.b16 %v34
  %v120 = vunpack.c.l.b16 %v35
  %v121 = vunpack.c.l.b16 %v36
  %v122 = vunpack.c.l.b16 %v37
  %v123 = vunpack.c.l.b16 %v38
  %v124 = vunpack.c.l.b16 %v39
  %v125 = vunpack.c.l.b16 %v40
  %v126 = vunpack.c.l.b16 %v41
  %v127 = vunpack.c.l.b16 %v42
  %v128 = vunpack.c.l.b16 %v43
  %v129 = vunpack.c.l.b16 %v44
  %v130 = vunpack.c.l.b16 %v45
  %v131 = vunpack.c.l.b16 %v46
  %v132 = vpack.c.b16 %v117, %v116
  %v133 = vpack.c.b16 %v119, %v118
  %v134 = vpack.c.b16 %v121, %v120
  %v135 = vpack.c.b16 %v123, %v122
  %v136 = vpack.c.b16 %v125, %v124
  %v137 = vpack.c.b16 %v127, %v126
  %v138 = vpack.c.b16 %v129, %v128
  %v139 = vpack.c.b16 %v131, %v130
  %148 = vmatprep.subr.bf16.mxu0 0
  %149 = vmatpush1.bf16.msra.mxu0 %v139
  %150 = vmatprep.subr.bf16.mxu0 0
  %151 = vmatpush1.bf16.msra.mxu0 %v138
  %152 = vmatprep.subr.bf16.mxu0 0
  %153 = vmatpush1.bf16.msra.mxu0 %v137
  %154 = vmatprep.subr.bf16.mxu0 0
  %155 = vmatpush1.bf16.msra.mxu0 %v136
  %156 = vmatprep.subr.bf16.mxu0 0
  %157 = vmatpush1.bf16.msra.mxu0 %v135
  %158 = vmatprep.subr.bf16.mxu0 0
  %159 = vmatpush1.bf16.msra.mxu0 %v134
  %160 = vmatprep.subr.bf16.mxu0 0
  %161 = vmatpush1.bf16.msra.mxu0 %v133
  %162 = vmatprep.subr.bf16.mxu0 0
  %163 = vmatpush1.bf16.msra.mxu0 %v132
  %164 = vmatprep.subr.bf16.mxu0 0
  %165 = vmatpush2.bf16.msra.mxu0 0
  %166 = vmatprep.subr.bf16.mxu0 0
  %167 = vmatpush2.bf16.msra.mxu0 0
  %168 = vmatprep.subr.bf16.mxu0 0
  %169 = vmatpush2.bf16.msra.mxu0 0
  %170 = vmatprep.subr.bf16.mxu0 0
  %171 = vmatpush2.bf16.msra.mxu0 0
  %172 = vmatprep.subr.bf16.mxu0 0
  %173 = vmatpush2.bf16.msra.mxu0 0
  %174 = vmatprep.subr.bf16.mxu0 0
  %175 = vmatpush2.bf16.msra.mxu0 0
  %176 = vmatprep.subr.bf16.mxu0 0
  %177 = vmatpush2.bf16.msra.mxu0 0
  %178 = vmatprep.subr.bf16.mxu0 0
  %179 = vmatpush2.bf16.msra.mxu0 0
  %180 = vmatprep.mubr.bf16.mxu0 0
  %181 = vmatmul.mubr.bf16.gmra.mxu0 %v84
  %v182 = vpop.f32.mrf.mxu0
  %v183 = vadd.f32 %v51, %v182
  %v184 = vpop.f32.mrf.mxu0
  %v185 = vpop.f32.mrf.mxu0
  %v186 = vadd.f32 %v51, %v185
  %v187 = vpop.f32.mrf.mxu0
  %188 = vmatprep.mubr.bf16.mxu0 0
  %189 = vmatmul.mubr.bf16.gmra.mxu0 %v85
  %v190 = vpop.f32.mrf.mxu0
  %v191 = vadd.f32 %v51, %v190
  %v192 = vpop.f32.mrf.mxu0
  %v193 = vpop.f32.mrf.mxu0
  %v194 = vadd.f32 %v51, %v193
  %v195 = vpop.f32.mrf.mxu0
  %196 = vmatprep.mubr.bf16.mxu0 0
  %197 = vmatmul.mubr.bf16.gmra.mxu0 %v86
  %v198 = vpop.f32.mrf.mxu0
  %v199 = vadd.f32 %v51, %v198
  %v200 = vpop.f32.mrf.mxu0
  %v201 = vpop.f32.mrf.mxu0
  %v202 = vadd.f32 %v51, %v201
  %v203 = vpop.f32.mrf.mxu0
  %204 = vmatprep.mubr.bf16.mxu0 0
  %205 = vmatmul.mubr.bf16.gmra.mxu0 %v87
  %v206 = vpop.f32.mrf.mxu0
  %v207 = vadd.f32 %v51, %v206
  %v208 = vpop.f32.mrf.mxu0
  %v209 = vpop.f32.mrf.mxu0
  %v210 = vadd.f32 %v51, %v209
  %v211 = vpop.f32.mrf.mxu0
  %212 = vmatprep.mubr.bf16.mxu0 0
  %213 = vmatmul.mubr.bf16.gmra.mxu0 %v88
  %v214 = vpop.f32.mrf.mxu0
  %v215 = vadd.f32 %v51, %v214
  %v216 = vpop.f32.mrf.mxu0
  %v217 = vpop.f32.mrf.mxu0
  %v218 = vadd.f32 %v51, %v217
  %v219 = vpop.f32.mrf.mxu0
  %220 = vmatprep.mubr.bf16.mxu0 0
  %221 = vmatmul.mubr.bf16.gmra.mxu0 %v89
  %v222 = vpop.f32.mrf.mxu0
  %v223 = vadd.f32 %v51, %v222
  %v224 = vpop.f32.mrf.mxu0
  %v225 = vpop.f32.mrf.mxu0
  %v226 = vadd.f32 %v51, %v225
  %v227 = vpop.f32.mrf.mxu0
  %228 = vmatprep.mubr.bf16.mxu0 0
  %229 = vmatmul.mubr.bf16.gmra.mxu0 %v90
  %v230 = vpop.f32.mrf.mxu0
  %v231 = vadd.f32 %v51, %v230
  %v232 = vpop.f32.mrf.mxu0
  %v233 = vpop.f32.mrf.mxu0
  %v234 = vadd.f32 %v51, %v233
  %v235 = vpop.f32.mrf.mxu0
  %236 = vmatprep.mubr.bf16.mxu0 0
  %237 = vmatmul.mubr.bf16.gmra.mxu0 %v91
  %v238 = vpop.f32.mrf.mxu0
  %v239 = vadd.f32 %v51, %v238
  %v240 = vpop.f32.mrf.mxu0
  %v241 = vpop.f32.mrf.mxu0
  %v242 = vadd.f32 %v51, %v241
  %v243 = vpop.f32.mrf.mxu0
  %244 = vdwg.mxu0
  %v245 = vmax.f32 %v183, 0.0
  %v246 = vmax.f32 %v186, 0.0
  %v247 = vmax.f32 %v191, 0.0
  %v248 = vmax.f32 %v194, 0.0
  %v249 = vmax.f32 %v199, 0.0
  %v250 = vmax.f32 %v202, 0.0
  %v251 = vmax.f32 %v207, 0.0
  %v252 = vmax.f32 %v210, 0.0
  %v253 = vmax.f32 %v215, 0.0
  %v254 = vmax.f32 %v218, 0.0
  %v255 = vmax.f32 %v223, 0.0
  %v256 = vmax.f32 %v226, 0.0
  %v257 = vmax.f32 %v231, 0.0
  %v258 = vmax.f32 %v234, 0.0
  %v259 = vmax.f32 %v239, 0.0
  %v260 = vmax.f32 %v242, 0.0
  %v261 = vpack.c.bf16 %v246, %v245
  %v262 = vpack.c.bf16 %v248, %v247
  %v263 = vpack.c.bf16 %v250, %v249
  %v264 = vpack.c.bf16 %v252, %v251
  %v265 = vpack.c.bf16 %v254, %v253
  %v266 = vpack.c.bf16 %v256, %v255
  %v267 = vpack.c.bf16 %v258, %v257
  %v268 = vpack.c.bf16 %v260, %v259
  %v277 = vunpack.c.l.b16 %v261
  %v278 = vunpack.c.h.b16 %v261
  %v279 = vunpack.c.l.b16 %v262
  %v280 = vunpack.c.h.b16 %v262
  %v281 = vunpack.c.l.b16 %v263
  %v282 = vunpack.c.h.b16 %v263
  %v283 = vunpack.c.l.b16 %v264
  %v284 = vunpack.c.h.b16 %v264
  %v285 = vunpack.c.l.b16 %v265
  %v286 = vunpack.c.h.b16 %v265
  %v287 = vunpack.c.l.b16 %v266
  %v288 = vunpack.c.h.b16 %v266
  %v289 = vunpack.c.l.b16 %v267
  %v290 = vunpack.c.h.b16 %v267
  %v291 = vunpack.c.l.b16 %v268
  %v292 = vunpack.c.h.b16 %v268
  %v293 = vpack.c.b16 %v277, %v277
  %v294 = vpack.c.b16 %v278, %v278
  %v295 = vpack.c.b16 %v279, %v279
  %v296 = vpack.c.b16 %v280, %v280
  %v297 = vpack.c.b16 %v281, %v281
  %v298 = vpack.c.b16 %v282, %v282
  %v299 = vpack.c.b16 %v283, %v283
  %v300 = vpack.c.b16 %v284, %v284
  %v301 = vpack.c.b16 %v285, %v285
  %v302 = vpack.c.b16 %v286, %v286
  %v303 = vpack.c.b16 %v287, %v287
  %v304 = vpack.c.b16 %v288, %v288
  %v305 = vpack.c.b16 %v289, %v289
  %v306 = vpack.c.b16 %v290, %v290
  %v307 = vpack.c.b16 %v291, %v291
  %v308 = vpack.c.b16 %v292, %v292
  %325 = vst [vmem:[%s3] sm:$0xf] %v293
  %326 = vst [vmem:[%s3 + $0x4] sm:$0xf] %v294
  %327 = vst [vmem:[%s3 + $0x8] sm:$0xf] %v295
  %328 = vst [vmem:[%s3 + $0xc] sm:$0xf] %v296
  %329 = vst [vmem:[%s3 + $0x10] sm:$0xf] %v297
  %330 = vst [vmem:[%s3 + $0x14] sm:$0xf] %v298
  %331 = vst [vmem:[%s3 + $0x18] sm:$0xf] %v299
  %332 = vst [vmem:[%s3 + $0x1c] sm:$0xf] %v300
  %333 = vst [vmem:[%s3 + $0x20] sm:$0xf] %v301
  %334 = vst [vmem:[%s3 + $0x24] sm:$0xf] %v302
  %335 = vst [vmem:[%s3 + $0x28] sm:$0xf] %v303
  %336 = vst [vmem:[%s3 + $0x2c] sm:$0xf] %v304
  %337 = vst [vmem:[%s3 + $0x30] sm:$0xf] %v305
  %338 = vst [vmem:[%s3 + $0x34] sm:$0xf] %v306
  %339 = vst [vmem:[%s3 + $0x38] sm:$0xf] %v307
  %340 = vst [vmem:[%s3 + $0x3c] sm:$0xf] %v308
  // Predicated region
  $region14: #{resnet_autoencoder_forward.19} parent=0 // pred_check
    _
  $region15: #{resnet_autoencoder_forward.19} parent=0 // pred_check_branch
    %342 = sbr.rel (0) target = $region17
  $region16: #{resnet_autoencoder_forward.19} parent=0 // pred_region
    _
  $region17: #{resnet_autoencoder_forward.19} parent=0 // pred_fallthru
    _
  // Predicated region
  $region18: #{resnet_autoencoder_forward.19} parent=0 // pred_check
    _
  $region19: #{resnet_autoencoder_forward.19} parent=0 // pred_check_branch
    %344 = sbr.rel (0) target = $region21
  $region20: #{resnet_autoencoder_forward.19} parent=0 // pred_region
    _
  $region21: #{resnet_autoencoder_forward.19} parent=0 // pred_fallthru
    _

// kernel: resnet_autoencoder_forward.20
$region0: #{resnet_autoencoder_forward.20}
  #allocation0 [shape = 'u32[]', space=smem, size = 0x4, offset = 0x4, fixed_abs, tag = 'smem constant byte address 0x4 - core index']
  #allocation1 [shape = 'u32[144,128]{1,0:T(1,128)}', space=vmem, size = 0x12000, scoped, tag = 'internal scratch']
  %s0 = inlined_call_operand.vmem [shape: bf16[128,128], index: 0, kind: input, shape index: {}]
  %s1 = inlined_call_operand.vmem [shape: bf16[128,128], index: 1, kind: input, shape index: {}]
  %s2 = inlined_call_operand.vmem [shape: f32[2,128], index: 2, kind: input, shape index: {}]
  %s3 = inlined_call_operand.vmem [shape: bf16[128,128], index: 3, kind: input, shape index: {}]
  %s4 = inlined_call_operand.vmem [shape: bf16[128,128], index: 4, kind: output, shape index: {}]
  %s5 = sld [smem:[#allocation0]]
  $region26: #{resnet_autoencoder_forward.20} parent=0
    _
  %s7 = ssub.s32 1, %s5
  %s8 = scalar_select 0, %s7, %s5
  // Predicated region
  $region2: #{resnet_autoencoder_forward.20} parent=0 // pred_check
    _
  $region3: #{resnet_autoencoder_forward.20} parent=0 // pred_check_branch
    %10 = sbr.rel (0) target = $region5
  $region4: #{resnet_autoencoder_forward.20} parent=0 // pred_region
    _
  $region5: #{resnet_autoencoder_forward.20} parent=0 // pred_fallthru
    _
  // Predicated region
  $region6: #{resnet_autoencoder_forward.20} parent=0 // pred_check
    _
  $region7: #{resnet_autoencoder_forward.20} parent=0 // pred_check_branch
    %12 = sbr.rel (0) target = $region9
  $region8: #{resnet_autoencoder_forward.20} parent=0 // pred_region
    _
  $region9: #{resnet_autoencoder_forward.20} parent=0 // pred_fallthru
    _
  // Predicated region
  $region10: #{resnet_autoencoder_forward.20} parent=0 // pred_check
    _
  $region11: #{resnet_autoencoder_forward.20} parent=0 // pred_check_branch
    %14 = sbr.rel (0) target = $region13
  $region12: #{resnet_autoencoder_forward.20} parent=0 // pred_region
    _
  $region13: #{resnet_autoencoder_forward.20} parent=0 // pred_fallthru
    _
  // Predicated region
  $region14: #{resnet_autoencoder_forward.20} parent=0 // pred_check
    _
  $region15: #{resnet_autoencoder_forward.20} parent=0 // pred_check_branch
    %16 = sbr.rel (0) target = $region17
  $region16: #{resnet_autoencoder_forward.20} parent=0 // pred_region
    _
  $region17: #{resnet_autoencoder_forward.20} parent=0 // pred_fallthru
    _
  %v18 = vld [vmem:[%s0] sm:$0xf]
  %v19 = vld [vmem:[%s0 + $0x4] sm:$0xf]
  %v20 = vld [vmem:[%s0 + $0x8] sm:$0xf]
  %v21 = vld [vmem:[%s0 + $0xc] sm:$0xf]
  %v22 = vld [vmem:[%s0 + $0x10] sm:$0xf]
  %v23 = vld [vmem:[%s0 + $0x14] sm:$0xf]
  %v24 = vld [vmem:[%s0 + $0x18] sm:$0xf]
  %v25 = vld [vmem:[%s0 + $0x1c] sm:$0xf]
  %v26 = vld [vmem:[%s0 + $0x20] sm:$0xf]
  %v27 = vld [vmem:[%s0 + $0x24] sm:$0xf]
  %v28 = vld [vmem:[%s0 + $0x28] sm:$0xf]
  %v29 = vld [vmem:[%s0 + $0x2c] sm:$0xf]
  %v30 = vld [vmem:[%s0 + $0x30] sm:$0xf]
  %v31 = vld [vmem:[%s0 + $0x34] sm:$0xf]
  %v32 = vld [vmem:[%s0 + $0x38] sm:$0xf]
  %v33 = vld [vmem:[%s0 + $0x3c] sm:$0xf]
  %v34 = vld [vmem:[%s1] sm:$0xf]
  %v35 = vld [vmem:[%s1 + $0x4] sm:$0xf]
  %v36 = vld [vmem:[%s1 + $0x8] sm:$0xf]
  %v37 = vld [vmem:[%s1 + $0xc] sm:$0xf]
  %v38 = vld [vmem:[%s1 + $0x10] sm:$0xf]
  %v39 = vld [vmem:[%s1 + $0x14] sm:$0xf]
  %v40 = vld [vmem:[%s1 + $0x18] sm:$0xf]
  %v41 = vld [vmem:[%s1 + $0x1c] sm:$0xf]
  %v42 = vld [vmem:[%s1 + $0x20] sm:$0xf]
  %v43 = vld [vmem:[%s1 + $0x24] sm:$0xf]
  %v44 = vld [vmem:[%s1 + $0x28] sm:$0xf]
  %v45 = vld [vmem:[%s1 + $0x2c] sm:$0xf]
  %v46 = vld [vmem:[%s1 + $0x30] sm:$0xf]
  %v47 = vld [vmem:[%s1 + $0x34] sm:$0xf]
  %v48 = vld [vmem:[%s1 + $0x38] sm:$0xf]
  %v49 = vld [vmem:[%s1 + $0x3c] sm:$0xf]
  %v50 = vld [vmem:[%s2] sm:$0x1]
  %v51 = vlaneseq
  %v52 = vshrl.u32 %v51, 7
  %v53 = vsub.s32 0, %v52
  %v54 = vrot.slane %v50, %v53
  %v71 = vunpack.c.l.b16 %v18
  %v72 = vunpack.c.l.b16 %v19
  %v73 = vunpack.c.l.b16 %v20
  %v74 = vunpack.c.l.b16 %v21
  %v75 = vunpack.c.l.b16 %v22
  %v76 = vunpack.c.l.b16 %v23
  %v77 = vunpack.c.l.b16 %v24
  %v78 = vunpack.c.l.b16 %v25
  %v79 = vunpack.c.l.b16 %v26
  %v80 = vunpack.c.l.b16 %v27
  %v81 = vunpack.c.l.b16 %v28
  %v82 = vunpack.c.l.b16 %v29
  %v83 = vunpack.c.l.b16 %v30
  %v84 = vunpack.c.l.b16 %v31
  %v85 = vunpack.c.l.b16 %v32
  %v86 = vunpack.c.l.b16 %v33
  %v87 = vpack.c.b16 %v72, %v71
  %v88 = vpack.c.b16 %v74, %v73
  %v89 = vpack.c.b16 %v76, %v75
  %v90 = vpack.c.b16 %v78, %v77
  %v91 = vpack.c.b16 %v80, %v79
  %v92 = vpack.c.b16 %v82, %v81
  %v93 = vpack.c.b16 %v84, %v83
  %v94 = vpack.c.b16 %v86, %v85
  %v119 = vunpack.c.l.b16 %v34
  %v120 = vunpack.c.l.b16 %v35
  %v121 = vunpack.c.l.b16 %v36
  %v122 = vunpack.c.l.b16 %v37
  %v123 = vunpack.c.l.b16 %v38
  %v124 = vunpack.c.l.b16 %v39
  %v125 = vunpack.c.l.b16 %v40
  %v126 = vunpack.c.l.b16 %v41
  %v127 = vunpack.c.l.b16 %v42
  %v128 = vunpack.c.l.b16 %v43
  %v129 = vunpack.c.l.b16 %v44
  %v130 = vunpack.c.l.b16 %v45
  %v131 = vunpack.c.l.b16 %v46
  %v132 = vunpack.c.l.b16 %v47
  %v133 = vunpack.c.l.b16 %v48
  %v134 = vunpack.c.l.b16 %v49
  %v135 = vpack.c.b16 %v120, %v119
  %v136 = vpack.c.b16 %v122, %v121
  %v137 = vpack.c.b16 %v124, %v123
  %v138 = vpack.c.b16 %v126, %v125
  %v139 = vpack.c.b16 %v128, %v127
  %v140 = vpack.c.b16 %v130, %v129
  %v141 = vpack.c.b16 %v132, %v131
  %v142 = vpack.c.b16 %v134, %v133
  %151 = vmatprep.subr.bf16.mxu0 0
  %152 = vmatpush1.bf16.msra.mxu0 %v142
  %153 = vmatprep.subr.bf16.mxu0 0
  %154 = vmatpush1.bf16.msra.mxu0 %v141
  %155 = vmatprep.subr.bf16.mxu0 0
  %156 = vmatpush1.bf16.msra.mxu0 %v140
  %157 = vmatprep.subr.bf16.mxu0 0
  %158 = vmatpush1.bf16.msra.mxu0 %v139
  %159 = vmatprep.subr.bf16.mxu0 0
  %160 = vmatpush1.bf16.msra.mxu0 %v138
  %161 = vmatprep.subr.bf16.mxu0 0
  %162 = vmatpush1.bf16.msra.mxu0 %v137
  %163 = vmatprep.subr.bf16.mxu0 0
  %164 = vmatpush1.bf16.msra.mxu0 %v136
  %165 = vmatprep.subr.bf16.mxu0 0
  %166 = vmatpush1.bf16.msra.mxu0 %v135
  %167 = vmatprep.subr.bf16.mxu0 0
  %168 = vmatpush2.bf16.msra.mxu0 0
  %169 = vmatprep.subr.bf16.mxu0 0
  %170 = vmatpush2.bf16.msra.mxu0 0
  %171 = vmatprep.subr.bf16.mxu0 0
  %172 = vmatpush2.bf16.msra.mxu0 0
  %173 = vmatprep.subr.bf16.mxu0 0
  %174 = vmatpush2.bf16.msra.mxu0 0
  %175 = vmatprep.subr.bf16.mxu0 0
  %176 = vmatpush2.bf16.msra.mxu0 0
  %177 = vmatprep.subr.bf16.mxu0 0
  %178 = vmatpush2.bf16.msra.mxu0 0
  %179 = vmatprep.subr.bf16.mxu0 0
  %180 = vmatpush2.bf16.msra.mxu0 0
  %181 = vmatprep.subr.bf16.mxu0 0
  %182 = vmatpush2.bf16.msra.mxu0 0
  %183 = vmatprep.mubr.bf16.mxu0 0
  %184 = vmatmul.mubr.bf16.gmra.mxu0 %v87
  %v185 = vpop.f32.mrf.mxu0
  %v186 = vadd.f32 %v54, %v185
  %v187 = vpop.f32.mrf.mxu0
  %v188 = vpop.f32.mrf.mxu0
  %v189 = vadd.f32 %v54, %v188
  %v190 = vpop.f32.mrf.mxu0
  %191 = vmatprep.mubr.bf16.mxu0 0
  %192 = vmatmul.mubr.bf16.gmra.mxu0 %v88
  %v193 = vpop.f32.mrf.mxu0
  %v194 = vadd.f32 %v54, %v193
  %v195 = vpop.f32.mrf.mxu0
  %v196 = vpop.f32.mrf.mxu0
  %v197 = vadd.f32 %v54, %v196
  %v198 = vpop.f32.mrf.mxu0
  %199 = vmatprep.mubr.bf16.mxu0 0
  %200 = vmatmul.mubr.bf16.gmra.mxu0 %v89
  %v201 = vpop.f32.mrf.mxu0
  %v202 = vadd.f32 %v54, %v201
  %v203 = vpop.f32.mrf.mxu0
  %v204 = vpop.f32.mrf.mxu0
  %v205 = vadd.f32 %v54, %v204
  %v206 = vpop.f32.mrf.mxu0
  %207 = vmatprep.mubr.bf16.mxu0 0
  %208 = vmatmul.mubr.bf16.gmra.mxu0 %v90
  %v209 = vpop.f32.mrf.mxu0
  %v210 = vadd.f32 %v54, %v209
  %v211 = vpop.f32.mrf.mxu0
  %v212 = vpop.f32.mrf.mxu0
  %v213 = vadd.f32 %v54, %v212
  %v214 = vpop.f32.mrf.mxu0
  %215 = vmatprep.mubr.bf16.mxu0 0
  %216 = vmatmul.mubr.bf16.gmra.mxu0 %v91
  %v217 = vpop.f32.mrf.mxu0
  %v218 = vadd.f32 %v54, %v217
  %v219 = vpop.f32.mrf.mxu0
  %v220 = vpop.f32.mrf.mxu0
  %v221 = vadd.f32 %v54, %v220
  %v222 = vpop.f32.mrf.mxu0
  %223 = vmatprep.mubr.bf16.mxu0 0
  %224 = vmatmul.mubr.bf16.gmra.mxu0 %v92
  %v225 = vpop.f32.mrf.mxu0
  %v226 = vadd.f32 %v54, %v225
  %v227 = vpop.f32.mrf.mxu0
  %v228 = vpop.f32.mrf.mxu0
  %v229 = vadd.f32 %v54, %v228
  %v230 = vpop.f32.mrf.mxu0
  %231 = vmatprep.mubr.bf16.mxu0 0
  %232 = vmatmul.mubr.bf16.gmra.mxu0 %v93
  %v233 = vpop.f32.mrf.mxu0
  %v234 = vadd.f32 %v54, %v233
  %v235 = vpop.f32.mrf.mxu0
  %v236 = vpop.f32.mrf.mxu0
  %v237 = vadd.f32 %v54, %v236
  %v238 = vpop.f32.mrf.mxu0
  %239 = vmatprep.mubr.bf16.mxu0 0
  %240 = vmatmul.mubr.bf16.gmra.mxu0 %v94
  %v241 = vpop.f32.mrf.mxu0
  %v242 = vadd.f32 %v54, %v241
  %v243 = vpop.f32.mrf.mxu0
  %v244 = vpop.f32.mrf.mxu0
  %v245 = vadd.f32 %v54, %v244
  %v246 = vpop.f32.mrf.mxu0
  %247 = vdwg.mxu0
  %v248 = vld [vmem:[%s3] sm:$0xf]
  %v249 = vld [vmem:[%s3 + $0x4] sm:$0xf]
  %v250 = vld [vmem:[%s3 + $0x8] sm:$0xf]
  %v251 = vld [vmem:[%s3 + $0xc] sm:$0xf]
  %v252 = vld [vmem:[%s3 + $0x10] sm:$0xf]
  %v253 = vld [vmem:[%s3 + $0x14] sm:$0xf]
  %v254 = vld [vmem:[%s3 + $0x18] sm:$0xf]
  %v255 = vld [vmem:[%s3 + $0x1c] sm:$0xf]
  %v256 = vld [vmem:[%s3 + $0x20] sm:$0xf]
  %v257 = vld [vmem:[%s3 + $0x24] sm:$0xf]
  %v258 = vld [vmem:[%s3 + $0x28] sm:$0xf]
  %v259 = vld [vmem:[%s3 + $0x2c] sm:$0xf]
  %v260 = vld [vmem:[%s3 + $0x30] sm:$0xf]
  %v261 = vld [vmem:[%s3 + $0x34] sm:$0xf]
  %v262 = vld [vmem:[%s3 + $0x38] sm:$0xf]
  %v263 = vld [vmem:[%s3 + $0x3c] sm:$0xf]
  %v264 = vunpack.c.l.bf16 %v248
  %v265 = vunpack.c.l.bf16 %v249
  %v266 = vunpack.c.l.bf16 %v250
  %v267 = vunpack.c.l.bf16 %v251
  %v268 = vunpack.c.l.bf16 %v252
  %v269 = vunpack.c.l.bf16 %v253
  %v270 = vunpack.c.l.bf16 %v254
  %v271 = vunpack.c.l.bf16 %v255
  %v272 = vunpack.c.l.bf16 %v256
  %v273 = vunpack.c.l.bf16 %v257
  %v274 = vunpack.c.l.bf16 %v258
  %v275 = vunpack.c.l.bf16 %v259
  %v276 = vunpack.c.l.bf16 %v260
  %v277 = vunpack.c.l.bf16 %v261
  %v278 = vunpack.c.l.bf16 %v262
  %v279 = vunpack.c.l.bf16 %v263
  %v280 = vadd.f32 %v186, %v264
  %v281 = vadd.f32 %v189, %v265
  %v282 = vadd.f32 %v194, %v266
  %v283 = vadd.f32 %v197, %v267
  %v284 = vadd.f32 %v202, %v268
  %v285 = vadd.f32 %v205, %v269
  %v286 = vadd.f32 %v210, %v270
  %v287 = vadd.f32 %v213, %v271
  %v288 = vadd.f32 %v218, %v272
  %v289 = vadd.f32 %v221, %v273
  %v290 = vadd.f32 %v226, %v274
  %v291 = vadd.f32 %v229, %v275
  %v292 = vadd.f32 %v234, %v276
  %v293 = vadd.f32 %v237, %v277
  %v294 = vadd.f32 %v242, %v278
  %v295 = vadd.f32 %v245, %v279
  %v296 = vmax.f32 %v280, 0.0
  %v297 = vmax.f32 %v281, 0.0
  %v298 = vmax.f32 %v282, 0.0
  %v299 = vmax.f32 %v283, 0.0
  %v300 = vmax.f32 %v284, 0.0
  %v301 = vmax.f32 %v285, 0.0
  %v302 = vmax.f32 %v286, 0.0
  %v303 = vmax.f32 %v287, 0.0
  %v304 = vmax.f32 %v288, 0.0
  %v305 = vmax.f32 %v289, 0.0
  %v306 = vmax.f32 %v290, 0.0
  %v307 = vmax.f32 %v291, 0.0
  %v308 = vmax.f32 %v292, 0.0
  %v309 = vmax.f32 %v293, 0.0
  %v310 = vmax.f32 %v294, 0.0
  %v311 = vmax.f32 %v295, 0.0
  %v312 = vpack.c.bf16 %v297, %v296
  %v313 = vpack.c.bf16 %v299, %v298
  %v314 = vpack.c.bf16 %v301, %v300
  %v315 = vpack.c.bf16 %v303, %v302
  %v316 = vpack.c.bf16 %v305, %v304
  %v317 = vpack.c.bf16 %v307, %v306
  %v318 = vpack.c.bf16 %v309, %v308
  %v319 = vpack.c.bf16 %v311, %v310
  %v328 = vunpack.c.l.b16 %v312
  %v329 = vunpack.c.h.b16 %v312
  %v330 = vunpack.c.l.b16 %v313
  %v331 = vunpack.c.h.b16 %v313
  %v332 = vunpack.c.l.b16 %v314
  %v333 = vunpack.c.h.b16 %v314
  %v334 = vunpack.c.l.b16 %v315
  %v335 = vunpack.c.h.b16 %v315
  %v336 = vunpack.c.l.b16 %v316
  %v337 = vunpack.c.h.b16 %v316
  %v338 = vunpack.c.l.b16 %v317
  %v339 = vunpack.c.h.b16 %v317
  %v340 = vunpack.c.l.b16 %v318
  %v341 = vunpack.c.h.b16 %v318
  %v342 = vunpack.c.l.b16 %v319
  %v343 = vunpack.c.h.b16 %v319
  %v344 = vpack.c.b16 %v328, %v328
  %v345 = vpack.c.b16 %v329, %v329
  %v346 = vpack.c.b16 %v330, %v330
  %v347 = vpack.c.b16 %v331, %v331
  %v348 = vpack.c.b16 %v332, %v332
  %v349 = vpack.c.b16 %v333, %v333
  %v350 = vpack.c.b16 %v334, %v334
  %v351 = vpack.c.b16 %v335, %v335
  %v352 = vpack.c.b16 %v336, %v336
  %v353 = vpack.c.b16 %v337, %v337
  %v354 = vpack.c.b16 %v338, %v338
  %v355 = vpack.c.b16 %v339, %v339
  %v356 = vpack.c.b16 %v340, %v340
  %v357 = vpack.c.b16 %v341, %v341
  %v358 = vpack.c.b16 %v342, %v342
  %v359 = vpack.c.b16 %v343, %v343
  %376 = vst [vmem:[%s4] sm:$0xf] %v344
  %377 = vst [vmem:[%s4 + $0x4] sm:$0xf] %v345
  %378 = vst [vmem:[%s4 + $0x8] sm:$0xf] %v346
  %379 = vst [vmem:[%s4 + $0xc] sm:$0xf] %v347
  %380 = vst [vmem:[%s4 + $0x10] sm:$0xf] %v348
  %381 = vst [vmem:[%s4 + $0x14] sm:$0xf] %v349
  %382 = vst [vmem:[%s4 + $0x18] sm:$0xf] %v350
  %383 = vst [vmem:[%s4 + $0x1c] sm:$0xf] %v351
  %384 = vst [vmem:[%s4 + $0x20] sm:$0xf] %v352
  %385 = vst [vmem:[%s4 + $0x24] sm:$0xf] %v353
  %386 = vst [vmem:[%s4 + $0x28] sm:$0xf] %v354
  %387 = vst [vmem:[%s4 + $0x2c] sm:$0xf] %v355
  %388 = vst [vmem:[%s4 + $0x30] sm:$0xf] %v356
  %389 = vst [vmem:[%s4 + $0x34] sm:$0xf] %v357
  %390 = vst [vmem:[%s4 + $0x38] sm:$0xf] %v358
  %391 = vst [vmem:[%s4 + $0x3c] sm:$0xf] %v359
  // Predicated region
  $region18: #{resnet_autoencoder_forward.20} parent=0 // pred_check
    _
  $region19: #{resnet_autoencoder_forward.20} parent=0 // pred_check_branch
    %393 = sbr.rel (0) target = $region21
  $region20: #{resnet_autoencoder_forward.20} parent=0 // pred_region
    _
  $region21: #{resnet_autoencoder_forward.20} parent=0 // pred_fallthru
    _
  // Predicated region
  $region22: #{resnet_autoencoder_forward.20} parent=0 // pred_check
    _
  $region23: #{resnet_autoencoder_forward.20} parent=0 // pred_check_branch
    %395 = sbr.rel (0) target = $region25
  $region24: #{resnet_autoencoder_forward.20} parent=0 // pred_region
    _
  $region25: #{resnet_autoencoder_forward.20} parent=0 // pred_fallthru
    _

// kernel: resnet_autoencoder_forward.21
$region0: #{resnet_autoencoder_forward.21}
  #allocation0 [shape = 'u32[]', space=smem, size = 0x4, offset = 0x4, fixed_abs, tag = 'smem constant byte address 0x4 - core index']
  #allocation1 [shape = 'u32[144,128]{1,0:T(1,128)}', space=vmem, size = 0x12000, scoped, tag = 'internal scratch']
  %s0 = inlined_call_operand.vmem [shape: bf16[32,128], index: 0, kind: input, shape index: {}]
  %s1 = inlined_call_operand.vmem [shape: bf16[128,128], index: 1, kind: input, shape index: {}]
  %s2 = inlined_call_operand.vmem [shape: f32[2,128], index: 2, kind: input, shape index: {}]
  %s3 = inlined_call_operand.vmem [shape: bf16[32,128], index: 3, kind: output, shape index: {}]
  %s4 = sld [smem:[#allocation0]]
  $region22: #{resnet_autoencoder_forward.21} parent=0
    _
  %s6 = ssub.s32 1, %s4
  %s7 = scalar_select 0, %s6, %s4
  // Predicated region
  $region2: #{resnet_autoencoder_forward.21} parent=0 // pred_check
    _
  $region3: #{resnet_autoencoder_forward.21} parent=0 // pred_check_branch
    %9 = sbr.rel (0) target = $region5
  $region4: #{resnet_autoencoder_forward.21} parent=0 // pred_region
    _
  $region5: #{resnet_autoencoder_forward.21} parent=0 // pred_fallthru
    _
  // Predicated region
  $region6: #{resnet_autoencoder_forward.21} parent=0 // pred_check
    _
  $region7: #{resnet_autoencoder_forward.21} parent=0 // pred_check_branch
    %11 = sbr.rel (0) target = $region9
  $region8: #{resnet_autoencoder_forward.21} parent=0 // pred_region
    _
  $region9: #{resnet_autoencoder_forward.21} parent=0 // pred_fallthru
    _
  // Predicated region
  $region10: #{resnet_autoencoder_forward.21} parent=0 // pred_check
    _
  $region11: #{resnet_autoencoder_forward.21} parent=0 // pred_check_branch
    %13 = sbr.rel (0) target = $region13
  $region12: #{resnet_autoencoder_forward.21} parent=0 // pred_region
    _
  $region13: #{resnet_autoencoder_forward.21} parent=0 // pred_fallthru
    _
  %v15 = vld [vmem:[%s0] sm:$0xf]
  %v16 = vld [vmem:[%s0 + $0x4] sm:$0xf]
  %v17 = vld [vmem:[%s0 + $0x8] sm:$0xf]
  %v18 = vld [vmem:[%s0 + $0xc] sm:$0xf]
  %v19 = vld [vmem:[%s1] sm:$0xf]
  %v20 = vld [vmem:[%s1 + $0x4] sm:$0xf]
  %v21 = vld [vmem:[%s1 + $0x8] sm:$0xf]
  %v22 = vld [vmem:[%s1 + $0xc] sm:$0xf]
  %v23 = vld [vmem:[%s1 + $0x10] sm:$0xf]
  %v24 = vld [vmem:[%s1 + $0x14] sm:$0xf]
  %v25 = vld [vmem:[%s1 + $0x18] sm:$0xf]
  %v26 = vld [vmem:[%s1 + $0x1c] sm:$0xf]
  %v27 = vld [vmem:[%s1 + $0x20] sm:$0xf]
  %v28 = vld [vmem:[%s1 + $0x24] sm:$0xf]
  %v29 = vld [vmem:[%s1 + $0x28] sm:$0xf]
  %v30 = vld [vmem:[%s1 + $0x2c] sm:$0xf]
  %v31 = vld [vmem:[%s1 + $0x30] sm:$0xf]
  %v32 = vld [vmem:[%s1 + $0x34] sm:$0xf]
  %v33 = vld [vmem:[%s1 + $0x38] sm:$0xf]
  %v34 = vld [vmem:[%s1 + $0x3c] sm:$0xf]
  %v35 = vld [vmem:[%s2] sm:$0x1]
  %v36 = vlaneseq
  %v37 = vshrl.u32 %v36, 7
  %v38 = vsub.s32 0, %v37
  %v39 = vrot.slane %v35, %v38
  %v44 = vunpack.c.l.b16 %v15
  %v45 = vunpack.c.l.b16 %v16
  %v46 = vunpack.c.l.b16 %v17
  %v47 = vunpack.c.l.b16 %v18
  %v48 = vpack.c.b16 %v45, %v44
  %v49 = vpack.c.b16 %v47, %v46
  %v68 = vunpack.c.l.b16 %v19
  %v69 = vunpack.c.l.b16 %v20
  %v70 = vunpack.c.l.b16 %v21
  %v71 = vunpack.c.l.b16 %v22
  %v72 = vunpack.c.l.b16 %v23
  %v73 = vunpack.c.l.b16 %v24
  %v74 = vunpack.c.l.b16 %v25
  %v75 = vunpack.c.l.b16 %v26
  %v76 = vunpack.c.l.b16 %v27
  %v77 = vunpack.c.l.b16 %v28
  %v78 = vunpack.c.l.b16 %v29
  %v79 = vunpack.c.l.b16 %v30
  %v80 = vunpack.c.l.b16 %v31
  %v81 = vunpack.c.l.b16 %v32
  %v82 = vunpack.c.l.b16 %v33
  %v83 = vunpack.c.l.b16 %v34
  %v84 = vpack.c.b16 %v69, %v68
  %v85 = vpack.c.b16 %v71, %v70
  %v86 = vpack.c.b16 %v73, %v72
  %v87 = vpack.c.b16 %v75, %v74
  %v88 = vpack.c.b16 %v77, %v76
  %v89 = vpack.c.b16 %v79, %v78
  %v90 = vpack.c.b16 %v81, %v80
  %v91 = vpack.c.b16 %v83, %v82
  %100 = vmatprep.subr.bf16.mxu0 0
  %101 = vmatpush1.bf16.msra.mxu0 %v91
  %102 = vmatprep.subr.bf16.mxu0 0
  %103 = vmatpush1.bf16.msra.mxu0 %v90
  %104 = vmatprep.subr.bf16.mxu0 0
  %105 = vmatpush1.bf16.msra.mxu0 %v89
  %106 = vmatprep.subr.bf16.mxu0 0
  %107 = vmatpush1.bf16.msra.mxu0 %v88
  %108 = vmatprep.subr.bf16.mxu0 0
  %109 = vmatpush1.bf16.msra.mxu0 %v87
  %110 = vmatprep.subr.bf16.mxu0 0
  %111 = vmatpush1.bf16.msra.mxu0 %v86
  %112 = vmatprep.subr.bf16.mxu0 0
  %113 = vmatpush1.bf16.msra.mxu0 %v85
  %114 = vmatprep.subr.bf16.mxu0 0
  %115 = vmatpush1.bf16.msra.mxu0 %v84
  %116 = vmatprep.subr.bf16.mxu0 0
  %117 = vmatpush2.bf16.msra.mxu0 0
  %118 = vmatprep.subr.bf16.mxu0 0
  %119 = vmatpush2.bf16.msra.mxu0 0
  %120 = vmatprep.subr.bf16.mxu0 0
  %121 = vmatpush2.bf16.msra.mxu0 0
  %122 = vmatprep.subr.bf16.mxu0 0
  %123 = vmatpush2.bf16.msra.mxu0 0
  %124 = vmatprep.subr.bf16.mxu0 0
  %125 = vmatpush2.bf16.msra.mxu0 0
  %126 = vmatprep.subr.bf16.mxu0 0
  %127 = vmatpush2.bf16.msra.mxu0 0
  %128 = vmatprep.subr.bf16.mxu0 0
  %129 = vmatpush2.bf16.msra.mxu0 0
  %130 = vmatprep.subr.bf16.mxu0 0
  %131 = vmatpush2.bf16.msra.mxu0 0
  %132 = vmatprep.mubr.bf16.mxu0 0
  %133 = vmatmul.mubr.bf16.gmra.mxu0 %v48
  %v134 = vpop.f32.mrf.mxu0
  %v135 = vadd.f32 %v39, %v134
  %v136 = vpop.f32.mrf.mxu0
  %v137 = vpop.f32.mrf.mxu0
  %v138 = vadd.f32 %v39, %v137
  %v139 = vpop.f32.mrf.mxu0
  %140 = vmatprep.mubr.bf16.mxu0 0
  %141 = vmatmul.mubr.bf16.gmra.mxu0 %v49
  %v142 = vpop.f32.mrf.mxu0
  %v143 = vadd.f32 %v39, %v142
  %v144 = vpop.f32.mrf.mxu0
  %v145 = vpop.f32.mrf.mxu0
  %v146 = vadd.f32 %v39, %v145
  %v147 = vpop.f32.mrf.mxu0
  %148 = vdwg.mxu0
  %v149 = vld [vmem:[%s2 + $0x1] sm:$0x1]
  %vm150 = vcmp.gt.f32.partialorder %v149, 0.0
  %v151 = vmax.f32 %v135, 0.0
  %v152 = vmax.f32 %v138, 0.0
  %v153 = vmax.f32 %v143, 0.0
  %v154 = vmax.f32 %v146, 0.0
  %v155 = vsel %vm150, 1, 0
  %v156 = vlaneseq
  %v157 = vshrl.u32 %v156, 7
  %v158 = vsub.s32 0, %v157
  %v159 = vrot.slane %v155, %v158
  %vm160 = vcmp.eq.s32.totalorder %v159, 1
  %v161 = vsel %vm160, %v151, %v135
  %v162 = vsel %vm160, %v152, %v138
  %v163 = vsel %vm160, %v153, %v143
  %v164 = vsel %vm160, %v154, %v146
  %v165 = vpack.c.bf16 %v162, %v161
  %v166 = vpack.c.bf16 %v164, %v163
  %v169 = vunpack.c.l.b16 %v165
  %v170 = vunpack.c.h.b16 %v165
  %v171 = vunpack.c.l.b16 %v166
  %v172 = vunpack.c.h.b16 %v166
  %v173 = vpack.c.b16 %v169, %v169
  %v174 = vpack.c.b16 %v170, %v170
  %v175 = vpack.c.b16 %v171, %v171
  %v176 = vpack.c.b16 %v172, %v172
  %181 = vst [vmem:[%s3] sm:$0xf] %v173
  %182 = vst [vmem:[%s3 + $0x4] sm:$0xf] %v174
  %183 = vst [vmem:[%s3 + $0x8] sm:$0xf] %v175
  %184 = vst [vmem:[%s3 + $0xc] sm:$0xf] %v176
  // Predicated region
  $region14: #{resnet_autoencoder_forward.21} parent=0 // pred_check
    _
  $region15: #{resnet_autoencoder_forward.21} parent=0 // pred_check_branch
    %186 = sbr.rel (0) target = $region17
  $region16: #{resnet_autoencoder_forward.21} parent=0 // pred_region
    _
  $region17: #{resnet_autoencoder_forward.21} parent=0 // pred_fallthru
    _
  // Predicated region
  $region18: #{resnet_autoencoder_forward.21} parent=0 // pred_check
    _
  $region19: #{resnet_autoencoder_forward.21} parent=0 // pred_check_branch
    %188 = sbr.rel (0) target = $region21
  $region20: #{resnet_autoencoder_forward.21} parent=0 // pred_region
    _
  $region21: #{resnet_autoencoder_forward.21} parent=0 // pred_fallthru
    _

// kernel: resnet_autoencoder_forward.22
$region0: #{resnet_autoencoder_forward.22}
  #allocation0 [shape = 'u32[]', space=smem, size = 0x4, offset = 0x4, fixed_abs, tag = 'smem constant byte address 0x4 - core index']
  #allocation1 [shape = 'u32[144,128]{1,0:T(1,128)}', space=vmem, size = 0x12000, scoped, tag = 'internal scratch']
  %s0 = inlined_call_operand.vmem [shape: bf16[32,256], index: 0, kind: input, shape index: {}]
  %s1 = inlined_call_operand.vmem [shape: bf16[256,128], index: 1, kind: input, shape index: {}]
  %s2 = inlined_call_operand.vmem [shape: f32[2,128], index: 2, kind: input, shape index: {}]
  %s3 = inlined_call_operand.vmem [shape: bf16[32,128], index: 3, kind: input, shape index: {}]
  %s4 = inlined_call_operand.vmem [shape: bf16[32,128], index: 4, kind: output, shape index: {}]
  %s5 = sld [smem:[#allocation0]]
  $region26: #{resnet_autoencoder_forward.22} parent=0
    _
  %s7 = ssub.s32 1, %s5
  %s8 = scalar_select 0, %s7, %s5
  // Predicated region
  $region2: #{resnet_autoencoder_forward.22} parent=0 // pred_check
    _
  $region3: #{resnet_autoencoder_forward.22} parent=0 // pred_check_branch
    %10 = sbr.rel (0) target = $region5
  $region4: #{resnet_autoencoder_forward.22} parent=0 // pred_region
    _
  $region5: #{resnet_autoencoder_forward.22} parent=0 // pred_fallthru
    _
  // Predicated region
  $region6: #{resnet_autoencoder_forward.22} parent=0 // pred_check
    _
  $region7: #{resnet_autoencoder_forward.22} parent=0 // pred_check_branch
    %12 = sbr.rel (0) target = $region9
  $region8: #{resnet_autoencoder_forward.22} parent=0 // pred_region
    _
  $region9: #{resnet_autoencoder_forward.22} parent=0 // pred_fallthru
    _
  // Predicated region
  $region10: #{resnet_autoencoder_forward.22} parent=0 // pred_check
    _
  $region11: #{resnet_autoencoder_forward.22} parent=0 // pred_check_branch
    %14 = sbr.rel (0) target = $region13
  $region12: #{resnet_autoencoder_forward.22} parent=0 // pred_region
    _
  $region13: #{resnet_autoencoder_forward.22} parent=0 // pred_fallthru
    _
  // Predicated region
  $region14: #{resnet_autoencoder_forward.22} parent=0 // pred_check
    _
  $region15: #{resnet_autoencoder_forward.22} parent=0 // pred_check_branch
    %16 = sbr.rel (0) target = $region17
  $region16: #{resnet_autoencoder_forward.22} parent=0 // pred_region
    _
  $region17: #{resnet_autoencoder_forward.22} parent=0 // pred_fallthru
    _
  %v18 = vld [vmem:[%s0] sm:$0xff]
  %v19 = vld [vmem:[%s0 + $0x8] sm:$0xff]
  %v20 = vld [vmem:[%s0 + $0x10] sm:$0xff]
  %v21 = vld [vmem:[%s0 + $0x18] sm:$0xff]
  %v22 = vld [vmem:[%s1] sm:$0xf]
  %v23 = vld [vmem:[%s1 + $0x4] sm:$0xf]
  %v24 = vld [vmem:[%s1 + $0x8] sm:$0xf]
  %v25 = vld [vmem:[%s1 + $0xc] sm:$0xf]
  %v26 = vld [vmem:[%s1 + $0x10] sm:$0xf]
  %v27 = vld [vmem:[%s1 + $0x14] sm:$0xf]
  %v28 = vld [vmem:[%s1 + $0x18] sm:$0xf]
  %v29 = vld [vmem:[%s1 + $0x1c] sm:$0xf]
  %v30 = vld [vmem:[%s1 + $0x20] sm:$0xf]
  %v31 = vld [vmem:[%s1 + $0x24] sm:$0xf]
  %v32 = vld [vmem:[%s1 + $0x28] sm:$0xf]
  %v33 = vld [vmem:[%s1 + $0x2c] sm:$0xf]
  %v34 = vld [vmem:[%s1 + $0x30] sm:$0xf]
  %v35 = vld [vmem:[%s1 + $0x34] sm:$0xf]
  %v36 = vld [vmem:[%s1 + $0x38] sm:$0xf]
  %v37 = vld [vmem:[%s1 + $0x3c] sm:$0xf]
  %v38 = vld [vmem:[%s1 + $0x40] sm:$0xf]
  %v39 = vld [vmem:[%s1 + $0x44] sm:$0xf]
  %v40 = vld [vmem:[%s1 + $0x48] sm:$0xf]
  %v41 = vld [vmem:[%s1 + $0x4c] sm:$0xf]
  %v42 = vld [vmem:[%s1 + $0x50] sm:$0xf]
  %v43 = vld [vmem:[%s1 + $0x54] sm:$0xf]
  %v44 = vld [vmem:[%s1 + $0x58] sm:$0xf]
  %v45 = vld [vmem:[%s1 + $0x5c] sm:$0xf]
  %v46 = vld [vmem:[%s1 + $0x60] sm:$0xf]
  %v47 = vld [vmem:[%s1 + $0x64] sm:$0xf]
  %v48 = vld [vmem:[%s1 + $0x68] sm:$0xf]
  %v49 = vld [vmem:[%s1 + $0x6c] sm:$0xf]
  %v50 = vld [vmem:[%s1 + $0x70] sm:$0xf]
  %v51 = vld [vmem:[%s1 + $0x74] sm:$0xf]
  %v52 = vld [vmem:[%s1 + $0x78] sm:$0xf]
  %v53 = vld [vmem:[%s1 + $0x7c] sm:$0xf]
  %v54 = vld [vmem:[%s2] sm:$0x1]
  %v55 = vlaneseq
  %v56 = vshrl.u32 %v55, 7
  %v57 = vsub.s32 0, %v56
  %v58 = vrot.slane %v54, %v57
  %v63 = vunpack.c.l.b16 %v18
  %v64 = vunpack.c.h.b16 %v18
  %v65 = vunpack.c.l.b16 %v19
  %v66 = vunpack.c.h.b16 %v19
  %v67 = vunpack.c.l.b16 %v20
  %v68 = vunpack.c.h.b16 %v20
  %v69 = vunpack.c.l.b16 %v21
  %v70 = vunpack.c.h.b16 %v21
  %v71 = vpack.c.b16 %v65, %v63
  %v72 = vpack.c.b16 %v66, %v64
  %v73 = vpack.c.b16 %v69, %v67
  %v74 = vpack.c.b16 %v70, %v68
  %v111 = vunpack.c.l.b16 %v22
  %v112 = vunpack.c.l.b16 %v23
  %v113 = vunpack.c.l.b16 %v24
  %v114 = vunpack.c.l.b16 %v25
  %v115 = vunpack.c.l.b16 %v26
  %v116 = vunpack.c.l.b16 %v27
  %v117 = vunpack.c.l.b16 %v28
  %v118 = vunpack.c.l.b16 %v29
  %v119 = vunpack.c.l.b16 %v30
  %v120 = vunpack.c.l.b16 %v31
  %v121 = vunpack.c.l.b16 %v32
  %v122 = vunpack.c.l.b16 %v33
  %v123 = vunpack.c.l.b16 %v34
  %v124 = vunpack.c.l.b16 %v35
  %v125 = vunpack.c.l.b16 %v36
  %v126 = vunpack.c.l.b16 %v37
  %v127 = vunpack.c.l.b16 %v38
  %v128 = vunpack.c.l.b16 %v39
  %v129 = vunpack.c.l.b16 %v40
  %v130 = vunpack.c.l.b16 %v41
  %v131 = vunpack.c.l.b16 %v42
  %v132 = vunpack.c.l.b16 %v43
  %v133 = vunpack.c.l.b16 %v44
  %v134 = vunpack.c.l.b16 %v45
  %v135 = vunpack.c.l.b16 %v46
  %v136 = vunpack.c.l.b16 %v47
  %v137 = vunpack.c.l.b16 %v48
  %v138 = vunpack.c.l.b16 %v49
  %v139 = vunpack.c.l.b16 %v50
  %v140 = vunpack.c.l.b16 %v51
  %v141 = vunpack.c.l.b16 %v52
  %v142 = vunpack.c.l.b16 %v53
  %v143 = vpack.c.b16 %v112, %v111
  %v144 = vpack.c.b16 %v114, %v113
  %v145 = vpack.c.b16 %v116, %v115
  %v146 = vpack.c.b16 %v118, %v117
  %v147 = vpack.c.b16 %v120, %v119
  %v148 = vpack.c.b16 %v122, %v121
  %v149 = vpack.c.b16 %v124, %v123
  %v150 = vpack.c.b16 %v126, %v125
  %v151 = vpack.c.b16 %v128, %v127
  %v152 = vpack.c.b16 %v130, %v129
  %v153 = vpack.c.b16 %v132, %v131
  %v154 = vpack.c.b16 %v134, %v133
  %v155 = vpack.c.b16 %v136, %v135
  %v156 = vpack.c.b16 %v138, %v137
  %v157 = vpack.c.b16 %v140, %v139
  %v158 = vpack.c.b16 %v142, %v141
  %175 = vmatprep.subr.bf16.mxu0 0
  %176 = vmatpush1.bf16.msra.mxu0 %v150
  %177 = vmatprep.subr.bf16.mxu0 0
  %178 = vmatpush1.bf16.msra.mxu0 %v149
  %179 = vmatprep.subr.bf16.mxu0 0
  %180 = vmatpush1.bf16.msra.mxu0 %v148
  %181 = vmatprep.subr.bf16.mxu0 0
  %182 = vmatpush1.bf16.msra.mxu0 %v147
  %183 = vmatprep.subr.bf16.mxu0 0
  %184 = vmatpush1.bf16.msra.mxu0 %v146
  %185 = vmatprep.subr.bf16.mxu0 0
  %186 = vmatpush1.bf16.msra.mxu0 %v145
  %187 = vmatprep.subr.bf16.mxu0 0
  %188 = vmatpush1.bf16.msra.mxu0 %v144
  %189 = vmatprep.subr.bf16.mxu0 0
  %190 = vmatpush1.bf16.msra.mxu0 %v143
  %191 = vmatprep.subr.bf16.mxu0 0
  %192 = vmatpush2.bf16.msra.mxu0 %v158
  %193 = vmatprep.subr.bf16.mxu0 0
  %194 = vmatpush2.bf16.msra.mxu0 %v157
  %195 = vmatprep.subr.bf16.mxu0 0
  %196 = vmatpush2.bf16.msra.mxu0 %v156
  %197 = vmatprep.subr.bf16.mxu0 0
  %198 = vmatpush2.bf16.msra.mxu0 %v155
  %199 = vmatprep.subr.bf16.mxu0 0
  %200 = vmatpush2.bf16.msra.mxu0 %v154
  %201 = vmatprep.subr.bf16.mxu0 0
  %202 = vmatpush2.bf16.msra.mxu0 %v153
  %203 = vmatprep.subr.bf16.mxu0 0
  %204 = vmatpush2.bf16.msra.mxu0 %v152
  %205 = vmatprep.subr.bf16.mxu0 0
  %206 = vmatpush2.bf16.msra.mxu0 %v151
  %207 = vmatprep.mubr.bf16.mxu0 %v72
  %208 = vmatmul.mubr.bf16.gmra.mxu0 %v71
  %v209 = vpop.f32.mrf.mxu0
  %v210 = vadd.f32 %v58, %v209
  %v211 = vpop.f32.mrf.mxu0
  %v212 = vpop.f32.mrf.mxu0
  %v213 = vadd.f32 %v58, %v212
  %v214 = vpop.f32.mrf.mxu0
  %215 = vmatprep.mubr.bf16.mxu0 %v74
  %216 = vmatmul.mubr.bf16.gmra.mxu0 %v73
  %v217 = vpop.f32.mrf.mxu0
  %v218 = vadd.f32 %v58, %v217
  %v219 = vpop.f32.mrf.mxu0
  %v220 = vpop.f32.mrf.mxu0
  %v221 = vadd.f32 %v58, %v220
  %v222 = vpop.f32.mrf.mxu0
  %223 = vdwg.mxu0
  %v224 = vld [vmem:[%s3] sm:$0xf]
  %v225 = vld [vmem:[%s3 + $0x4] sm:$0xf]
  %v226 = vld [vmem:[%s3 + $0x8] sm:$0xf]
  %v227 = vld [vmem:[%s3 + $0xc] sm:$0xf]
  %v228 = vunpack.c.l.bf16 %v224
  %v229 = vunpack.c.l.bf16 %v225
  %v230 = vunpack.c.l.bf16 %v226
  %v231 = vunpack.c.l.bf16 %v227
  %v232 = vadd.f32 %v210, %v228
  %v233 = vadd.f32 %v213, %v229
  %v234 = vadd.f32 %v218, %v230
  %v235 = vadd.f32 %v221, %v231
  %v236 = vmax.f32 %v232, 0.0
  %v237 = vmax.f32 %v233, 0.0
  %v238 = vmax.f32 %v234, 0.0
  %v239 = vmax.f32 %v235, 0.0
  %v240 = vpack.c.bf16 %v237, %v236
  %v241 = vpack.c.bf16 %v239, %v238
  %v244 = vunpack.c.l.b16 %v240
  %v245 = vunpack.c.h.b16 %v240
  %v246 = vunpack.c.l.b16 %v241
  %v247 = vunpack.c.h.b16 %v241
  %v248 = vpack.c.b16 %v244, %v244
  %v249 = vpack.c.b16 %v245, %v245
  %v250 = vpack.c.b16 %v246, %v246
  %v251 = vpack.c.b16 %v247, %v247
  %256 = vst [vmem:[%s4] sm:$0xf] %v248
  %257 = vst [vmem:[%s4 + $0x4] sm:$0xf] %v249
  %258 = vst [vmem:[%s4 + $0x8] sm:$0xf] %v250
  %259 = vst [vmem:[%s4 + $0xc] sm:$0xf] %v251
  // Predicated region
  $region18: #{resnet_autoencoder_forward.22} parent=0 // pred_check
    _
  $region19: #{resnet_autoencoder_forward.22} parent=0 // pred_check_branch
    %261 = sbr.rel (0) target = $region21
  $region20: #{resnet_autoencoder_forward.22} parent=0 // pred_region
    _
  $region21: #{resnet_autoencoder_forward.22} parent=0 // pred_fallthru
    _
  // Predicated region
  $region22: #{resnet_autoencoder_forward.22} parent=0 // pred_check
    _
  $region23: #{resnet_autoencoder_forward.22} parent=0 // pred_check_branch
    %263 = sbr.rel (0) target = $region25
  $region24: #{resnet_autoencoder_forward.22} parent=0 // pred_region
    _
  $region25: #{resnet_autoencoder_forward.22} parent=0 // pred_fallthru
    _

// kernel: resnet_autoencoder_forward.23
$region0: #{resnet_autoencoder_forward.23}
  #allocation0 [shape = 'u32[]', space=smem, size = 0x4, offset = 0x4, fixed_abs, tag = 'smem constant byte address 0x4 - core index']
  #allocation1 [shape = 'u32[144,128]{1,0:T(1,128)}', space=vmem, size = 0x12000, scoped, tag = 'internal scratch']
  %s0 = inlined_call_operand.vmem [shape: bf16[16,256], index: 0, kind: input, shape index: {}]
  %s1 = inlined_call_operand.vmem [shape: bf16[256,128], index: 1, kind: input, shape index: {}]
  %s2 = inlined_call_operand.vmem [shape: f32[2,128], index: 2, kind: input, shape index: {}]
  %s3 = inlined_call_operand.vmem [shape: bf16[16,128], index: 3, kind: output, shape index: {}]
  %s4 = sld [smem:[#allocation0]]
  $region22: #{resnet_autoencoder_forward.23} parent=0
    _
  %s6 = ssub.s32 1, %s4
  %s7 = scalar_select 0, %s6, %s4
  // Predicated region
  $region2: #{resnet_autoencoder_forward.23} parent=0 // pred_check
    _
  $region3: #{resnet_autoencoder_forward.23} parent=0 // pred_check_branch
    %9 = sbr.rel (0) target = $region5
  $region4: #{resnet_autoencoder_forward.23} parent=0 // pred_region
    _
  $region5: #{resnet_autoencoder_forward.23} parent=0 // pred_fallthru
    _
  // Predicated region
  $region6: #{resnet_autoencoder_forward.23} parent=0 // pred_check
    _
  $region7: #{resnet_autoencoder_forward.23} parent=0 // pred_check_branch
    %11 = sbr.rel (0) target = $region9
  $region8: #{resnet_autoencoder_forward.23} parent=0 // pred_region
    _
  $region9: #{resnet_autoencoder_forward.23} parent=0 // pred_fallthru
    _
  // Predicated region
  $region10: #{resnet_autoencoder_forward.23} parent=0 // pred_check
    _
  $region11: #{resnet_autoencoder_forward.23} parent=0 // pred_check_branch
    %13 = sbr.rel (0) target = $region13
  $region12: #{resnet_autoencoder_forward.23} parent=0 // pred_region
    _
  $region13: #{resnet_autoencoder_forward.23} parent=0 // pred_fallthru
    _
  %v15 = vld [vmem:[%s0] sm:$0xff]
  %v16 = vld [vmem:[%s0 + $0x8] sm:$0xff]
  %v17 = vld [vmem:[%s1] sm:$0xf]
  %v18 = vld [vmem:[%s1 + $0x4] sm:$0xf]
  %v19 = vld [vmem:[%s1 + $0x8] sm:$0xf]
  %v20 = vld [vmem:[%s1 + $0xc] sm:$0xf]
  %v21 = vld [vmem:[%s1 + $0x10] sm:$0xf]
  %v22 = vld [vmem:[%s1 + $0x14] sm:$0xf]
  %v23 = vld [vmem:[%s1 + $0x18] sm:$0xf]
  %v24 = vld [vmem:[%s1 + $0x1c] sm:$0xf]
  %v25 = vld [vmem:[%s1 + $0x20] sm:$0xf]
  %v26 = vld [vmem:[%s1 + $0x24] sm:$0xf]
  %v27 = vld [vmem:[%s1 + $0x28] sm:$0xf]
  %v28 = vld [vmem:[%s1 + $0x2c] sm:$0xf]
  %v29 = vld [vmem:[%s1 + $0x30] sm:$0xf]
  %v30 = vld [vmem:[%s1 + $0x34] sm:$0xf]
  %v31 = vld [vmem:[%s1 + $0x38] sm:$0xf]
  %v32 = vld [vmem:[%s1 + $0x3c] sm:$0xf]
  %v33 = vld [vmem:[%s1 + $0x40] sm:$0xf]
  %v34 = vld [vmem:[%s1 + $0x44] sm:$0xf]
  %v35 = vld [vmem:[%s1 + $0x48] sm:$0xf]
  %v36 = vld [vmem:[%s1 + $0x4c] sm:$0xf]
  %v37 = vld [vmem:[%s1 + $0x50] sm:$0xf]
  %v38 = vld [vmem:[%s1 + $0x54] sm:$0xf]
  %v39 = vld [vmem:[%s1 + $0x58] sm:$0xf]
  %v40 = vld [vmem:[%s1 + $0x5c] sm:$0xf]
  %v41 = vld [vmem:[%s1 + $0x60] sm:$0xf]
  %v42 = vld [vmem:[%s1 + $0x64] sm:$0xf]
  %v43 = vld [vmem:[%s1 + $0x68] sm:$0xf]
  %v44 = vld [vmem:[%s1 + $0x6c] sm:$0xf]
  %v45 = vld [vmem:[%s1 + $0x70] sm:$0xf]
  %v46 = vld [vmem:[%s1 + $0x74] sm:$0xf]
  %v47 = vld [vmem:[%s1 + $0x78] sm:$0xf]
  %v48 = vld [vmem:[%s1 + $0x7c] sm:$0xf]
  %v49 = vld [vmem:[%s2] sm:$0x1]
  %v50 = vlaneseq
  %v51 = vshrl.u32 %v50, 7
  %v52 = vsub.s32 0, %v51
  %v53 = vrot.slane %v49, %v52
  %v56 = vunpack.c.l.b16 %v15
  %v57 = vunpack.c.h.b16 %v15
  %v58 = vunpack.c.l.b16 %v16
  %v59 = vunpack.c.h.b16 %v16
  %v60 = vpack.c.b16 %v58, %v56
  %v61 = vpack.c.b16 %v59, %v57
  %v96 = vunpack.c.l.b16 %v17
  %v97 = vunpack.c.l.b16 %v18
  %v98 = vunpack.c.l.b16 %v19
  %v99 = vunpack.c.l.b16 %v20
  %v100 = vunpack.c.l.b16 %v21
  %v101 = vunpack.c.l.b16 %v22
  %v102 = vunpack.c.l.b16 %v23
  %v103 = vunpack.c.l.b16 %v24
  %v104 = vunpack.c.l.b16 %v25
  %v105 = vunpack.c.l.b16 %v26
  %v106 = vunpack.c.l.b16 %v27
  %v107 = vunpack.c.l.b16 %v28
  %v108 = vunpack.c.l.b16 %v29
  %v109 = vunpack.c.l.b16 %v30
  %v110 = vunpack.c.l.b16 %v31
  %v111 = vunpack.c.l.b16 %v32
  %v112 = vunpack.c.l.b16 %v33
  %v113 = vunpack.c.l.b16 %v34
  %v114 = vunpack.c.l.b16 %v35
  %v115 = vunpack.c.l.b16 %v36
  %v116 = vunpack.c.l.b16 %v37
  %v117 = vunpack.c.l.b16 %v38
  %v118 = vunpack.c.l.b16 %v39
  %v119 = vunpack.c.l.b16 %v40
  %v120 = vunpack.c.l.b16 %v41
  %v121 = vunpack.c.l.b16 %v42
  %v122 = vunpack.c.l.b16 %v43
  %v123 = vunpack.c.l.b16 %v44
  %v124 = vunpack.c.l.b16 %v45
  %v125 = vunpack.c.l.b16 %v46
  %v126 = vunpack.c.l.b16 %v47
  %v127 = vunpack.c.l.b16 %v48
  %v128 = vpack.c.b16 %v97, %v96
  %v129 = vpack.c.b16 %v99, %v98
  %v130 = vpack.c.b16 %v101, %v100
  %v131 = vpack.c.b16 %v103, %v102
  %v132 = vpack.c.b16 %v105, %v104
  %v133 = vpack.c.b16 %v107, %v106
  %v134 = vpack.c.b16 %v109, %v108
  %v135 = vpack.c.b16 %v111, %v110
  %v136 = vpack.c.b16 %v113, %v112
  %v137 = vpack.c.b16 %v115, %v114
  %v138 = vpack.c.b16 %v117, %v116
  %v139 = vpack.c.b16 %v119, %v118
  %v140 = vpack.c.b16 %v121, %v120
  %v141 = vpack.c.b16 %v123, %v122
  %v142 = vpack.c.b16 %v125, %v124
  %v143 = vpack.c.b16 %v127, %v126
  %160 = vmatprep.subr.bf16.mxu0 0
  %161 = vmatpush1.bf16.msra.mxu0 %v135
  %162 = vmatprep.subr.bf16.mxu0 0
  %163 = vmatpush1.bf16.msra.mxu0 %v134
  %164 = vmatprep.subr.bf16.mxu0 0
  %165 = vmatpush1.bf16.msra.mxu0 %v133
  %166 = vmatprep.subr.bf16.mxu0 0
  %167 = vmatpush1.bf16.msra.mxu0 %v132
  %168 = vmatprep.subr.bf16.mxu0 0
  %169 = vmatpush1.bf16.msra.mxu0 %v131
  %170 = vmatprep.subr.bf16.mxu0 0
  %171 = vmatpush1.bf16.msra.mxu0 %v130
  %172 = vmatprep.subr.bf16.mxu0 0
  %173 = vmatpush1.bf16.msra.mxu0 %v129
  %174 = vmatprep.subr.bf16.mxu0 0
  %175 = vmatpush1.bf16.msra.mxu0 %v128
  %176 = vmatprep.subr.bf16.mxu0 0
  %177 = vmatpush2.bf16.msra.mxu0 %v143
  %178 = vmatprep.subr.bf16.mxu0 0
  %179 = vmatpush2.bf16.msra.mxu0 %v142
  %180 = vmatprep.subr.bf16.mxu0 0
  %181 = vmatpush2.bf16.msra.mxu0 %v141
  %182 = vmatprep.subr.bf16.mxu0 0
  %183 = vmatpush2.bf16.msra.mxu0 %v140
  %184 = vmatprep.subr.bf16.mxu0 0
  %185 = vmatpush2.bf16.msra.mxu0 %v139
  %186 = vmatprep.subr.bf16.mxu0 0
  %187 = vmatpush2.bf16.msra.mxu0 %v138
  %188 = vmatprep.subr.bf16.mxu0 0
  %189 = vmatpush2.bf16.msra.mxu0 %v137
  %190 = vmatprep.subr.bf16.mxu0 0
  %191 = vmatpush2.bf16.msra.mxu0 %v136
  %192 = vmatprep.mubr.bf16.mxu0 %v61
  %193 = vmatmul.mubr.bf16.gmra.mxu0 %v60
  %v194 = vpop.f32.mrf.mxu0
  %v195 = vadd.f32 %v53, %v194
  %v196 = vpop.f32.mrf.mxu0
  %v197 = vpop.f32.mrf.mxu0
  %v198 = vadd.f32 %v53, %v197
  %v199 = vpop.f32.mrf.mxu0
  %200 = vdwg.mxu0
  %v201 = vld [vmem:[%s2 + $0x1] sm:$0x1]
  %vm202 = vcmp.gt.f32.partialorder %v201, 0.0
  %v203 = vmax.f32 %v195, 0.0
  %v204 = vmax.f32 %v198, 0.0
  %v205 = vsel %vm202, 1, 0
  %v206 = vlaneseq
  %v207 = vshrl.u32 %v206, 7
  %v208 = vsub.s32 0, %v207
  %v209 = vrot.slane %v205, %v208
  %vm210 = vcmp.eq.s32.totalorder %v209, 1
  %v211 = vsel %vm210, %v203, %v195
  %v212 = vsel %vm210, %v204, %v198
  %v213 = vpack.c.bf16 %v212, %v211
  %v215 = vunpack.c.l.b16 %v213
  %v216 = vunpack.c.h.b16 %v213
  %v217 = vpack.c.b16 %v215, %v215
  %v218 = vpack.c.b16 %v216, %v216
  %221 = vst [vmem:[%s3] sm:$0xf] %v217
  %222 = vst [vmem:[%s3 + $0x4] sm:$0xf] %v218
  // Predicated region
  $region14: #{resnet_autoencoder_forward.23} parent=0 // pred_check
    _
  $region15: #{resnet_autoencoder_forward.23} parent=0 // pred_check_branch
    %224 = sbr.rel (0) target = $region17
  $region16: #{resnet_autoencoder_forward.23} parent=0 // pred_region
    _
  $region17: #{resnet_autoencoder_forward.23} parent=0 // pred_fallthru
    _
  // Predicated region
  $region18: #{resnet_autoencoder_forward.23} parent=0 // pred_check
    _
  $region19: #{resnet_autoencoder_forward.23} parent=0 // pred_check_branch
    %226 = sbr.rel (0) target = $region21
  $region20: #{resnet_autoencoder_forward.23} parent=0 // pred_region
    _
  $region21: #{resnet_autoencoder_forward.23} parent=0 // pred_fallthru
    _

// kernel: resnet_autoencoder_forward.24
$region0: #{resnet_autoencoder_forward.24}
  #allocation0 [shape = 'u32[]', space=smem, size = 0x4, offset = 0x4, fixed_abs, tag = 'smem constant byte address 0x4 - core index']
  #allocation1 [shape = 'u32[144,128]{1,0:T(1,128)}', space=vmem, size = 0x12000, scoped, tag = 'internal scratch']
  %s0 = inlined_call_operand.vmem [shape: bf16[16,384], index: 0, kind: input, shape index: {}]
  %s1 = inlined_call_operand.vmem [shape: bf16[384,128], index: 1, kind: input, shape index: {}]
  %s2 = inlined_call_operand.vmem [shape: f32[2,128], index: 2, kind: input, shape index: {}]
  %s3 = inlined_call_operand.vmem [shape: bf16[16,128], index: 3, kind: input, shape index: {}]
  %s4 = inlined_call_operand.vmem [shape: bf16[16,128], index: 4, kind: output, shape index: {}]
  %s5 = sld [smem:[#allocation0]]
  $region26: #{resnet_autoencoder_forward.24} parent=0
    _
  %s7 = ssub.s32 1, %s5
  %s8 = scalar_select 0, %s7, %s5
  // Predicated region
  $region2: #{resnet_autoencoder_forward.24} parent=0 // pred_check
    _
  $region3: #{resnet_autoencoder_forward.24} parent=0 // pred_check_branch
    %10 = sbr.rel (0) target = $region5
  $region4: #{resnet_autoencoder_forward.24} parent=0 // pred_region
    _
  $region5: #{resnet_autoencoder_forward.24} parent=0 // pred_fallthru
    _
  // Predicated region
  $region6: #{resnet_autoencoder_forward.24} parent=0 // pred_check
    _
  $region7: #{resnet_autoencoder_forward.24} parent=0 // pred_check_branch
    %12 = sbr.rel (0) target = $region9
  $region8: #{resnet_autoencoder_forward.24} parent=0 // pred_region
    _
  $region9: #{resnet_autoencoder_forward.24} parent=0 // pred_fallthru
    _
  // Predicated region
  $region10: #{resnet_autoencoder_forward.24} parent=0 // pred_check
    _
  $region11: #{resnet_autoencoder_forward.24} parent=0 // pred_check_branch
    %14 = sbr.rel (0) target = $region13
  $region12: #{resnet_autoencoder_forward.24} parent=0 // pred_region
    _
  $region13: #{resnet_autoencoder_forward.24} parent=0 // pred_fallthru
    _
  // Predicated region
  $region14: #{resnet_autoencoder_forward.24} parent=0 // pred_check
    _
  $region15: #{resnet_autoencoder_forward.24} parent=0 // pred_check_branch
    %16 = sbr.rel (0) target = $region17
  $region16: #{resnet_autoencoder_forward.24} parent=0 // pred_region
    _
  $region17: #{resnet_autoencoder_forward.24} parent=0 // pred_fallthru
    _
  %v18 = vld [vmem:[%s0] sm:$0xff]
  %v19 = vld [vmem:[%s0 + $0x8] sm:$0xf]
  %v20 = vld [vmem:[%s0 + $0xc] sm:$0xff]
  %v21 = vld [vmem:[%s0 + $0x14] sm:$0xf]
  %v22 = vld [vmem:[%s1] sm:$0xf]
  %v23 = vld [vmem:[%s1 + $0x4] sm:$0xf]
  %v24 = vld [vmem:[%s1 + $0x8] sm:$0xf]
  %v25 = vld [vmem:[%s1 + $0xc] sm:$0xf]
  %v26 = vld [vmem:[%s1 + $0x10] sm:$0xf]
  %v27 = vld [vmem:[%s1 + $0x14] sm:$0xf]
  %v28 = vld [vmem:[%s1 + $0x18] sm:$0xf]
  %v29 = vld [vmem:[%s1 + $0x1c] sm:$0xf]
  %v30 = vld [vmem:[%s1 + $0x20] sm:$0xf]
  %v31 = vld [vmem:[%s1 + $0x24] sm:$0xf]
  %v32 = vld [vmem:[%s1 + $0x28] sm:$0xf]
  %v33 = vld [vmem:[%s1 + $0x2c] sm:$0xf]
  %v34 = vld [vmem:[%s1 + $0x30] sm:$0xf]
  %v35 = vld [vmem:[%s1 + $0x34] sm:$0xf]
  %v36 = vld [vmem:[%s1 + $0x38] sm:$0xf]
  %v37 = vld [vmem:[%s1 + $0x3c] sm:$0xf]
  %v38 = vld [vmem:[%s1 + $0x40] sm:$0xf]
  %v39 = vld [vmem:[%s1 + $0x44] sm:$0xf]
  %v40 = vld [vmem:[%s1 + $0x48] sm:$0xf]
  %v41 = vld [vmem:[%s1 + $0x4c] sm:$0xf]
  %v42 = vld [vmem:[%s1 + $0x50] sm:$0xf]
  %v43 = vld [vmem:[%s1 + $0x54] sm:$0xf]
  %v44 = vld [vmem:[%s1 + $0x58] sm:$0xf]
  %v45 = vld [vmem:[%s1 + $0x5c] sm:$0xf]
  %v46 = vld [vmem:[%s1 + $0x60] sm:$0xf]
  %v47 = vld [vmem:[%s1 + $0x64] sm:$0xf]
  %v48 = vld [vmem:[%s1 + $0x68] sm:$0xf]
  %v49 = vld [vmem:[%s1 + $0x6c] sm:$0xf]
  %v50 = vld [vmem:[%s1 + $0x70] sm:$0xf]
  %v51 = vld [vmem:[%s1 + $0x74] sm:$0xf]
  %v52 = vld [vmem:[%s1 + $0x78] sm:$0xf]
  %v53 = vld [vmem:[%s1 + $0x7c] sm:$0xf]
  %v54 = vld [vmem:[%s1 + $0x80] sm:$0xf]
  %v55 = vld [vmem:[%s1 + $0x84] sm:$0xf]
  %v56 = vld [vmem:[%s1 + $0x88] sm:$0xf]
  %v57 = vld [vmem:[%s1 + $0x8c] sm:$0xf]
  %v58 = vld [vmem:[%s1 + $0x90] sm:$0xf]
  %v59 = vld [vmem:[%s1 + $0x94] sm:$0xf]
  %v60 = vld [vmem:[%s1 + $0x98] sm:$0xf]
  %v61 = vld [vmem:[%s1 + $0x9c] sm:$0xf]
  %v62 = vld [vmem:[%s1 + $0xa0] sm:$0xf]
  %v63 = vld [vmem:[%s1 + $0xa4] sm:$0xf]
  %v64 = vld [vmem:[%s1 + $0xa8] sm:$0xf]
  %v65 = vld [vmem:[%s1 + $0xac] sm:$0xf]
  %v66 = vld [vmem:[%s1 + $0xb0] sm:$0xf]
  %v67 = vld [vmem:[%s1 + $0xb4] sm:$0xf]
  %v68 = vld [vmem:[%s1 + $0xb8] sm:$0xf]
  %v69 = vld [vmem:[%s1 + $0xbc] sm:$0xf]
  %v70 = vld [vmem:[%s2] sm:$0x1]
  %v71 = vlaneseq
  %v72 = vshrl.u32 %v71, 7
  %v73 = vsub.s32 0, %v72
  %v74 = vrot.slane %v70, %v73
  %v79 = vunpack.c.l.b16 %v18
  %v80 = vunpack.c.h.b16 %v18
  %v81 = vunpack.c.l.b16 %v19
  %v82 = vunpack.c.l.b16 %v20
  %v83 = vunpack.c.h.b16 %v20
  %v84 = vunpack.c.l.b16 %v21
  %v85 = vpack.c.b16 %v82, %v79
  %v86 = vpack.c.b16 %v83, %v80
  %v87 = vpack.c.b16 %v84, %v81
  %v139 = vunpack.c.l.b16 %v22
  %v140 = vunpack.c.l.b16 %v23
  %v141 = vunpack.c.l.b16 %v24
  %v142 = vunpack.c.l.b16 %v25
  %v143 = vunpack.c.l.b16 %v26
  %v144 = vunpack.c.l.b16 %v27
  %v145 = vunpack.c.l.b16 %v28
  %v146 = vunpack.c.l.b16 %v29
  %v147 = vunpack.c.l.b16 %v30
  %v148 = vunpack.c.l.b16 %v31
  %v149 = vunpack.c.l.b16 %v32
  %v150 = vunpack.c.l.b16 %v33
  %v151 = vunpack.c.l.b16 %v34
  %v152 = vunpack.c.l.b16 %v35
  %v153 = vunpack.c.l.b16 %v36
  %v154 = vunpack.c.l.b16 %v37
  %v155 = vunpack.c.l.b16 %v38
  %v156 = vunpack.c.l.b16 %v39
  %v157 = vunpack.c.l.b16 %v40
  %v158 = vunpack.c.l.b16 %v41
  %v159 = vunpack.c.l.b16 %v42
  %v160 = vunpack.c.l.b16 %v43
  %v161 = vunpack.c.l.b16 %v44
  %v162 = vunpack.c.l.b16 %v45
  %v163 = vunpack.c.l.b16 %v46
  %v164 = vunpack.c.l.b16 %v47
  %v165 = vunpack.c.l.b16 %v48
  %v166 = vunpack.c.l.b16 %v49
  %v167 = vunpack.c.l.b16 %v50
  %v168 = vunpack.c.l.b16 %v51
  %v169 = vunpack.c.l.b16 %v52
  %v170 = vunpack.c.l.b16 %v53
  %v171 = vunpack.c.l.b16 %v54
  %v172 = vunpack.c.l.b16 %v55
  %v173 = vunpack.c.l.b16 %v56
  %v174 = vunpack.c.l.b16 %v57
  %v175 = vunpack.c.l.b16 %v58
  %v176 = vunpack.c.l.b16 %v59
  %v177 = vunpack.c.l.b16 %v60
  %v178 = vunpack.c.l.b16 %v61
  %v179 = vunpack.c.l.b16 %v62
  %v180 = vunpack.c.l.b16 %v63
  %v181 = vunpack.c.l.b16 %v64
  %v182 = vunpack.c.l.b16 %v65
  %v183 = vunpack.c.l.b16 %v66
  %v184 = vunpack.c.l.b16 %v67
  %v185 = vunpack.c.l.b16 %v68
  %v186 = vunpack.c.l.b16 %v69
  %v187 = vpack.c.b16 %v140, %v139
  %v188 = vpack.c.b16 %v142, %v141
  %v189 = vpack.c.b16 %v144, %v143
  %v190 = vpack.c.b16 %v146, %v145
  %v191 = vpack.c.b16 %v148, %v147
  %v192 = vpack.c.b16 %v150, %v149
  %v193 = vpack.c.b16 %v152, %v151
  %v194 = vpack.c.b16 %v154, %v153
  %v195 = vpack.c.b16 %v156, %v155
  %v196 = vpack.c.b16 %v158, %v157
  %v197 = vpack.c.b16 %v160, %v159
  %v198 = vpack.c.b16 %v162, %v161
  %v199 = vpack.c.b16 %v164, %v163
  %v200 = vpack.c.b16 %v166, %v165
  %v201 = vpack.c.b16 %v168, %v167
  %v202 = vpack.c.b16 %v170, %v169
  %v203 = vpack.c.b16 %v172, %v171
  %v204 = vpack.c.b16 %v174, %v173
  %v205 = vpack.c.b16 %v176, %v175
  %v206 = vpack.c.b16 %v178, %v177
  %v207 = vpack.c.b16 %v180, %v179
  %v208 = vpack.c.b16 %v182, %v181
  %v209 = vpack.c.b16 %v184, %v183
  %v210 = vpack.c.b16 %v186, %v185
  %235 = vmatprep.subr.bf16.mxu0 0
  %236 = vmatpush1.bf16.msra.mxu0 %v194
  %237 = vmatprep.subr.bf16.mxu0 0
  %238 = vmatpush1.bf16.msra.mxu0 %v193
  %239 = vmatprep.subr.bf16.mxu0 0
  %240 = vmatpush1.bf16.msra.mxu0 %v192
  %241 = vmatprep.subr.bf16.mxu0 0
  %242 = vmatpush1.bf16.msra.mxu0 %v191
  %243 = vmatprep.subr.bf16.mxu0 0
  %244 = vmatpush1.bf16.msra.mxu0 %v190
  %245 = vmatprep.subr.bf16.mxu0 0
  %246 = vmatpush1.bf16.msra.mxu0 %v189
  %247 = vmatprep.subr.bf16.mxu0 0
  %248 = vmatpush1.bf16.msra.mxu0 %v188
  %249 = vmatprep.subr.bf16.mxu0 0
  %250 = vmatpush1.bf16.msra.mxu0 %v187
  %251 = vmatprep.subr.bf16.mxu0 0
  %252 = vmatpush2.bf16.msra.mxu0 %v202
  %253 = vmatprep.subr.bf16.mxu0 0
  %254 = vmatpush2.bf16.msra.mxu0 %v201
  %255 = vmatprep.subr.bf16.mxu0 0
  %256 = vmatpush2.bf16.msra.mxu0 %v200
  %257 = vmatprep.subr.bf16.mxu0 0
  %258 = vmatpush2.bf16.msra.mxu0 %v199
  %259 = vmatprep.subr.bf16.mxu0 0
  %260 = vmatpush2.bf16.msra.mxu0 %v198
  %261 = vmatprep.subr.bf16.mxu0 0
  %262 = vmatpush2.bf16.msra.mxu0 %v197
  %263 = vmatprep.subr.bf16.mxu0 0
  %264 = vmatpush2.bf16.msra.mxu0 %v196
  %265 = vmatprep.subr.bf16.mxu0 0
  %266 = vmatpush2.bf16.msra.mxu0 %v195
  %267 = vmatprep.mubr.bf16.mxu0 %v86
  %268 = vmatmul.mubr.bf16.gmra.mxu0 %v85
  %v269 = vpop.f32.mrf.mxu0
  %v270 = vadd.f32 %v74, %v269
  %v271 = vpop.f32.mrf.mxu0
  %v272 = vpop.f32.mrf.mxu0
  %v273 = vadd.f32 %v74, %v272
  %v274 = vpop.f32.mrf.mxu0
  %275 = vdwg.mxu0
  %276 = vmatprep.subr.bf16.mxu0 0
  %277 = vmatpush1.bf16.msra.mxu0 %v210
  %278 = vmatprep.subr.bf16.mxu0 0
  %279 = vmatpush1.bf16.msra.mxu0 %v209
  %280 = vmatprep.subr.bf16.mxu0 0
  %281 = vmatpush1.bf16.msra.mxu0 %v208
  %282 = vmatprep.subr.bf16.mxu0 0
  %283 = vmatpush1.bf16.msra.mxu0 %v207
  %284 = vmatprep.subr.bf16.mxu0 0
  %285 = vmatpush1.bf16.msra.mxu0 %v206
  %286 = vmatprep.subr.bf16.mxu0 0
  %287 = vmatpush1.bf16.msra.mxu0 %v205
  %288 = vmatprep.subr.bf16.mxu0 0
  %289 = vmatpush1.bf16.msra.mxu0 %v204
  %290 = vmatprep.subr.bf16.mxu0 0
  %291 = vmatpush1.bf16.msra.mxu0 %v203
  %292 = vmatprep.subr.bf16.mxu0 0
  %293 = vmatpush2.bf16.msra.mxu0 0
  %294 = vmatprep.subr.bf16.mxu0 0
  %295 = vmatpush2.bf16.msra.mxu0 0
  %296 = vmatprep.subr.bf16.mxu0 0
  %297 = vmatpush2.bf16.msra.mxu0 0
  %298 = vmatprep.subr.bf16.mxu0 0
  %299 = vmatpush2.bf16.msra.mxu0 0
  %300 = vmatprep.subr.bf16.mxu0 0
  %301 = vmatpush2.bf16.msra.mxu0 0
  %302 = vmatprep.subr.bf16.mxu0 0
  %303 = vmatpush2.bf16.msra.mxu0 0
  %304 = vmatprep.subr.bf16.mxu0 0
  %305 = vmatpush2.bf16.msra.mxu0 0
  %306 = vmatprep.subr.bf16.mxu0 0
  %307 = vmatpush2.bf16.msra.mxu0 0
  %308 = vmatprep.mubr.bf16.mxu0 0
  %309 = vmatmul.mubr.bf16.gmra.mxu0 %v87
  %v310 = vpop.f32.mrf.mxu0
  %v311 = vadd.f32 %v270, %v310
  %v312 = vpop.f32.mrf.mxu0
  %v313 = vpop.f32.mrf.mxu0
  %v314 = vadd.f32 %v273, %v313
  %v315 = vpop.f32.mrf.mxu0
  %316 = vdwg.mxu0
  %v317 = vld [vmem:[%s3] sm:$0xf]
  %v318 = vld [vmem:[%s3 + $0x4] sm:$0xf]
  %v319 = vunpack.c.l.bf16 %v317
  %v320 = vunpack.c.l.bf16 %v318
  %v321 = vadd.f32 %v311, %v319
  %v322 = vadd.f32 %v314, %v320
  %v323 = vmax.f32 %v321, 0.0
  %v324 = vmax.f32 %v322, 0.0
  %v325 = vpack.c.bf16 %v324, %v323
  %v327 = vunpack.c.l.b16 %v325
  %v328 = vunpack.c.h.b16 %v325
  %v329 = vpack.c.b16 %v327, %v327
  %v330 = vpack.c.b16 %v328, %v328
  %333 = vst [vmem:[%s4] sm:$0xf] %v329
  %334 = vst [vmem:[%s4 + $0x4] sm:$0xf] %v330
  // Predicated region
  $region18: #{resnet_autoencoder_forward.24} parent=0 // pred_check
    _
  $region19: #{resnet_autoencoder_forward.24} parent=0 // pred_check_branch
    %336 = sbr.rel (0) target = $region21
  $region20: #{resnet_autoencoder_forward.24} parent=0 // pred_region
    _
  $region21: #{resnet_autoencoder_forward.24} parent=0 // pred_fallthru
    _
  // Predicated region
  $region22: #{resnet_autoencoder_forward.24} parent=0 // pred_check
    _
  $region23: #{resnet_autoencoder_forward.24} parent=0 // pred_check_branch
    %338 = sbr.rel (0) target = $region25
  $region24: #{resnet_autoencoder_forward.24} parent=0 // pred_region
    _
  $region25: #{resnet_autoencoder_forward.24} parent=0 // pred_fallthru
    _

// kernel: resnet_autoencoder_forward.25
$region0: #{resnet_autoencoder_forward.25}
  #allocation0 [shape = 'u32[]', space=smem, size = 0x4, offset = 0x4, fixed_abs, tag = 'smem constant byte address 0x4 - core index']
  #allocation1 [shape = 'u32[144,128]{1,0:T(1,128)}', space=vmem, size = 0x12000, scoped, tag = 'internal scratch']
  %s0 = inlined_call_operand.vmem [shape: bf16[16,384], index: 0, kind: input, shape index: {}]
  %s1 = inlined_call_operand.vmem [shape: bf16[384,128], index: 1, kind: input, shape index: {}]
  %s2 = inlined_call_operand.vmem [shape: f32[2,128], index: 2, kind: input, shape index: {}]
  %s3 = inlined_call_operand.vmem [shape: bf16[16,128], index: 3, kind: output, shape index: {}]
  %s4 = sld [smem:[#allocation0]]
  $region22: #{resnet_autoencoder_forward.25} parent=0
    _
  %s6 = ssub.s32 1, %s4
  %s7 = scalar_select 0, %s6, %s4
  // Predicated region
  $region2: #{resnet_autoencoder_forward.25} parent=0 // pred_check
    _
  $region3: #{resnet_autoencoder_forward.25} parent=0 // pred_check_branch
    %9 = sbr.rel (0) target = $region5
  $region4: #{resnet_autoencoder_forward.25} parent=0 // pred_region
    _
  $region5: #{resnet_autoencoder_forward.25} parent=0 // pred_fallthru
    _
  // Predicated region
  $region6: #{resnet_autoencoder_forward.25} parent=0 // pred_check
    _
  $region7: #{resnet_autoencoder_forward.25} parent=0 // pred_check_branch
    %11 = sbr.rel (0) target = $region9
  $region8: #{resnet_autoencoder_forward.25} parent=0 // pred_region
    _
  $region9: #{resnet_autoencoder_forward.25} parent=0 // pred_fallthru
    _
  // Predicated region
  $region10: #{resnet_autoencoder_forward.25} parent=0 // pred_check
    _
  $region11: #{resnet_autoencoder_forward.25} parent=0 // pred_check_branch
    %13 = sbr.rel (0) target = $region13
  $region12: #{resnet_autoencoder_forward.25} parent=0 // pred_region
    _
  $region13: #{resnet_autoencoder_forward.25} parent=0 // pred_fallthru
    _
  %v15 = vld [vmem:[%s0] sm:$0xff]
  %v16 = vld [vmem:[%s0 + $0x8] sm:$0xf]
  %v17 = vld [vmem:[%s0 + $0xc] sm:$0xff]
  %v18 = vld [vmem:[%s0 + $0x14] sm:$0xf]
  %v19 = vld [vmem:[%s1] sm:$0xf]
  %v20 = vld [vmem:[%s1 + $0x4] sm:$0xf]
  %v21 = vld [vmem:[%s1 + $0x8] sm:$0xf]
  %v22 = vld [vmem:[%s1 + $0xc] sm:$0xf]
  %v23 = vld [vmem:[%s1 + $0x10] sm:$0xf]
  %v24 = vld [vmem:[%s1 + $0x14] sm:$0xf]
  %v25 = vld [vmem:[%s1 + $0x18] sm:$0xf]
  %v26 = vld [vmem:[%s1 + $0x1c] sm:$0xf]
  %v27 = vld [vmem:[%s1 + $0x20] sm:$0xf]
  %v28 = vld [vmem:[%s1 + $0x24] sm:$0xf]
  %v29 = vld [vmem:[%s1 + $0x28] sm:$0xf]
  %v30 = vld [vmem:[%s1 + $0x2c] sm:$0xf]
  %v31 = vld [vmem:[%s1 + $0x30] sm:$0xf]
  %v32 = vld [vmem:[%s1 + $0x34] sm:$0xf]
  %v33 = vld [vmem:[%s1 + $0x38] sm:$0xf]
  %v34 = vld [vmem:[%s1 + $0x3c] sm:$0xf]
  %v35 = vld [vmem:[%s1 + $0x40] sm:$0xf]
  %v36 = vld [vmem:[%s1 + $0x44] sm:$0xf]
  %v37 = vld [vmem:[%s1 + $0x48] sm:$0xf]
  %v38 = vld [vmem:[%s1 + $0x4c] sm:$0xf]
  %v39 = vld [vmem:[%s1 + $0x50] sm:$0xf]
  %v40 = vld [vmem:[%s1 + $0x54] sm:$0xf]
  %v41 = vld [vmem:[%s1 + $0x58] sm:$0xf]
  %v42 = vld [vmem:[%s1 + $0x5c] sm:$0xf]
  %v43 = vld [vmem:[%s1 + $0x60] sm:$0xf]
  %v44 = vld [vmem:[%s1 + $0x64] sm:$0xf]
  %v45 = vld [vmem:[%s1 + $0x68] sm:$0xf]
  %v46 = vld [vmem:[%s1 + $0x6c] sm:$0xf]
  %v47 = vld [vmem:[%s1 + $0x70] sm:$0xf]
  %v48 = vld [vmem:[%s1 + $0x74] sm:$0xf]
  %v49 = vld [vmem:[%s1 + $0x78] sm:$0xf]
  %v50 = vld [vmem:[%s1 + $0x7c] sm:$0xf]
  %v51 = vld [vmem:[%s1 + $0x80] sm:$0xf]
  %v52 = vld [vmem:[%s1 + $0x84] sm:$0xf]
  %v53 = vld [vmem:[%s1 + $0x88] sm:$0xf]
  %v54 = vld [vmem:[%s1 + $0x8c] sm:$0xf]
  %v55 = vld [vmem:[%s1 + $0x90] sm:$0xf]
  %v56 = vld [vmem:[%s1 + $0x94] sm:$0xf]
  %v57 = vld [vmem:[%s1 + $0x98] sm:$0xf]
  %v58 = vld [vmem:[%s1 + $0x9c] sm:$0xf]
  %v59 = vld [vmem:[%s1 + $0xa0] sm:$0xf]
  %v60 = vld [vmem:[%s1 + $0xa4] sm:$0xf]
  %v61 = vld [vmem:[%s1 + $0xa8] sm:$0xf]
  %v62 = vld [vmem:[%s1 + $0xac] sm:$0xf]
  %v63 = vld [vmem:[%s1 + $0xb0] sm:$0xf]
  %v64 = vld [vmem:[%s1 + $0xb4] sm:$0xf]
  %v65 = vld [vmem:[%s1 + $0xb8] sm:$0xf]
  %v66 = vld [vmem:[%s1 + $0xbc] sm:$0xf]
  %v67 = vld [vmem:[%s2] sm:$0x1]
  %v68 = vlaneseq
  %v69 = vshrl.u32 %v68, 7
  %v70 = vsub.s32 0, %v69
  %v71 = vrot.slane %v67, %v70
  %v76 = vunpack.c.l.b16 %v15
  %v77 = vunpack.c.h.b16 %v15
  %v78 = vunpack.c.l.b16 %v16
  %v79 = vunpack.c.l.b16 %v17
  %v80 = vunpack.c.h.b16 %v17
  %v81 = vunpack.c.l.b16 %v18
  %v82 = vpack.c.b16 %v79, %v76
  %v83 = vpack.c.b16 %v80, %v77
  %v84 = vpack.c.b16 %v81, %v78
  %v136 = vunpack.c.l.b16 %v19
  %v137 = vunpack.c.l.b16 %v20
  %v138 = vunpack.c.l.b16 %v21
  %v139 = vunpack.c.l.b16 %v22
  %v140 = vunpack.c.l.b16 %v23
  %v141 = vunpack.c.l.b16 %v24
  %v142 = vunpack.c.l.b16 %v25
  %v143 = vunpack.c.l.b16 %v26
  %v144 = vunpack.c.l.b16 %v27
  %v145 = vunpack.c.l.b16 %v28
  %v146 = vunpack.c.l.b16 %v29
  %v147 = vunpack.c.l.b16 %v30
  %v148 = vunpack.c.l.b16 %v31
  %v149 = vunpack.c.l.b16 %v32
  %v150 = vunpack.c.l.b16 %v33
  %v151 = vunpack.c.l.b16 %v34
  %v152 = vunpack.c.l.b16 %v35
  %v153 = vunpack.c.l.b16 %v36
  %v154 = vunpack.c.l.b16 %v37
  %v155 = vunpack.c.l.b16 %v38
  %v156 = vunpack.c.l.b16 %v39
  %v157 = vunpack.c.l.b16 %v40
  %v158 = vunpack.c.l.b16 %v41
  %v159 = vunpack.c.l.b16 %v42
  %v160 = vunpack.c.l.b16 %v43
  %v161 = vunpack.c.l.b16 %v44
  %v162 = vunpack.c.l.b16 %v45
  %v163 = vunpack.c.l.b16 %v46
  %v164 = vunpack.c.l.b16 %v47
  %v165 = vunpack.c.l.b16 %v48
  %v166 = vunpack.c.l.b16 %v49
  %v167 = vunpack.c.l.b16 %v50
  %v168 = vunpack.c.l.b16 %v51
  %v169 = vunpack.c.l.b16 %v52
  %v170 = vunpack.c.l.b16 %v53
  %v171 = vunpack.c.l.b16 %v54
  %v172 = vunpack.c.l.b16 %v55
  %v173 = vunpack.c.l.b16 %v56
  %v174 = vunpack.c.l.b16 %v57
  %v175 = vunpack.c.l.b16 %v58
  %v176 = vunpack.c.l.b16 %v59
  %v177 = vunpack.c.l.b16 %v60
  %v178 = vunpack.c.l.b16 %v61
  %v179 = vunpack.c.l.b16 %v62
  %v180 = vunpack.c.l.b16 %v63
  %v181 = vunpack.c.l.b16 %v64
  %v182 = vunpack.c.l.b16 %v65
  %v183 = vunpack.c.l.b16 %v66
  %v184 = vpack.c.b16 %v137, %v136
  %v185 = vpack.c.b16 %v139, %v138
  %v186 = vpack.c.b16 %v141, %v140
  %v187 = vpack.c.b16 %v143, %v142
  %v188 = vpack.c.b16 %v145, %v144
  %v189 = vpack.c.b16 %v147, %v146
  %v190 = vpack.c.b16 %v149, %v148
  %v191 = vpack.c.b16 %v151, %v150
  %v192 = vpack.c.b16 %v153, %v152
  %v193 = vpack.c.b16 %v155, %v154
  %v194 = vpack.c.b16 %v157, %v156
  %v195 = vpack.c.b16 %v159, %v158
  %v196 = vpack.c.b16 %v161, %v160
  %v197 = vpack.c.b16 %v163, %v162
  %v198 = vpack.c.b16 %v165, %v164
  %v199 = vpack.c.b16 %v167, %v166
  %v200 = vpack.c.b16 %v169, %v168
  %v201 = vpack.c.b16 %v171, %v170
  %v202 = vpack.c.b16 %v173, %v172
  %v203 = vpack.c.b16 %v175, %v174
  %v204 = vpack.c.b16 %v177, %v176
  %v205 = vpack.c.b16 %v179, %v178
  %v206 = vpack.c.b16 %v181, %v180
  %v207 = vpack.c.b16 %v183, %v182
  %232 = vmatprep.subr.bf16.mxu0 0
  %233 = vmatpush1.bf16.msra.mxu0 %v191
  %234 = vmatprep.subr.bf16.mxu0 0
  %235 = vmatpush1.bf16.msra.mxu0 %v190
  %236 = vmatprep.subr.bf16.mxu0 0
  %237 = vmatpush1.bf16.msra.mxu0 %v189
  %238 = vmatprep.subr.bf16.mxu0 0
  %239 = vmatpush1.bf16.msra.mxu0 %v188
  %240 = vmatprep.subr.bf16.mxu0 0
  %241 = vmatpush1.bf16.msra.mxu0 %v187
  %242 = vmatprep.subr.bf16.mxu0 0
  %243 = vmatpush1.bf16.msra.mxu0 %v186
  %244 = vmatprep.subr.bf16.mxu0 0
  %245 = vmatpush1.bf16.msra.mxu0 %v185
  %246 = vmatprep.subr.bf16.mxu0 0
  %247 = vmatpush1.bf16.msra.mxu0 %v184
  %248 = vmatprep.subr.bf16.mxu0 0
  %249 = vmatpush2.bf16.msra.mxu0 %v199
  %250 = vmatprep.subr.bf16.mxu0 0
  %251 = vmatpush2.bf16.msra.mxu0 %v198
  %252 = vmatprep.subr.bf16.mxu0 0
  %253 = vmatpush2.bf16.msra.mxu0 %v197
  %254 = vmatprep.subr.bf16.mxu0 0
  %255 = vmatpush2.bf16.msra.mxu0 %v196
  %256 = vmatprep.subr.bf16.mxu0 0
  %257 = vmatpush2.bf16.msra.mxu0 %v195
  %258 = vmatprep.subr.bf16.mxu0 0
  %259 = vmatpush2.bf16.msra.mxu0 %v194
  %260 = vmatprep.subr.bf16.mxu0 0
  %261 = vmatpush2.bf16.msra.mxu0 %v193
  %262 = vmatprep.subr.bf16.mxu0 0
  %263 = vmatpush2.bf16.msra.mxu0 %v192
  %264 = vmatprep.mubr.bf16.mxu0 %v83
  %265 = vmatmul.mubr.bf16.gmra.mxu0 %v82
  %v266 = vpop.f32.mrf.mxu0
  %v267 = vadd.f32 %v71, %v266
  %v268 = vpop.f32.mrf.mxu0
  %v269 = vpop.f32.mrf.mxu0
  %v270 = vadd.f32 %v71, %v269
  %v271 = vpop.f32.mrf.mxu0
  %272 = vdwg.mxu0
  %273 = vmatprep.subr.bf16.mxu0 0
  %274 = vmatpush1.bf16.msra.mxu0 %v207
  %275 = vmatprep.subr.bf16.mxu0 0
  %276 = vmatpush1.bf16.msra.mxu0 %v206
  %277 = vmatprep.subr.bf16.mxu0 0
  %278 = vmatpush1.bf16.msra.mxu0 %v205
  %279 = vmatprep.subr.bf16.mxu0 0
  %280 = vmatpush1.bf16.msra.mxu0 %v204
  %281 = vmatprep.subr.bf16.mxu0 0
  %282 = vmatpush1.bf16.msra.mxu0 %v203
  %283 = vmatprep.subr.bf16.mxu0 0
  %284 = vmatpush1.bf16.msra.mxu0 %v202
  %285 = vmatprep.subr.bf16.mxu0 0
  %286 = vmatpush1.bf16.msra.mxu0 %v201
  %287 = vmatprep.subr.bf16.mxu0 0
  %288 = vmatpush1.bf16.msra.mxu0 %v200
  %289 = vmatprep.subr.bf16.mxu0 0
  %290 = vmatpush2.bf16.msra.mxu0 0
  %291 = vmatprep.subr.bf16.mxu0 0
  %292 = vmatpush2.bf16.msra.mxu0 0
  %293 = vmatprep.subr.bf16.mxu0 0
  %294 = vmatpush2.bf16.msra.mxu0 0
  %295 = vmatprep.subr.bf16.mxu0 0
  %296 = vmatpush2.bf16.msra.mxu0 0
  %297 = vmatprep.subr.bf16.mxu0 0
  %298 = vmatpush2.bf16.msra.mxu0 0
  %299 = vmatprep.subr.bf16.mxu0 0
  %300 = vmatpush2.bf16.msra.mxu0 0
  %301 = vmatprep.subr.bf16.mxu0 0
  %302 = vmatpush2.bf16.msra.mxu0 0
  %303 = vmatprep.subr.bf16.mxu0 0
  %304 = vmatpush2.bf16.msra.mxu0 0
  %305 = vmatprep.mubr.bf16.mxu0 0
  %306 = vmatmul.mubr.bf16.gmra.mxu0 %v84
  %v307 = vpop.f32.mrf.mxu0
  %v308 = vadd.f32 %v267, %v307
  %v309 = vpop.f32.mrf.mxu0
  %v310 = vpop.f32.mrf.mxu0
  %v311 = vadd.f32 %v270, %v310
  %v312 = vpop.f32.mrf.mxu0
  %313 = vdwg.mxu0
  %v314 = vld [vmem:[%s2 + $0x1] sm:$0x1]
  %vm315 = vcmp.gt.f32.partialorder %v314, 0.0
  %v316 = vmax.f32 %v308, 0.0
  %v317 = vmax.f32 %v311, 0.0
  %v318 = vsel %vm315, 1, 0
  %v319 = vlaneseq
  %v320 = vshrl.u32 %v319, 7
  %v321 = vsub.s32 0, %v320
  %v322 = vrot.slane %v318, %v321
  %vm323 = vcmp.eq.s32.totalorder %v322, 1
  %v324 = vsel %vm323, %v316, %v308
  %v325 = vsel %vm323, %v317, %v311
  %v326 = vpack.c.bf16 %v325, %v324
  %v328 = vunpack.c.l.b16 %v326
  %v329 = vunpack.c.h.b16 %v326
  %v330 = vpack.c.b16 %v328, %v328
  %v331 = vpack.c.b16 %v329, %v329
  %334 = vst [vmem:[%s3] sm:$0xf] %v330
  %335 = vst [vmem:[%s3 + $0x4] sm:$0xf] %v331
  // Predicated region
  $region14: #{resnet_autoencoder_forward.25} parent=0 // pred_check
    _
  $region15: #{resnet_autoencoder_forward.25} parent=0 // pred_check_branch
    %337 = sbr.rel (0) target = $region17
  $region16: #{resnet_autoencoder_forward.25} parent=0 // pred_region
    _
  $region17: #{resnet_autoencoder_forward.25} parent=0 // pred_fallthru
    _
  // Predicated region
  $region18: #{resnet_autoencoder_forward.25} parent=0 // pred_check
    _
  $region19: #{resnet_autoencoder_forward.25} parent=0 // pred_check_branch
    %339 = sbr.rel (0) target = $region21
  $region20: #{resnet_autoencoder_forward.25} parent=0 // pred_region
    _
  $region21: #{resnet_autoencoder_forward.25} parent=0 // pred_fallthru
    _

// kernel: resnet_autoencoder_forward.26
$region0: #{resnet_autoencoder_forward.26}
  #allocation0 [shape = 'u32[]', space=smem, size = 0x4, offset = 0x4, fixed_abs, tag = 'smem constant byte address 0x4 - core index']
  #allocation1 [shape = 'u32[144,128]{1,0:T(1,128)}', space=vmem, size = 0x12000, scoped, tag = 'internal scratch']
  %s0 = inlined_call_operand.vmem [shape: bf16[16,640], index: 0, kind: input, shape index: {}]
  %s1 = inlined_call_operand.vmem [shape: bf16[640,128], index: 1, kind: input, shape index: {}]
  %s2 = inlined_call_operand.vmem [shape: f32[2,128], index: 2, kind: input, shape index: {}]
  %s3 = inlined_call_operand.vmem [shape: bf16[16,128], index: 3, kind: input, shape index: {}]
  %s4 = inlined_call_operand.vmem [shape: bf16[16,128], index: 4, kind: output, shape index: {}]
  %s5 = sld [smem:[#allocation0]]
  $region26: #{resnet_autoencoder_forward.26} parent=0
    _
  %s7 = ssub.s32 1, %s5
  %s8 = scalar_select 0, %s7, %s5
  // Predicated region
  $region2: #{resnet_autoencoder_forward.26} parent=0 // pred_check
    _
  $region3: #{resnet_autoencoder_forward.26} parent=0 // pred_check_branch
    %10 = sbr.rel (0) target = $region5
  $region4: #{resnet_autoencoder_forward.26} parent=0 // pred_region
    _
  $region5: #{resnet_autoencoder_forward.26} parent=0 // pred_fallthru
    _
  // Predicated region
  $region6: #{resnet_autoencoder_forward.26} parent=0 // pred_check
    _
  $region7: #{resnet_autoencoder_forward.26} parent=0 // pred_check_branch
    %12 = sbr.rel (0) target = $region9
  $region8: #{resnet_autoencoder_forward.26} parent=0 // pred_region
    _
  $region9: #{resnet_autoencoder_forward.26} parent=0 // pred_fallthru
    _
  // Predicated region
  $region10: #{resnet_autoencoder_forward.26} parent=0 // pred_check
    _
  $region11: #{resnet_autoencoder_forward.26} parent=0 // pred_check_branch
    %14 = sbr.rel (0) target = $region13
  $region12: #{resnet_autoencoder_forward.26} parent=0 // pred_region
    _
  $region13: #{resnet_autoencoder_forward.26} parent=0 // pred_fallthru
    _
  // Predicated region
  $region14: #{resnet_autoencoder_forward.26} parent=0 // pred_check
    _
  $region15: #{resnet_autoencoder_forward.26} parent=0 // pred_check_branch
    %16 = sbr.rel (0) target = $region17
  $region16: #{resnet_autoencoder_forward.26} parent=0 // pred_region
    _
  $region17: #{resnet_autoencoder_forward.26} parent=0 // pred_fallthru
    _
  %v18 = vld [vmem:[%s0] sm:$0xff]
  %v19 = vld [vmem:[%s0 + $0x8] sm:$0xff]
  %v20 = vld [vmem:[%s0 + $0x10] sm:$0xf]
  %v21 = vld [vmem:[%s0 + $0x14] sm:$0xff]
  %v22 = vld [vmem:[%s0 + $0x1c] sm:$0xff]
  %v23 = vld [vmem:[%s0 + $0x24] sm:$0xf]
  %v24 = vld [vmem:[%s1] sm:$0xf]
  %v25 = vld [vmem:[%s1 + $0x4] sm:$0xf]
  %v26 = vld [vmem:[%s1 + $0x8] sm:$0xf]
  %v27 = vld [vmem:[%s1 + $0xc] sm:$0xf]
  %v28 = vld [vmem:[%s1 + $0x10] sm:$0xf]
  %v29 = vld [vmem:[%s1 + $0x14] sm:$0xf]
  %v30 = vld [vmem:[%s1 + $0x18] sm:$0xf]
  %v31 = vld [vmem:[%s1 + $0x1c] sm:$0xf]
  %v32 = vld [vmem:[%s1 + $0x20] sm:$0xf]
  %v33 = vld [vmem:[%s1 + $0x24] sm:$0xf]
  %v34 = vld [vmem:[%s1 + $0x28] sm:$0xf]
  %v35 = vld [vmem:[%s1 + $0x2c] sm:$0xf]
  %v36 = vld [vmem:[%s1 + $0x30] sm:$0xf]
  %v37 = vld [vmem:[%s1 + $0x34] sm:$0xf]
  %v38 = vld [vmem:[%s1 + $0x38] sm:$0xf]
  %v39 = vld [vmem:[%s1 + $0x3c] sm:$0xf]
  %v40 = vld [vmem:[%s1 + $0x40] sm:$0xf]
  %v41 = vld [vmem:[%s1 + $0x44] sm:$0xf]
  %v42 = vld [vmem:[%s1 + $0x48] sm:$0xf]
  %v43 = vld [vmem:[%s1 + $0x4c] sm:$0xf]
  %v44 = vld [vmem:[%s1 + $0x50] sm:$0xf]
  %v45 = vld [vmem:[%s1 + $0x54] sm:$0xf]
  %v46 = vld [vmem:[%s1 + $0x58] sm:$0xf]
  %v47 = vld [vmem:[%s1 + $0x5c] sm:$0xf]
  %v48 = vld [vmem:[%s1 + $0x60] sm:$0xf]
  %v49 = vld [vmem:[%s1 + $0x64] sm:$0xf]
  %v50 = vld [vmem:[%s1 + $0x68] sm:$0xf]
  %v51 = vld [vmem:[%s1 + $0x6c] sm:$0xf]
  %v52 = vld [vmem:[%s1 + $0x70] sm:$0xf]
  %v53 = vld [vmem:[%s1 + $0x74] sm:$0xf]
  %v54 = vld [vmem:[%s1 + $0x78] sm:$0xf]
  %v55 = vld [vmem:[%s1 + $0x7c] sm:$0xf]
  %v56 = vld [vmem:[%s1 + $0x80] sm:$0xf]
  %v57 = vld [vmem:[%s1 + $0x84] sm:$0xf]
  %v58 = vld [vmem:[%s1 + $0x88] sm:$0xf]
  %v59 = vld [vmem:[%s1 + $0x8c] sm:$0xf]
  %v60 = vld [vmem:[%s1 + $0x90] sm:$0xf]
  %v61 = vld [vmem:[%s1 + $0x94] sm:$0xf]
  %v62 = vld [vmem:[%s1 + $0x98] sm:$0xf]
  %v63 = vld [vmem:[%s1 + $0x9c] sm:$0xf]
  %v64 = vld [vmem:[%s1 + $0xa0] sm:$0xf]
  %v65 = vld [vmem:[%s1 + $0xa4] sm:$0xf]
  %v66 = vld [vmem:[%s1 + $0xa8] sm:$0xf]
  %v67 = vld [vmem:[%s1 + $0xac] sm:$0xf]
  %v68 = vld [vmem:[%s1 + $0xb0] sm:$0xf]
  %v69 = vld [vmem:[%s1 + $0xb4] sm:$0xf]
  %v70 = vld [vmem:[%s1 + $0xb8] sm:$0xf]
  %v71 = vld [vmem:[%s1 + $0xbc] sm:$0xf]
  %v72 = vld [vmem:[%s1 + $0xc0] sm:$0xf]
  %v73 = vld [vmem:[%s1 + $0xc4] sm:$0xf]
  %v74 = vld [vmem:[%s1 + $0xc8] sm:$0xf]
  %v75 = vld [vmem:[%s1 + $0xcc] sm:$0xf]
  %v76 = vld [vmem:[%s1 + $0xd0] sm:$0xf]
  %v77 = vld [vmem:[%s1 + $0xd4] sm:$0xf]
  %v78 = vld [vmem:[%s1 + $0xd8] sm:$0xf]
  %v79 = vld [vmem:[%s1 + $0xdc] sm:$0xf]
  %v80 = vld [vmem:[%s1 + $0xe0] sm:$0xf]
  %v81 = vld [vmem:[%s1 + $0xe4] sm:$0xf]
  %v82 = vld [vmem:[%s1 + $0xe8] sm:$0xf]
  %v83 = vld [vmem:[%s1 + $0xec] sm:$0xf]
  %v84 = vld [vmem:[%s1 + $0xf0] sm:$0xf]
  %v85 = vld [vmem:[%s1 + $0xf4] sm:$0xf]
  %v86 = vld [vmem:[%s1 + $0xf8] sm:$0xf]
  %v87 = vld [vmem:[%s1 + $0xfc] sm:$0xf]
  %v88 = vld [vmem:[%s1 + $0x100] sm:$0xf]
  %v89 = vld [vmem:[%s1 + $0x104] sm:$0xf]
  %v90 = vld [vmem:[%s1 + $0x108] sm:$0xf]
  %v91 = vld [vmem:[%s1 + $0x10c] sm:$0xf]
  %v92 = vld [vmem:[%s1 + $0x110] sm:$0xf]
  %v93 = vld [vmem:[%s1 + $0x114] sm:$0xf]
  %v94 = vld [vmem:[%s1 + $0x118] sm:$0xf]
  %v95 = vld [vmem:[%s1 + $0x11c] sm:$0xf]
  %v96 = vld [vmem:[%s1 + $0x120] sm:$0xf]
  %v97 = vld [vmem:[%s1 + $0x124] sm:$0xf]
  %v98 = vld [vmem:[%s1 + $0x128] sm:$0xf]
  %v99 = vld [vmem:[%s1 + $0x12c] sm:$0xf]
  %v100 = vld [vmem:[%s1 + $0x130] sm:$0xf]
  %v101 = vld [vmem:[%s1 + $0x134] sm:$0xf]
  %v102 = vld [vmem:[%s1 + $0x138] sm:$0xf]
  %v103 = vld [vmem:[%s1 + $0x13c] sm:$0xf]
  %v104 = vld [vmem:[%s2] sm:$0x1]
  %v105 = vlaneseq
  %v106 = vshrl.u32 %v105, 7
  %v107 = vsub.s32 0, %v106
  %v108 = vrot.slane %v104, %v107
  %v115 = vunpack.c.l.b16 %v18
  %v116 = vunpack.c.h.b16 %v18
  %v117 = vunpack.c.l.b16 %v19
  %v118 = vunpack.c.h.b16 %v19
  %v119 = vunpack.c.l.b16 %v20
  %v120 = vunpack.c.l.b16 %v21
  %v121 = vunpack.c.h.b16 %v21
  %v122 = vunpack.c.l.b16 %v22
  %v123 = vunpack.c.h.b16 %v22
  %v124 = vunpack.c.l.b16 %v23
  %v125 = vpack.c.b16 %v120, %v115
  %v126 = vpack.c.b16 %v121, %v116
  %v127 = vpack.c.b16 %v122, %v117
  %v128 = vpack.c.b16 %v123, %v118
  %v129 = vpack.c.b16 %v124, %v119
  %v215 = vunpack.c.l.b16 %v24
  %v216 = vunpack.c.l.b16 %v25
  %v217 = vunpack.c.l.b16 %v26
  %v218 = vunpack.c.l.b16 %v27
  %v219 = vunpack.c.l.b16 %v28
  %v220 = vunpack.c.l.b16 %v29
  %v221 = vunpack.c.l.b16 %v30
  %v222 = vunpack.c.l.b16 %v31
  %v223 = vunpack.c.l.b16 %v32
  %v224 = vunpack.c.l.b16 %v33
  %v225 = vunpack.c.l.b16 %v34
  %v226 = vunpack.c.l.b16 %v35
  %v227 = vunpack.c.l.b16 %v36
  %v228 = vunpack.c.l.b16 %v37
  %v229 = vunpack.c.l.b16 %v38
  %v230 = vunpack.c.l.b16 %v39
  %v231 = vunpack.c.l.b16 %v40
  %v232 = vunpack.c.l.b16 %v41
  %v233 = vunpack.c.l.b16 %v42
  %v234 = vunpack.c.l.b16 %v43
  %v235 = vunpack.c.l.b16 %v44
  %v236 = vunpack.c.l.b16 %v45
  %v237 = vunpack.c.l.b16 %v46
  %v238 = vunpack.c.l.b16 %v47
  %v239 = vunpack.c.l.b16 %v48
  %v240 = vunpack.c.l.b16 %v49
  %v241 = vunpack.c.l.b16 %v50
  %v242 = vunpack.c.l.b16 %v51
  %v243 = vunpack.c.l.b16 %v52
  %v244 = vunpack.c.l.b16 %v53
  %v245 = vunpack.c.l.b16 %v54
  %v246 = vunpack.c.l.b16 %v55
  %v247 = vunpack.c.l.b16 %v56
  %v248 = vunpack.c.l.b16 %v57
  %v249 = vunpack.c.l.b16 %v58
  %v250 = vunpack.c.l.b16 %v59
  %v251 = vunpack.c.l.b16 %v60
  %v252 = vunpack.c.l.b16 %v61
  %v253 = vunpack.c.l.b16 %v62
  %v254 = vunpack.c.l.b16 %v63
  %v255 = vunpack.c.l.b16 %v64
  %v256 = vunpack.c.l.b16 %v65
  %v257 = vunpack.c.l.b16 %v66
  %v258 = vunpack.c.l.b16 %v67
  %v259 = vunpack.c.l.b16 %v68
  %v260 = vunpack.c.l.b16 %v69
  %v261 = vunpack.c.l.b16 %v70
  %v262 = vunpack.c.l.b16 %v71
  %v263 = vunpack.c.l.b16 %v72
  %v264 = vunpack.c.l.b16 %v73
  %v265 = vunpack.c.l.b16 %v74
  %v266 = vunpack.c.l.b16 %v75
  %v267 = vunpack.c.l.b16 %v76
  %v268 = vunpack.c.l.b16 %v77
  %v269 = vunpack.c.l.b16 %v78
  %v270 = vunpack.c.l.b16 %v79
  %v271 = vunpack.c.l.b16 %v80
  %v272 = vunpack.c.l.b16 %v81
  %v273 = vunpack.c.l.b16 %v82
  %v274 = vunpack.c.l.b16 %v83
  %v275 = vunpack.c.l.b16 %v84
  %v276 = vunpack.c.l.b16 %v85
  %v277 = vunpack.c.l.b16 %v86
  %v278 = vunpack.c.l.b16 %v87
  %v279 = vunpack.c.l.b16 %v88
  %v280 = vunpack.c.l.b16 %v89
  %v281 = vunpack.c.l.b16 %v90
  %v282 = vunpack.c.l.b16 %v91
  %v283 = vunpack.c.l.b16 %v92
  %v284 = vunpack.c.l.b16 %v93
  %v285 = vunpack.c.l.b16 %v94
  %v286 = vunpack.c.l.b16 %v95
  %v287 = vunpack.c.l.b16 %v96
  %v288 = vunpack.c.l.b16 %v97
  %v289 = vunpack.c.l.b16 %v98
  %v290 = vunpack.c.l.b16 %v99
  %v291 = vunpack.c.l.b16 %v100
  %v292 = vunpack.c.l.b16 %v101
  %v293 = vunpack.c.l.b16 %v102
  %v294 = vunpack.c.l.b16 %v103
  %v295 = vpack.c.b16 %v216, %v215
  %v296 = vpack.c.b16 %v218, %v217
  %v297 = vpack.c.b16 %v220, %v219
  %v298 = vpack.c.b16 %v222, %v221
  %v299 = vpack.c.b16 %v224, %v223
  %v300 = vpack.c.b16 %v226, %v225
  %v301 = vpack.c.b16 %v228, %v227
  %v302 = vpack.c.b16 %v230, %v229
  %v303 = vpack.c.b16 %v232, %v231
  %v304 = vpack.c.b16 %v234, %v233
  %v305 = vpack.c.b16 %v236, %v235
  %v306 = vpack.c.b16 %v238, %v237
  %v307 = vpack.c.b16 %v240, %v239
  %v308 = vpack.c.b16 %v242, %v241
  %v309 = vpack.c.b16 %v244, %v243
  %v310 = vpack.c.b16 %v246, %v245
  %v311 = vpack.c.b16 %v248, %v247
  %v312 = vpack.c.b16 %v250, %v249
  %v313 = vpack.c.b16 %v252, %v251
  %v314 = vpack.c.b16 %v254, %v253
  %v315 = vpack.c.b16 %v256, %v255
  %v316 = vpack.c.b16 %v258, %v257
  %v317 = vpack.c.b16 %v260, %v259
  %v318 = vpack.c.b16 %v262, %v261
  %v319 = vpack.c.b16 %v264, %v263
  %v320 = vpack.c.b16 %v266, %v265
  %v321 = vpack.c.b16 %v268, %v267
  %v322 = vpack.c.b16 %v270, %v269
  %v323 = vpack.c.b16 %v272, %v271
  %v324 = vpack.c.b16 %v274, %v273
  %v325 = vpack.c.b16 %v276, %v275
  %v326 = vpack.c.b16 %v278, %v277
  %v327 = vpack.c.b16 %v280, %v279
  %v328 = vpack.c.b16 %v282, %v281
  %v329 = vpack.c.b16 %v284, %v283
  %v330 = vpack.c.b16 %v286, %v285
  %v331 = vpack.c.b16 %v288, %v287
  %v332 = vpack.c.b16 %v290, %v289
  %v333 = vpack.c.b16 %v292, %v291
  %v334 = vpack.c.b16 %v294, %v293
  %375 = vmatprep.subr.bf16.mxu0 0
  %376 = vmatpush1.bf16.msra.mxu0 %v302
  %377 = vmatprep.subr.bf16.mxu0 0
  %378 = vmatpush1.bf16.msra.mxu0 %v301
  %379 = vmatprep.subr.bf16.mxu0 0
  %380 = vmatpush1.bf16.msra.mxu0 %v300
  %381 = vmatprep.subr.bf16.mxu0 0
  %382 = vmatpush1.bf16.msra.mxu0 %v299
  %383 = vmatprep.subr.bf16.mxu0 0
  %384 = vmatpush1.bf16.msra.mxu0 %v298
  %385 = vmatprep.subr.bf16.mxu0 0
  %386 = vmatpush1.bf16.msra.mxu0 %v297
  %387 = vmatprep.subr.bf16.mxu0 0
  %388 = vmatpush1.bf16.msra.mxu0 %v296
  %389 = vmatprep.subr.bf16.mxu0 0
  %390 = vmatpush1.bf16.msra.mxu0 %v295
  %391 = vmatprep.subr.bf16.mxu0 0
  %392 = vmatpush2.bf16.msra.mxu0 %v310
  %393 = vmatprep.subr.bf16.mxu0 0
  %394 = vmatpush2.bf16.msra.mxu0 %v309
  %395 = vmatprep.subr.bf16.mxu0 0
  %396 = vmatpush2.bf16.msra.mxu0 %v308
  %397 = vmatprep.subr.bf16.mxu0 0
  %398 = vmatpush2.bf16.msra.mxu0 %v307
  %399 = vmatprep.subr.bf16.mxu0 0
  %400 = vmatpush2.bf16.msra.mxu0 %v306
  %401 = vmatprep.subr.bf16.mxu0 0
  %402 = vmatpush2.bf16.msra.mxu0 %v305
  %403 = vmatprep.subr.bf16.mxu0 0
  %404 = vmatpush2.bf16.msra.mxu0 %v304
  %405 = vmatprep.subr.bf16.mxu0 0
  %406 = vmatpush2.bf16.msra.mxu0 %v303
  %407 = vmatprep.mubr.bf16.mxu0 %v126
  %408 = vmatmul.mubr.bf16.gmra.mxu0 %v125
  %v409 = vpop.f32.mrf.mxu0
  %v410 = vadd.f32 %v108, %v409
  %v411 = vpop.f32.mrf.mxu0
  %v412 = vpop.f32.mrf.mxu0
  %v413 = vadd.f32 %v108, %v412
  %v414 = vpop.f32.mrf.mxu0
  %415 = vdwg.mxu0
  %416 = vmatprep.subr.bf16.mxu0 0
  %417 = vmatpush1.bf16.msra.mxu0 %v318
  %418 = vmatprep.subr.bf16.mxu0 0
  %419 = vmatpush1.bf16.msra.mxu0 %v317
  %420 = vmatprep.subr.bf16.mxu0 0
  %421 = vmatpush1.bf16.msra.mxu0 %v316
  %422 = vmatprep.subr.bf16.mxu0 0
  %423 = vmatpush1.bf16.msra.mxu0 %v315
  %424 = vmatprep.subr.bf16.mxu0 0
  %425 = vmatpush1.bf16.msra.mxu0 %v314
  %426 = vmatprep.subr.bf16.mxu0 0
  %427 = vmatpush1.bf16.msra.mxu0 %v313
  %428 = vmatprep.subr.bf16.mxu0 0
  %429 = vmatpush1.bf16.msra.mxu0 %v312
  %430 = vmatprep.subr.bf16.mxu0 0
  %431 = vmatpush1.bf16.msra.mxu0 %v311
  %432 = vmatprep.subr.bf16.mxu0 0
  %433 = vmatpush2.bf16.msra.mxu0 %v326
  %434 = vmatprep.subr.bf16.mxu0 0
  %435 = vmatpush2.bf16.msra.mxu0 %v325
  %436 = vmatprep.subr.bf16.mxu0 0
  %437 = vmatpush2.bf16.msra.mxu0 %v324
  %438 = vmatprep.subr.bf16.mxu0 0
  %439 = vmatpush2.bf16.msra.mxu0 %v323
  %440 = vmatprep.subr.bf16.mxu0 0
  %441 = vmatpush2.bf16.msra.mxu0 %v322
  %442 = vmatprep.subr.bf16.mxu0 0
  %443 = vmatpush2.bf16.msra.mxu0 %v321
  %444 = vmatprep.subr.bf16.mxu0 0
  %445 = vmatpush2.bf16.msra.mxu0 %v320
  %446 = vmatprep.subr.bf16.mxu0 0
  %447 = vmatpush2.bf16.msra.mxu0 %v319
  %448 = vmatprep.mubr.bf16.mxu0 %v128
  %449 = vmatmul.mubr.bf16.gmra.mxu0 %v127
  %v450 = vpop.f32.mrf.mxu0
  %v451 = vadd.f32 %v410, %v450
  %v452 = vpop.f32.mrf.mxu0
  %v453 = vpop.f32.mrf.mxu0
  %v454 = vadd.f32 %v413, %v453
  %v455 = vpop.f32.mrf.mxu0
  %456 = vdwg.mxu0
  %457 = vmatprep.subr.bf16.mxu0 0
  %458 = vmatpush1.bf16.msra.mxu0 %v334
  %459 = vmatprep.subr.bf16.mxu0 0
  %460 = vmatpush1.bf16.msra.mxu0 %v333
  %461 = vmatprep.subr.bf16.mxu0 0
  %462 = vmatpush1.bf16.msra.mxu0 %v332
  %463 = vmatprep.subr.bf16.mxu0 0
  %464 = vmatpush1.bf16.msra.mxu0 %v331
  %465 = vmatprep.subr.bf16.mxu0 0
  %466 = vmatpush1.bf16.msra.mxu0 %v330
  %467 = vmatprep.subr.bf16.mxu0 0
  %468 = vmatpush1.bf16.msra.mxu0 %v329
  %469 = vmatprep.subr.bf16.mxu0 0
  %470 = vmatpush1.bf16.msra.mxu0 %v328
  %471 = vmatprep.subr.bf16.mxu0 0
  %472 = vmatpush1.bf16.msra.mxu0 %v327
  %473 = vmatprep.subr.bf16.mxu0 0
  %474 = vmatpush2.bf16.msra.mxu0 0
  %475 = vmatprep.subr.bf16.mxu0 0
  %476 = vmatpush2.bf16.msra.mxu0 0
  %477 = vmatprep.subr.bf16.mxu0 0
  %478 = vmatpush2.bf16.msra.mxu0 0
  %479 = vmatprep.subr.bf16.mxu0 0
  %480 = vmatpush2.bf16.msra.mxu0 0
  %481 = vmatprep.subr.bf16.mxu0 0
  %482 = vmatpush2.bf16.msra.mxu0 0
  %483 = vmatprep.subr.bf16.mxu0 0
  %484 = vmatpush2.bf16.msra.mxu0 0
  %485 = vmatprep.subr.bf16.mxu0 0
  %486 = vmatpush2.bf16.msra.mxu0 0
  %487 = vmatprep.subr.bf16.mxu0 0
  %488 = vmatpush2.bf16.msra.mxu0 0
  %489 = vmatprep.mubr.bf16.mxu0 0
  %490 = vmatmul.mubr.bf16.gmra.mxu0 %v129
  %v491 = vpop.f32.mrf.mxu0
  %v492 = vadd.f32 %v451, %v491
  %v493 = vpop.f32.mrf.mxu0
  %v494 = vpop.f32.mrf.mxu0
  %v495 = vadd.f32 %v454, %v494
  %v496 = vpop.f32.mrf.mxu0
  %497 = vdwg.mxu0
  %v498 = vld [vmem:[%s3] sm:$0xf]
  %v499 = vld [vmem:[%s3 + $0x4] sm:$0xf]
  %v500 = vunpack.c.l.bf16 %v498
  %v501 = vunpack.c.l.bf16 %v499
  %v502 = vadd.f32 %v492, %v500
  %v503 = vadd.f32 %v495, %v501
  %v504 = vmax.f32 %v502, 0.0
  %v505 = vmax.f32 %v503, 0.0
  %v506 = vpack.c.bf16 %v505, %v504
  %v508 = vunpack.c.l.b16 %v506
  %v509 = vunpack.c.h.b16 %v506
  %v510 = vpack.c.b16 %v508, %v508
  %v511 = vpack.c.b16 %v509, %v509
  %514 = vst [vmem:[%s4] sm:$0xf] %v510
  %515 = vst [vmem:[%s4 + $0x4] sm:$0xf] %v511
  // Predicated region
  $region18: #{resnet_autoencoder_forward.26} parent=0 // pred_check
    _
  $region19: #{resnet_autoencoder_forward.26} parent=0 // pred_check_branch
    %517 = sbr.rel (0) target = $region21
  $region20: #{resnet_autoencoder_forward.26} parent=0 // pred_region
    _
  $region21: #{resnet_autoencoder_forward.26} parent=0 // pred_fallthru
    _
  // Predicated region
  $region22: #{resnet_autoencoder_forward.26} parent=0 // pred_check
    _
  $region23: #{resnet_autoencoder_forward.26} parent=0 // pred_check_branch
    %519 = sbr.rel (0) target = $region25
  $region24: #{resnet_autoencoder_forward.26} parent=0 // pred_region
    _
  $region25: #{resnet_autoencoder_forward.26} parent=0 // pred_fallthru
    _

// kernel: resnet_autoencoder_forward.27
$region0: #{resnet_autoencoder_forward.27}
  #allocation0 [shape = 'u32[]', space=smem, size = 0x4, offset = 0x4, fixed_abs, tag = 'smem constant byte address 0x4 - core index']
  #allocation1 [shape = 'u32[144,128]{1,0:T(1,128)}', space=vmem, size = 0x12000, scoped, tag = 'internal scratch']
  %s0 = inlined_call_operand.vmem [shape: bf16[16,640], index: 0, kind: input, shape index: {}]
  %s1 = inlined_call_operand.vmem [shape: bf16[640,128], index: 1, kind: input, shape index: {}]
  %s2 = inlined_call_operand.vmem [shape: f32[2,128], index: 2, kind: input, shape index: {}]
  %s3 = inlined_call_operand.vmem [shape: bf16[16,128], index: 3, kind: output, shape index: {}]
  %s4 = sld [smem:[#allocation0]]
  $region22: #{resnet_autoencoder_forward.27} parent=0
    _
  %s6 = ssub.s32 1, %s4
  %s7 = scalar_select 0, %s6, %s4
  // Predicated region
  $region2: #{resnet_autoencoder_forward.27} parent=0 // pred_check
    _
  $region3: #{resnet_autoencoder_forward.27} parent=0 // pred_check_branch
    %9 = sbr.rel (0) target = $region5
  $region4: #{resnet_autoencoder_forward.27} parent=0 // pred_region
    _
  $region5: #{resnet_autoencoder_forward.27} parent=0 // pred_fallthru
    _
  // Predicated region
  $region6: #{resnet_autoencoder_forward.27} parent=0 // pred_check
    _
  $region7: #{resnet_autoencoder_forward.27} parent=0 // pred_check_branch
    %11 = sbr.rel (0) target = $region9
  $region8: #{resnet_autoencoder_forward.27} parent=0 // pred_region
    _
  $region9: #{resnet_autoencoder_forward.27} parent=0 // pred_fallthru
    _
  // Predicated region
  $region10: #{resnet_autoencoder_forward.27} parent=0 // pred_check
    _
  $region11: #{resnet_autoencoder_forward.27} parent=0 // pred_check_branch
    %13 = sbr.rel (0) target = $region13
  $region12: #{resnet_autoencoder_forward.27} parent=0 // pred_region
    _
  $region13: #{resnet_autoencoder_forward.27} parent=0 // pred_fallthru
    _
  %v15 = vld [vmem:[%s0] sm:$0xff]
  %v16 = vld [vmem:[%s0 + $0x8] sm:$0xff]
  %v17 = vld [vmem:[%s0 + $0x10] sm:$0xf]
  %v18 = vld [vmem:[%s0 + $0x14] sm:$0xff]
  %v19 = vld [vmem:[%s0 + $0x1c] sm:$0xff]
  %v20 = vld [vmem:[%s0 + $0x24] sm:$0xf]
  %v21 = vld [vmem:[%s1] sm:$0xf]
  %v22 = vld [vmem:[%s1 + $0x4] sm:$0xf]
  %v23 = vld [vmem:[%s1 + $0x8] sm:$0xf]
  %v24 = vld [vmem:[%s1 + $0xc] sm:$0xf]
  %v25 = vld [vmem:[%s1 + $0x10] sm:$0xf]
  %v26 = vld [vmem:[%s1 + $0x14] sm:$0xf]
  %v27 = vld [vmem:[%s1 + $0x18] sm:$0xf]
  %v28 = vld [vmem:[%s1 + $0x1c] sm:$0xf]
  %v29 = vld [vmem:[%s1 + $0x20] sm:$0xf]
  %v30 = vld [vmem:[%s1 + $0x24] sm:$0xf]
  %v31 = vld [vmem:[%s1 + $0x28] sm:$0xf]
  %v32 = vld [vmem:[%s1 + $0x2c] sm:$0xf]
  %v33 = vld [vmem:[%s1 + $0x30] sm:$0xf]
  %v34 = vld [vmem:[%s1 + $0x34] sm:$0xf]
  %v35 = vld [vmem:[%s1 + $0x38] sm:$0xf]
  %v36 = vld [vmem:[%s1 + $0x3c] sm:$0xf]
  %v37 = vld [vmem:[%s1 + $0x40] sm:$0xf]
  %v38 = vld [vmem:[%s1 + $0x44] sm:$0xf]
  %v39 = vld [vmem:[%s1 + $0x48] sm:$0xf]
  %v40 = vld [vmem:[%s1 + $0x4c] sm:$0xf]
  %v41 = vld [vmem:[%s1 + $0x50] sm:$0xf]
  %v42 = vld [vmem:[%s1 + $0x54] sm:$0xf]
  %v43 = vld [vmem:[%s1 + $0x58] sm:$0xf]
  %v44 = vld [vmem:[%s1 + $0x5c] sm:$0xf]
  %v45 = vld [vmem:[%s1 + $0x60] sm:$0xf]
  %v46 = vld [vmem:[%s1 + $0x64] sm:$0xf]
  %v47 = vld [vmem:[%s1 + $0x68] sm:$0xf]
  %v48 = vld [vmem:[%s1 + $0x6c] sm:$0xf]
  %v49 = vld [vmem:[%s1 + $0x70] sm:$0xf]
  %v50 = vld [vmem:[%s1 + $0x74] sm:$0xf]
  %v51 = vld [vmem:[%s1 + $0x78] sm:$0xf]
  %v52 = vld [vmem:[%s1 + $0x7c] sm:$0xf]
  %v53 = vld [vmem:[%s1 + $0x80] sm:$0xf]
  %v54 = vld [vmem:[%s1 + $0x84] sm:$0xf]
  %v55 = vld [vmem:[%s1 + $0x88] sm:$0xf]
  %v56 = vld [vmem:[%s1 + $0x8c] sm:$0xf]
  %v57 = vld [vmem:[%s1 + $0x90] sm:$0xf]
  %v58 = vld [vmem:[%s1 + $0x94] sm:$0xf]
  %v59 = vld [vmem:[%s1 + $0x98] sm:$0xf]
  %v60 = vld [vmem:[%s1 + $0x9c] sm:$0xf]
  %v61 = vld [vmem:[%s1 + $0xa0] sm:$0xf]
  %v62 = vld [vmem:[%s1 + $0xa4] sm:$0xf]
  %v63 = vld [vmem:[%s1 + $0xa8] sm:$0xf]
  %v64 = vld [vmem:[%s1 + $0xac] sm:$0xf]
  %v65 = vld [vmem:[%s1 + $0xb0] sm:$0xf]
  %v66 = vld [vmem:[%s1 + $0xb4] sm:$0xf]
  %v67 = vld [vmem:[%s1 + $0xb8] sm:$0xf]
  %v68 = vld [vmem:[%s1 + $0xbc] sm:$0xf]
  %v69 = vld [vmem:[%s1 + $0xc0] sm:$0xf]
  %v70 = vld [vmem:[%s1 + $0xc4] sm:$0xf]
  %v71 = vld [vmem:[%s1 + $0xc8] sm:$0xf]
  %v72 = vld [vmem:[%s1 + $0xcc] sm:$0xf]
  %v73 = vld [vmem:[%s1 + $0xd0] sm:$0xf]
  %v74 = vld [vmem:[%s1 + $0xd4] sm:$0xf]
  %v75 = vld [vmem:[%s1 + $0xd8] sm:$0xf]
  %v76 = vld [vmem:[%s1 + $0xdc] sm:$0xf]
  %v77 = vld [vmem:[%s1 + $0xe0] sm:$0xf]
  %v78 = vld [vmem:[%s1 + $0xe4] sm:$0xf]
  %v79 = vld [vmem:[%s1 + $0xe8] sm:$0xf]
  %v80 = vld [vmem:[%s1 + $0xec] sm:$0xf]
  %v81 = vld [vmem:[%s1 + $0xf0] sm:$0xf]
  %v82 = vld [vmem:[%s1 + $0xf4] sm:$0xf]
  %v83 = vld [vmem:[%s1 + $0xf8] sm:$0xf]
  %v84 = vld [vmem:[%s1 + $0xfc] sm:$0xf]
  %v85 = vld [vmem:[%s1 + $0x100] sm:$0xf]
  %v86 = vld [vmem:[%s1 + $0x104] sm:$0xf]
  %v87 = vld [vmem:[%s1 + $0x108] sm:$0xf]
  %v88 = vld [vmem:[%s1 + $0x10c] sm:$0xf]
  %v89 = vld [vmem:[%s1 + $0x110] sm:$0xf]
  %v90 = vld [vmem:[%s1 + $0x114] sm:$0xf]
  %v91 = vld [vmem:[%s1 + $0x118] sm:$0xf]
  %v92 = vld [vmem:[%s1 + $0x11c] sm:$0xf]
  %v93 = vld [vmem:[%s1 + $0x120] sm:$0xf]
  %v94 = vld [vmem:[%s1 + $0x124] sm:$0xf]
  %v95 = vld [vmem:[%s1 + $0x128] sm:$0xf]
  %v96 = vld [vmem:[%s1 + $0x12c] sm:$0xf]
  %v97 = vld [vmem:[%s1 + $0x130] sm:$0xf]
  %v98 = vld [vmem:[%s1 + $0x134] sm:$0xf]
  %v99 = vld [vmem:[%s1 + $0x138] sm:$0xf]
  %v100 = vld [vmem:[%s1 + $0x13c] sm:$0xf]
  %v101 = vld [vmem:[%s2] sm:$0x1]
  %v102 = vlaneseq
  %v103 = vshrl.u32 %v102, 7
  %v104 = vsub.s32 0, %v103
  %v105 = vrot.slane %v101, %v104
  %v112 = vunpack.c.l.b16 %v15
  %v113 = vunpack.c.h.b16 %v15
  %v114 = vunpack.c.l.b16 %v16
  %v115 = vunpack.c.h.b16 %v16
  %v116 = vunpack.c.l.b16 %v17
  %v117 = vunpack.c.l.b16 %v18
  %v118 = vunpack.c.h.b16 %v18
  %v119 = vunpack.c.l.b16 %v19
  %v120 = vunpack.c.h.b16 %v19
  %v121 = vunpack.c.l.b16 %v20
  %v122 = vpack.c.b16 %v117, %v112
  %v123 = vpack.c.b16 %v118, %v113
  %v124 = vpack.c.b16 %v119, %v114
  %v125 = vpack.c.b16 %v120, %v115
  %v126 = vpack.c.b16 %v121, %v116
  %v212 = vunpack.c.l.b16 %v21
  %v213 = vunpack.c.l.b16 %v22
  %v214 = vunpack.c.l.b16 %v23
  %v215 = vunpack.c.l.b16 %v24
  %v216 = vunpack.c.l.b16 %v25
  %v217 = vunpack.c.l.b16 %v26
  %v218 = vunpack.c.l.b16 %v27
  %v219 = vunpack.c.l.b16 %v28
  %v220 = vunpack.c.l.b16 %v29
  %v221 = vunpack.c.l.b16 %v30
  %v222 = vunpack.c.l.b16 %v31
  %v223 = vunpack.c.l.b16 %v32
  %v224 = vunpack.c.l.b16 %v33
  %v225 = vunpack.c.l.b16 %v34
  %v226 = vunpack.c.l.b16 %v35
  %v227 = vunpack.c.l.b16 %v36
  %v228 = vunpack.c.l.b16 %v37
  %v229 = vunpack.c.l.b16 %v38
  %v230 = vunpack.c.l.b16 %v39
  %v231 = vunpack.c.l.b16 %v40
  %v232 = vunpack.c.l.b16 %v41
  %v233 = vunpack.c.l.b16 %v42
  %v234 = vunpack.c.l.b16 %v43
  %v235 = vunpack.c.l.b16 %v44
  %v236 = vunpack.c.l.b16 %v45
  %v237 = vunpack.c.l.b16 %v46
  %v238 = vunpack.c.l.b16 %v47
  %v239 = vunpack.c.l.b16 %v48
  %v240 = vunpack.c.l.b16 %v49
  %v241 = vunpack.c.l.b16 %v50
  %v242 = vunpack.c.l.b16 %v51
  %v243 = vunpack.c.l.b16 %v52
  %v244 = vunpack.c.l.b16 %v53
  %v245 = vunpack.c.l.b16 %v54
  %v246 = vunpack.c.l.b16 %v55
  %v247 = vunpack.c.l.b16 %v56
  %v248 = vunpack.c.l.b16 %v57
  %v249 = vunpack.c.l.b16 %v58
  %v250 = vunpack.c.l.b16 %v59
  %v251 = vunpack.c.l.b16 %v60
  %v252 = vunpack.c.l.b16 %v61
  %v253 = vunpack.c.l.b16 %v62
  %v254 = vunpack.c.l.b16 %v63
  %v255 = vunpack.c.l.b16 %v64
  %v256 = vunpack.c.l.b16 %v65
  %v257 = vunpack.c.l.b16 %v66
  %v258 = vunpack.c.l.b16 %v67
  %v259 = vunpack.c.l.b16 %v68
  %v260 = vunpack.c.l.b16 %v69
  %v261 = vunpack.c.l.b16 %v70
  %v262 = vunpack.c.l.b16 %v71
  %v263 = vunpack.c.l.b16 %v72
  %v264 = vunpack.c.l.b16 %v73
  %v265 = vunpack.c.l.b16 %v74
  %v266 = vunpack.c.l.b16 %v75
  %v267 = vunpack.c.l.b16 %v76
  %v268 = vunpack.c.l.b16 %v77
  %v269 = vunpack.c.l.b16 %v78
  %v270 = vunpack.c.l.b16 %v79
  %v271 = vunpack.c.l.b16 %v80
  %v272 = vunpack.c.l.b16 %v81
  %v273 = vunpack.c.l.b16 %v82
  %v274 = vunpack.c.l.b16 %v83
  %v275 = vunpack.c.l.b16 %v84
  %v276 = vunpack.c.l.b16 %v85
  %v277 = vunpack.c.l.b16 %v86
  %v278 = vunpack.c.l.b16 %v87
  %v279 = vunpack.c.l.b16 %v88
  %v280 = vunpack.c.l.b16 %v89
  %v281 = vunpack.c.l.b16 %v90
  %v282 = vunpack.c.l.b16 %v91
  %v283 = vunpack.c.l.b16 %v92
  %v284 = vunpack.c.l.b16 %v93
  %v285 = vunpack.c.l.b16 %v94
  %v286 = vunpack.c.l.b16 %v95
  %v287 = vunpack.c.l.b16 %v96
  %v288 = vunpack.c.l.b16 %v97
  %v289 = vunpack.c.l.b16 %v98
  %v290 = vunpack.c.l.b16 %v99
  %v291 = vunpack.c.l.b16 %v100
  %v292 = vpack.c.b16 %v213, %v212
  %v293 = vpack.c.b16 %v215, %v214
  %v294 = vpack.c.b16 %v217, %v216
  %v295 = vpack.c.b16 %v219, %v218
  %v296 = vpack.c.b16 %v221, %v220
  %v297 = vpack.c.b16 %v223, %v222
  %v298 = vpack.c.b16 %v225, %v224
  %v299 = vpack.c.b16 %v227, %v226
  %v300 = vpack.c.b16 %v229, %v228
  %v301 = vpack.c.b16 %v231, %v230
  %v302 = vpack.c.b16 %v233, %v232
  %v303 = vpack.c.b16 %v235, %v234
  %v304 = vpack.c.b16 %v237, %v236
  %v305 = vpack.c.b16 %v239, %v238
  %v306 = vpack.c.b16 %v241, %v240
  %v307 = vpack.c.b16 %v243, %v242
  %v308 = vpack.c.b16 %v245, %v244
  %v309 = vpack.c.b16 %v247, %v246
  %v310 = vpack.c.b16 %v249, %v248
  %v311 = vpack.c.b16 %v251, %v250
  %v312 = vpack.c.b16 %v253, %v252
  %v313 = vpack.c.b16 %v255, %v254
  %v314 = vpack.c.b16 %v257, %v256
  %v315 = vpack.c.b16 %v259, %v258
  %v316 = vpack.c.b16 %v261, %v260
  %v317 = vpack.c.b16 %v263, %v262
  %v318 = vpack.c.b16 %v265, %v264
  %v319 = vpack.c.b16 %v267, %v266
  %v320 = vpack.c.b16 %v269, %v268
  %v321 = vpack.c.b16 %v271, %v270
  %v322 = vpack.c.b16 %v273, %v272
  %v323 = vpack.c.b16 %v275, %v274
  %v324 = vpack.c.b16 %v277, %v276
  %v325 = vpack.c.b16 %v279, %v278
  %v326 = vpack.c.b16 %v281, %v280
  %v327 = vpack.c.b16 %v283, %v282
  %v328 = vpack.c.b16 %v285, %v284
  %v329 = vpack.c.b16 %v287, %v286
  %v330 = vpack.c.b16 %v289, %v288
  %v331 = vpack.c.b16 %v291, %v290
  %372 = vmatprep.subr.bf16.mxu0 0
  %373 = vmatpush1.bf16.msra.mxu0 %v299
  %374 = vmatprep.subr.bf16.mxu0 0
  %375 = vmatpush1.bf16.msra.mxu0 %v298
  %376 = vmatprep.subr.bf16.mxu0 0
  %377 = vmatpush1.bf16.msra.mxu0 %v297
  %378 = vmatprep.subr.bf16.mxu0 0
  %379 = vmatpush1.bf16.msra.mxu0 %v296
  %380 = vmatprep.subr.bf16.mxu0 0
  %381 = vmatpush1.bf16.msra.mxu0 %v295
  %382 = vmatprep.subr.bf16.mxu0 0
  %383 = vmatpush1.bf16.msra.mxu0 %v294
  %384 = vmatprep.subr.bf16.mxu0 0
  %385 = vmatpush1.bf16.msra.mxu0 %v293
  %386 = vmatprep.subr.bf16.mxu0 0
  %387 = vmatpush1.bf16.msra.mxu0 %v292
  %388 = vmatprep.subr.bf16.mxu0 0
  %389 = vmatpush2.bf16.msra.mxu0 %v307
  %390 = vmatprep.subr.bf16.mxu0 0
  %391 = vmatpush2.bf16.msra.mxu0 %v306
  %392 = vmatprep.subr.bf16.mxu0 0
  %393 = vmatpush2.bf16.msra.mxu0 %v305
  %394 = vmatprep.subr.bf16.mxu0 0
  %395 = vmatpush2.bf16.msra.mxu0 %v304
  %396 = vmatprep.subr.bf16.mxu0 0
  %397 = vmatpush2.bf16.msra.mxu0 %v303
  %398 = vmatprep.subr.bf16.mxu0 0
  %399 = vmatpush2.bf16.msra.mxu0 %v302
  %400 = vmatprep.subr.bf16.mxu0 0
  %401 = vmatpush2.bf16.msra.mxu0 %v301
  %402 = vmatprep.subr.bf16.mxu0 0
  %403 = vmatpush2.bf16.msra.mxu0 %v300
  %404 = vmatprep.mubr.bf16.mxu0 %v123
  %405 = vmatmul.mubr.bf16.gmra.mxu0 %v122
  %v406 = vpop.f32.mrf.mxu0
  %v407 = vadd.f32 %v105, %v406
  %v408 = vpop.f32.mrf.mxu0
  %v409 = vpop.f32.mrf.mxu0
  %v410 = vadd.f32 %v105, %v409
  %v411 = vpop.f32.mrf.mxu0
  %412 = vdwg.mxu0
  %413 = vmatprep.subr.bf16.mxu0 0
  %414 = vmatpush1.bf16.msra.mxu0 %v315
  %415 = vmatprep.subr.bf16.mxu0 0
  %416 = vmatpush1.bf16.msra.mxu0 %v314
  %417 = vmatprep.subr.bf16.mxu0 0
  %418 = vmatpush1.bf16.msra.mxu0 %v313
  %419 = vmatprep.subr.bf16.mxu0 0
  %420 = vmatpush1.bf16.msra.mxu0 %v312
  %421 = vmatprep.subr.bf16.mxu0 0
  %422 = vmatpush1.bf16.msra.mxu0 %v311
  %423 = vmatprep.subr.bf16.mxu0 0
  %424 = vmatpush1.bf16.msra.mxu0 %v310
  %425 = vmatprep.subr.bf16.mxu0 0
  %426 = vmatpush1.bf16.msra.mxu0 %v309
  %427 = vmatprep.subr.bf16.mxu0 0
  %428 = vmatpush1.bf16.msra.mxu0 %v308
  %429 = vmatprep.subr.bf16.mxu0 0
  %430 = vmatpush2.bf16.msra.mxu0 %v323
  %431 = vmatprep.subr.bf16.mxu0 0
  %432 = vmatpush2.bf16.msra.mxu0 %v322
  %433 = vmatprep.subr.bf16.mxu0 0
  %434 = vmatpush2.bf16.msra.mxu0 %v321
  %435 = vmatprep.subr.bf16.mxu0 0
  %436 = vmatpush2.bf16.msra.mxu0 %v320
  %437 = vmatprep.subr.bf16.mxu0 0
  %438 = vmatpush2.bf16.msra.mxu0 %v319
  %439 = vmatprep.subr.bf16.mxu0 0
  %440 = vmatpush2.bf16.msra.mxu0 %v318
  %441 = vmatprep.subr.bf16.mxu0 0
  %442 = vmatpush2.bf16.msra.mxu0 %v317
  %443 = vmatprep.subr.bf16.mxu0 0
  %444 = vmatpush2.bf16.msra.mxu0 %v316
  %445 = vmatprep.mubr.bf16.mxu0 %v125
  %446 = vmatmul.mubr.bf16.gmra.mxu0 %v124
  %v447 = vpop.f32.mrf.mxu0
  %v448 = vadd.f32 %v407, %v447
  %v449 = vpop.f32.mrf.mxu0
  %v450 = vpop.f32.mrf.mxu0
  %v451 = vadd.f32 %v410, %v450
  %v452 = vpop.f32.mrf.mxu0
  %453 = vdwg.mxu0
  %454 = vmatprep.subr.bf16.mxu0 0
  %455 = vmatpush1.bf16.msra.mxu0 %v331
  %456 = vmatprep.subr.bf16.mxu0 0
  %457 = vmatpush1.bf16.msra.mxu0 %v330
  %458 = vmatprep.subr.bf16.mxu0 0
  %459 = vmatpush1.bf16.msra.mxu0 %v329
  %460 = vmatprep.subr.bf16.mxu0 0
  %461 = vmatpush1.bf16.msra.mxu0 %v328
  %462 = vmatprep.subr.bf16.mxu0 0
  %463 = vmatpush1.bf16.msra.mxu0 %v327
  %464 = vmatprep.subr.bf16.mxu0 0
  %465 = vmatpush1.bf16.msra.mxu0 %v326
  %466 = vmatprep.subr.bf16.mxu0 0
  %467 = vmatpush1.bf16.msra.mxu0 %v325
  %468 = vmatprep.subr.bf16.mxu0 0
  %469 = vmatpush1.bf16.msra.mxu0 %v324
  %470 = vmatprep.subr.bf16.mxu0 0
  %471 = vmatpush2.bf16.msra.mxu0 0
  %472 = vmatprep.subr.bf16.mxu0 0
  %473 = vmatpush2.bf16.msra.mxu0 0
  %474 = vmatprep.subr.bf16.mxu0 0
  %475 = vmatpush2.bf16.msra.mxu0 0
  %476 = vmatprep.subr.bf16.mxu0 0
  %477 = vmatpush2.bf16.msra.mxu0 0
  %478 = vmatprep.subr.bf16.mxu0 0
  %479 = vmatpush2.bf16.msra.mxu0 0
  %480 = vmatprep.subr.bf16.mxu0 0
  %481 = vmatpush2.bf16.msra.mxu0 0
  %482 = vmatprep.subr.bf16.mxu0 0
  %483 = vmatpush2.bf16.msra.mxu0 0
  %484 = vmatprep.subr.bf16.mxu0 0
  %485 = vmatpush2.bf16.msra.mxu0 0
  %486 = vmatprep.mubr.bf16.mxu0 0
  %487 = vmatmul.mubr.bf16.gmra.mxu0 %v126
  %v488 = vpop.f32.mrf.mxu0
  %v489 = vadd.f32 %v448, %v488
  %v490 = vpop.f32.mrf.mxu0
  %v491 = vpop.f32.mrf.mxu0
  %v492 = vadd.f32 %v451, %v491
  %v493 = vpop.f32.mrf.mxu0
  %494 = vdwg.mxu0
  %v495 = vld [vmem:[%s2 + $0x1] sm:$0x1]
  %vm496 = vcmp.gt.f32.partialorder %v495, 0.0
  %v497 = vmax.f32 %v489, 0.0
  %v498 = vmax.f32 %v492, 0.0
  %v499 = vsel %vm496, 1, 0
  %v500 = vlaneseq
  %v501 = vshrl.u32 %v500, 7
  %v502 = vsub.s32 0, %v501
  %v503 = vrot.slane %v499, %v502
  %vm504 = vcmp.eq.s32.totalorder %v503, 1
  %v505 = vsel %vm504, %v497, %v489
  %v506 = vsel %vm504, %v498, %v492
  %v507 = vpack.c.bf16 %v506, %v505
  %v509 = vunpack.c.l.b16 %v507
  %v510 = vunpack.c.h.b16 %v507
  %v511 = vpack.c.b16 %v509, %v509
  %v512 = vpack.c.b16 %v510, %v510
  %515 = vst [vmem:[%s3] sm:$0xf] %v511
  %516 = vst [vmem:[%s3 + $0x4] sm:$0xf] %v512
  // Predicated region
  $region14: #{resnet_autoencoder_forward.27} parent=0 // pred_check
    _
  $region15: #{resnet_autoencoder_forward.27} parent=0 // pred_check_branch
    %518 = sbr.rel (0) target = $region17
  $region16: #{resnet_autoencoder_forward.27} parent=0 // pred_region
    _
  $region17: #{resnet_autoencoder_forward.27} parent=0 // pred_fallthru
    _
  // Predicated region
  $region18: #{resnet_autoencoder_forward.27} parent=0 // pred_check
    _
  $region19: #{resnet_autoencoder_forward.27} parent=0 // pred_check_branch
    %520 = sbr.rel (0) target = $region21
  $region20: #{resnet_autoencoder_forward.27} parent=0 // pred_region
    _
  $region21: #{resnet_autoencoder_forward.27} parent=0 // pred_fallthru
    _

// kernel: resnet_autoencoder_forward.28
$region0: #{resnet_autoencoder_forward.28}
  #allocation0 [shape = 'u32[]', space=smem, size = 0x4, offset = 0x4, fixed_abs, tag = 'smem constant byte address 0x4 - core index']
  #allocation1 [shape = 'u32[144,128]{1,0:T(1,128)}', space=vmem, size = 0x12000, scoped, tag = 'internal scratch']
  %s0 = inlined_call_operand.vmem [shape: bf16[16,256], index: 0, kind: input, shape index: {}]
  %s1 = inlined_call_operand.vmem [shape: bf16[256,128], index: 1, kind: input, shape index: {}]
  %s2 = inlined_call_operand.vmem [shape: f32[2,128], index: 2, kind: input, shape index: {}]
  %s3 = inlined_call_operand.vmem [shape: bf16[16,128], index: 3, kind: input, shape index: {}]
  %s4 = inlined_call_operand.vmem [shape: bf16[16,128], index: 4, kind: output, shape index: {}]
  %s5 = sld [smem:[#allocation0]]
  $region26: #{resnet_autoencoder_forward.28} parent=0
    _
  %s7 = ssub.s32 1, %s5
  %s8 = scalar_select 0, %s7, %s5
  // Predicated region
  $region2: #{resnet_autoencoder_forward.28} parent=0 // pred_check
    _
  $region3: #{resnet_autoencoder_forward.28} parent=0 // pred_check_branch
    %10 = sbr.rel (0) target = $region5
  $region4: #{resnet_autoencoder_forward.28} parent=0 // pred_region
    _
  $region5: #{resnet_autoencoder_forward.28} parent=0 // pred_fallthru
    _
  // Predicated region
  $region6: #{resnet_autoencoder_forward.28} parent=0 // pred_check
    _
  $region7: #{resnet_autoencoder_forward.28} parent=0 // pred_check_branch
    %12 = sbr.rel (0) target = $region9
  $region8: #{resnet_autoencoder_forward.28} parent=0 // pred_region
    _
  $region9: #{resnet_autoencoder_forward.28} parent=0 // pred_fallthru
    _
  // Predicated region
  $region10: #{resnet_autoencoder_forward.28} parent=0 // pred_check
    _
  $region11: #{resnet_autoencoder_forward.28} parent=0 // pred_check_branch
    %14 = sbr.rel (0) target = $region13
  $region12: #{resnet_autoencoder_forward.28} parent=0 // pred_region
    _
  $region13: #{resnet_autoencoder_forward.28} parent=0 // pred_fallthru
    _
  // Predicated region
  $region14: #{resnet_autoencoder_forward.28} parent=0 // pred_check
    _
  $region15: #{resnet_autoencoder_forward.28} parent=0 // pred_check_branch
    %16 = sbr.rel (0) target = $region17
  $region16: #{resnet_autoencoder_forward.28} parent=0 // pred_region
    _
  $region17: #{resnet_autoencoder_forward.28} parent=0 // pred_fallthru
    _
  %v18 = vld [vmem:[%s0] sm:$0xff]
  %v19 = vld [vmem:[%s0 + $0x8] sm:$0xff]
  %v20 = vld [vmem:[%s1] sm:$0xf]
  %v21 = vld [vmem:[%s1 + $0x4] sm:$0xf]
  %v22 = vld [vmem:[%s1 + $0x8] sm:$0xf]
  %v23 = vld [vmem:[%s1 + $0xc] sm:$0xf]
  %v24 = vld [vmem:[%s1 + $0x10] sm:$0xf]
  %v25 = vld [vmem:[%s1 + $0x14] sm:$0xf]
  %v26 = vld [vmem:[%s1 + $0x18] sm:$0xf]
  %v27 = vld [vmem:[%s1 + $0x1c] sm:$0xf]
  %v28 = vld [vmem:[%s1 + $0x20] sm:$0xf]
  %v29 = vld [vmem:[%s1 + $0x24] sm:$0xf]
  %v30 = vld [vmem:[%s1 + $0x28] sm:$0xf]
  %v31 = vld [vmem:[%s1 + $0x2c] sm:$0xf]
  %v32 = vld [vmem:[%s1 + $0x30] sm:$0xf]
  %v33 = vld [vmem:[%s1 + $0x34] sm:$0xf]
  %v34 = vld [vmem:[%s1 + $0x38] sm:$0xf]
  %v35 = vld [vmem:[%s1 + $0x3c] sm:$0xf]
  %v36 = vld [vmem:[%s1 + $0x40] sm:$0xf]
  %v37 = vld [vmem:[%s1 + $0x44] sm:$0xf]
  %v38 = vld [vmem:[%s1 + $0x48] sm:$0xf]
  %v39 = vld [vmem:[%s1 + $0x4c] sm:$0xf]
  %v40 = vld [vmem:[%s1 + $0x50] sm:$0xf]
  %v41 = vld [vmem:[%s1 + $0x54] sm:$0xf]
  %v42 = vld [vmem:[%s1 + $0x58] sm:$0xf]
  %v43 = vld [vmem:[%s1 + $0x5c] sm:$0xf]
  %v44 = vld [vmem:[%s1 + $0x60] sm:$0xf]
  %v45 = vld [vmem:[%s1 + $0x64] sm:$0xf]
  %v46 = vld [vmem:[%s1 + $0x68] sm:$0xf]
  %v47 = vld [vmem:[%s1 + $0x6c] sm:$0xf]
  %v48 = vld [vmem:[%s1 + $0x70] sm:$0xf]
  %v49 = vld [vmem:[%s1 + $0x74] sm:$0xf]
  %v50 = vld [vmem:[%s1 + $0x78] sm:$0xf]
  %v51 = vld [vmem:[%s1 + $0x7c] sm:$0xf]
  %v52 = vld [vmem:[%s2] sm:$0x1]
  %v53 = vlaneseq
  %v54 = vshrl.u32 %v53, 7
  %v55 = vsub.s32 0, %v54
  %v56 = vrot.slane %v52, %v55
  %v59 = vunpack.c.l.b16 %v18
  %v60 = vunpack.c.h.b16 %v18
  %v61 = vunpack.c.l.b16 %v19
  %v62 = vunpack.c.h.b16 %v19
  %v63 = vpack.c.b16 %v61, %v59
  %v64 = vpack.c.b16 %v62, %v60
  %v99 = vunpack.c.l.b16 %v20
  %v100 = vunpack.c.l.b16 %v21
  %v101 = vunpack.c.l.b16 %v22
  %v102 = vunpack.c.l.b16 %v23
  %v103 = vunpack.c.l.b16 %v24
  %v104 = vunpack.c.l.b16 %v25
  %v105 = vunpack.c.l.b16 %v26
  %v106 = vunpack.c.l.b16 %v27
  %v107 = vunpack.c.l.b16 %v28
  %v108 = vunpack.c.l.b16 %v29
  %v109 = vunpack.c.l.b16 %v30
  %v110 = vunpack.c.l.b16 %v31
  %v111 = vunpack.c.l.b16 %v32
  %v112 = vunpack.c.l.b16 %v33
  %v113 = vunpack.c.l.b16 %v34
  %v114 = vunpack.c.l.b16 %v35
  %v115 = vunpack.c.l.b16 %v36
  %v116 = vunpack.c.l.b16 %v37
  %v117 = vunpack.c.l.b16 %v38
  %v118 = vunpack.c.l.b16 %v39
  %v119 = vunpack.c.l.b16 %v40
  %v120 = vunpack.c.l.b16 %v41
  %v121 = vunpack.c.l.b16 %v42
  %v122 = vunpack.c.l.b16 %v43
  %v123 = vunpack.c.l.b16 %v44
  %v124 = vunpack.c.l.b16 %v45
  %v125 = vunpack.c.l.b16 %v46
  %v126 = vunpack.c.l.b16 %v47
  %v127 = vunpack.c.l.b16 %v48
  %v128 = vunpack.c.l.b16 %v49
  %v129 = vunpack.c.l.b16 %v50
  %v130 = vunpack.c.l.b16 %v51
  %v131 = vpack.c.b16 %v100, %v99
  %v132 = vpack.c.b16 %v102, %v101
  %v133 = vpack.c.b16 %v104, %v103
  %v134 = vpack.c.b16 %v106, %v105
  %v135 = vpack.c.b16 %v108, %v107
  %v136 = vpack.c.b16 %v110, %v109
  %v137 = vpack.c.b16 %v112, %v111
  %v138 = vpack.c.b16 %v114, %v113
  %v139 = vpack.c.b16 %v116, %v115
  %v140 = vpack.c.b16 %v118, %v117
  %v141 = vpack.c.b16 %v120, %v119
  %v142 = vpack.c.b16 %v122, %v121
  %v143 = vpack.c.b16 %v124, %v123
  %v144 = vpack.c.b16 %v126, %v125
  %v145 = vpack.c.b16 %v128, %v127
  %v146 = vpack.c.b16 %v130, %v129
  %163 = vmatprep.subr.bf16.mxu0 0
  %164 = vmatpush1.bf16.msra.mxu0 %v138
  %165 = vmatprep.subr.bf16.mxu0 0
  %166 = vmatpush1.bf16.msra.mxu0 %v137
  %167 = vmatprep.subr.bf16.mxu0 0
  %168 = vmatpush1.bf16.msra.mxu0 %v136
  %169 = vmatprep.subr.bf16.mxu0 0
  %170 = vmatpush1.bf16.msra.mxu0 %v135
  %171 = vmatprep.subr.bf16.mxu0 0
  %172 = vmatpush1.bf16.msra.mxu0 %v134
  %173 = vmatprep.subr.bf16.mxu0 0
  %174 = vmatpush1.bf16.msra.mxu0 %v133
  %175 = vmatprep.subr.bf16.mxu0 0
  %176 = vmatpush1.bf16.msra.mxu0 %v132
  %177 = vmatprep.subr.bf16.mxu0 0
  %178 = vmatpush1.bf16.msra.mxu0 %v131
  %179 = vmatprep.subr.bf16.mxu0 0
  %180 = vmatpush2.bf16.msra.mxu0 %v146
  %181 = vmatprep.subr.bf16.mxu0 0
  %182 = vmatpush2.bf16.msra.mxu0 %v145
  %183 = vmatprep.subr.bf16.mxu0 0
  %184 = vmatpush2.bf16.msra.mxu0 %v144
  %185 = vmatprep.subr.bf16.mxu0 0
  %186 = vmatpush2.bf16.msra.mxu0 %v143
  %187 = vmatprep.subr.bf16.mxu0 0
  %188 = vmatpush2.bf16.msra.mxu0 %v142
  %189 = vmatprep.subr.bf16.mxu0 0
  %190 = vmatpush2.bf16.msra.mxu0 %v141
  %191 = vmatprep.subr.bf16.mxu0 0
  %192 = vmatpush2.bf16.msra.mxu0 %v140
  %193 = vmatprep.subr.bf16.mxu0 0
  %194 = vmatpush2.bf16.msra.mxu0 %v139
  %195 = vmatprep.mubr.bf16.mxu0 %v64
  %196 = vmatmul.mubr.bf16.gmra.mxu0 %v63
  %v197 = vpop.f32.mrf.mxu0
  %v198 = vadd.f32 %v56, %v197
  %v199 = vpop.f32.mrf.mxu0
  %v200 = vpop.f32.mrf.mxu0
  %v201 = vadd.f32 %v56, %v200
  %v202 = vpop.f32.mrf.mxu0
  %203 = vdwg.mxu0
  %v204 = vld [vmem:[%s3] sm:$0xf]
  %v205 = vld [vmem:[%s3 + $0x4] sm:$0xf]
  %v206 = vunpack.c.l.bf16 %v204
  %v207 = vunpack.c.l.bf16 %v205
  %v208 = vadd.f32 %v198, %v206
  %v209 = vadd.f32 %v201, %v207
  %v210 = vmax.f32 %v208, 0.0
  %v211 = vmax.f32 %v209, 0.0
  %v212 = vpack.c.bf16 %v211, %v210
  %v214 = vunpack.c.l.b16 %v212
  %v215 = vunpack.c.h.b16 %v212
  %v216 = vpack.c.b16 %v214, %v214
  %v217 = vpack.c.b16 %v215, %v215
  %220 = vst [vmem:[%s4] sm:$0xf] %v216
  %221 = vst [vmem:[%s4 + $0x4] sm:$0xf] %v217
  // Predicated region
  $region18: #{resnet_autoencoder_forward.28} parent=0 // pred_check
    _
  $region19: #{resnet_autoencoder_forward.28} parent=0 // pred_check_branch
    %223 = sbr.rel (0) target = $region21
  $region20: #{resnet_autoencoder_forward.28} parent=0 // pred_region
    _
  $region21: #{resnet_autoencoder_forward.28} parent=0 // pred_fallthru
    _
  // Predicated region
  $region22: #{resnet_autoencoder_forward.28} parent=0 // pred_check
    _
  $region23: #{resnet_autoencoder_forward.28} parent=0 // pred_check_branch
    %225 = sbr.rel (0) target = $region25
  $region24: #{resnet_autoencoder_forward.28} parent=0 // pred_region
    _
  $region25: #{resnet_autoencoder_forward.28} parent=0 // pred_fallthru
    _

// kernel: resnet_autoencoder_forward.30
$region0: #{resnet_autoencoder_forward.30}
  #allocation0 [shape = 'u32[]', space=smem, size = 0x4, offset = 0x4, fixed_abs, tag = 'smem constant byte address 0x4 - core index']
  #allocation1 [shape = 'u32[144,128]{1,0:T(1,128)}', space=vmem, size = 0x12000, scoped, tag = 'internal scratch']
  %s0 = inlined_call_operand.vmem [shape: bf16[16,128], index: 0, kind: input, shape index: {}]
  %s1 = inlined_call_operand.vmem [shape: bf16[128,128], index: 1, kind: input, shape index: {}]
  %s2 = inlined_call_operand.vmem [shape: f32[2,128], index: 2, kind: input, shape index: {}]
  %s3 = inlined_call_operand.vmem [shape: bf16[16,128], index: 3, kind: input, shape index: {}]
  %s4 = inlined_call_operand.vmem [shape: bf16[16,128], index: 4, kind: output, shape index: {}]
  %s5 = sld [smem:[#allocation0]]
  $region26: #{resnet_autoencoder_forward.30} parent=0
    _
  %s7 = ssub.s32 1, %s5
  %s8 = scalar_select 0, %s7, %s5
  // Predicated region
  $region2: #{resnet_autoencoder_forward.30} parent=0 // pred_check
    _
  $region3: #{resnet_autoencoder_forward.30} parent=0 // pred_check_branch
    %10 = sbr.rel (0) target = $region5
  $region4: #{resnet_autoencoder_forward.30} parent=0 // pred_region
    _
  $region5: #{resnet_autoencoder_forward.30} parent=0 // pred_fallthru
    _
  // Predicated region
  $region6: #{resnet_autoencoder_forward.30} parent=0 // pred_check
    _
  $region7: #{resnet_autoencoder_forward.30} parent=0 // pred_check_branch
    %12 = sbr.rel (0) target = $region9
  $region8: #{resnet_autoencoder_forward.30} parent=0 // pred_region
    _
  $region9: #{resnet_autoencoder_forward.30} parent=0 // pred_fallthru
    _
  // Predicated region
  $region10: #{resnet_autoencoder_forward.30} parent=0 // pred_check
    _
  $region11: #{resnet_autoencoder_forward.30} parent=0 // pred_check_branch
    %14 = sbr.rel (0) target = $region13
  $region12: #{resnet_autoencoder_forward.30} parent=0 // pred_region
    _
  $region13: #{resnet_autoencoder_forward.30} parent=0 // pred_fallthru
    _
  // Predicated region
  $region14: #{resnet_autoencoder_forward.30} parent=0 // pred_check
    _
  $region15: #{resnet_autoencoder_forward.30} parent=0 // pred_check_branch
    %16 = sbr.rel (0) target = $region17
  $region16: #{resnet_autoencoder_forward.30} parent=0 // pred_region
    _
  $region17: #{resnet_autoencoder_forward.30} parent=0 // pred_fallthru
    _
  %v18 = vld [vmem:[%s0] sm:$0xf]
  %v19 = vld [vmem:[%s0 + $0x4] sm:$0xf]
  %v20 = vld [vmem:[%s1] sm:$0xf]
  %v21 = vld [vmem:[%s1 + $0x4] sm:$0xf]
  %v22 = vld [vmem:[%s1 + $0x8] sm:$0xf]
  %v23 = vld [vmem:[%s1 + $0xc] sm:$0xf]
  %v24 = vld [vmem:[%s1 + $0x10] sm:$0xf]
  %v25 = vld [vmem:[%s1 + $0x14] sm:$0xf]
  %v26 = vld [vmem:[%s1 + $0x18] sm:$0xf]
  %v27 = vld [vmem:[%s1 + $0x1c] sm:$0xf]
  %v28 = vld [vmem:[%s1 + $0x20] sm:$0xf]
  %v29 = vld [vmem:[%s1 + $0x24] sm:$0xf]
  %v30 = vld [vmem:[%s1 + $0x28] sm:$0xf]
  %v31 = vld [vmem:[%s1 + $0x2c] sm:$0xf]
  %v32 = vld [vmem:[%s1 + $0x30] sm:$0xf]
  %v33 = vld [vmem:[%s1 + $0x34] sm:$0xf]
  %v34 = vld [vmem:[%s1 + $0x38] sm:$0xf]
  %v35 = vld [vmem:[%s1 + $0x3c] sm:$0xf]
  %v36 = vld [vmem:[%s2] sm:$0x1]
  %v37 = vlaneseq
  %v38 = vshrl.u32 %v37, 7
  %v39 = vsub.s32 0, %v38
  %v40 = vrot.slane %v36, %v39
  %v43 = vunpack.c.l.b16 %v18
  %v44 = vunpack.c.l.b16 %v19
  %v45 = vpack.c.b16 %v44, %v43
  %v63 = vunpack.c.l.b16 %v20
  %v64 = vunpack.c.l.b16 %v21
  %v65 = vunpack.c.l.b16 %v22
  %v66 = vunpack.c.l.b16 %v23
  %v67 = vunpack.c.l.b16 %v24
  %v68 = vunpack.c.l.b16 %v25
  %v69 = vunpack.c.l.b16 %v26
  %v70 = vunpack.c.l.b16 %v27
  %v71 = vunpack.c.l.b16 %v28
  %v72 = vunpack.c.l.b16 %v29
  %v73 = vunpack.c.l.b16 %v30
  %v74 = vunpack.c.l.b16 %v31
  %v75 = vunpack.c.l.b16 %v32
  %v76 = vunpack.c.l.b16 %v33
  %v77 = vunpack.c.l.b16 %v34
  %v78 = vunpack.c.l.b16 %v35
  %v79 = vpack.c.b16 %v64, %v63
  %v80 = vpack.c.b16 %v66, %v65
  %v81 = vpack.c.b16 %v68, %v67
  %v82 = vpack.c.b16 %v70, %v69
  %v83 = vpack.c.b16 %v72, %v71
  %v84 = vpack.c.b16 %v74, %v73
  %v85 = vpack.c.b16 %v76, %v75
  %v86 = vpack.c.b16 %v78, %v77
  %95 = vmatprep.subr.bf16.mxu0 0
  %96 = vmatpush1.bf16.msra.mxu0 %v86
  %97 = vmatprep.subr.bf16.mxu0 0
  %98 = vmatpush1.bf16.msra.mxu0 %v85
  %99 = vmatprep.subr.bf16.mxu0 0
  %100 = vmatpush1.bf16.msra.mxu0 %v84
  %101 = vmatprep.subr.bf16.mxu0 0
  %102 = vmatpush1.bf16.msra.mxu0 %v83
  %103 = vmatprep.subr.bf16.mxu0 0
  %104 = vmatpush1.bf16.msra.mxu0 %v82
  %105 = vmatprep.subr.bf16.mxu0 0
  %106 = vmatpush1.bf16.msra.mxu0 %v81
  %107 = vmatprep.subr.bf16.mxu0 0
  %108 = vmatpush1.bf16.msra.mxu0 %v80
  %109 = vmatprep.subr.bf16.mxu0 0
  %110 = vmatpush1.bf16.msra.mxu0 %v79
  %111 = vmatprep.subr.bf16.mxu0 0
  %112 = vmatpush2.bf16.msra.mxu0 0
  %113 = vmatprep.subr.bf16.mxu0 0
  %114 = vmatpush2.bf16.msra.mxu0 0
  %115 = vmatprep.subr.bf16.mxu0 0
  %116 = vmatpush2.bf16.msra.mxu0 0
  %117 = vmatprep.subr.bf16.mxu0 0
  %118 = vmatpush2.bf16.msra.mxu0 0
  %119 = vmatprep.subr.bf16.mxu0 0
  %120 = vmatpush2.bf16.msra.mxu0 0
  %121 = vmatprep.subr.bf16.mxu0 0
  %122 = vmatpush2.bf16.msra.mxu0 0
  %123 = vmatprep.subr.bf16.mxu0 0
  %124 = vmatpush2.bf16.msra.mxu0 0
  %125 = vmatprep.subr.bf16.mxu0 0
  %126 = vmatpush2.bf16.msra.mxu0 0
  %127 = vmatprep.mubr.bf16.mxu0 0
  %128 = vmatmul.mubr.bf16.gmra.mxu0 %v45
  %v129 = vpop.f32.mrf.mxu0
  %v130 = vadd.f32 %v40, %v129
  %v131 = vpop.f32.mrf.mxu0
  %v132 = vpop.f32.mrf.mxu0
  %v133 = vadd.f32 %v40, %v132
  %v134 = vpop.f32.mrf.mxu0
  %135 = vdwg.mxu0
  %v136 = vld [vmem:[%s3] sm:$0xf]
  %v137 = vld [vmem:[%s3 + $0x4] sm:$0xf]
  %v138 = vunpack.c.l.bf16 %v136
  %v139 = vunpack.c.l.bf16 %v137
  %v140 = vadd.f32 %v130, %v138
  %v141 = vadd.f32 %v133, %v139
  %v142 = vmax.f32 %v140, 0.0
  %v143 = vmax.f32 %v141, 0.0
  %v144 = vpack.c.bf16 %v143, %v142
  %v146 = vunpack.c.l.b16 %v144
  %v147 = vunpack.c.h.b16 %v144
  %v148 = vpack.c.b16 %v146, %v146
  %v149 = vpack.c.b16 %v147, %v147
  %152 = vst [vmem:[%s4] sm:$0xf] %v148
  %153 = vst [vmem:[%s4 + $0x4] sm:$0xf] %v149
  // Predicated region
  $region18: #{resnet_autoencoder_forward.30} parent=0 // pred_check
    _
  $region19: #{resnet_autoencoder_forward.30} parent=0 // pred_check_branch
    %155 = sbr.rel (0) target = $region21
  $region20: #{resnet_autoencoder_forward.30} parent=0 // pred_region
    _
  $region21: #{resnet_autoencoder_forward.30} parent=0 // pred_fallthru
    _
  // Predicated region
  $region22: #{resnet_autoencoder_forward.30} parent=0 // pred_check
    _
  $region23: #{resnet_autoencoder_forward.30} parent=0 // pred_check_branch
    %157 = sbr.rel (0) target = $region25
  $region24: #{resnet_autoencoder_forward.30} parent=0 // pred_region
    _
  $region25: #{resnet_autoencoder_forward.30} parent=0 // pred_fallthru
    _

// kernel: resnet_autoencoder_forward.31
$region0: #{resnet_autoencoder_forward.31}
  #allocation0 [shape = 'u32[]', space=smem, size = 0x4, offset = 0x4, fixed_abs, tag = 'smem constant byte address 0x4 - core index']
  #allocation1 [shape = 'u32[144,128]{1,0:T(1,128)}', space=vmem, size = 0x12000, scoped, tag = 'internal scratch']
  %s0 = inlined_call_operand.vmem [shape: bf16[32,256], index: 0, kind: input, shape index: {}]
  %s1 = inlined_call_operand.vmem [shape: bf16[256,128], index: 1, kind: input, shape index: {}]
  %s2 = inlined_call_operand.vmem [shape: f32[2,128], index: 2, kind: input, shape index: {}]
  %s3 = inlined_call_operand.vmem [shape: bf16[32,128], index: 3, kind: output, shape index: {}]
  %s4 = sld [smem:[#allocation0]]
  $region22: #{resnet_autoencoder_forward.31} parent=0
    _
  %s6 = ssub.s32 1, %s4
  %s7 = scalar_select 0, %s6, %s4
  // Predicated region
  $region2: #{resnet_autoencoder_forward.31} parent=0 // pred_check
    _
  $region3: #{resnet_autoencoder_forward.31} parent=0 // pred_check_branch
    %9 = sbr.rel (0) target = $region5
  $region4: #{resnet_autoencoder_forward.31} parent=0 // pred_region
    _
  $region5: #{resnet_autoencoder_forward.31} parent=0 // pred_fallthru
    _
  // Predicated region
  $region6: #{resnet_autoencoder_forward.31} parent=0 // pred_check
    _
  $region7: #{resnet_autoencoder_forward.31} parent=0 // pred_check_branch
    %11 = sbr.rel (0) target = $region9
  $region8: #{resnet_autoencoder_forward.31} parent=0 // pred_region
    _
  $region9: #{resnet_autoencoder_forward.31} parent=0 // pred_fallthru
    _
  // Predicated region
  $region10: #{resnet_autoencoder_forward.31} parent=0 // pred_check
    _
  $region11: #{resnet_autoencoder_forward.31} parent=0 // pred_check_branch
    %13 = sbr.rel (0) target = $region13
  $region12: #{resnet_autoencoder_forward.31} parent=0 // pred_region
    _
  $region13: #{resnet_autoencoder_forward.31} parent=0 // pred_fallthru
    _
  %v15 = vld [vmem:[%s0] sm:$0xff]
  %v16 = vld [vmem:[%s0 + $0x8] sm:$0xff]
  %v17 = vld [vmem:[%s0 + $0x10] sm:$0xff]
  %v18 = vld [vmem:[%s0 + $0x18] sm:$0xff]
  %v19 = vld [vmem:[%s1] sm:$0xf]
  %v20 = vld [vmem:[%s1 + $0x4] sm:$0xf]
  %v21 = vld [vmem:[%s1 + $0x8] sm:$0xf]
  %v22 = vld [vmem:[%s1 + $0xc] sm:$0xf]
  %v23 = vld [vmem:[%s1 + $0x10] sm:$0xf]
  %v24 = vld [vmem:[%s1 + $0x14] sm:$0xf]
  %v25 = vld [vmem:[%s1 + $0x18] sm:$0xf]
  %v26 = vld [vmem:[%s1 + $0x1c] sm:$0xf]
  %v27 = vld [vmem:[%s1 + $0x20] sm:$0xf]
  %v28 = vld [vmem:[%s1 + $0x24] sm:$0xf]
  %v29 = vld [vmem:[%s1 + $0x28] sm:$0xf]
  %v30 = vld [vmem:[%s1 + $0x2c] sm:$0xf]
  %v31 = vld [vmem:[%s1 + $0x30] sm:$0xf]
  %v32 = vld [vmem:[%s1 + $0x34] sm:$0xf]
  %v33 = vld [vmem:[%s1 + $0x38] sm:$0xf]
  %v34 = vld [vmem:[%s1 + $0x3c] sm:$0xf]
  %v35 = vld [vmem:[%s1 + $0x40] sm:$0xf]
  %v36 = vld [vmem:[%s1 + $0x44] sm:$0xf]
  %v37 = vld [vmem:[%s1 + $0x48] sm:$0xf]
  %v38 = vld [vmem:[%s1 + $0x4c] sm:$0xf]
  %v39 = vld [vmem:[%s1 + $0x50] sm:$0xf]
  %v40 = vld [vmem:[%s1 + $0x54] sm:$0xf]
  %v41 = vld [vmem:[%s1 + $0x58] sm:$0xf]
  %v42 = vld [vmem:[%s1 + $0x5c] sm:$0xf]
  %v43 = vld [vmem:[%s1 + $0x60] sm:$0xf]
  %v44 = vld [vmem:[%s1 + $0x64] sm:$0xf]
  %v45 = vld [vmem:[%s1 + $0x68] sm:$0xf]
  %v46 = vld [vmem:[%s1 + $0x6c] sm:$0xf]
  %v47 = vld [vmem:[%s1 + $0x70] sm:$0xf]
  %v48 = vld [vmem:[%s1 + $0x74] sm:$0xf]
  %v49 = vld [vmem:[%s1 + $0x78] sm:$0xf]
  %v50 = vld [vmem:[%s1 + $0x7c] sm:$0xf]
  %v51 = vld [vmem:[%s2] sm:$0x1]
  %v52 = vlaneseq
  %v53 = vshrl.u32 %v52, 7
  %v54 = vsub.s32 0, %v53
  %v55 = vrot.slane %v51, %v54
  %v60 = vunpack.c.l.b16 %v15
  %v61 = vunpack.c.h.b16 %v15
  %v62 = vunpack.c.l.b16 %v16
  %v63 = vunpack.c.h.b16 %v16
  %v64 = vunpack.c.l.b16 %v17
  %v65 = vunpack.c.h.b16 %v17
  %v66 = vunpack.c.l.b16 %v18
  %v67 = vunpack.c.h.b16 %v18
  %v68 = vpack.c.b16 %v62, %v60
  %v69 = vpack.c.b16 %v63, %v61
  %v70 = vpack.c.b16 %v66, %v64
  %v71 = vpack.c.b16 %v67, %v65
  %v108 = vunpack.c.l.b16 %v19
  %v109 = vunpack.c.l.b16 %v20
  %v110 = vunpack.c.l.b16 %v21
  %v111 = vunpack.c.l.b16 %v22
  %v112 = vunpack.c.l.b16 %v23
  %v113 = vunpack.c.l.b16 %v24
  %v114 = vunpack.c.l.b16 %v25
  %v115 = vunpack.c.l.b16 %v26
  %v116 = vunpack.c.l.b16 %v27
  %v117 = vunpack.c.l.b16 %v28
  %v118 = vunpack.c.l.b16 %v29
  %v119 = vunpack.c.l.b16 %v30
  %v120 = vunpack.c.l.b16 %v31
  %v121 = vunpack.c.l.b16 %v32
  %v122 = vunpack.c.l.b16 %v33
  %v123 = vunpack.c.l.b16 %v34
  %v124 = vunpack.c.l.b16 %v35
  %v125 = vunpack.c.l.b16 %v36
  %v126 = vunpack.c.l.b16 %v37
  %v127 = vunpack.c.l.b16 %v38
  %v128 = vunpack.c.l.b16 %v39
  %v129 = vunpack.c.l.b16 %v40
  %v130 = vunpack.c.l.b16 %v41
  %v131 = vunpack.c.l.b16 %v42
  %v132 = vunpack.c.l.b16 %v43
  %v133 = vunpack.c.l.b16 %v44
  %v134 = vunpack.c.l.b16 %v45
  %v135 = vunpack.c.l.b16 %v46
  %v136 = vunpack.c.l.b16 %v47
  %v137 = vunpack.c.l.b16 %v48
  %v138 = vunpack.c.l.b16 %v49
  %v139 = vunpack.c.l.b16 %v50
  %v140 = vpack.c.b16 %v109, %v108
  %v141 = vpack.c.b16 %v111, %v110
  %v142 = vpack.c.b16 %v113, %v112
  %v143 = vpack.c.b16 %v115, %v114
  %v144 = vpack.c.b16 %v117, %v116
  %v145 = vpack.c.b16 %v119, %v118
  %v146 = vpack.c.b16 %v121, %v120
  %v147 = vpack.c.b16 %v123, %v122
  %v148 = vpack.c.b16 %v125, %v124
  %v149 = vpack.c.b16 %v127, %v126
  %v150 = vpack.c.b16 %v129, %v128
  %v151 = vpack.c.b16 %v131, %v130
  %v152 = vpack.c.b16 %v133, %v132
  %v153 = vpack.c.b16 %v135, %v134
  %v154 = vpack.c.b16 %v137, %v136
  %v155 = vpack.c.b16 %v139, %v138
  %172 = vmatprep.subr.bf16.mxu0 0
  %173 = vmatpush1.bf16.msra.mxu0 %v147
  %174 = vmatprep.subr.bf16.mxu0 0
  %175 = vmatpush1.bf16.msra.mxu0 %v146
  %176 = vmatprep.subr.bf16.mxu0 0
  %177 = vmatpush1.bf16.msra.mxu0 %v145
  %178 = vmatprep.subr.bf16.mxu0 0
  %179 = vmatpush1.bf16.msra.mxu0 %v144
  %180 = vmatprep.subr.bf16.mxu0 0
  %181 = vmatpush1.bf16.msra.mxu0 %v143
  %182 = vmatprep.subr.bf16.mxu0 0
  %183 = vmatpush1.bf16.msra.mxu0 %v142
  %184 = vmatprep.subr.bf16.mxu0 0
  %185 = vmatpush1.bf16.msra.mxu0 %v141
  %186 = vmatprep.subr.bf16.mxu0 0
  %187 = vmatpush1.bf16.msra.mxu0 %v140
  %188 = vmatprep.subr.bf16.mxu0 0
  %189 = vmatpush2.bf16.msra.mxu0 %v155
  %190 = vmatprep.subr.bf16.mxu0 0
  %191 = vmatpush2.bf16.msra.mxu0 %v154
  %192 = vmatprep.subr.bf16.mxu0 0
  %193 = vmatpush2.bf16.msra.mxu0 %v153
  %194 = vmatprep.subr.bf16.mxu0 0
  %195 = vmatpush2.bf16.msra.mxu0 %v152
  %196 = vmatprep.subr.bf16.mxu0 0
  %197 = vmatpush2.bf16.msra.mxu0 %v151
  %198 = vmatprep.subr.bf16.mxu0 0
  %199 = vmatpush2.bf16.msra.mxu0 %v150
  %200 = vmatprep.subr.bf16.mxu0 0
  %201 = vmatpush2.bf16.msra.mxu0 %v149
  %202 = vmatprep.subr.bf16.mxu0 0
  %203 = vmatpush2.bf16.msra.mxu0 %v148
  %204 = vmatprep.mubr.bf16.mxu0 %v69
  %205 = vmatmul.mubr.bf16.gmra.mxu0 %v68
  %v206 = vpop.f32.mrf.mxu0
  %v207 = vadd.f32 %v55, %v206
  %v208 = vpop.f32.mrf.mxu0
  %v209 = vpop.f32.mrf.mxu0
  %v210 = vadd.f32 %v55, %v209
  %v211 = vpop.f32.mrf.mxu0
  %212 = vmatprep.mubr.bf16.mxu0 %v71
  %213 = vmatmul.mubr.bf16.gmra.mxu0 %v70
  %v214 = vpop.f32.mrf.mxu0
  %v215 = vadd.f32 %v55, %v214
  %v216 = vpop.f32.mrf.mxu0
  %v217 = vpop.f32.mrf.mxu0
  %v218 = vadd.f32 %v55, %v217
  %v219 = vpop.f32.mrf.mxu0
  %220 = vdwg.mxu0
  %v221 = vld [vmem:[%s2 + $0x1] sm:$0x1]
  %vm222 = vcmp.gt.f32.partialorder %v221, 0.0
  %v223 = vmax.f32 %v207, 0.0
  %v224 = vmax.f32 %v210, 0.0
  %v225 = vmax.f32 %v215, 0.0
  %v226 = vmax.f32 %v218, 0.0
  %v227 = vsel %vm222, 1, 0
  %v228 = vlaneseq
  %v229 = vshrl.u32 %v228, 7
  %v230 = vsub.s32 0, %v229
  %v231 = vrot.slane %v227, %v230
  %vm232 = vcmp.eq.s32.totalorder %v231, 1
  %v233 = vsel %vm232, %v223, %v207
  %v234 = vsel %vm232, %v224, %v210
  %v235 = vsel %vm232, %v225, %v215
  %v236 = vsel %vm232, %v226, %v218
  %v237 = vpack.c.bf16 %v234, %v233
  %v238 = vpack.c.bf16 %v236, %v235
  %v241 = vunpack.c.l.b16 %v237
  %v242 = vunpack.c.h.b16 %v237
  %v243 = vunpack.c.l.b16 %v238
  %v244 = vunpack.c.h.b16 %v238
  %v245 = vpack.c.b16 %v241, %v241
  %v246 = vpack.c.b16 %v242, %v242
  %v247 = vpack.c.b16 %v243, %v243
  %v248 = vpack.c.b16 %v244, %v244
  %253 = vst [vmem:[%s3] sm:$0xf] %v245
  %254 = vst [vmem:[%s3 + $0x4] sm:$0xf] %v246
  %255 = vst [vmem:[%s3 + $0x8] sm:$0xf] %v247
  %256 = vst [vmem:[%s3 + $0xc] sm:$0xf] %v248
  // Predicated region
  $region14: #{resnet_autoencoder_forward.31} parent=0 // pred_check
    _
  $region15: #{resnet_autoencoder_forward.31} parent=0 // pred_check_branch
    %258 = sbr.rel (0) target = $region17
  $region16: #{resnet_autoencoder_forward.31} parent=0 // pred_region
    _
  $region17: #{resnet_autoencoder_forward.31} parent=0 // pred_fallthru
    _
  // Predicated region
  $region18: #{resnet_autoencoder_forward.31} parent=0 // pred_check
    _
  $region19: #{resnet_autoencoder_forward.31} parent=0 // pred_check_branch
    %260 = sbr.rel (0) target = $region21
  $region20: #{resnet_autoencoder_forward.31} parent=0 // pred_region
    _
  $region21: #{resnet_autoencoder_forward.31} parent=0 // pred_fallthru
    _

// kernel: resnet_autoencoder_forward.32
$region0: #{resnet_autoencoder_forward.32}
  #allocation0 [shape = 'u32[]', space=smem, size = 0x4, offset = 0x4, fixed_abs, tag = 'smem constant byte address 0x4 - core index']
  #allocation1 [shape = 'u32[144,128]{1,0:T(1,128)}', space=vmem, size = 0x12000, scoped, tag = 'internal scratch']
  %s0 = inlined_call_operand.vmem [shape: bf16[32,128], index: 0, kind: input, shape index: {}]
  %s1 = inlined_call_operand.vmem [shape: bf16[128,128], index: 1, kind: input, shape index: {}]
  %s2 = inlined_call_operand.vmem [shape: f32[2,128], index: 2, kind: input, shape index: {}]
  %s3 = inlined_call_operand.vmem [shape: bf16[32,128], index: 3, kind: input, shape index: {}]
  %s4 = inlined_call_operand.vmem [shape: bf16[32,128], index: 4, kind: output, shape index: {}]
  %s5 = sld [smem:[#allocation0]]
  $region26: #{resnet_autoencoder_forward.32} parent=0
    _
  %s7 = ssub.s32 1, %s5
  %s8 = scalar_select 0, %s7, %s5
  // Predicated region
  $region2: #{resnet_autoencoder_forward.32} parent=0 // pred_check
    _
  $region3: #{resnet_autoencoder_forward.32} parent=0 // pred_check_branch
    %10 = sbr.rel (0) target = $region5
  $region4: #{resnet_autoencoder_forward.32} parent=0 // pred_region
    _
  $region5: #{resnet_autoencoder_forward.32} parent=0 // pred_fallthru
    _
  // Predicated region
  $region6: #{resnet_autoencoder_forward.32} parent=0 // pred_check
    _
  $region7: #{resnet_autoencoder_forward.32} parent=0 // pred_check_branch
    %12 = sbr.rel (0) target = $region9
  $region8: #{resnet_autoencoder_forward.32} parent=0 // pred_region
    _
  $region9: #{resnet_autoencoder_forward.32} parent=0 // pred_fallthru
    _
  // Predicated region
  $region10: #{resnet_autoencoder_forward.32} parent=0 // pred_check
    _
  $region11: #{resnet_autoencoder_forward.32} parent=0 // pred_check_branch
    %14 = sbr.rel (0) target = $region13
  $region12: #{resnet_autoencoder_forward.32} parent=0 // pred_region
    _
  $region13: #{resnet_autoencoder_forward.32} parent=0 // pred_fallthru
    _
  // Predicated region
  $region14: #{resnet_autoencoder_forward.32} parent=0 // pred_check
    _
  $region15: #{resnet_autoencoder_forward.32} parent=0 // pred_check_branch
    %16 = sbr.rel (0) target = $region17
  $region16: #{resnet_autoencoder_forward.32} parent=0 // pred_region
    _
  $region17: #{resnet_autoencoder_forward.32} parent=0 // pred_fallthru
    _
  %v18 = vld [vmem:[%s0] sm:$0xf]
  %v19 = vld [vmem:[%s0 + $0x4] sm:$0xf]
  %v20 = vld [vmem:[%s0 + $0x8] sm:$0xf]
  %v21 = vld [vmem:[%s0 + $0xc] sm:$0xf]
  %v22 = vld [vmem:[%s1] sm:$0xf]
  %v23 = vld [vmem:[%s1 + $0x4] sm:$0xf]
  %v24 = vld [vmem:[%s1 + $0x8] sm:$0xf]
  %v25 = vld [vmem:[%s1 + $0xc] sm:$0xf]
  %v26 = vld [vmem:[%s1 + $0x10] sm:$0xf]
  %v27 = vld [vmem:[%s1 + $0x14] sm:$0xf]
  %v28 = vld [vmem:[%s1 + $0x18] sm:$0xf]
  %v29 = vld [vmem:[%s1 + $0x1c] sm:$0xf]
  %v30 = vld [vmem:[%s1 + $0x20] sm:$0xf]
  %v31 = vld [vmem:[%s1 + $0x24] sm:$0xf]
  %v32 = vld [vmem:[%s1 + $0x28] sm:$0xf]
  %v33 = vld [vmem:[%s1 + $0x2c] sm:$0xf]
  %v34 = vld [vmem:[%s1 + $0x30] sm:$0xf]
  %v35 = vld [vmem:[%s1 + $0x34] sm:$0xf]
  %v36 = vld [vmem:[%s1 + $0x38] sm:$0xf]
  %v37 = vld [vmem:[%s1 + $0x3c] sm:$0xf]
  %v38 = vld [vmem:[%s2] sm:$0x1]
  %v39 = vlaneseq
  %v40 = vshrl.u32 %v39, 7
  %v41 = vsub.s32 0, %v40
  %v42 = vrot.slane %v38, %v41
  %v47 = vunpack.c.l.b16 %v18
  %v48 = vunpack.c.l.b16 %v19
  %v49 = vunpack.c.l.b16 %v20
  %v50 = vunpack.c.l.b16 %v21
  %v51 = vpack.c.b16 %v48, %v47
  %v52 = vpack.c.b16 %v50, %v49
  %v71 = vunpack.c.l.b16 %v22
  %v72 = vunpack.c.l.b16 %v23
  %v73 = vunpack.c.l.b16 %v24
  %v74 = vunpack.c.l.b16 %v25
  %v75 = vunpack.c.l.b16 %v26
  %v76 = vunpack.c.l.b16 %v27
  %v77 = vunpack.c.l.b16 %v28
  %v78 = vunpack.c.l.b16 %v29
  %v79 = vunpack.c.l.b16 %v30
  %v80 = vunpack.c.l.b16 %v31
  %v81 = vunpack.c.l.b16 %v32
  %v82 = vunpack.c.l.b16 %v33
  %v83 = vunpack.c.l.b16 %v34
  %v84 = vunpack.c.l.b16 %v35
  %v85 = vunpack.c.l.b16 %v36
  %v86 = vunpack.c.l.b16 %v37
  %v87 = vpack.c.b16 %v72, %v71
  %v88 = vpack.c.b16 %v74, %v73
  %v89 = vpack.c.b16 %v76, %v75
  %v90 = vpack.c.b16 %v78, %v77
  %v91 = vpack.c.b16 %v80, %v79
  %v92 = vpack.c.b16 %v82, %v81
  %v93 = vpack.c.b16 %v84, %v83
  %v94 = vpack.c.b16 %v86, %v85
  %103 = vmatprep.subr.bf16.mxu0 0
  %104 = vmatpush1.bf16.msra.mxu0 %v94
  %105 = vmatprep.subr.bf16.mxu0 0
  %106 = vmatpush1.bf16.msra.mxu0 %v93
  %107 = vmatprep.subr.bf16.mxu0 0
  %108 = vmatpush1.bf16.msra.mxu0 %v92
  %109 = vmatprep.subr.bf16.mxu0 0
  %110 = vmatpush1.bf16.msra.mxu0 %v91
  %111 = vmatprep.subr.bf16.mxu0 0
  %112 = vmatpush1.bf16.msra.mxu0 %v90
  %113 = vmatprep.subr.bf16.mxu0 0
  %114 = vmatpush1.bf16.msra.mxu0 %v89
  %115 = vmatprep.subr.bf16.mxu0 0
  %116 = vmatpush1.bf16.msra.mxu0 %v88
  %117 = vmatprep.subr.bf16.mxu0 0
  %118 = vmatpush1.bf16.msra.mxu0 %v87
  %119 = vmatprep.subr.bf16.mxu0 0
  %120 = vmatpush2.bf16.msra.mxu0 0
  %121 = vmatprep.subr.bf16.mxu0 0
  %122 = vmatpush2.bf16.msra.mxu0 0
  %123 = vmatprep.subr.bf16.mxu0 0
  %124 = vmatpush2.bf16.msra.mxu0 0
  %125 = vmatprep.subr.bf16.mxu0 0
  %126 = vmatpush2.bf16.msra.mxu0 0
  %127 = vmatprep.subr.bf16.mxu0 0
  %128 = vmatpush2.bf16.msra.mxu0 0
  %129 = vmatprep.subr.bf16.mxu0 0
  %130 = vmatpush2.bf16.msra.mxu0 0
  %131 = vmatprep.subr.bf16.mxu0 0
  %132 = vmatpush2.bf16.msra.mxu0 0
  %133 = vmatprep.subr.bf16.mxu0 0
  %134 = vmatpush2.bf16.msra.mxu0 0
  %135 = vmatprep.mubr.bf16.mxu0 0
  %136 = vmatmul.mubr.bf16.gmra.mxu0 %v51
  %v137 = vpop.f32.mrf.mxu0
  %v138 = vadd.f32 %v42, %v137
  %v139 = vpop.f32.mrf.mxu0
  %v140 = vpop.f32.mrf.mxu0
  %v141 = vadd.f32 %v42, %v140
  %v142 = vpop.f32.mrf.mxu0
  %143 = vmatprep.mubr.bf16.mxu0 0
  %144 = vmatmul.mubr.bf16.gmra.mxu0 %v52
  %v145 = vpop.f32.mrf.mxu0
  %v146 = vadd.f32 %v42, %v145
  %v147 = vpop.f32.mrf.mxu0
  %v148 = vpop.f32.mrf.mxu0
  %v149 = vadd.f32 %v42, %v148
  %v150 = vpop.f32.mrf.mxu0
  %151 = vdwg.mxu0
  %v152 = vld [vmem:[%s3] sm:$0xf]
  %v153 = vld [vmem:[%s3 + $0x4] sm:$0xf]
  %v154 = vld [vmem:[%s3 + $0x8] sm:$0xf]
  %v155 = vld [vmem:[%s3 + $0xc] sm:$0xf]
  %v156 = vunpack.c.l.bf16 %v152
  %v157 = vunpack.c.l.bf16 %v153
  %v158 = vunpack.c.l.bf16 %v154
  %v159 = vunpack.c.l.bf16 %v155
  %v160 = vadd.f32 %v138, %v156
  %v161 = vadd.f32 %v141, %v157
  %v162 = vadd.f32 %v146, %v158
  %v163 = vadd.f32 %v149, %v159
  %v164 = vmax.f32 %v160, 0.0
  %v165 = vmax.f32 %v161, 0.0
  %v166 = vmax.f32 %v162, 0.0
  %v167 = vmax.f32 %v163, 0.0
  %v168 = vpack.c.bf16 %v165, %v164
  %v169 = vpack.c.bf16 %v167, %v166
  %v172 = vunpack.c.l.b16 %v168
  %v173 = vunpack.c.h.b16 %v168
  %v174 = vunpack.c.l.b16 %v169
  %v175 = vunpack.c.h.b16 %v169
  %v176 = vpack.c.b16 %v172, %v172
  %v177 = vpack.c.b16 %v173, %v173
  %v178 = vpack.c.b16 %v174, %v174
  %v179 = vpack.c.b16 %v175, %v175
  %184 = vst [vmem:[%s4] sm:$0xf] %v176
  %185 = vst [vmem:[%s4 + $0x4] sm:$0xf] %v177
  %186 = vst [vmem:[%s4 + $0x8] sm:$0xf] %v178
  %187 = vst [vmem:[%s4 + $0xc] sm:$0xf] %v179
  // Predicated region
  $region18: #{resnet_autoencoder_forward.32} parent=0 // pred_check
    _
  $region19: #{resnet_autoencoder_forward.32} parent=0 // pred_check_branch
    %189 = sbr.rel (0) target = $region21
  $region20: #{resnet_autoencoder_forward.32} parent=0 // pred_region
    _
  $region21: #{resnet_autoencoder_forward.32} parent=0 // pred_fallthru
    _
  // Predicated region
  $region22: #{resnet_autoencoder_forward.32} parent=0 // pred_check
    _
  $region23: #{resnet_autoencoder_forward.32} parent=0 // pred_check_branch
    %191 = sbr.rel (0) target = $region25
  $region24: #{resnet_autoencoder_forward.32} parent=0 // pred_region
    _
  $region25: #{resnet_autoencoder_forward.32} parent=0 // pred_fallthru
    _

// kernel: resnet_autoencoder_forward.33
$region0: #{resnet_autoencoder_forward.33}
  #allocation0 [shape = 'u32[]', space=smem, size = 0x4, offset = 0x4, fixed_abs, tag = 'smem constant byte address 0x4 - core index']
  #allocation1 [shape = 'u32[144,128]{1,0:T(1,128)}', space=vmem, size = 0x12000, scoped, tag = 'internal scratch']
  %s0 = inlined_call_operand.vmem [shape: bf16[128,128], index: 0, kind: input, shape index: {}]
  %s1 = inlined_call_operand.vmem [shape: bf16[128,128], index: 1, kind: input, shape index: {}]
  %s2 = inlined_call_operand.vmem [shape: f32[2,128], index: 2, kind: input, shape index: {}]
  %s3 = inlined_call_operand.vmem [shape: bf16[128,128], index: 3, kind: output, shape index: {}]
  %s4 = sld [smem:[#allocation0]]
  $region22: #{resnet_autoencoder_forward.33} parent=0
    _
  %s6 = ssub.s32 1, %s4
  %s7 = scalar_select 0, %s6, %s4
  // Predicated region
  $region2: #{resnet_autoencoder_forward.33} parent=0 // pred_check
    _
  $region3: #{resnet_autoencoder_forward.33} parent=0 // pred_check_branch
    %9 = sbr.rel (0) target = $region5
  $region4: #{resnet_autoencoder_forward.33} parent=0 // pred_region
    _
  $region5: #{resnet_autoencoder_forward.33} parent=0 // pred_fallthru
    _
  // Predicated region
  $region6: #{resnet_autoencoder_forward.33} parent=0 // pred_check
    _
  $region7: #{resnet_autoencoder_forward.33} parent=0 // pred_check_branch
    %11 = sbr.rel (0) target = $region9
  $region8: #{resnet_autoencoder_forward.33} parent=0 // pred_region
    _
  $region9: #{resnet_autoencoder_forward.33} parent=0 // pred_fallthru
    _
  // Predicated region
  $region10: #{resnet_autoencoder_forward.33} parent=0 // pred_check
    _
  $region11: #{resnet_autoencoder_forward.33} parent=0 // pred_check_branch
    %13 = sbr.rel (0) target = $region13
  $region12: #{resnet_autoencoder_forward.33} parent=0 // pred_region
    _
  $region13: #{resnet_autoencoder_forward.33} parent=0 // pred_fallthru
    _
  %v15 = vld [vmem:[%s0] sm:$0xf]
  %v16 = vld [vmem:[%s0 + $0x4] sm:$0xf]
  %v17 = vld [vmem:[%s0 + $0x8] sm:$0xf]
  %v18 = vld [vmem:[%s0 + $0xc] sm:$0xf]
  %v19 = vld [vmem:[%s0 + $0x10] sm:$0xf]
  %v20 = vld [vmem:[%s0 + $0x14] sm:$0xf]
  %v21 = vld [vmem:[%s0 + $0x18] sm:$0xf]
  %v22 = vld [vmem:[%s0 + $0x1c] sm:$0xf]
  %v23 = vld [vmem:[%s0 + $0x20] sm:$0xf]
  %v24 = vld [vmem:[%s0 + $0x24] sm:$0xf]
  %v25 = vld [vmem:[%s0 + $0x28] sm:$0xf]
  %v26 = vld [vmem:[%s0 + $0x2c] sm:$0xf]
  %v27 = vld [vmem:[%s0 + $0x30] sm:$0xf]
  %v28 = vld [vmem:[%s0 + $0x34] sm:$0xf]
  %v29 = vld [vmem:[%s0 + $0x38] sm:$0xf]
  %v30 = vld [vmem:[%s0 + $0x3c] sm:$0xf]
  %v31 = vld [vmem:[%s1] sm:$0xf]
  %v32 = vld [vmem:[%s1 + $0x4] sm:$0xf]
  %v33 = vld [vmem:[%s1 + $0x8] sm:$0xf]
  %v34 = vld [vmem:[%s1 + $0xc] sm:$0xf]
  %v35 = vld [vmem:[%s1 + $0x10] sm:$0xf]
  %v36 = vld [vmem:[%s1 + $0x14] sm:$0xf]
  %v37 = vld [vmem:[%s1 + $0x18] sm:$0xf]
  %v38 = vld [vmem:[%s1 + $0x1c] sm:$0xf]
  %v39 = vld [vmem:[%s1 + $0x20] sm:$0xf]
  %v40 = vld [vmem:[%s1 + $0x24] sm:$0xf]
  %v41 = vld [vmem:[%s1 + $0x28] sm:$0xf]
  %v42 = vld [vmem:[%s1 + $0x2c] sm:$0xf]
  %v43 = vld [vmem:[%s1 + $0x30] sm:$0xf]
  %v44 = vld [vmem:[%s1 + $0x34] sm:$0xf]
  %v45 = vld [vmem:[%s1 + $0x38] sm:$0xf]
  %v46 = vld [vmem:[%s1 + $0x3c] sm:$0xf]
  %v47 = vld [vmem:[%s2] sm:$0x1]
  %v48 = vlaneseq
  %v49 = vshrl.u32 %v48, 7
  %v50 = vsub.s32 0, %v49
  %v51 = vrot.slane %v47, %v50
  %v68 = vunpack.c.l.b16 %v15
  %v69 = vunpack.c.l.b16 %v16
  %v70 = vunpack.c.l.b16 %v17
  %v71 = vunpack.c.l.b16 %v18
  %v72 = vunpack.c.l.b16 %v19
  %v73 = vunpack.c.l.b16 %v20
  %v74 = vunpack.c.l.b16 %v21
  %v75 = vunpack.c.l.b16 %v22
  %v76 = vunpack.c.l.b16 %v23
  %v77 = vunpack.c.l.b16 %v24
  %v78 = vunpack.c.l.b16 %v25
  %v79 = vunpack.c.l.b16 %v26
  %v80 = vunpack.c.l.b16 %v27
  %v81 = vunpack.c.l.b16 %v28
  %v82 = vunpack.c.l.b16 %v29
  %v83 = vunpack.c.l.b16 %v30
  %v84 = vpack.c.b16 %v69, %v68
  %v85 = vpack.c.b16 %v71, %v70
  %v86 = vpack.c.b16 %v73, %v72
  %v87 = vpack.c.b16 %v75, %v74
  %v88 = vpack.c.b16 %v77, %v76
  %v89 = vpack.c.b16 %v79, %v78
  %v90 = vpack.c.b16 %v81, %v80
  %v91 = vpack.c.b16 %v83, %v82
  %v116 = vunpack.c.l.b16 %v31
  %v117 = vunpack.c.l.b16 %v32
  %v118 = vunpack.c.l.b16 %v33
  %v119 = vunpack.c.l.b16 %v34
  %v120 = vunpack.c.l.b16 %v35
  %v121 = vunpack.c.l.b16 %v36
  %v122 = vunpack.c.l.b16 %v37
  %v123 = vunpack.c.l.b16 %v38
  %v124 = vunpack.c.l.b16 %v39
  %v125 = vunpack.c.l.b16 %v40
  %v126 = vunpack.c.l.b16 %v41
  %v127 = vunpack.c.l.b16 %v42
  %v128 = vunpack.c.l.b16 %v43
  %v129 = vunpack.c.l.b16 %v44
  %v130 = vunpack.c.l.b16 %v45
  %v131 = vunpack.c.l.b16 %v46
  %v132 = vpack.c.b16 %v117, %v116
  %v133 = vpack.c.b16 %v119, %v118
  %v134 = vpack.c.b16 %v121, %v120
  %v135 = vpack.c.b16 %v123, %v122
  %v136 = vpack.c.b16 %v125, %v124
  %v137 = vpack.c.b16 %v127, %v126
  %v138 = vpack.c.b16 %v129, %v128
  %v139 = vpack.c.b16 %v131, %v130
  %148 = vmatprep.subr.bf16.mxu0 0
  %149 = vmatpush1.bf16.msra.mxu0 %v139
  %150 = vmatprep.subr.bf16.mxu0 0
  %151 = vmatpush1.bf16.msra.mxu0 %v138
  %152 = vmatprep.subr.bf16.mxu0 0
  %153 = vmatpush1.bf16.msra.mxu0 %v137
  %154 = vmatprep.subr.bf16.mxu0 0
  %155 = vmatpush1.bf16.msra.mxu0 %v136
  %156 = vmatprep.subr.bf16.mxu0 0
  %157 = vmatpush1.bf16.msra.mxu0 %v135
  %158 = vmatprep.subr.bf16.mxu0 0
  %159 = vmatpush1.bf16.msra.mxu0 %v134
  %160 = vmatprep.subr.bf16.mxu0 0
  %161 = vmatpush1.bf16.msra.mxu0 %v133
  %162 = vmatprep.subr.bf16.mxu0 0
  %163 = vmatpush1.bf16.msra.mxu0 %v132
  %164 = vmatprep.subr.bf16.mxu0 0
  %165 = vmatpush2.bf16.msra.mxu0 0
  %166 = vmatprep.subr.bf16.mxu0 0
  %167 = vmatpush2.bf16.msra.mxu0 0
  %168 = vmatprep.subr.bf16.mxu0 0
  %169 = vmatpush2.bf16.msra.mxu0 0
  %170 = vmatprep.subr.bf16.mxu0 0
  %171 = vmatpush2.bf16.msra.mxu0 0
  %172 = vmatprep.subr.bf16.mxu0 0
  %173 = vmatpush2.bf16.msra.mxu0 0
  %174 = vmatprep.subr.bf16.mxu0 0
  %175 = vmatpush2.bf16.msra.mxu0 0
  %176 = vmatprep.subr.bf16.mxu0 0
  %177 = vmatpush2.bf16.msra.mxu0 0
  %178 = vmatprep.subr.bf16.mxu0 0
  %179 = vmatpush2.bf16.msra.mxu0 0
  %180 = vmatprep.mubr.bf16.mxu0 0
  %181 = vmatmul.mubr.bf16.gmra.mxu0 %v84
  %v182 = vpop.f32.mrf.mxu0
  %v183 = vadd.f32 %v51, %v182
  %v184 = vpop.f32.mrf.mxu0
  %v185 = vpop.f32.mrf.mxu0
  %v186 = vadd.f32 %v51, %v185
  %v187 = vpop.f32.mrf.mxu0
  %188 = vmatprep.mubr.bf16.mxu0 0
  %189 = vmatmul.mubr.bf16.gmra.mxu0 %v85
  %v190 = vpop.f32.mrf.mxu0
  %v191 = vadd.f32 %v51, %v190
  %v192 = vpop.f32.mrf.mxu0
  %v193 = vpop.f32.mrf.mxu0
  %v194 = vadd.f32 %v51, %v193
  %v195 = vpop.f32.mrf.mxu0
  %196 = vmatprep.mubr.bf16.mxu0 0
  %197 = vmatmul.mubr.bf16.gmra.mxu0 %v86
  %v198 = vpop.f32.mrf.mxu0
  %v199 = vadd.f32 %v51, %v198
  %v200 = vpop.f32.mrf.mxu0
  %v201 = vpop.f32.mrf.mxu0
  %v202 = vadd.f32 %v51, %v201
  %v203 = vpop.f32.mrf.mxu0
  %204 = vmatprep.mubr.bf16.mxu0 0
  %205 = vmatmul.mubr.bf16.gmra.mxu0 %v87
  %v206 = vpop.f32.mrf.mxu0
  %v207 = vadd.f32 %v51, %v206
  %v208 = vpop.f32.mrf.mxu0
  %v209 = vpop.f32.mrf.mxu0
  %v210 = vadd.f32 %v51, %v209
  %v211 = vpop.f32.mrf.mxu0
  %212 = vmatprep.mubr.bf16.mxu0 0
  %213 = vmatmul.mubr.bf16.gmra.mxu0 %v88
  %v214 = vpop.f32.mrf.mxu0
  %v215 = vadd.f32 %v51, %v214
  %v216 = vpop.f32.mrf.mxu0
  %v217 = vpop.f32.mrf.mxu0
  %v218 = vadd.f32 %v51, %v217
  %v219 = vpop.f32.mrf.mxu0
  %220 = vmatprep.mubr.bf16.mxu0 0
  %221 = vmatmul.mubr.bf16.gmra.mxu0 %v89
  %v222 = vpop.f32.mrf.mxu0
  %v223 = vadd.f32 %v51, %v222
  %v224 = vpop.f32.mrf.mxu0
  %v225 = vpop.f32.mrf.mxu0
  %v226 = vadd.f32 %v51, %v225
  %v227 = vpop.f32.mrf.mxu0
  %228 = vmatprep.mubr.bf16.mxu0 0
  %229 = vmatmul.mubr.bf16.gmra.mxu0 %v90
  %v230 = vpop.f32.mrf.mxu0
  %v231 = vadd.f32 %v51, %v230
  %v232 = vpop.f32.mrf.mxu0
  %v233 = vpop.f32.mrf.mxu0
  %v234 = vadd.f32 %v51, %v233
  %v235 = vpop.f32.mrf.mxu0
  %236 = vmatprep.mubr.bf16.mxu0 0
  %237 = vmatmul.mubr.bf16.gmra.mxu0 %v91
  %v238 = vpop.f32.mrf.mxu0
  %v239 = vadd.f32 %v51, %v238
  %v240 = vpop.f32.mrf.mxu0
  %v241 = vpop.f32.mrf.mxu0
  %v242 = vadd.f32 %v51, %v241
  %v243 = vpop.f32.mrf.mxu0
  %244 = vdwg.mxu0
  %v245 = vld [vmem:[%s2 + $0x1] sm:$0x1]
  %vm246 = vcmp.gt.f32.partialorder %v245, 0.0
  %v247 = vmax.f32 %v183, 0.0
  %v248 = vmax.f32 %v186, 0.0
  %v249 = vmax.f32 %v191, 0.0
  %v250 = vmax.f32 %v194, 0.0
  %v251 = vmax.f32 %v199, 0.0
  %v252 = vmax.f32 %v202, 0.0
  %v253 = vmax.f32 %v207, 0.0
  %v254 = vmax.f32 %v210, 0.0
  %v255 = vmax.f32 %v215, 0.0
  %v256 = vmax.f32 %v218, 0.0
  %v257 = vmax.f32 %v223, 0.0
  %v258 = vmax.f32 %v226, 0.0
  %v259 = vmax.f32 %v231, 0.0
  %v260 = vmax.f32 %v234, 0.0
  %v261 = vmax.f32 %v239, 0.0
  %v262 = vmax.f32 %v242, 0.0
  %v263 = vsel %vm246, 1, 0
  %v264 = vlaneseq
  %v265 = vshrl.u32 %v264, 7
  %v266 = vsub.s32 0, %v265
  %v267 = vrot.slane %v263, %v266
  %vm268 = vcmp.eq.s32.totalorder %v267, 1
  %v269 = vsel %vm268, %v247, %v183
  %v270 = vsel %vm268, %v248, %v186
  %v271 = vsel %vm268, %v249, %v191
  %v272 = vsel %vm268, %v250, %v194
  %v273 = vsel %vm268, %v251, %v199
  %v274 = vsel %vm268, %v252, %v202
  %v275 = vsel %vm268, %v253, %v207
  %v276 = vsel %vm268, %v254, %v210
  %v277 = vsel %vm268, %v255, %v215
  %v278 = vsel %vm268, %v256, %v218
  %v279 = vsel %vm268, %v257, %v223
  %v280 = vsel %vm268, %v258, %v226
  %v281 = vsel %vm268, %v259, %v231
  %v282 = vsel %vm268, %v260, %v234
  %v283 = vsel %vm268, %v261, %v239
  %v284 = vsel %vm268, %v262, %v242
  %v285 = vpack.c.bf16 %v270, %v269
  %v286 = vpack.c.bf16 %v272, %v271
  %v287 = vpack.c.bf16 %v274, %v273
  %v288 = vpack.c.bf16 %v276, %v275
  %v289 = vpack.c.bf16 %v278, %v277
  %v290 = vpack.c.bf16 %v280, %v279
  %v291 = vpack.c.bf16 %v282, %v281
  %v292 = vpack.c.bf16 %v284, %v283
  %v301 = vunpack.c.l.b16 %v285
  %v302 = vunpack.c.h.b16 %v285
  %v303 = vunpack.c.l.b16 %v286
  %v304 = vunpack.c.h.b16 %v286
  %v305 = vunpack.c.l.b16 %v287
  %v306 = vunpack.c.h.b16 %v287
  %v307 = vunpack.c.l.b16 %v288
  %v308 = vunpack.c.h.b16 %v288
  %v309 = vunpack.c.l.b16 %v289
  %v310 = vunpack.c.h.b16 %v289
  %v311 = vunpack.c.l.b16 %v290
  %v312 = vunpack.c.h.b16 %v290
  %v313 = vunpack.c.l.b16 %v291
  %v314 = vunpack.c.h.b16 %v291
  %v315 = vunpack.c.l.b16 %v292
  %v316 = vunpack.c.h.b16 %v292
  %v317 = vpack.c.b16 %v301, %v301
  %v318 = vpack.c.b16 %v302, %v302
  %v319 = vpack.c.b16 %v303, %v303
  %v320 = vpack.c.b16 %v304, %v304
  %v321 = vpack.c.b16 %v305, %v305
  %v322 = vpack.c.b16 %v306, %v306
  %v323 = vpack.c.b16 %v307, %v307
  %v324 = vpack.c.b16 %v308, %v308
  %v325 = vpack.c.b16 %v309, %v309
  %v326 = vpack.c.b16 %v310, %v310
  %v327 = vpack.c.b16 %v311, %v311
  %v328 = vpack.c.b16 %v312, %v312
  %v329 = vpack.c.b16 %v313, %v313
  %v330 = vpack.c.b16 %v314, %v314
  %v331 = vpack.c.b16 %v315, %v315
  %v332 = vpack.c.b16 %v316, %v316
  %349 = vst [vmem:[%s3] sm:$0xf] %v317
  %350 = vst [vmem:[%s3 + $0x4] sm:$0xf] %v318
  %351 = vst [vmem:[%s3 + $0x8] sm:$0xf] %v319
  %352 = vst [vmem:[%s3 + $0xc] sm:$0xf] %v320
  %353 = vst [vmem:[%s3 + $0x10] sm:$0xf] %v321
  %354 = vst [vmem:[%s3 + $0x14] sm:$0xf] %v322
  %355 = vst [vmem:[%s3 + $0x18] sm:$0xf] %v323
  %356 = vst [vmem:[%s3 + $0x1c] sm:$0xf] %v324
  %357 = vst [vmem:[%s3 + $0x20] sm:$0xf] %v325
  %358 = vst [vmem:[%s3 + $0x24] sm:$0xf] %v326
  %359 = vst [vmem:[%s3 + $0x28] sm:$0xf] %v327
  %360 = vst [vmem:[%s3 + $0x2c] sm:$0xf] %v328
  %361 = vst [vmem:[%s3 + $0x30] sm:$0xf] %v329
  %362 = vst [vmem:[%s3 + $0x34] sm:$0xf] %v330
  %363 = vst [vmem:[%s3 + $0x38] sm:$0xf] %v331
  %364 = vst [vmem:[%s3 + $0x3c] sm:$0xf] %v332
  // Predicated region
  $region14: #{resnet_autoencoder_forward.33} parent=0 // pred_check
    _
  $region15: #{resnet_autoencoder_forward.33} parent=0 // pred_check_branch
    %366 = sbr.rel (0) target = $region17
  $region16: #{resnet_autoencoder_forward.33} parent=0 // pred_region
    _
  $region17: #{resnet_autoencoder_forward.33} parent=0 // pred_fallthru
    _
  // Predicated region
  $region18: #{resnet_autoencoder_forward.33} parent=0 // pred_check
    _
  $region19: #{resnet_autoencoder_forward.33} parent=0 // pred_check_branch
    %368 = sbr.rel (0) target = $region21
  $region20: #{resnet_autoencoder_forward.33} parent=0 // pred_region
    _
  $region21: #{resnet_autoencoder_forward.33} parent=0 // pred_fallthru
    _

// kernel: resnet_autoencoder_forward.35
$region0: #{resnet_autoencoder_forward.35}
  #allocation0 [shape = 'u32[]', space=smem, size = 0x4, offset = 0x4, fixed_abs, tag = 'smem constant byte address 0x4 - core index']
  #allocation1 [shape = 'u32[144,128]{1,0:T(1,128)}', space=vmem, size = 0x12000, scoped, tag = 'internal scratch']
  %s0 = inlined_call_operand.vmem [shape: bf16[512,128], index: 0, kind: input, shape index: {}]
  %s1 = inlined_call_operand.vmem [shape: bf16[128,128], index: 1, kind: input, shape index: {}]
  %s2 = inlined_call_operand.vmem [shape: f32[2,128], index: 2, kind: input, shape index: {}]
  %s3 = inlined_call_operand.vmem [shape: f32[512,128], index: 3, kind: output, shape index: {}]
  %s4 = sld [smem:[#allocation0]]
  $region22: #{resnet_autoencoder_forward.35} parent=0
    _
  %s6 = ssub.s32 1, %s4
  %s7 = scalar_select 0, %s6, %s4
  // Predicated region
  $region2: #{resnet_autoencoder_forward.35} parent=0 // pred_check
    _
  $region3: #{resnet_autoencoder_forward.35} parent=0 // pred_check_branch
    %9 = sbr.rel (0) target = $region5
  $region4: #{resnet_autoencoder_forward.35} parent=0 // pred_region
    _
  $region5: #{resnet_autoencoder_forward.35} parent=0 // pred_fallthru
    _
  // Predicated region
  $region6: #{resnet_autoencoder_forward.35} parent=0 // pred_check
    _
  $region7: #{resnet_autoencoder_forward.35} parent=0 // pred_check_branch
    %11 = sbr.rel (0) target = $region9
  $region8: #{resnet_autoencoder_forward.35} parent=0 // pred_region
    _
  $region9: #{resnet_autoencoder_forward.35} parent=0 // pred_fallthru
    _
  // Predicated region
  $region10: #{resnet_autoencoder_forward.35} parent=0 // pred_check
    _
  $region11: #{resnet_autoencoder_forward.35} parent=0 // pred_check_branch
    %13 = sbr.rel (0) target = $region13
  $region12: #{resnet_autoencoder_forward.35} parent=0 // pred_region
    _
  $region13: #{resnet_autoencoder_forward.35} parent=0 // pred_fallthru
    _
  %v15 = vld [vmem:[%s0] sm:$0xf]
  %v16 = vld [vmem:[%s0 + $0x4] sm:$0xf]
  %v17 = vld [vmem:[%s0 + $0x8] sm:$0xf]
  %v18 = vld [vmem:[%s0 + $0xc] sm:$0xf]
  %v19 = vld [vmem:[%s0 + $0x10] sm:$0xf]
  %v20 = vld [vmem:[%s0 + $0x14] sm:$0xf]
  %v21 = vld [vmem:[%s0 + $0x18] sm:$0xf]
  %v22 = vld [vmem:[%s0 + $0x1c] sm:$0xf]
  %v23 = vld [vmem:[%s0 + $0x20] sm:$0xf]
  %v24 = vld [vmem:[%s0 + $0x24] sm:$0xf]
  %v25 = vld [vmem:[%s0 + $0x28] sm:$0xf]
  %v26 = vld [vmem:[%s0 + $0x2c] sm:$0xf]
  %v27 = vld [vmem:[%s0 + $0x30] sm:$0xf]
  %v28 = vld [vmem:[%s0 + $0x34] sm:$0xf]
  %v29 = vld [vmem:[%s0 + $0x38] sm:$0xf]
  %v30 = vld [vmem:[%s0 + $0x3c] sm:$0xf]
  %v31 = vld [vmem:[%s0 + $0x40] sm:$0xf]
  %v32 = vld [vmem:[%s0 + $0x44] sm:$0xf]
  %v33 = vld [vmem:[%s0 + $0x48] sm:$0xf]
  %v34 = vld [vmem:[%s0 + $0x4c] sm:$0xf]
  %v35 = vld [vmem:[%s0 + $0x50] sm:$0xf]
  %v36 = vld [vmem:[%s0 + $0x54] sm:$0xf]
  %v37 = vld [vmem:[%s0 + $0x58] sm:$0xf]
  %v38 = vld [vmem:[%s0 + $0x5c] sm:$0xf]
  %v39 = vld [vmem:[%s0 + $0x60] sm:$0xf]
  %v40 = vld [vmem:[%s0 + $0x64] sm:$0xf]
  %v41 = vld [vmem:[%s0 + $0x68] sm:$0xf]
  %v42 = vld [vmem:[%s0 + $0x6c] sm:$0xf]
  %v43 = vld [vmem:[%s0 + $0x70] sm:$0xf]
  %v44 = vld [vmem:[%s0 + $0x74] sm:$0xf]
  %v45 = vld [vmem:[%s0 + $0x78] sm:$0xf]
  %v46 = vld [vmem:[%s0 + $0x7c] sm:$0xf]
  %v47 = vld [vmem:[%s0 + $0x80] sm:$0xf]
  %v48 = vld [vmem:[%s0 + $0x84] sm:$0xf]
  %v49 = vld [vmem:[%s0 + $0x88] sm:$0xf]
  %v50 = vld [vmem:[%s0 + $0x8c] sm:$0xf]
  %v51 = vld [vmem:[%s0 + $0x90] sm:$0xf]
  %v52 = vld [vmem:[%s0 + $0x94] sm:$0xf]
  %v53 = vld [vmem:[%s0 + $0x98] sm:$0xf]
  %v54 = vld [vmem:[%s0 + $0x9c] sm:$0xf]
  %v55 = vld [vmem:[%s0 + $0xa0] sm:$0xf]
  %v56 = vld [vmem:[%s0 + $0xa4] sm:$0xf]
  %v57 = vld [vmem:[%s0 + $0xa8] sm:$0xf]
  %v58 = vld [vmem:[%s0 + $0xac] sm:$0xf]
  %v59 = vld [vmem:[%s0 + $0xb0] sm:$0xf]
  %v60 = vld [vmem:[%s0 + $0xb4] sm:$0xf]
  %v61 = vld [vmem:[%s0 + $0xb8] sm:$0xf]
  %v62 = vld [vmem:[%s0 + $0xbc] sm:$0xf]
  %v63 = vld [vmem:[%s0 + $0xc0] sm:$0xf]
  %v64 = vld [vmem:[%s0 + $0xc4] sm:$0xf]
  %v65 = vld [vmem:[%s0 + $0xc8] sm:$0xf]
  %v66 = vld [vmem:[%s0 + $0xcc] sm:$0xf]
  %v67 = vld [vmem:[%s0 + $0xd0] sm:$0xf]
  %v68 = vld [vmem:[%s0 + $0xd4] sm:$0xf]
  %v69 = vld [vmem:[%s0 + $0xd8] sm:$0xf]
  %v70 = vld [vmem:[%s0 + $0xdc] sm:$0xf]
  %v71 = vld [vmem:[%s0 + $0xe0] sm:$0xf]
  %v72 = vld [vmem:[%s0 + $0xe4] sm:$0xf]
  %v73 = vld [vmem:[%s0 + $0xe8] sm:$0xf]
  %v74 = vld [vmem:[%s0 + $0xec] sm:$0xf]
  %v75 = vld [vmem:[%s0 + $0xf0] sm:$0xf]
  %v76 = vld [vmem:[%s0 + $0xf4] sm:$0xf]
  %v77 = vld [vmem:[%s0 + $0xf8] sm:$0xf]
  %v78 = vld [vmem:[%s0 + $0xfc] sm:$0xf]
  %v79 = vld [vmem:[%s1] sm:$0xf]
  %v80 = vld [vmem:[%s1 + $0x4] sm:$0xf]
  %v81 = vld [vmem:[%s1 + $0x8] sm:$0xf]
  %v82 = vld [vmem:[%s1 + $0xc] sm:$0xf]
  %v83 = vld [vmem:[%s1 + $0x10] sm:$0xf]
  %v84 = vld [vmem:[%s1 + $0x14] sm:$0xf]
  %v85 = vld [vmem:[%s1 + $0x18] sm:$0xf]
  %v86 = vld [vmem:[%s1 + $0x1c] sm:$0xf]
  %v87 = vld [vmem:[%s1 + $0x20] sm:$0xf]
  %v88 = vld [vmem:[%s1 + $0x24] sm:$0xf]
  %v89 = vld [vmem:[%s1 + $0x28] sm:$0xf]
  %v90 = vld [vmem:[%s1 + $0x2c] sm:$0xf]
  %v91 = vld [vmem:[%s1 + $0x30] sm:$0xf]
  %v92 = vld [vmem:[%s1 + $0x34] sm:$0xf]
  %v93 = vld [vmem:[%s1 + $0x38] sm:$0xf]
  %v94 = vld [vmem:[%s1 + $0x3c] sm:$0xf]
  %v95 = vld [vmem:[%s2] sm:$0x1]
  %v96 = vlaneseq
  %v97 = vshrl.u32 %v96, 7
  %v98 = vsub.s32 0, %v97
  %v99 = vrot.slane %v95, %v98
  %v164 = vunpack.c.l.b16 %v15
  %v165 = vunpack.c.l.b16 %v16
  %v166 = vunpack.c.l.b16 %v17
  %v167 = vunpack.c.l.b16 %v18
  %v168 = vunpack.c.l.b16 %v19
  %v169 = vunpack.c.l.b16 %v20
  %v170 = vunpack.c.l.b16 %v21
  %v171 = vunpack.c.l.b16 %v22
  %v172 = vunpack.c.l.b16 %v23
  %v173 = vunpack.c.l.b16 %v24
  %v174 = vunpack.c.l.b16 %v25
  %v175 = vunpack.c.l.b16 %v26
  %v176 = vunpack.c.l.b16 %v27
  %v177 = vunpack.c.l.b16 %v28
  %v178 = vunpack.c.l.b16 %v29
  %v179 = vunpack.c.l.b16 %v30
  %v180 = vunpack.c.l.b16 %v31
  %v181 = vunpack.c.l.b16 %v32
  %v182 = vunpack.c.l.b16 %v33
  %v183 = vunpack.c.l.b16 %v34
  %v184 = vunpack.c.l.b16 %v35
  %v185 = vunpack.c.l.b16 %v36
  %v186 = vunpack.c.l.b16 %v37
  %v187 = vunpack.c.l.b16 %v38
  %v188 = vunpack.c.l.b16 %v39
  %v189 = vunpack.c.l.b16 %v40
  %v190 = vunpack.c.l.b16 %v41
  %v191 = vunpack.c.l.b16 %v42
  %v192 = vunpack.c.l.b16 %v43
  %v193 = vunpack.c.l.b16 %v44
  %v194 = vunpack.c.l.b16 %v45
  %v195 = vunpack.c.l.b16 %v46
  %v196 = vunpack.c.l.b16 %v47
  %v197 = vunpack.c.l.b16 %v48
  %v198 = vunpack.c.l.b16 %v49
  %v199 = vunpack.c.l.b16 %v50
  %v200 = vunpack.c.l.b16 %v51
  %v201 = vunpack.c.l.b16 %v52
  %v202 = vunpack.c.l.b16 %v53
  %v203 = vunpack.c.l.b16 %v54
  %v204 = vunpack.c.l.b16 %v55
  %v205 = vunpack.c.l.b16 %v56
  %v206 = vunpack.c.l.b16 %v57
  %v207 = vunpack.c.l.b16 %v58
  %v208 = vunpack.c.l.b16 %v59
  %v209 = vunpack.c.l.b16 %v60
  %v210 = vunpack.c.l.b16 %v61
  %v211 = vunpack.c.l.b16 %v62
  %v212 = vunpack.c.l.b16 %v63
  %v213 = vunpack.c.l.b16 %v64
  %v214 = vunpack.c.l.b16 %v65
  %v215 = vunpack.c.l.b16 %v66
  %v216 = vunpack.c.l.b16 %v67
  %v217 = vunpack.c.l.b16 %v68
  %v218 = vunpack.c.l.b16 %v69
  %v219 = vunpack.c.l.b16 %v70
  %v220 = vunpack.c.l.b16 %v71
  %v221 = vunpack.c.l.b16 %v72
  %v222 = vunpack.c.l.b16 %v73
  %v223 = vunpack.c.l.b16 %v74
  %v224 = vunpack.c.l.b16 %v75
  %v225 = vunpack.c.l.b16 %v76
  %v226 = vunpack.c.l.b16 %v77
  %v227 = vunpack.c.l.b16 %v78
  %v228 = vpack.c.b16 %v165, %v164
  %v229 = vpack.c.b16 %v167, %v166
  %v230 = vpack.c.b16 %v169, %v168
  %v231 = vpack.c.b16 %v171, %v170
  %v232 = vpack.c.b16 %v173, %v172
  %v233 = vpack.c.b16 %v175, %v174
  %v234 = vpack.c.b16 %v177, %v176
  %v235 = vpack.c.b16 %v179, %v178
  %v236 = vpack.c.b16 %v181, %v180
  %v237 = vpack.c.b16 %v183, %v182
  %v238 = vpack.c.b16 %v185, %v184
  %v239 = vpack.c.b16 %v187, %v186
  %v240 = vpack.c.b16 %v189, %v188
  %v241 = vpack.c.b16 %v191, %v190
  %v242 = vpack.c.b16 %v193, %v192
  %v243 = vpack.c.b16 %v195, %v194
  %v244 = vpack.c.b16 %v197, %v196
  %v245 = vpack.c.b16 %v199, %v198
  %v246 = vpack.c.b16 %v201, %v200
  %v247 = vpack.c.b16 %v203, %v202
  %v248 = vpack.c.b16 %v205, %v204
  %v249 = vpack.c.b16 %v207, %v206
  %v250 = vpack.c.b16 %v209, %v208
  %v251 = vpack.c.b16 %v211, %v210
  %v252 = vpack.c.b16 %v213, %v212
  %v253 = vpack.c.b16 %v215, %v214
  %v254 = vpack.c.b16 %v217, %v216
  %v255 = vpack.c.b16 %v219, %v218
  %v256 = vpack.c.b16 %v221, %v220
  %v257 = vpack.c.b16 %v223, %v222
  %v258 = vpack.c.b16 %v225, %v224
  %v259 = vpack.c.b16 %v227, %v226
  %v308 = vunpack.c.l.b16 %v79
  %v309 = vunpack.c.l.b16 %v80
  %v310 = vunpack.c.l.b16 %v81
  %v311 = vunpack.c.l.b16 %v82
  %v312 = vunpack.c.l.b16 %v83
  %v313 = vunpack.c.l.b16 %v84
  %v314 = vunpack.c.l.b16 %v85
  %v315 = vunpack.c.l.b16 %v86
  %v316 = vunpack.c.l.b16 %v87
  %v317 = vunpack.c.l.b16 %v88
  %v318 = vunpack.c.l.b16 %v89
  %v319 = vunpack.c.l.b16 %v90
  %v320 = vunpack.c.l.b16 %v91
  %v321 = vunpack.c.l.b16 %v92
  %v322 = vunpack.c.l.b16 %v93
  %v323 = vunpack.c.l.b16 %v94
  %v324 = vpack.c.b16 %v309, %v308
  %v325 = vpack.c.b16 %v311, %v310
  %v326 = vpack.c.b16 %v313, %v312
  %v327 = vpack.c.b16 %v315, %v314
  %v328 = vpack.c.b16 %v317, %v316
  %v329 = vpack.c.b16 %v319, %v318
  %v330 = vpack.c.b16 %v321, %v320
  %v331 = vpack.c.b16 %v323, %v322
  %340 = vmatprep.subr.bf16.mxu0 0
  %341 = vmatpush1.bf16.msra.mxu0 %v331
  %342 = vmatprep.subr.bf16.mxu0 0
  %343 = vmatpush1.bf16.msra.mxu0 %v330
  %344 = vmatprep.subr.bf16.mxu0 0
  %345 = vmatpush1.bf16.msra.mxu0 %v329
  %346 = vmatprep.subr.bf16.mxu0 0
  %347 = vmatpush1.bf16.msra.mxu0 %v328
  %348 = vmatprep.subr.bf16.mxu0 0
  %349 = vmatpush1.bf16.msra.mxu0 %v327
  %350 = vmatprep.subr.bf16.mxu0 0
  %351 = vmatpush1.bf16.msra.mxu0 %v326
  %352 = vmatprep.subr.bf16.mxu0 0
  %353 = vmatpush1.bf16.msra.mxu0 %v325
  %354 = vmatprep.subr.bf16.mxu0 0
  %355 = vmatpush1.bf16.msra.mxu0 %v324
  %356 = vmatprep.subr.bf16.mxu0 0
  %357 = vmatpush2.bf16.msra.mxu0 0
  %358 = vmatprep.subr.bf16.mxu0 0
  %359 = vmatpush2.bf16.msra.mxu0 0
  %360 = vmatprep.subr.bf16.mxu0 0
  %361 = vmatpush2.bf16.msra.mxu0 0
  %362 = vmatprep.subr.bf16.mxu0 0
  %363 = vmatpush2.bf16.msra.mxu0 0
  %364 = vmatprep.subr.bf16.mxu0 0
  %365 = vmatpush2.bf16.msra.mxu0 0
  %366 = vmatprep.subr.bf16.mxu0 0
  %367 = vmatpush2.bf16.msra.mxu0 0
  %368 = vmatprep.subr.bf16.mxu0 0
  %369 = vmatpush2.bf16.msra.mxu0 0
  %370 = vmatprep.subr.bf16.mxu0 0
  %371 = vmatpush2.bf16.msra.mxu0 0
  %372 = vmatprep.mubr.bf16.mxu0 0
  %373 = vmatmul.mubr.bf16.gmra.mxu0 %v228
  %v374 = vpop.f32.mrf.mxu0
  %v375 = vadd.f32 %v99, %v374
  %v376 = vpop.f32.mrf.mxu0
  %v377 = vpop.f32.mrf.mxu0
  %v378 = vadd.f32 %v99, %v377
  %v379 = vpop.f32.mrf.mxu0
  %380 = vmatprep.mubr.bf16.mxu0 0
  %381 = vmatmul.mubr.bf16.gmra.mxu0 %v229
  %v382 = vpop.f32.mrf.mxu0
  %v383 = vadd.f32 %v99, %v382
  %v384 = vpop.f32.mrf.mxu0
  %v385 = vpop.f32.mrf.mxu0
  %v386 = vadd.f32 %v99, %v385
  %v387 = vpop.f32.mrf.mxu0
  %388 = vmatprep.mubr.bf16.mxu0 0
  %389 = vmatmul.mubr.bf16.gmra.mxu0 %v230
  %v390 = vpop.f32.mrf.mxu0
  %v391 = vadd.f32 %v99, %v390
  %v392 = vpop.f32.mrf.mxu0
  %v393 = vpop.f32.mrf.mxu0
  %v394 = vadd.f32 %v99, %v393
  %v395 = vpop.f32.mrf.mxu0
  %396 = vmatprep.mubr.bf16.mxu0 0
  %397 = vmatmul.mubr.bf16.gmra.mxu0 %v231
  %v398 = vpop.f32.mrf.mxu0
  %v399 = vadd.f32 %v99, %v398
  %v400 = vpop.f32.mrf.mxu0
  %v401 = vpop.f32.mrf.mxu0
  %v402 = vadd.f32 %v99, %v401
  %v403 = vpop.f32.mrf.mxu0
  %404 = vmatprep.mubr.bf16.mxu0 0
  %405 = vmatmul.mubr.bf16.gmra.mxu0 %v232
  %v406 = vpop.f32.mrf.mxu0
  %v407 = vadd.f32 %v99, %v406
  %v408 = vpop.f32.mrf.mxu0
  %v409 = vpop.f32.mrf.mxu0
  %v410 = vadd.f32 %v99, %v409
  %v411 = vpop.f32.mrf.mxu0
  %412 = vmatprep.mubr.bf16.mxu0 0
  %413 = vmatmul.mubr.bf16.gmra.mxu0 %v233
  %v414 = vpop.f32.mrf.mxu0
  %v415 = vadd.f32 %v99, %v414
  %v416 = vpop.f32.mrf.mxu0
  %v417 = vpop.f32.mrf.mxu0
  %v418 = vadd.f32 %v99, %v417
  %v419 = vpop.f32.mrf.mxu0
  %420 = vmatprep.mubr.bf16.mxu0 0
  %421 = vmatmul.mubr.bf16.gmra.mxu0 %v234
  %v422 = vpop.f32.mrf.mxu0
  %v423 = vadd.f32 %v99, %v422
  %v424 = vpop.f32.mrf.mxu0
  %v425 = vpop.f32.mrf.mxu0
  %v426 = vadd.f32 %v99, %v425
  %v427 = vpop.f32.mrf.mxu0
  %428 = vmatprep.mubr.bf16.mxu0 0
  %429 = vmatmul.mubr.bf16.gmra.mxu0 %v235
  %v430 = vpop.f32.mrf.mxu0
  %v431 = vadd.f32 %v99, %v430
  %v432 = vpop.f32.mrf.mxu0
  %v433 = vpop.f32.mrf.mxu0
  %v434 = vadd.f32 %v99, %v433
  %v435 = vpop.f32.mrf.mxu0
  %436 = vmatprep.mubr.bf16.mxu0 0
  %437 = vmatmul.mubr.bf16.gmra.mxu0 %v236
  %v438 = vpop.f32.mrf.mxu0
  %v439 = vadd.f32 %v99, %v438
  %v440 = vpop.f32.mrf.mxu0
  %v441 = vpop.f32.mrf.mxu0
  %v442 = vadd.f32 %v99, %v441
  %v443 = vpop.f32.mrf.mxu0
  %444 = vmatprep.mubr.bf16.mxu0 0
  %445 = vmatmul.mubr.bf16.gmra.mxu0 %v237
  %v446 = vpop.f32.mrf.mxu0
  %v447 = vadd.f32 %v99, %v446
  %v448 = vpop.f32.mrf.mxu0
  %v449 = vpop.f32.mrf.mxu0
  %v450 = vadd.f32 %v99, %v449
  %v451 = vpop.f32.mrf.mxu0
  %452 = vmatprep.mubr.bf16.mxu0 0
  %453 = vmatmul.mubr.bf16.gmra.mxu0 %v238
  %v454 = vpop.f32.mrf.mxu0
  %v455 = vadd.f32 %v99, %v454
  %v456 = vpop.f32.mrf.mxu0
  %v457 = vpop.f32.mrf.mxu0
  %v458 = vadd.f32 %v99, %v457
  %v459 = vpop.f32.mrf.mxu0
  %460 = vmatprep.mubr.bf16.mxu0 0
  %461 = vmatmul.mubr.bf16.gmra.mxu0 %v239
  %v462 = vpop.f32.mrf.mxu0
  %v463 = vadd.f32 %v99, %v462
  %v464 = vpop.f32.mrf.mxu0
  %v465 = vpop.f32.mrf.mxu0
  %v466 = vadd.f32 %v99, %v465
  %v467 = vpop.f32.mrf.mxu0
  %468 = vmatprep.mubr.bf16.mxu0 0
  %469 = vmatmul.mubr.bf16.gmra.mxu0 %v240
  %v470 = vpop.f32.mrf.mxu0
  %v471 = vadd.f32 %v99, %v470
  %v472 = vpop.f32.mrf.mxu0
  %v473 = vpop.f32.mrf.mxu0
  %v474 = vadd.f32 %v99, %v473
  %v475 = vpop.f32.mrf.mxu0
  %476 = vmatprep.mubr.bf16.mxu0 0
  %477 = vmatmul.mubr.bf16.gmra.mxu0 %v241
  %v478 = vpop.f32.mrf.mxu0
  %v479 = vadd.f32 %v99, %v478
  %v480 = vpop.f32.mrf.mxu0
  %v481 = vpop.f32.mrf.mxu0
  %v482 = vadd.f32 %v99, %v481
  %v483 = vpop.f32.mrf.mxu0
  %484 = vmatprep.mubr.bf16.mxu0 0
  %485 = vmatmul.mubr.bf16.gmra.mxu0 %v242
  %v486 = vpop.f32.mrf.mxu0
  %v487 = vadd.f32 %v99, %v486
  %v488 = vpop.f32.mrf.mxu0
  %v489 = vpop.f32.mrf.mxu0
  %v490 = vadd.f32 %v99, %v489
  %v491 = vpop.f32.mrf.mxu0
  %492 = vmatprep.mubr.bf16.mxu0 0
  %493 = vmatmul.mubr.bf16.gmra.mxu0 %v243
  %v494 = vpop.f32.mrf.mxu0
  %v495 = vadd.f32 %v99, %v494
  %v496 = vpop.f32.mrf.mxu0
  %v497 = vpop.f32.mrf.mxu0
  %v498 = vadd.f32 %v99, %v497
  %v499 = vpop.f32.mrf.mxu0
  %500 = vmatprep.mubr.bf16.mxu0 0
  %501 = vmatmul.mubr.bf16.gmra.mxu0 %v244
  %v502 = vpop.f32.mrf.mxu0
  %v503 = vadd.f32 %v99, %v502
  %v504 = vpop.f32.mrf.mxu0
  %v505 = vpop.f32.mrf.mxu0
  %v506 = vadd.f32 %v99, %v505
  %v507 = vpop.f32.mrf.mxu0
  %508 = vmatprep.mubr.bf16.mxu0 0
  %509 = vmatmul.mubr.bf16.gmra.mxu0 %v245
  %v510 = vpop.f32.mrf.mxu0
  %v511 = vadd.f32 %v99, %v510
  %v512 = vpop.f32.mrf.mxu0
  %v513 = vpop.f32.mrf.mxu0
  %v514 = vadd.f32 %v99, %v513
  %v515 = vpop.f32.mrf.mxu0
  %516 = vmatprep.mubr.bf16.mxu0 0
  %517 = vmatmul.mubr.bf16.gmra.mxu0 %v246
  %v518 = vpop.f32.mrf.mxu0
  %v519 = vadd.f32 %v99, %v518
  %v520 = vpop.f32.mrf.mxu0
  %v521 = vpop.f32.mrf.mxu0
  %v522 = vadd.f32 %v99, %v521
  %v523 = vpop.f32.mrf.mxu0
  %524 = vmatprep.mubr.bf16.mxu0 0
  %525 = vmatmul.mubr.bf16.gmra.mxu0 %v247
  %v526 = vpop.f32.mrf.mxu0
  %v527 = vadd.f32 %v99, %v526
  %v528 = vpop.f32.mrf.mxu0
  %v529 = vpop.f32.mrf.mxu0
  %v530 = vadd.f32 %v99, %v529
  %v531 = vpop.f32.mrf.mxu0
  %532 = vmatprep.mubr.bf16.mxu0 0
  %533 = vmatmul.mubr.bf16.gmra.mxu0 %v248
  %v534 = vpop.f32.mrf.mxu0
  %v535 = vadd.f32 %v99, %v534
  %v536 = vpop.f32.mrf.mxu0
  %v537 = vpop.f32.mrf.mxu0
  %v538 = vadd.f32 %v99, %v537
  %v539 = vpop.f32.mrf.mxu0
  %540 = vmatprep.mubr.bf16.mxu0 0
  %541 = vmatmul.mubr.bf16.gmra.mxu0 %v249
  %v542 = vpop.f32.mrf.mxu0
  %v543 = vadd.f32 %v99, %v542
  %v544 = vpop.f32.mrf.mxu0
  %v545 = vpop.f32.mrf.mxu0
  %v546 = vadd.f32 %v99, %v545
  %v547 = vpop.f32.mrf.mxu0
  %548 = vmatprep.mubr.bf16.mxu0 0
  %549 = vmatmul.mubr.bf16.gmra.mxu0 %v250
  %v550 = vpop.f32.mrf.mxu0
  %v551 = vadd.f32 %v99, %v550
  %v552 = vpop.f32.mrf.mxu0
  %v553 = vpop.f32.mrf.mxu0
  %v554 = vadd.f32 %v99, %v553
  %v555 = vpop.f32.mrf.mxu0
  %556 = vmatprep.mubr.bf16.mxu0 0
  %557 = vmatmul.mubr.bf16.gmra.mxu0 %v251
  %v558 = vpop.f32.mrf.mxu0
  %v559 = vadd.f32 %v99, %v558
  %v560 = vpop.f32.mrf.mxu0
  %v561 = vpop.f32.mrf.mxu0
  %v562 = vadd.f32 %v99, %v561
  %v563 = vpop.f32.mrf.mxu0
  %564 = vmatprep.mubr.bf16.mxu0 0
  %565 = vmatmul.mubr.bf16.gmra.mxu0 %v252
  %v566 = vpop.f32.mrf.mxu0
  %v567 = vadd.f32 %v99, %v566
  %v568 = vpop.f32.mrf.mxu0
  %v569 = vpop.f32.mrf.mxu0
  %v570 = vadd.f32 %v99, %v569
  %v571 = vpop.f32.mrf.mxu0
  %572 = vmatprep.mubr.bf16.mxu0 0
  %573 = vmatmul.mubr.bf16.gmra.mxu0 %v253
  %v574 = vpop.f32.mrf.mxu0
  %v575 = vadd.f32 %v99, %v574
  %v576 = vpop.f32.mrf.mxu0
  %v577 = vpop.f32.mrf.mxu0
  %v578 = vadd.f32 %v99, %v577
  %v579 = vpop.f32.mrf.mxu0
  %580 = vmatprep.mubr.bf16.mxu0 0
  %581 = vmatmul.mubr.bf16.gmra.mxu0 %v254
  %v582 = vpop.f32.mrf.mxu0
  %v583 = vadd.f32 %v99, %v582
  %v584 = vpop.f32.mrf.mxu0
  %v585 = vpop.f32.mrf.mxu0
  %v586 = vadd.f32 %v99, %v585
  %v587 = vpop.f32.mrf.mxu0
  %588 = vmatprep.mubr.bf16.mxu0 0
  %589 = vmatmul.mubr.bf16.gmra.mxu0 %v255
  %v590 = vpop.f32.mrf.mxu0
  %v591 = vadd.f32 %v99, %v590
  %v592 = vpop.f32.mrf.mxu0
  %v593 = vpop.f32.mrf.mxu0
  %v594 = vadd.f32 %v99, %v593
  %v595 = vpop.f32.mrf.mxu0
  %596 = vmatprep.mubr.bf16.mxu0 0
  %597 = vmatmul.mubr.bf16.gmra.mxu0 %v256
  %v598 = vpop.f32.mrf.mxu0
  %v599 = vadd.f32 %v99, %v598
  %v600 = vpop.f32.mrf.mxu0
  %v601 = vpop.f32.mrf.mxu0
  %v602 = vadd.f32 %v99, %v601
  %v603 = vpop.f32.mrf.mxu0
  %604 = vmatprep.mubr.bf16.mxu0 0
  %605 = vmatmul.mubr.bf16.gmra.mxu0 %v257
  %v606 = vpop.f32.mrf.mxu0
  %v607 = vadd.f32 %v99, %v606
  %v608 = vpop.f32.mrf.mxu0
  %v609 = vpop.f32.mrf.mxu0
  %v610 = vadd.f32 %v99, %v609
  %v611 = vpop.f32.mrf.mxu0
  %612 = vmatprep.mubr.bf16.mxu0 0
  %613 = vmatmul.mubr.bf16.gmra.mxu0 %v258
  %v614 = vpop.f32.mrf.mxu0
  %v615 = vadd.f32 %v99, %v614
  %v616 = vpop.f32.mrf.mxu0
  %v617 = vpop.f32.mrf.mxu0
  %v618 = vadd.f32 %v99, %v617
  %v619 = vpop.f32.mrf.mxu0
  %620 = vmatprep.mubr.bf16.mxu0 0
  %621 = vmatmul.mubr.bf16.gmra.mxu0 %v259
  %v622 = vpop.f32.mrf.mxu0
  %v623 = vadd.f32 %v99, %v622
  %v624 = vpop.f32.mrf.mxu0
  %v625 = vpop.f32.mrf.mxu0
  %v626 = vadd.f32 %v99, %v625
  %v627 = vpop.f32.mrf.mxu0
  %628 = vdwg.mxu0
  %629 = vst [vmem:[%s3] sm:$0xff] %v375
  %630 = vst [vmem:[%s3 + $0x8] sm:$0xff] %v378
  %631 = vst [vmem:[%s3 + $0x10] sm:$0xff] %v383
  %632 = vst [vmem:[%s3 + $0x18] sm:$0xff] %v386
  %633 = vst [vmem:[%s3 + $0x20] sm:$0xff] %v391
  %634 = vst [vmem:[%s3 + $0x28] sm:$0xff] %v394
  %635 = vst [vmem:[%s3 + $0x30] sm:$0xff] %v399
  %636 = vst [vmem:[%s3 + $0x38] sm:$0xff] %v402
  %637 = vst [vmem:[%s3 + $0x40] sm:$0xff] %v407
  %638 = vst [vmem:[%s3 + $0x48] sm:$0xff] %v410
  %639 = vst [vmem:[%s3 + $0x50] sm:$0xff] %v415
  %640 = vst [vmem:[%s3 + $0x58] sm:$0xff] %v418
  %641 = vst [vmem:[%s3 + $0x60] sm:$0xff] %v423
  %642 = vst [vmem:[%s3 + $0x68] sm:$0xff] %v426
  %643 = vst [vmem:[%s3 + $0x70] sm:$0xff] %v431
  %644 = vst [vmem:[%s3 + $0x78] sm:$0xff] %v434
  %645 = vst [vmem:[%s3 + $0x80] sm:$0xff] %v439
  %646 = vst [vmem:[%s3 + $0x88] sm:$0xff] %v442
  %647 = vst [vmem:[%s3 + $0x90] sm:$0xff] %v447
  %648 = vst [vmem:[%s3 + $0x98] sm:$0xff] %v450
  %649 = vst [vmem:[%s3 + $0xa0] sm:$0xff] %v455
  %650 = vst [vmem:[%s3 + $0xa8] sm:$0xff] %v458
  %651 = vst [vmem:[%s3 + $0xb0] sm:$0xff] %v463
  %652 = vst [vmem:[%s3 + $0xb8] sm:$0xff] %v466
  %653 = vst [vmem:[%s3 + $0xc0] sm:$0xff] %v471
  %654 = vst [vmem:[%s3 + $0xc8] sm:$0xff] %v474
  %655 = vst [vmem:[%s3 + $0xd0] sm:$0xff] %v479
  %656 = vst [vmem:[%s3 + $0xd8] sm:$0xff] %v482
  %657 = vst [vmem:[%s3 + $0xe0] sm:$0xff] %v487
  %658 = vst [vmem:[%s3 + $0xe8] sm:$0xff] %v490
  %659 = vst [vmem:[%s3 + $0xf0] sm:$0xff] %v495
  %660 = vst [vmem:[%s3 + $0xf8] sm:$0xff] %v498
  %661 = vst [vmem:[%s3 + $0x100] sm:$0xff] %v503
  %662 = vst [vmem:[%s3 + $0x108] sm:$0xff] %v506
  %663 = vst [vmem:[%s3 + $0x110] sm:$0xff] %v511
  %664 = vst [vmem:[%s3 + $0x118] sm:$0xff] %v514
  %665 = vst [vmem:[%s3 + $0x120] sm:$0xff] %v519
  %666 = vst [vmem:[%s3 + $0x128] sm:$0xff] %v522
  %667 = vst [vmem:[%s3 + $0x130] sm:$0xff] %v527
  %668 = vst [vmem:[%s3 + $0x138] sm:$0xff] %v530
  %669 = vst [vmem:[%s3 + $0x140] sm:$0xff] %v535
  %670 = vst [vmem:[%s3 + $0x148] sm:$0xff] %v538
  %671 = vst [vmem:[%s3 + $0x150] sm:$0xff] %v543
  %672 = vst [vmem:[%s3 + $0x158] sm:$0xff] %v546
  %673 = vst [vmem:[%s3 + $0x160] sm:$0xff] %v551
  %674 = vst [vmem:[%s3 + $0x168] sm:$0xff] %v554
  %675 = vst [vmem:[%s3 + $0x170] sm:$0xff] %v559
  %676 = vst [vmem:[%s3 + $0x178] sm:$0xff] %v562
  %677 = vst [vmem:[%s3 + $0x180] sm:$0xff] %v567
  %678 = vst [vmem:[%s3 + $0x188] sm:$0xff] %v570
  %679 = vst [vmem:[%s3 + $0x190] sm:$0xff] %v575
  %680 = vst [vmem:[%s3 + $0x198] sm:$0xff] %v578
  %681 = vst [vmem:[%s3 + $0x1a0] sm:$0xff] %v583
  %682 = vst [vmem:[%s3 + $0x1a8] sm:$0xff] %v586
  %683 = vst [vmem:[%s3 + $0x1b0] sm:$0xff] %v591
  %684 = vst [vmem:[%s3 + $0x1b8] sm:$0xff] %v594
  %685 = vst [vmem:[%s3 + $0x1c0] sm:$0xff] %v599
  %686 = vst [vmem:[%s3 + $0x1c8] sm:$0xff] %v602
  %687 = vst [vmem:[%s3 + $0x1d0] sm:$0xff] %v607
  %688 = vst [vmem:[%s3 + $0x1d8] sm:$0xff] %v610
  %689 = vst [vmem:[%s3 + $0x1e0] sm:$0xff] %v615
  %690 = vst [vmem:[%s3 + $0x1e8] sm:$0xff] %v618
  %691 = vst [vmem:[%s3 + $0x1f0] sm:$0xff] %v623
  %692 = vst [vmem:[%s3 + $0x1f8] sm:$0xff] %v626
  // Predicated region
  $region14: #{resnet_autoencoder_forward.35} parent=0 // pred_check
    _
  $region15: #{resnet_autoencoder_forward.35} parent=0 // pred_check_branch
    %694 = sbr.rel (0) target = $region17
  $region16: #{resnet_autoencoder_forward.35} parent=0 // pred_region
    _
  $region17: #{resnet_autoencoder_forward.35} parent=0 // pred_fallthru
    _
  // Predicated region
  $region18: #{resnet_autoencoder_forward.35} parent=0 // pred_check
    _
  $region19: #{resnet_autoencoder_forward.35} parent=0 // pred_check_branch
    %696 = sbr.rel (0) target = $region21
  $region20: #{resnet_autoencoder_forward.35} parent=0 // pred_region
    _
  $region21: #{resnet_autoencoder_forward.35} parent=0 // pred_fallthru
    _

</llo_original>
